<compile_context>
chip_gen: v7x
topology: tpu7x:2x2x1
jax: 0.10.0
libtpu: 0.0.40
codegen_flags: <defaults>
</compile_context>

<pallas_src>
import functools
import numpy as np
import jax
import jax.numpy as jnp
from jax import lax
from jax.experimental import pallas as pl
from jax.experimental.pallas import tpu as pltpu

# ---------------- model hyper-parameters (scaled-down, same structure) -------
VOCAB = 128        # max_features
D = 32             # embedding size ("size" / 300 in the original)
C = 16             # conv out_channels (100 in the original)
H = 16             # LSTM hidden size (50 in the original)
P = 8              # adaptive_avg_pool1d target length (50 in the original)
KS = (3, 4, 5)     # conv kernel heights
B = 2              # batch
L = 16             # sequence length (tokens)
T = 3 * P          # LSTM sequence length after concatenation

LANE = 128         # TPU lane width
C_PAD = 128        # conv channels padded lane-dense
G_PAD = 128        # 4*H gate width padded lane-dense


def _adaptive_pool_matrix(l_in: int, l_out: int) -> jnp.ndarray:
    """Pooling matrix M (l_out, l_in): einsum('pl,blc->pbc', M, x) ==
    F.adaptive_avg_pool1d over the l axis (matches PyTorch's window rule)."""
    m = np.zeros((l_out, l_in), np.float32)
    for i in range(l_out):
        s = (i * l_in) // l_out
        e = -((-(i + 1) * l_in) // l_out)      # ceil((i+1)*l_in / l_out)
        m[i, s:e] = 1.0 / (e - s)
    return jnp.asarray(m)


def cnn_lstm_kernel(emb_ref,
                    w0_ref, b0_ref, m0_ref,
                    w1_ref, b1_ref, m1_ref,
                    w2_ref, b2_ref, m2_ref,
                    wih_ref, whh_ref, bl_ref,
                    wfc_ref, bfc_ref,
                    out_ref,
                    *, ks, hidden):
    emb = emb_ref[...]                                   # (B, L, D) bf16
    b, l, _ = emb.shape
    hsz = hidden
    g_pad = whh_ref.shape[-1]

    def branch_pool(w_ref, b_ref, m_ref, k):
        """One conv branch -> pooled features in time-major (P, B, C_pad)."""
        c_pad = w_ref.shape[-1]
        l_out = l - k + 1
        # k shifted (B,l_out,D) @ (D,C_pad) matmuls accumulated in f32.
        # Avoids the lane-axis im2col concat of non-128-aligned D-wide chunks.
        conv = jnp.zeros((b, l_out, c_pad), jnp.float32)
        for dk in range(k):
            conv = conv + jnp.einsum(
                'bld,dc->blc', emb[:, dk:dk + l_out, :], w_ref[dk],
                preferred_element_type=jnp.float32)
        conv = jnp.maximum(conv + b_ref[...].reshape(1, 1, c_pad), 0.0)
        # adaptive_avg_pool1d(., P) as a matmul, producing (P, B, C_pad).
        return jnp.einsum('pl,blc->pbc', m_ref[...], conv,
                          preferred_element_type=jnp.float32)

    p0 = branch_pool(w0_ref, b0_ref, m0_ref, ks[0])
    p1 = branch_pool(w1_ref, b1_ref, m1_ref, ks[1])
    p2 = branch_pool(w2_ref, b2_ref, m2_ref, ks[2])
    # Leading-axis (time) concat; same ordering as torch.cat(..., dim=2)
    # followed by .transpose(1,2).transpose(0,1).  Dropout(0.1) == identity.
    seq = jnp.concatenate([p0, p1, p2], axis=0)          # (T, B, C_pad) f32

    # Hoisted LSTM input projection + combined bias: one bf16 MXU matmul for
    # all steps, f32 accumulation.  W_ih pad rows/cols are zero.
    xp = (jnp.einsum('tbc,cg->tbg', seq.astype(jnp.bfloat16), wih_ref[...],
                     preferred_element_type=jnp.float32)
          + bl_ref[...].reshape(1, 1, g_pad))            # (T, B, G_pad) f32

    # tanh(x) = 2*sigmoid(2x) - 1 for the g gate, with the x2 pre-scale hoisted
    # OUT of the recurrence: double the g-gate lanes of xp and the g-gate
    # columns of W_hh once, so each step needs a single full-vreg sigmoid plus
    # a cheap 2s-1 fixup on the (B, H) g slice.
    gate_lane = lax.broadcasted_iota(jnp.int32, (1, g_pad), 1)
    is_g = jnp.logical_and(gate_lane >= 2 * hsz, gate_lane < 3 * hsz)
    gate_scale = jnp.where(is_g, 2.0, 1.0)               # (1, G_pad)
    w_hh = whh_ref[...] * gate_scale                     # (H, G_pad) f32
    xp = xp * gate_scale

    h_t = jnp.zeros((b, hsz), jnp.float32)
    c_t = jnp.zeros((b, hsz), jnp.float32)
    # Fully unrolled recurrence (T=24 static): one loop-invariant-weight MXU
    # push per step, one full-vreg sigmoid + one tiny tanh(c_t) per step, all
    # state kept in f32 vregs.  Pad lanes (>= 4H) never feed the gate slices.
    for t in range(xp.shape[0]):
        gates = xp[t] + jnp.dot(h_t, w_hh,
                                preferred_element_type=jnp.float32)  # (B, G_pad)
        s = jax.nn.sigmoid(gates)                        # single EUP pass
        i_g = s[:, 0 * hsz:1 * hsz]
        f_g = s[:, 1 * hsz:2 * hsz]
        g_g = 2.0 * s[:, 2 * hsz:3 * hsz] - 1.0          # tanh via identity
        o_g = s[:, 3 * hsz:4 * hsz]
        c_t = f_g * c_t + i_g * g_g
        h_t = o_g * jnp.tanh(c_t)                        # native EUP tanh

    # fc(hn.squeeze(0)): w_fc padded to (H, 128) (only column 0 nonzero) so the
    # output store is lane-dense; wrapper slices column 0.
    out_ref[...] = (jnp.dot(h_t, wfc_ref[...],
                            preferred_element_type=jnp.float32)
                    + bfc_ref[...])


def _pad_to(x, shape):
    return jnp.pad(x, [(0, t - s) for s, t in zip(x.shape, shape)])


def init_params(key):
    ks = jax.random.split(key, 12)

    def rnd(k, shape, s):
        return jax.random.normal(k, shape, jnp.float32) * s

    params = {
        # frozen embedding table (stand-in for the word2vec matrix)
        'emb': rnd(ks[0], (VOCAB, D), 0.1),
        # LSTM(C -> H): W_ih^T (C_pad, G_pad), W_hh^T (H, G_pad), combined
        # bias b_ih + b_hh (1, G_pad).  PyTorch gate order i, f, g, o; pads 0.
        'w_ih': _pad_to(rnd(ks[7], (C, 4 * H), 0.1),
                        (C_PAD, G_PAD)).astype(jnp.bfloat16),
        'w_hh': _pad_to(rnd(ks[8], (H, 4 * H), 0.1), (H, G_PAD)),
        'b_l': _pad_to(rnd(ks[9], (1, 4 * H), 0.1), (1, G_PAD)),
        # fc(H -> 1), pre-transposed and lane-padded to (H, 128) / (1, 128).
        'w_fc': _pad_to(rnd(ks[10], (H, 1), 0.1), (H, LANE)),
        'b_fc': _pad_to(rnd(ks[11], (1, 1), 0.1), (1, LANE)),
    }
    # conv weights stored as (k, D, C_pad) bf16 (row dk,d <-> PyTorch
    # conv.weight[c_out, 0, dk, d]); biases (1, C_pad) f32; pads zero.
    for i, k in enumerate(KS):
        params[f'w{i}'] = _pad_to(rnd(ks[1 + 2 * i], (k, D, C), 0.05),
                                  (k, D, C_PAD)).astype(jnp.bfloat16)
        params[f'b{i}'] = _pad_to(rnd(ks[2 + 2 * i], (1, C), 0.05), (1, C_PAD))
    return params


def cnn_forward(text, params):
    # glue: embedding gather (frozen table lookup) in plain JAX; bf16 MXU feed.
    emb = jnp.take(params['emb'], text, axis=0).astype(jnp.bfloat16)  # (B,L,D)

    pool_mats = [_adaptive_pool_matrix(L - k + 1, P) for k in KS]     # (P,l_out)

    inputs = [emb,
              params['w0'], params['b0'], pool_mats[0],
              params['w1'], params['b1'], pool_mats[1],
              params['w2'], params['b2'], pool_mats[2],
              params['w_ih'], params['w_hh'], params['b_l'],
              params['w_fc'], params['b_fc']]

    kernel = functools.partial(cnn_lstm_kernel, ks=KS, hidden=H)
    out_pad = pl.pallas_call(
        kernel,
        out_shape=jax.ShapeDtypeStruct((text.shape[0], LANE), jnp.float32),
        in_specs=[pl.BlockSpec(memory_space=pltpu.MemorySpace.VMEM)] * len(inputs),
        out_specs=pl.BlockSpec(memory_space=pltpu.MemorySpace.VMEM),
    )(*inputs)
    # Lane-dense (B, 128) store inside the kernel; fc result lives in column 0.
    return out_pad[:, :1]


if __name__ == "__main__":
    key = jax.random.PRNGKey(0)
    pkey, tkey = jax.random.split(key)
    params = init_params(pkey)
    text = jax.random.randint(tkey, (B, L), 0, VOCAB, dtype=jnp.int32)

    out = jax.jit(cnn_forward)(text, params)
    out = jax.block_until_ready(out)
    assert out.shape == (B, 1) and out.dtype == jnp.float32
    assert bool(jnp.all(jnp.isfinite(out)))
    print("KERNEL_OK")
</pallas_src>

<mosaic_0001>
module attributes {stable_mosaic.version = 11 : i64} {
  func.func @cnn_lstm_kernel(%arg0: memref<2x16x32xbf16, #tpu.memory_space<vmem>>, %arg1: memref<3x32x128xbf16, #tpu.memory_space<vmem>>, %arg2: memref<1x128xf32, #tpu.memory_space<vmem>>, %arg3: memref<8x14xf32, #tpu.memory_space<vmem>>, %arg4: memref<4x32x128xbf16, #tpu.memory_space<vmem>>, %arg5: memref<1x128xf32, #tpu.memory_space<vmem>>, %arg6: memref<8x13xf32, #tpu.memory_space<vmem>>, %arg7: memref<5x32x128xbf16, #tpu.memory_space<vmem>>, %arg8: memref<1x128xf32, #tpu.memory_space<vmem>>, %arg9: memref<8x12xf32, #tpu.memory_space<vmem>>, %arg10: memref<128x128xbf16, #tpu.memory_space<vmem>>, %arg11: memref<16x128xf32, #tpu.memory_space<vmem>>, %arg12: memref<1x128xf32, #tpu.memory_space<vmem>>, %arg13: memref<16x128xf32, #tpu.memory_space<vmem>>, %arg14: memref<1x128xf32, #tpu.memory_space<vmem>>, %arg15: memref<2x128xf32, #tpu.memory_space<vmem>>) attributes {dimension_semantics = [], scalar_prefetch = 0 : i64, scratch_operands = 0 : i64, tpu.core_type = #tpu.core_type<tc>} {
    %c0 = arith.constant 0 : index
    %c0_0 = arith.constant 0 : index
    %c0_1 = arith.constant 0 : index
    %0 = vector.load %arg0[%c0, %c0_0, %c0_1] : memref<2x16x32xbf16, #tpu.memory_space<vmem>>, vector<2x16x32xbf16>
    %cst = arith.constant 0.000000e+00 : f32
    %1 = vector.broadcast %cst : f32 to vector<2x14x128xf32>
    %2 = vector.extract_strided_slice %0 {offsets = [0, 0, 0], sizes = [2, 14, 32], strides = [1, 1, 1]} : vector<2x16x32xbf16> to vector<2x14x32xbf16>
    %c0_2 = arith.constant 0 : index
    %c0_3 = arith.constant 0 : index
    %c0_4 = arith.constant 0 : index
    %3 = vector.load %arg1[%c0_2, %c0_3, %c0_4] : memref<3x32x128xbf16, #tpu.memory_space<vmem>>, vector<1x32x128xbf16>
    %4 = vector.shape_cast %3 : vector<1x32x128xbf16> to vector<32x128xbf16>
    "tpu.trace_start"() <{level = 10 : i32, message = "bld,dc->blc"}> : () -> ()
    %cst_5 = arith.constant dense<0.000000e+00> : vector<2x14x128xf32>
    %5 = tpu.matmul %2, %4, %cst_5 {dimension_numbers = #tpu.dot_dimension_numbers<[2], [0], [0, 1], [1], [0, 0, 0, 1, 1, 1], [], []>} : vector<2x14x32xbf16>, vector<32x128xbf16>, vector<2x14x128xf32> -> vector<2x14x128xf32>
    "tpu.trace_stop"() : () -> ()
    %6 = arith.addf %1, %5 : vector<2x14x128xf32>
    %7 = vector.extract_strided_slice %0 {offsets = [0, 1, 0], sizes = [2, 14, 32], strides = [1, 1, 1]} : vector<2x16x32xbf16> to vector<2x14x32xbf16>
    %c1 = arith.constant 1 : index
    %c0_6 = arith.constant 0 : index
    %c0_7 = arith.constant 0 : index
    %8 = vector.load %arg1[%c1, %c0_6, %c0_7] : memref<3x32x128xbf16, #tpu.memory_space<vmem>>, vector<1x32x128xbf16>
    %9 = vector.shape_cast %8 : vector<1x32x128xbf16> to vector<32x128xbf16>
    "tpu.trace_start"() <{level = 10 : i32, message = "bld,dc->blc"}> : () -> ()
    %cst_8 = arith.constant dense<0.000000e+00> : vector<2x14x128xf32>
    %10 = tpu.matmul %7, %9, %cst_8 {dimension_numbers = #tpu.dot_dimension_numbers<[2], [0], [0, 1], [1], [0, 0, 0, 1, 1, 1], [], []>} : vector<2x14x32xbf16>, vector<32x128xbf16>, vector<2x14x128xf32> -> vector<2x14x128xf32>
    "tpu.trace_stop"() : () -> ()
    %11 = arith.addf %6, %10 : vector<2x14x128xf32>
    %12 = vector.extract_strided_slice %0 {offsets = [0, 2, 0], sizes = [2, 14, 32], strides = [1, 1, 1]} : vector<2x16x32xbf16> to vector<2x14x32xbf16>
    %c2 = arith.constant 2 : index
    %c0_9 = arith.constant 0 : index
    %c0_10 = arith.constant 0 : index
    %13 = vector.load %arg1[%c2, %c0_9, %c0_10] : memref<3x32x128xbf16, #tpu.memory_space<vmem>>, vector<1x32x128xbf16>
    %14 = vector.shape_cast %13 : vector<1x32x128xbf16> to vector<32x128xbf16>
    "tpu.trace_start"() <{level = 10 : i32, message = "bld,dc->blc"}> : () -> ()
    %cst_11 = arith.constant dense<0.000000e+00> : vector<2x14x128xf32>
    %15 = tpu.matmul %12, %14, %cst_11 {dimension_numbers = #tpu.dot_dimension_numbers<[2], [0], [0, 1], [1], [0, 0, 0, 1, 1, 1], [], []>} : vector<2x14x32xbf16>, vector<32x128xbf16>, vector<2x14x128xf32> -> vector<2x14x128xf32>
    "tpu.trace_stop"() : () -> ()
    %16 = arith.addf %11, %15 : vector<2x14x128xf32>
    %c0_12 = arith.constant 0 : index
    %c0_13 = arith.constant 0 : index
    %17 = vector.load %arg2[%c0_12, %c0_13] : memref<1x128xf32, #tpu.memory_space<vmem>>, vector<1x128xf32>
    %18 = vector.shape_cast %17 : vector<1x128xf32> to vector<1x1x128xf32>
    %19 = vector.broadcast %18 : vector<1x1x128xf32> to vector<2x14x128xf32>
    %20 = arith.addf %16, %19 : vector<2x14x128xf32>
    %cst_14 = arith.constant 0.000000e+00 : f32
    %21 = vector.broadcast %cst_14 : f32 to vector<2x14x128xf32>
    %22 = arith.maximumf %20, %21 : vector<2x14x128xf32>
    %c0_15 = arith.constant 0 : index
    %c0_16 = arith.constant 0 : index
    %23 = vector.load %arg3[%c0_15, %c0_16] : memref<8x14xf32, #tpu.memory_space<vmem>>, vector<8x14xf32>
    "tpu.trace_start"() <{level = 10 : i32, message = "pl,blc->pbc"}> : () -> ()
    %cst_17 = arith.constant dense<0.000000e+00> : vector<8x2x128xf32>
    %24 = tpu.matmul %23, %22, %cst_17 {dimension_numbers = #tpu.dot_dimension_numbers<[1], [1], [0], [0, 2], [0, 0, 1, 0, 1, 2], [], []>} : vector<8x14xf32>, vector<2x14x128xf32>, vector<8x2x128xf32> -> vector<8x2x128xf32>
    %cst_18 = arith.constant 0.000000e+00 : f32
    "tpu.trace_stop"() : () -> ()
    %25 = vector.broadcast %cst_18 : f32 to vector<2x13x128xf32>
    %26 = vector.extract_strided_slice %0 {offsets = [0, 0, 0], sizes = [2, 13, 32], strides = [1, 1, 1]} : vector<2x16x32xbf16> to vector<2x13x32xbf16>
    %c0_19 = arith.constant 0 : index
    %c0_20 = arith.constant 0 : index
    %c0_21 = arith.constant 0 : index
    %27 = vector.load %arg4[%c0_19, %c0_20, %c0_21] : memref<4x32x128xbf16, #tpu.memory_space<vmem>>, vector<1x32x128xbf16>
    %28 = vector.shape_cast %27 : vector<1x32x128xbf16> to vector<32x128xbf16>
    "tpu.trace_start"() <{level = 10 : i32, message = "bld,dc->blc"}> : () -> ()
    %cst_22 = arith.constant dense<0.000000e+00> : vector<2x13x128xf32>
    %29 = tpu.matmul %26, %28, %cst_22 {dimension_numbers = #tpu.dot_dimension_numbers<[2], [0], [0, 1], [1], [0, 0, 0, 1, 1, 1], [], []>} : vector<2x13x32xbf16>, vector<32x128xbf16>, vector<2x13x128xf32> -> vector<2x13x128xf32>
    "tpu.trace_stop"() : () -> ()
    %30 = arith.addf %25, %29 : vector<2x13x128xf32>
    %31 = vector.extract_strided_slice %0 {offsets = [0, 1, 0], sizes = [2, 13, 32], strides = [1, 1, 1]} : vector<2x16x32xbf16> to vector<2x13x32xbf16>
    %c1_23 = arith.constant 1 : index
    %c0_24 = arith.constant 0 : index
    %c0_25 = arith.constant 0 : index
    %32 = vector.load %arg4[%c1_23, %c0_24, %c0_25] : memref<4x32x128xbf16, #tpu.memory_space<vmem>>, vector<1x32x128xbf16>
    %33 = vector.shape_cast %32 : vector<1x32x128xbf16> to vector<32x128xbf16>
    "tpu.trace_start"() <{level = 10 : i32, message = "bld,dc->blc"}> : () -> ()
    %cst_26 = arith.constant dense<0.000000e+00> : vector<2x13x128xf32>
    %34 = tpu.matmul %31, %33, %cst_26 {dimension_numbers = #tpu.dot_dimension_numbers<[2], [0], [0, 1], [1], [0, 0, 0, 1, 1, 1], [], []>} : vector<2x13x32xbf16>, vector<32x128xbf16>, vector<2x13x128xf32> -> vector<2x13x128xf32>
    "tpu.trace_stop"() : () -> ()
    %35 = arith.addf %30, %34 : vector<2x13x128xf32>
    %36 = vector.extract_strided_slice %0 {offsets = [0, 2, 0], sizes = [2, 13, 32], strides = [1, 1, 1]} : vector<2x16x32xbf16> to vector<2x13x32xbf16>
    %c2_27 = arith.constant 2 : index
    %c0_28 = arith.constant 0 : index
    %c0_29 = arith.constant 0 : index
    %37 = vector.load %arg4[%c2_27, %c0_28, %c0_29] : memref<4x32x128xbf16, #tpu.memory_space<vmem>>, vector<1x32x128xbf16>
    %38 = vector.shape_cast %37 : vector<1x32x128xbf16> to vector<32x128xbf16>
    "tpu.trace_start"() <{level = 10 : i32, message = "bld,dc->blc"}> : () -> ()
    %cst_30 = arith.constant dense<0.000000e+00> : vector<2x13x128xf32>
    %39 = tpu.matmul %36, %38, %cst_30 {dimension_numbers = #tpu.dot_dimension_numbers<[2], [0], [0, 1], [1], [0, 0, 0, 1, 1, 1], [], []>} : vector<2x13x32xbf16>, vector<32x128xbf16>, vector<2x13x128xf32> -> vector<2x13x128xf32>
    "tpu.trace_stop"() : () -> ()
    %40 = arith.addf %35, %39 : vector<2x13x128xf32>
    %41 = vector.extract_strided_slice %0 {offsets = [0, 3, 0], sizes = [2, 13, 32], strides = [1, 1, 1]} : vector<2x16x32xbf16> to vector<2x13x32xbf16>
    %c3 = arith.constant 3 : index
    %c0_31 = arith.constant 0 : index
    %c0_32 = arith.constant 0 : index
    %42 = vector.load %arg4[%c3, %c0_31, %c0_32] : memref<4x32x128xbf16, #tpu.memory_space<vmem>>, vector<1x32x128xbf16>
    %43 = vector.shape_cast %42 : vector<1x32x128xbf16> to vector<32x128xbf16>
    "tpu.trace_start"() <{level = 10 : i32, message = "bld,dc->blc"}> : () -> ()
    %cst_33 = arith.constant dense<0.000000e+00> : vector<2x13x128xf32>
    %44 = tpu.matmul %41, %43, %cst_33 {dimension_numbers = #tpu.dot_dimension_numbers<[2], [0], [0, 1], [1], [0, 0, 0, 1, 1, 1], [], []>} : vector<2x13x32xbf16>, vector<32x128xbf16>, vector<2x13x128xf32> -> vector<2x13x128xf32>
    "tpu.trace_stop"() : () -> ()
    %45 = arith.addf %40, %44 : vector<2x13x128xf32>
    %c0_34 = arith.constant 0 : index
    %c0_35 = arith.constant 0 : index
    %46 = vector.load %arg5[%c0_34, %c0_35] : memref<1x128xf32, #tpu.memory_space<vmem>>, vector<1x128xf32>
    %47 = vector.shape_cast %46 : vector<1x128xf32> to vector<1x1x128xf32>
    %48 = vector.broadcast %47 : vector<1x1x128xf32> to vector<2x13x128xf32>
    %49 = arith.addf %45, %48 : vector<2x13x128xf32>
    %cst_36 = arith.constant 0.000000e+00 : f32
    %50 = vector.broadcast %cst_36 : f32 to vector<2x13x128xf32>
    %51 = arith.maximumf %49, %50 : vector<2x13x128xf32>
    %c0_37 = arith.constant 0 : index
    %c0_38 = arith.constant 0 : index
    %52 = vector.load %arg6[%c0_37, %c0_38] : memref<8x13xf32, #tpu.memory_space<vmem>>, vector<8x13xf32>
    "tpu.trace_start"() <{level = 10 : i32, message = "pl,blc->pbc"}> : () -> ()
    %cst_39 = arith.constant dense<0.000000e+00> : vector<8x2x128xf32>
    %53 = tpu.matmul %52, %51, %cst_39 {dimension_numbers = #tpu.dot_dimension_numbers<[1], [1], [0], [0, 2], [0, 0, 1, 0, 1, 2], [], []>} : vector<8x13xf32>, vector<2x13x128xf32>, vector<8x2x128xf32> -> vector<8x2x128xf32>
    %cst_40 = arith.constant 0.000000e+00 : f32
    "tpu.trace_stop"() : () -> ()
    %54 = vector.broadcast %cst_40 : f32 to vector<2x12x128xf32>
    %55 = vector.extract_strided_slice %0 {offsets = [0, 0, 0], sizes = [2, 12, 32], strides = [1, 1, 1]} : vector<2x16x32xbf16> to vector<2x12x32xbf16>
    %c0_41 = arith.constant 0 : index
    %c0_42 = arith.constant 0 : index
    %c0_43 = arith.constant 0 : index
    %56 = vector.load %arg7[%c0_41, %c0_42, %c0_43] : memref<5x32x128xbf16, #tpu.memory_space<vmem>>, vector<1x32x128xbf16>
    %57 = vector.shape_cast %56 : vector<1x32x128xbf16> to vector<32x128xbf16>
    "tpu.trace_start"() <{level = 10 : i32, message = "bld,dc->blc"}> : () -> ()
    %cst_44 = arith.constant dense<0.000000e+00> : vector<2x12x128xf32>
    %58 = tpu.matmul %55, %57, %cst_44 {dimension_numbers = #tpu.dot_dimension_numbers<[2], [0], [0, 1], [1], [0, 0, 0, 1, 1, 1], [], []>} : vector<2x12x32xbf16>, vector<32x128xbf16>, vector<2x12x128xf32> -> vector<2x12x128xf32>
    "tpu.trace_stop"() : () -> ()
    %59 = arith.addf %54, %58 : vector<2x12x128xf32>
    %60 = vector.extract_strided_slice %0 {offsets = [0, 1, 0], sizes = [2, 12, 32], strides = [1, 1, 1]} : vector<2x16x32xbf16> to vector<2x12x32xbf16>
    %c1_45 = arith.constant 1 : index
    %c0_46 = arith.constant 0 : index
    %c0_47 = arith.constant 0 : index
    %61 = vector.load %arg7[%c1_45, %c0_46, %c0_47] : memref<5x32x128xbf16, #tpu.memory_space<vmem>>, vector<1x32x128xbf16>
    %62 = vector.shape_cast %61 : vector<1x32x128xbf16> to vector<32x128xbf16>
    "tpu.trace_start"() <{level = 10 : i32, message = "bld,dc->blc"}> : () -> ()
    %cst_48 = arith.constant dense<0.000000e+00> : vector<2x12x128xf32>
    %63 = tpu.matmul %60, %62, %cst_48 {dimension_numbers = #tpu.dot_dimension_numbers<[2], [0], [0, 1], [1], [0, 0, 0, 1, 1, 1], [], []>} : vector<2x12x32xbf16>, vector<32x128xbf16>, vector<2x12x128xf32> -> vector<2x12x128xf32>
    "tpu.trace_stop"() : () -> ()
    %64 = arith.addf %59, %63 : vector<2x12x128xf32>
    %65 = vector.extract_strided_slice %0 {offsets = [0, 2, 0], sizes = [2, 12, 32], strides = [1, 1, 1]} : vector<2x16x32xbf16> to vector<2x12x32xbf16>
    %c2_49 = arith.constant 2 : index
    %c0_50 = arith.constant 0 : index
    %c0_51 = arith.constant 0 : index
    %66 = vector.load %arg7[%c2_49, %c0_50, %c0_51] : memref<5x32x128xbf16, #tpu.memory_space<vmem>>, vector<1x32x128xbf16>
    %67 = vector.shape_cast %66 : vector<1x32x128xbf16> to vector<32x128xbf16>
    "tpu.trace_start"() <{level = 10 : i32, message = "bld,dc->blc"}> : () -> ()
    %cst_52 = arith.constant dense<0.000000e+00> : vector<2x12x128xf32>
    %68 = tpu.matmul %65, %67, %cst_52 {dimension_numbers = #tpu.dot_dimension_numbers<[2], [0], [0, 1], [1], [0, 0, 0, 1, 1, 1], [], []>} : vector<2x12x32xbf16>, vector<32x128xbf16>, vector<2x12x128xf32> -> vector<2x12x128xf32>
    "tpu.trace_stop"() : () -> ()
    %69 = arith.addf %64, %68 : vector<2x12x128xf32>
    %70 = vector.extract_strided_slice %0 {offsets = [0, 3, 0], sizes = [2, 12, 32], strides = [1, 1, 1]} : vector<2x16x32xbf16> to vector<2x12x32xbf16>
    %c3_53 = arith.constant 3 : index
    %c0_54 = arith.constant 0 : index
    %c0_55 = arith.constant 0 : index
    %71 = vector.load %arg7[%c3_53, %c0_54, %c0_55] : memref<5x32x128xbf16, #tpu.memory_space<vmem>>, vector<1x32x128xbf16>
    %72 = vector.shape_cast %71 : vector<1x32x128xbf16> to vector<32x128xbf16>
    "tpu.trace_start"() <{level = 10 : i32, message = "bld,dc->blc"}> : () -> ()
    %cst_56 = arith.constant dense<0.000000e+00> : vector<2x12x128xf32>
    %73 = tpu.matmul %70, %72, %cst_56 {dimension_numbers = #tpu.dot_dimension_numbers<[2], [0], [0, 1], [1], [0, 0, 0, 1, 1, 1], [], []>} : vector<2x12x32xbf16>, vector<32x128xbf16>, vector<2x12x128xf32> -> vector<2x12x128xf32>
    "tpu.trace_stop"() : () -> ()
    %74 = arith.addf %69, %73 : vector<2x12x128xf32>
    %75 = vector.extract_strided_slice %0 {offsets = [0, 4, 0], sizes = [2, 12, 32], strides = [1, 1, 1]} : vector<2x16x32xbf16> to vector<2x12x32xbf16>
    %c4 = arith.constant 4 : index
    %c0_57 = arith.constant 0 : index
    %c0_58 = arith.constant 0 : index
    %76 = vector.load %arg7[%c4, %c0_57, %c0_58] : memref<5x32x128xbf16, #tpu.memory_space<vmem>>, vector<1x32x128xbf16>
    %77 = vector.shape_cast %76 : vector<1x32x128xbf16> to vector<32x128xbf16>
    "tpu.trace_start"() <{level = 10 : i32, message = "bld,dc->blc"}> : () -> ()
    %cst_59 = arith.constant dense<0.000000e+00> : vector<2x12x128xf32>
    %78 = tpu.matmul %75, %77, %cst_59 {dimension_numbers = #tpu.dot_dimension_numbers<[2], [0], [0, 1], [1], [0, 0, 0, 1, 1, 1], [], []>} : vector<2x12x32xbf16>, vector<32x128xbf16>, vector<2x12x128xf32> -> vector<2x12x128xf32>
    "tpu.trace_stop"() : () -> ()
    %79 = arith.addf %74, %78 : vector<2x12x128xf32>
    %c0_60 = arith.constant 0 : index
    %c0_61 = arith.constant 0 : index
    %80 = vector.load %arg8[%c0_60, %c0_61] : memref<1x128xf32, #tpu.memory_space<vmem>>, vector<1x128xf32>
    %81 = vector.shape_cast %80 : vector<1x128xf32> to vector<1x1x128xf32>
    %82 = vector.broadcast %81 : vector<1x1x128xf32> to vector<2x12x128xf32>
    %83 = arith.addf %79, %82 : vector<2x12x128xf32>
    %cst_62 = arith.constant 0.000000e+00 : f32
    %84 = vector.broadcast %cst_62 : f32 to vector<2x12x128xf32>
    %85 = arith.maximumf %83, %84 : vector<2x12x128xf32>
    %c0_63 = arith.constant 0 : index
    %c0_64 = arith.constant 0 : index
    %86 = vector.load %arg9[%c0_63, %c0_64] : memref<8x12xf32, #tpu.memory_space<vmem>>, vector<8x12xf32>
    "tpu.trace_start"() <{level = 10 : i32, message = "pl,blc->pbc"}> : () -> ()
    %cst_65 = arith.constant dense<0.000000e+00> : vector<8x2x128xf32>
    %87 = tpu.matmul %86, %85, %cst_65 {dimension_numbers = #tpu.dot_dimension_numbers<[1], [1], [0], [0, 2], [0, 0, 1, 0, 1, 2], [], []>} : vector<8x12xf32>, vector<2x12x128xf32>, vector<8x2x128xf32> -> vector<8x2x128xf32>
    "tpu.trace_stop"() : () -> ()
    %88 = tpu.concatenate %24, %53, %87 in 0 : vector<8x2x128xf32>, vector<8x2x128xf32>, vector<8x2x128xf32> -> vector<24x2x128xf32>
    %89 = arith.truncf %88 : vector<24x2x128xf32> to vector<24x2x128xbf16>
    %c0_66 = arith.constant 0 : index
    %c0_67 = arith.constant 0 : index
    %90 = vector.load %arg10[%c0_66, %c0_67] : memref<128x128xbf16, #tpu.memory_space<vmem>>, vector<128x128xbf16>
    "tpu.trace_start"() <{level = 10 : i32, message = "tbc,cg->tbg"}> : () -> ()
    %cst_68 = arith.constant dense<0.000000e+00> : vector<24x2x128xf32>
    %91 = tpu.matmul %89, %90, %cst_68 {dimension_numbers = #tpu.dot_dimension_numbers<[2], [0], [0, 1], [1], [0, 0, 0, 1, 1, 1], [], []>} : vector<24x2x128xbf16>, vector<128x128xbf16>, vector<24x2x128xf32> -> vector<24x2x128xf32>
    "tpu.trace_stop"() : () -> ()
    %c0_69 = arith.constant 0 : index
    %c0_70 = arith.constant 0 : index
    %92 = vector.load %arg12[%c0_69, %c0_70] : memref<1x128xf32, #tpu.memory_space<vmem>>, vector<1x128xf32>
    %93 = vector.shape_cast %92 : vector<1x128xf32> to vector<1x1x128xf32>
    %94 = vector.broadcast %93 : vector<1x1x128xf32> to vector<24x2x128xf32>
    %95 = arith.addf %91, %94 : vector<24x2x128xf32>
    %96 = tpu.iota {dimensions = array<i32: 1>} : vector<1x128xi32>
    %c32_i32 = arith.constant 32 : i32
    %97 = vector.broadcast %c32_i32 : i32 to vector<1x128xi32>
    %98 = arith.cmpi sge, %96, %97 : vector<1x128xi32>
    %c48_i32 = arith.constant 48 : i32
    %99 = vector.broadcast %c48_i32 : i32 to vector<1x128xi32>
    %100 = arith.cmpi slt, %96, %99 : vector<1x128xi32>
    %101 = arith.andi %98, %100 : vector<1x128xi1>
    %cst_71 = arith.constant 2.000000e+00 : f32
    %cst_72 = arith.constant 1.000000e+00 : f32
    %102 = vector.broadcast %cst_71 : f32 to vector<1x128xf32>
    %103 = vector.broadcast %cst_72 : f32 to vector<1x128xf32>
    %104 = arith.select %101, %102, %103 : vector<1x128xi1>, vector<1x128xf32>
    %c0_73 = arith.constant 0 : index
    %c0_74 = arith.constant 0 : index
    %105 = vector.load %arg11[%c0_73, %c0_74] : memref<16x128xf32, #tpu.memory_space<vmem>>, vector<16x128xf32>
    %106 = vector.broadcast %104 : vector<1x128xf32> to vector<16x128xf32>
    %107 = arith.mulf %105, %106 : vector<16x128xf32>
    %108 = vector.shape_cast %104 : vector<1x128xf32> to vector<1x1x128xf32>
    %109 = vector.broadcast %108 : vector<1x1x128xf32> to vector<24x2x128xf32>
    %110 = arith.mulf %95, %109 : vector<24x2x128xf32>
    %cst_75 = arith.constant 0.000000e+00 : f32
    %111 = vector.broadcast %cst_75 : f32 to vector<2x16xf32>
    %cst_76 = arith.constant 0.000000e+00 : f32
    %112 = vector.broadcast %cst_76 : f32 to vector<2x16xf32>
    %113 = vector.extract_strided_slice %110 {offsets = [0, 0, 0], sizes = [1, 2, 128], strides = [1, 1, 1]} : vector<24x2x128xf32> to vector<1x2x128xf32>
    %114 = vector.shape_cast %113 : vector<1x2x128xf32> to vector<2x128xf32>
    %cst_77 = arith.constant dense<0.000000e+00> : vector<2x128xf32>
    %115 = tpu.matmul %111, %107, %cst_77 {dimension_numbers = #tpu.dot_dimension_numbers<[1], [0], [0], [1], [0, 0, 1, 1], [], []>} : vector<2x16xf32>, vector<16x128xf32>, vector<2x128xf32> -> vector<2x128xf32>
    %116 = arith.addf %114, %115 : vector<2x128xf32>
    %117 = arith.negf %116 : vector<2x128xf32>
    %118 = math.exp %117 : vector<2x128xf32>
    %cst_78 = arith.constant 1.000000e+00 : f32
    %119 = vector.broadcast %cst_78 : f32 to vector<2x128xf32>
    %120 = arith.addf %119, %118 : vector<2x128xf32>
    %121 = arith.divf %119, %120 : vector<2x128xf32>
    %122 = vector.extract_strided_slice %121 {offsets = [0, 0], sizes = [2, 16], strides = [1, 1]} : vector<2x128xf32> to vector<2x16xf32>
    %123 = vector.extract_strided_slice %121 {offsets = [0, 16], sizes = [2, 16], strides = [1, 1]} : vector<2x128xf32> to vector<2x16xf32>
    %124 = vector.extract_strided_slice %121 {offsets = [0, 32], sizes = [2, 16], strides = [1, 1]} : vector<2x128xf32> to vector<2x16xf32>
    %cst_79 = arith.constant 2.000000e+00 : f32
    %125 = vector.broadcast %cst_79 : f32 to vector<2x16xf32>
    %126 = arith.mulf %125, %124 : vector<2x16xf32>
    %cst_80 = arith.constant 1.000000e+00 : f32
    %127 = vector.broadcast %cst_80 : f32 to vector<2x16xf32>
    %128 = arith.subf %126, %127 : vector<2x16xf32>
    %129 = vector.extract_strided_slice %121 {offsets = [0, 48], sizes = [2, 16], strides = [1, 1]} : vector<2x128xf32> to vector<2x16xf32>
    %130 = arith.mulf %123, %112 : vector<2x16xf32>
    %131 = arith.mulf %122, %128 : vector<2x16xf32>
    %132 = arith.addf %130, %131 : vector<2x16xf32>
    %133 = math.tanh %132 : vector<2x16xf32>
    %134 = arith.mulf %129, %133 : vector<2x16xf32>
    %135 = vector.extract_strided_slice %110 {offsets = [1, 0, 0], sizes = [1, 2, 128], strides = [1, 1, 1]} : vector<24x2x128xf32> to vector<1x2x128xf32>
    %136 = vector.shape_cast %135 : vector<1x2x128xf32> to vector<2x128xf32>
    %cst_81 = arith.constant dense<0.000000e+00> : vector<2x128xf32>
    %137 = tpu.matmul %134, %107, %cst_81 {dimension_numbers = #tpu.dot_dimension_numbers<[1], [0], [0], [1], [0, 0, 1, 1], [], []>} : vector<2x16xf32>, vector<16x128xf32>, vector<2x128xf32> -> vector<2x128xf32>
    %138 = arith.addf %136, %137 : vector<2x128xf32>
    %139 = arith.negf %138 : vector<2x128xf32>
    %140 = math.exp %139 : vector<2x128xf32>
    %cst_82 = arith.constant 1.000000e+00 : f32
    %141 = vector.broadcast %cst_82 : f32 to vector<2x128xf32>
    %142 = arith.addf %141, %140 : vector<2x128xf32>
    %143 = arith.divf %141, %142 : vector<2x128xf32>
    %144 = vector.extract_strided_slice %143 {offsets = [0, 0], sizes = [2, 16], strides = [1, 1]} : vector<2x128xf32> to vector<2x16xf32>
    %145 = vector.extract_strided_slice %143 {offsets = [0, 16], sizes = [2, 16], strides = [1, 1]} : vector<2x128xf32> to vector<2x16xf32>
    %146 = vector.extract_strided_slice %143 {offsets = [0, 32], sizes = [2, 16], strides = [1, 1]} : vector<2x128xf32> to vector<2x16xf32>
    %cst_83 = arith.constant 2.000000e+00 : f32
    %147 = vector.broadcast %cst_83 : f32 to vector<2x16xf32>
    %148 = arith.mulf %147, %146 : vector<2x16xf32>
    %cst_84 = arith.constant 1.000000e+00 : f32
    %149 = vector.broadcast %cst_84 : f32 to vector<2x16xf32>
    %150 = arith.subf %148, %149 : vector<2x16xf32>
    %151 = vector.extract_strided_slice %143 {offsets = [0, 48], sizes = [2, 16], strides = [1, 1]} : vector<2x128xf32> to vector<2x16xf32>
    %152 = arith.mulf %145, %132 : vector<2x16xf32>
    %153 = arith.mulf %144, %150 : vector<2x16xf32>
    %154 = arith.addf %152, %153 : vector<2x16xf32>
    %155 = math.tanh %154 : vector<2x16xf32>
    %156 = arith.mulf %151, %155 : vector<2x16xf32>
    %157 = vector.extract_strided_slice %110 {offsets = [2, 0, 0], sizes = [1, 2, 128], strides = [1, 1, 1]} : vector<24x2x128xf32> to vector<1x2x128xf32>
    %158 = vector.shape_cast %157 : vector<1x2x128xf32> to vector<2x128xf32>
    %cst_85 = arith.constant dense<0.000000e+00> : vector<2x128xf32>
    %159 = tpu.matmul %156, %107, %cst_85 {dimension_numbers = #tpu.dot_dimension_numbers<[1], [0], [0], [1], [0, 0, 1, 1], [], []>} : vector<2x16xf32>, vector<16x128xf32>, vector<2x128xf32> -> vector<2x128xf32>
    %160 = arith.addf %158, %159 : vector<2x128xf32>
    %161 = arith.negf %160 : vector<2x128xf32>
    %162 = math.exp %161 : vector<2x128xf32>
    %cst_86 = arith.constant 1.000000e+00 : f32
    %163 = vector.broadcast %cst_86 : f32 to vector<2x128xf32>
    %164 = arith.addf %163, %162 : vector<2x128xf32>
    %165 = arith.divf %163, %164 : vector<2x128xf32>
    %166 = vector.extract_strided_slice %165 {offsets = [0, 0], sizes = [2, 16], strides = [1, 1]} : vector<2x128xf32> to vector<2x16xf32>
    %167 = vector.extract_strided_slice %165 {offsets = [0, 16], sizes = [2, 16], strides = [1, 1]} : vector<2x128xf32> to vector<2x16xf32>
    %168 = vector.extract_strided_slice %165 {offsets = [0, 32], sizes = [2, 16], strides = [1, 1]} : vector<2x128xf32> to vector<2x16xf32>
    %cst_87 = arith.constant 2.000000e+00 : f32
    %169 = vector.broadcast %cst_87 : f32 to vector<2x16xf32>
    %170 = arith.mulf %169, %168 : vector<2x16xf32>
    %cst_88 = arith.constant 1.000000e+00 : f32
    %171 = vector.broadcast %cst_88 : f32 to vector<2x16xf32>
    %172 = arith.subf %170, %171 : vector<2x16xf32>
    %173 = vector.extract_strided_slice %165 {offsets = [0, 48], sizes = [2, 16], strides = [1, 1]} : vector<2x128xf32> to vector<2x16xf32>
    %174 = arith.mulf %167, %154 : vector<2x16xf32>
    %175 = arith.mulf %166, %172 : vector<2x16xf32>
    %176 = arith.addf %174, %175 : vector<2x16xf32>
    %177 = math.tanh %176 : vector<2x16xf32>
    %178 = arith.mulf %173, %177 : vector<2x16xf32>
    %179 = vector.extract_strided_slice %110 {offsets = [3, 0, 0], sizes = [1, 2, 128], strides = [1, 1, 1]} : vector<24x2x128xf32> to vector<1x2x128xf32>
    %180 = vector.shape_cast %179 : vector<1x2x128xf32> to vector<2x128xf32>
    %cst_89 = arith.constant dense<0.000000e+00> : vector<2x128xf32>
    %181 = tpu.matmul %178, %107, %cst_89 {dimension_numbers = #tpu.dot_dimension_numbers<[1], [0], [0], [1], [0, 0, 1, 1], [], []>} : vector<2x16xf32>, vector<16x128xf32>, vector<2x128xf32> -> vector<2x128xf32>
    %182 = arith.addf %180, %181 : vector<2x128xf32>
    %183 = arith.negf %182 : vector<2x128xf32>
    %184 = math.exp %183 : vector<2x128xf32>
    %cst_90 = arith.constant 1.000000e+00 : f32
    %185 = vector.broadcast %cst_90 : f32 to vector<2x128xf32>
    %186 = arith.addf %185, %184 : vector<2x128xf32>
    %187 = arith.divf %185, %186 : vector<2x128xf32>
    %188 = vector.extract_strided_slice %187 {offsets = [0, 0], sizes = [2, 16], strides = [1, 1]} : vector<2x128xf32> to vector<2x16xf32>
    %189 = vector.extract_strided_slice %187 {offsets = [0, 16], sizes = [2, 16], strides = [1, 1]} : vector<2x128xf32> to vector<2x16xf32>
    %190 = vector.extract_strided_slice %187 {offsets = [0, 32], sizes = [2, 16], strides = [1, 1]} : vector<2x128xf32> to vector<2x16xf32>
    %cst_91 = arith.constant 2.000000e+00 : f32
    %191 = vector.broadcast %cst_91 : f32 to vector<2x16xf32>
    %192 = arith.mulf %191, %190 : vector<2x16xf32>
    %cst_92 = arith.constant 1.000000e+00 : f32
    %193 = vector.broadcast %cst_92 : f32 to vector<2x16xf32>
    %194 = arith.subf %192, %193 : vector<2x16xf32>
    %195 = vector.extract_strided_slice %187 {offsets = [0, 48], sizes = [2, 16], strides = [1, 1]} : vector<2x128xf32> to vector<2x16xf32>
    %196 = arith.mulf %189, %176 : vector<2x16xf32>
    %197 = arith.mulf %188, %194 : vector<2x16xf32>
    %198 = arith.addf %196, %197 : vector<2x16xf32>
    %199 = math.tanh %198 : vector<2x16xf32>
    %200 = arith.mulf %195, %199 : vector<2x16xf32>
    %201 = vector.extract_strided_slice %110 {offsets = [4, 0, 0], sizes = [1, 2, 128], strides = [1, 1, 1]} : vector<24x2x128xf32> to vector<1x2x128xf32>
    %202 = vector.shape_cast %201 : vector<1x2x128xf32> to vector<2x128xf32>
    %cst_93 = arith.constant dense<0.000000e+00> : vector<2x128xf32>
    %203 = tpu.matmul %200, %107, %cst_93 {dimension_numbers = #tpu.dot_dimension_numbers<[1], [0], [0], [1], [0, 0, 1, 1], [], []>} : vector<2x16xf32>, vector<16x128xf32>, vector<2x128xf32> -> vector<2x128xf32>
    %204 = arith.addf %202, %203 : vector<2x128xf32>
    %205 = arith.negf %204 : vector<2x128xf32>
    %206 = math.exp %205 : vector<2x128xf32>
    %cst_94 = arith.constant 1.000000e+00 : f32
    %207 = vector.broadcast %cst_94 : f32 to vector<2x128xf32>
    %208 = arith.addf %207, %206 : vector<2x128xf32>
    %209 = arith.divf %207, %208 : vector<2x128xf32>
    %210 = vector.extract_strided_slice %209 {offsets = [0, 0], sizes = [2, 16], strides = [1, 1]} : vector<2x128xf32> to vector<2x16xf32>
    %211 = vector.extract_strided_slice %209 {offsets = [0, 16], sizes = [2, 16], strides = [1, 1]} : vector<2x128xf32> to vector<2x16xf32>
    %212 = vector.extract_strided_slice %209 {offsets = [0, 32], sizes = [2, 16], strides = [1, 1]} : vector<2x128xf32> to vector<2x16xf32>
    %cst_95 = arith.constant 2.000000e+00 : f32
    %213 = vector.broadcast %cst_95 : f32 to vector<2x16xf32>
    %214 = arith.mulf %213, %212 : vector<2x16xf32>
    %cst_96 = arith.constant 1.000000e+00 : f32
    %215 = vector.broadcast %cst_96 : f32 to vector<2x16xf32>
    %216 = arith.subf %214, %215 : vector<2x16xf32>
    %217 = vector.extract_strided_slice %209 {offsets = [0, 48], sizes = [2, 16], strides = [1, 1]} : vector<2x128xf32> to vector<2x16xf32>
    %218 = arith.mulf %211, %198 : vector<2x16xf32>
    %219 = arith.mulf %210, %216 : vector<2x16xf32>
    %220 = arith.addf %218, %219 : vector<2x16xf32>
    %221 = math.tanh %220 : vector<2x16xf32>
    %222 = arith.mulf %217, %221 : vector<2x16xf32>
    %223 = vector.extract_strided_slice %110 {offsets = [5, 0, 0], sizes = [1, 2, 128], strides = [1, 1, 1]} : vector<24x2x128xf32> to vector<1x2x128xf32>
    %224 = vector.shape_cast %223 : vector<1x2x128xf32> to vector<2x128xf32>
    %cst_97 = arith.constant dense<0.000000e+00> : vector<2x128xf32>
    %225 = tpu.matmul %222, %107, %cst_97 {dimension_numbers = #tpu.dot_dimension_numbers<[1], [0], [0], [1], [0, 0, 1, 1], [], []>} : vector<2x16xf32>, vector<16x128xf32>, vector<2x128xf32> -> vector<2x128xf32>
    %226 = arith.addf %224, %225 : vector<2x128xf32>
    %227 = arith.negf %226 : vector<2x128xf32>
    %228 = math.exp %227 : vector<2x128xf32>
    %cst_98 = arith.constant 1.000000e+00 : f32
    %229 = vector.broadcast %cst_98 : f32 to vector<2x128xf32>
    %230 = arith.addf %229, %228 : vector<2x128xf32>
    %231 = arith.divf %229, %230 : vector<2x128xf32>
    %232 = vector.extract_strided_slice %231 {offsets = [0, 0], sizes = [2, 16], strides = [1, 1]} : vector<2x128xf32> to vector<2x16xf32>
    %233 = vector.extract_strided_slice %231 {offsets = [0, 16], sizes = [2, 16], strides = [1, 1]} : vector<2x128xf32> to vector<2x16xf32>
    %234 = vector.extract_strided_slice %231 {offsets = [0, 32], sizes = [2, 16], strides = [1, 1]} : vector<2x128xf32> to vector<2x16xf32>
    %cst_99 = arith.constant 2.000000e+00 : f32
    %235 = vector.broadcast %cst_99 : f32 to vector<2x16xf32>
    %236 = arith.mulf %235, %234 : vector<2x16xf32>
    %cst_100 = arith.constant 1.000000e+00 : f32
    %237 = vector.broadcast %cst_100 : f32 to vector<2x16xf32>
    %238 = arith.subf %236, %237 : vector<2x16xf32>
    %239 = vector.extract_strided_slice %231 {offsets = [0, 48], sizes = [2, 16], strides = [1, 1]} : vector<2x128xf32> to vector<2x16xf32>
    %240 = arith.mulf %233, %220 : vector<2x16xf32>
    %241 = arith.mulf %232, %238 : vector<2x16xf32>
    %242 = arith.addf %240, %241 : vector<2x16xf32>
    %243 = math.tanh %242 : vector<2x16xf32>
    %244 = arith.mulf %239, %243 : vector<2x16xf32>
    %245 = vector.extract_strided_slice %110 {offsets = [6, 0, 0], sizes = [1, 2, 128], strides = [1, 1, 1]} : vector<24x2x128xf32> to vector<1x2x128xf32>
    %246 = vector.shape_cast %245 : vector<1x2x128xf32> to vector<2x128xf32>
    %cst_101 = arith.constant dense<0.000000e+00> : vector<2x128xf32>
    %247 = tpu.matmul %244, %107, %cst_101 {dimension_numbers = #tpu.dot_dimension_numbers<[1], [0], [0], [1], [0, 0, 1, 1], [], []>} : vector<2x16xf32>, vector<16x128xf32>, vector<2x128xf32> -> vector<2x128xf32>
    %248 = arith.addf %246, %247 : vector<2x128xf32>
    %249 = arith.negf %248 : vector<2x128xf32>
    %250 = math.exp %249 : vector<2x128xf32>
    %cst_102 = arith.constant 1.000000e+00 : f32
    %251 = vector.broadcast %cst_102 : f32 to vector<2x128xf32>
    %252 = arith.addf %251, %250 : vector<2x128xf32>
    %253 = arith.divf %251, %252 : vector<2x128xf32>
    %254 = vector.extract_strided_slice %253 {offsets = [0, 0], sizes = [2, 16], strides = [1, 1]} : vector<2x128xf32> to vector<2x16xf32>
    %255 = vector.extract_strided_slice %253 {offsets = [0, 16], sizes = [2, 16], strides = [1, 1]} : vector<2x128xf32> to vector<2x16xf32>
    %256 = vector.extract_strided_slice %253 {offsets = [0, 32], sizes = [2, 16], strides = [1, 1]} : vector<2x128xf32> to vector<2x16xf32>
    %cst_103 = arith.constant 2.000000e+00 : f32
    %257 = vector.broadcast %cst_103 : f32 to vector<2x16xf32>
    %258 = arith.mulf %257, %256 : vector<2x16xf32>
    %cst_104 = arith.constant 1.000000e+00 : f32
    %259 = vector.broadcast %cst_104 : f32 to vector<2x16xf32>
    %260 = arith.subf %258, %259 : vector<2x16xf32>
    %261 = vector.extract_strided_slice %253 {offsets = [0, 48], sizes = [2, 16], strides = [1, 1]} : vector<2x128xf32> to vector<2x16xf32>
    %262 = arith.mulf %255, %242 : vector<2x16xf32>
    %263 = arith.mulf %254, %260 : vector<2x16xf32>
    %264 = arith.addf %262, %263 : vector<2x16xf32>
    %265 = math.tanh %264 : vector<2x16xf32>
    %266 = arith.mulf %261, %265 : vector<2x16xf32>
    %267 = vector.extract_strided_slice %110 {offsets = [7, 0, 0], sizes = [1, 2, 128], strides = [1, 1, 1]} : vector<24x2x128xf32> to vector<1x2x128xf32>
    %268 = vector.shape_cast %267 : vector<1x2x128xf32> to vector<2x128xf32>
    %cst_105 = arith.constant dense<0.000000e+00> : vector<2x128xf32>
    %269 = tpu.matmul %266, %107, %cst_105 {dimension_numbers = #tpu.dot_dimension_numbers<[1], [0], [0], [1], [0, 0, 1, 1], [], []>} : vector<2x16xf32>, vector<16x128xf32>, vector<2x128xf32> -> vector<2x128xf32>
    %270 = arith.addf %268, %269 : vector<2x128xf32>
    %271 = arith.negf %270 : vector<2x128xf32>
    %272 = math.exp %271 : vector<2x128xf32>
    %cst_106 = arith.constant 1.000000e+00 : f32
    %273 = vector.broadcast %cst_106 : f32 to vector<2x128xf32>
    %274 = arith.addf %273, %272 : vector<2x128xf32>
    %275 = arith.divf %273, %274 : vector<2x128xf32>
    %276 = vector.extract_strided_slice %275 {offsets = [0, 0], sizes = [2, 16], strides = [1, 1]} : vector<2x128xf32> to vector<2x16xf32>
    %277 = vector.extract_strided_slice %275 {offsets = [0, 16], sizes = [2, 16], strides = [1, 1]} : vector<2x128xf32> to vector<2x16xf32>
    %278 = vector.extract_strided_slice %275 {offsets = [0, 32], sizes = [2, 16], strides = [1, 1]} : vector<2x128xf32> to vector<2x16xf32>
    %cst_107 = arith.constant 2.000000e+00 : f32
    %279 = vector.broadcast %cst_107 : f32 to vector<2x16xf32>
    %280 = arith.mulf %279, %278 : vector<2x16xf32>
    %cst_108 = arith.constant 1.000000e+00 : f32
    %281 = vector.broadcast %cst_108 : f32 to vector<2x16xf32>
    %282 = arith.subf %280, %281 : vector<2x16xf32>
    %283 = vector.extract_strided_slice %275 {offsets = [0, 48], sizes = [2, 16], strides = [1, 1]} : vector<2x128xf32> to vector<2x16xf32>
    %284 = arith.mulf %277, %264 : vector<2x16xf32>
    %285 = arith.mulf %276, %282 : vector<2x16xf32>
    %286 = arith.addf %284, %285 : vector<2x16xf32>
    %287 = math.tanh %286 : vector<2x16xf32>
    %288 = arith.mulf %283, %287 : vector<2x16xf32>
    %289 = vector.extract_strided_slice %110 {offsets = [8, 0, 0], sizes = [1, 2, 128], strides = [1, 1, 1]} : vector<24x2x128xf32> to vector<1x2x128xf32>
    %290 = vector.shape_cast %289 : vector<1x2x128xf32> to vector<2x128xf32>
    %cst_109 = arith.constant dense<0.000000e+00> : vector<2x128xf32>
    %291 = tpu.matmul %288, %107, %cst_109 {dimension_numbers = #tpu.dot_dimension_numbers<[1], [0], [0], [1], [0, 0, 1, 1], [], []>} : vector<2x16xf32>, vector<16x128xf32>, vector<2x128xf32> -> vector<2x128xf32>
    %292 = arith.addf %290, %291 : vector<2x128xf32>
    %293 = arith.negf %292 : vector<2x128xf32>
    %294 = math.exp %293 : vector<2x128xf32>
    %cst_110 = arith.constant 1.000000e+00 : f32
    %295 = vector.broadcast %cst_110 : f32 to vector<2x128xf32>
    %296 = arith.addf %295, %294 : vector<2x128xf32>
    %297 = arith.divf %295, %296 : vector<2x128xf32>
    %298 = vector.extract_strided_slice %297 {offsets = [0, 0], sizes = [2, 16], strides = [1, 1]} : vector<2x128xf32> to vector<2x16xf32>
    %299 = vector.extract_strided_slice %297 {offsets = [0, 16], sizes = [2, 16], strides = [1, 1]} : vector<2x128xf32> to vector<2x16xf32>
    %300 = vector.extract_strided_slice %297 {offsets = [0, 32], sizes = [2, 16], strides = [1, 1]} : vector<2x128xf32> to vector<2x16xf32>
    %cst_111 = arith.constant 2.000000e+00 : f32
    %301 = vector.broadcast %cst_111 : f32 to vector<2x16xf32>
    %302 = arith.mulf %301, %300 : vector<2x16xf32>
    %cst_112 = arith.constant 1.000000e+00 : f32
    %303 = vector.broadcast %cst_112 : f32 to vector<2x16xf32>
    %304 = arith.subf %302, %303 : vector<2x16xf32>
    %305 = vector.extract_strided_slice %297 {offsets = [0, 48], sizes = [2, 16], strides = [1, 1]} : vector<2x128xf32> to vector<2x16xf32>
    %306 = arith.mulf %299, %286 : vector<2x16xf32>
    %307 = arith.mulf %298, %304 : vector<2x16xf32>
    %308 = arith.addf %306, %307 : vector<2x16xf32>
    %309 = math.tanh %308 : vector<2x16xf32>
    %310 = arith.mulf %305, %309 : vector<2x16xf32>
    %311 = vector.extract_strided_slice %110 {offsets = [9, 0, 0], sizes = [1, 2, 128], strides = [1, 1, 1]} : vector<24x2x128xf32> to vector<1x2x128xf32>
    %312 = vector.shape_cast %311 : vector<1x2x128xf32> to vector<2x128xf32>
    %cst_113 = arith.constant dense<0.000000e+00> : vector<2x128xf32>
    %313 = tpu.matmul %310, %107, %cst_113 {dimension_numbers = #tpu.dot_dimension_numbers<[1], [0], [0], [1], [0, 0, 1, 1], [], []>} : vector<2x16xf32>, vector<16x128xf32>, vector<2x128xf32> -> vector<2x128xf32>
    %314 = arith.addf %312, %313 : vector<2x128xf32>
    %315 = arith.negf %314 : vector<2x128xf32>
    %316 = math.exp %315 : vector<2x128xf32>
    %cst_114 = arith.constant 1.000000e+00 : f32
    %317 = vector.broadcast %cst_114 : f32 to vector<2x128xf32>
    %318 = arith.addf %317, %316 : vector<2x128xf32>
    %319 = arith.divf %317, %318 : vector<2x128xf32>
    %320 = vector.extract_strided_slice %319 {offsets = [0, 0], sizes = [2, 16], strides = [1, 1]} : vector<2x128xf32> to vector<2x16xf32>
    %321 = vector.extract_strided_slice %319 {offsets = [0, 16], sizes = [2, 16], strides = [1, 1]} : vector<2x128xf32> to vector<2x16xf32>
    %322 = vector.extract_strided_slice %319 {offsets = [0, 32], sizes = [2, 16], strides = [1, 1]} : vector<2x128xf32> to vector<2x16xf32>
    %cst_115 = arith.constant 2.000000e+00 : f32
    %323 = vector.broadcast %cst_115 : f32 to vector<2x16xf32>
    %324 = arith.mulf %323, %322 : vector<2x16xf32>
    %cst_116 = arith.constant 1.000000e+00 : f32
    %325 = vector.broadcast %cst_116 : f32 to vector<2x16xf32>
    %326 = arith.subf %324, %325 : vector<2x16xf32>
    %327 = vector.extract_strided_slice %319 {offsets = [0, 48], sizes = [2, 16], strides = [1, 1]} : vector<2x128xf32> to vector<2x16xf32>
    %328 = arith.mulf %321, %308 : vector<2x16xf32>
    %329 = arith.mulf %320, %326 : vector<2x16xf32>
    %330 = arith.addf %328, %329 : vector<2x16xf32>
    %331 = math.tanh %330 : vector<2x16xf32>
    %332 = arith.mulf %327, %331 : vector<2x16xf32>
    %333 = vector.extract_strided_slice %110 {offsets = [10, 0, 0], sizes = [1, 2, 128], strides = [1, 1, 1]} : vector<24x2x128xf32> to vector<1x2x128xf32>
    %334 = vector.shape_cast %333 : vector<1x2x128xf32> to vector<2x128xf32>
    %cst_117 = arith.constant dense<0.000000e+00> : vector<2x128xf32>
    %335 = tpu.matmul %332, %107, %cst_117 {dimension_numbers = #tpu.dot_dimension_numbers<[1], [0], [0], [1], [0, 0, 1, 1], [], []>} : vector<2x16xf32>, vector<16x128xf32>, vector<2x128xf32> -> vector<2x128xf32>
    %336 = arith.addf %334, %335 : vector<2x128xf32>
    %337 = arith.negf %336 : vector<2x128xf32>
    %338 = math.exp %337 : vector<2x128xf32>
    %cst_118 = arith.constant 1.000000e+00 : f32
    %339 = vector.broadcast %cst_118 : f32 to vector<2x128xf32>
    %340 = arith.addf %339, %338 : vector<2x128xf32>
    %341 = arith.divf %339, %340 : vector<2x128xf32>
    %342 = vector.extract_strided_slice %341 {offsets = [0, 0], sizes = [2, 16], strides = [1, 1]} : vector<2x128xf32> to vector<2x16xf32>
    %343 = vector.extract_strided_slice %341 {offsets = [0, 16], sizes = [2, 16], strides = [1, 1]} : vector<2x128xf32> to vector<2x16xf32>
    %344 = vector.extract_strided_slice %341 {offsets = [0, 32], sizes = [2, 16], strides = [1, 1]} : vector<2x128xf32> to vector<2x16xf32>
    %cst_119 = arith.constant 2.000000e+00 : f32
    %345 = vector.broadcast %cst_119 : f32 to vector<2x16xf32>
    %346 = arith.mulf %345, %344 : vector<2x16xf32>
    %cst_120 = arith.constant 1.000000e+00 : f32
    %347 = vector.broadcast %cst_120 : f32 to vector<2x16xf32>
    %348 = arith.subf %346, %347 : vector<2x16xf32>
    %349 = vector.extract_strided_slice %341 {offsets = [0, 48], sizes = [2, 16], strides = [1, 1]} : vector<2x128xf32> to vector<2x16xf32>
    %350 = arith.mulf %343, %330 : vector<2x16xf32>
    %351 = arith.mulf %342, %348 : vector<2x16xf32>
    %352 = arith.addf %350, %351 : vector<2x16xf32>
    %353 = math.tanh %352 : vector<2x16xf32>
    %354 = arith.mulf %349, %353 : vector<2x16xf32>
    %355 = vector.extract_strided_slice %110 {offsets = [11, 0, 0], sizes = [1, 2, 128], strides = [1, 1, 1]} : vector<24x2x128xf32> to vector<1x2x128xf32>
    %356 = vector.shape_cast %355 : vector<1x2x128xf32> to vector<2x128xf32>
    %cst_121 = arith.constant dense<0.000000e+00> : vector<2x128xf32>
    %357 = tpu.matmul %354, %107, %cst_121 {dimension_numbers = #tpu.dot_dimension_numbers<[1], [0], [0], [1], [0, 0, 1, 1], [], []>} : vector<2x16xf32>, vector<16x128xf32>, vector<2x128xf32> -> vector<2x128xf32>
    %358 = arith.addf %356, %357 : vector<2x128xf32>
    %359 = arith.negf %358 : vector<2x128xf32>
    %360 = math.exp %359 : vector<2x128xf32>
    %cst_122 = arith.constant 1.000000e+00 : f32
    %361 = vector.broadcast %cst_122 : f32 to vector<2x128xf32>
    %362 = arith.addf %361, %360 : vector<2x128xf32>
    %363 = arith.divf %361, %362 : vector<2x128xf32>
    %364 = vector.extract_strided_slice %363 {offsets = [0, 0], sizes = [2, 16], strides = [1, 1]} : vector<2x128xf32> to vector<2x16xf32>
    %365 = vector.extract_strided_slice %363 {offsets = [0, 16], sizes = [2, 16], strides = [1, 1]} : vector<2x128xf32> to vector<2x16xf32>
    %366 = vector.extract_strided_slice %363 {offsets = [0, 32], sizes = [2, 16], strides = [1, 1]} : vector<2x128xf32> to vector<2x16xf32>
    %cst_123 = arith.constant 2.000000e+00 : f32
    %367 = vector.broadcast %cst_123 : f32 to vector<2x16xf32>
    %368 = arith.mulf %367, %366 : vector<2x16xf32>
    %cst_124 = arith.constant 1.000000e+00 : f32
    %369 = vector.broadcast %cst_124 : f32 to vector<2x16xf32>
    %370 = arith.subf %368, %369 : vector<2x16xf32>
    %371 = vector.extract_strided_slice %363 {offsets = [0, 48], sizes = [2, 16], strides = [1, 1]} : vector<2x128xf32> to vector<2x16xf32>
    %372 = arith.mulf %365, %352 : vector<2x16xf32>
    %373 = arith.mulf %364, %370 : vector<2x16xf32>
    %374 = arith.addf %372, %373 : vector<2x16xf32>
    %375 = math.tanh %374 : vector<2x16xf32>
    %376 = arith.mulf %371, %375 : vector<2x16xf32>
    %377 = vector.extract_strided_slice %110 {offsets = [12, 0, 0], sizes = [1, 2, 128], strides = [1, 1, 1]} : vector<24x2x128xf32> to vector<1x2x128xf32>
    %378 = vector.shape_cast %377 : vector<1x2x128xf32> to vector<2x128xf32>
    %cst_125 = arith.constant dense<0.000000e+00> : vector<2x128xf32>
    %379 = tpu.matmul %376, %107, %cst_125 {dimension_numbers = #tpu.dot_dimension_numbers<[1], [0], [0], [1], [0, 0, 1, 1], [], []>} : vector<2x16xf32>, vector<16x128xf32>, vector<2x128xf32> -> vector<2x128xf32>
    %380 = arith.addf %378, %379 : vector<2x128xf32>
    %381 = arith.negf %380 : vector<2x128xf32>
    %382 = math.exp %381 : vector<2x128xf32>
    %cst_126 = arith.constant 1.000000e+00 : f32
    %383 = vector.broadcast %cst_126 : f32 to vector<2x128xf32>
    %384 = arith.addf %383, %382 : vector<2x128xf32>
    %385 = arith.divf %383, %384 : vector<2x128xf32>
    %386 = vector.extract_strided_slice %385 {offsets = [0, 0], sizes = [2, 16], strides = [1, 1]} : vector<2x128xf32> to vector<2x16xf32>
    %387 = vector.extract_strided_slice %385 {offsets = [0, 16], sizes = [2, 16], strides = [1, 1]} : vector<2x128xf32> to vector<2x16xf32>
    %388 = vector.extract_strided_slice %385 {offsets = [0, 32], sizes = [2, 16], strides = [1, 1]} : vector<2x128xf32> to vector<2x16xf32>
    %cst_127 = arith.constant 2.000000e+00 : f32
    %389 = vector.broadcast %cst_127 : f32 to vector<2x16xf32>
    %390 = arith.mulf %389, %388 : vector<2x16xf32>
    %cst_128 = arith.constant 1.000000e+00 : f32
    %391 = vector.broadcast %cst_128 : f32 to vector<2x16xf32>
    %392 = arith.subf %390, %391 : vector<2x16xf32>
    %393 = vector.extract_strided_slice %385 {offsets = [0, 48], sizes = [2, 16], strides = [1, 1]} : vector<2x128xf32> to vector<2x16xf32>
    %394 = arith.mulf %387, %374 : vector<2x16xf32>
    %395 = arith.mulf %386, %392 : vector<2x16xf32>
    %396 = arith.addf %394, %395 : vector<2x16xf32>
    %397 = math.tanh %396 : vector<2x16xf32>
    %398 = arith.mulf %393, %397 : vector<2x16xf32>
    %399 = vector.extract_strided_slice %110 {offsets = [13, 0, 0], sizes = [1, 2, 128], strides = [1, 1, 1]} : vector<24x2x128xf32> to vector<1x2x128xf32>
    %400 = vector.shape_cast %399 : vector<1x2x128xf32> to vector<2x128xf32>
    %cst_129 = arith.constant dense<0.000000e+00> : vector<2x128xf32>
    %401 = tpu.matmul %398, %107, %cst_129 {dimension_numbers = #tpu.dot_dimension_numbers<[1], [0], [0], [1], [0, 0, 1, 1], [], []>} : vector<2x16xf32>, vector<16x128xf32>, vector<2x128xf32> -> vector<2x128xf32>
    %402 = arith.addf %400, %401 : vector<2x128xf32>
    %403 = arith.negf %402 : vector<2x128xf32>
    %404 = math.exp %403 : vector<2x128xf32>
    %cst_130 = arith.constant 1.000000e+00 : f32
    %405 = vector.broadcast %cst_130 : f32 to vector<2x128xf32>
    %406 = arith.addf %405, %404 : vector<2x128xf32>
    %407 = arith.divf %405, %406 : vector<2x128xf32>
    %408 = vector.extract_strided_slice %407 {offsets = [0, 0], sizes = [2, 16], strides = [1, 1]} : vector<2x128xf32> to vector<2x16xf32>
    %409 = vector.extract_strided_slice %407 {offsets = [0, 16], sizes = [2, 16], strides = [1, 1]} : vector<2x128xf32> to vector<2x16xf32>
    %410 = vector.extract_strided_slice %407 {offsets = [0, 32], sizes = [2, 16], strides = [1, 1]} : vector<2x128xf32> to vector<2x16xf32>
    %cst_131 = arith.constant 2.000000e+00 : f32
    %411 = vector.broadcast %cst_131 : f32 to vector<2x16xf32>
    %412 = arith.mulf %411, %410 : vector<2x16xf32>
    %cst_132 = arith.constant 1.000000e+00 : f32
    %413 = vector.broadcast %cst_132 : f32 to vector<2x16xf32>
    %414 = arith.subf %412, %413 : vector<2x16xf32>
    %415 = vector.extract_strided_slice %407 {offsets = [0, 48], sizes = [2, 16], strides = [1, 1]} : vector<2x128xf32> to vector<2x16xf32>
    %416 = arith.mulf %409, %396 : vector<2x16xf32>
    %417 = arith.mulf %408, %414 : vector<2x16xf32>
    %418 = arith.addf %416, %417 : vector<2x16xf32>
    %419 = math.tanh %418 : vector<2x16xf32>
    %420 = arith.mulf %415, %419 : vector<2x16xf32>
    %421 = vector.extract_strided_slice %110 {offsets = [14, 0, 0], sizes = [1, 2, 128], strides = [1, 1, 1]} : vector<24x2x128xf32> to vector<1x2x128xf32>
    %422 = vector.shape_cast %421 : vector<1x2x128xf32> to vector<2x128xf32>
    %cst_133 = arith.constant dense<0.000000e+00> : vector<2x128xf32>
    %423 = tpu.matmul %420, %107, %cst_133 {dimension_numbers = #tpu.dot_dimension_numbers<[1], [0], [0], [1], [0, 0, 1, 1], [], []>} : vector<2x16xf32>, vector<16x128xf32>, vector<2x128xf32> -> vector<2x128xf32>
    %424 = arith.addf %422, %423 : vector<2x128xf32>
    %425 = arith.negf %424 : vector<2x128xf32>
    %426 = math.exp %425 : vector<2x128xf32>
    %cst_134 = arith.constant 1.000000e+00 : f32
    %427 = vector.broadcast %cst_134 : f32 to vector<2x128xf32>
    %428 = arith.addf %427, %426 : vector<2x128xf32>
    %429 = arith.divf %427, %428 : vector<2x128xf32>
    %430 = vector.extract_strided_slice %429 {offsets = [0, 0], sizes = [2, 16], strides = [1, 1]} : vector<2x128xf32> to vector<2x16xf32>
    %431 = vector.extract_strided_slice %429 {offsets = [0, 16], sizes = [2, 16], strides = [1, 1]} : vector<2x128xf32> to vector<2x16xf32>
    %432 = vector.extract_strided_slice %429 {offsets = [0, 32], sizes = [2, 16], strides = [1, 1]} : vector<2x128xf32> to vector<2x16xf32>
    %cst_135 = arith.constant 2.000000e+00 : f32
    %433 = vector.broadcast %cst_135 : f32 to vector<2x16xf32>
    %434 = arith.mulf %433, %432 : vector<2x16xf32>
    %cst_136 = arith.constant 1.000000e+00 : f32
    %435 = vector.broadcast %cst_136 : f32 to vector<2x16xf32>
    %436 = arith.subf %434, %435 : vector<2x16xf32>
    %437 = vector.extract_strided_slice %429 {offsets = [0, 48], sizes = [2, 16], strides = [1, 1]} : vector<2x128xf32> to vector<2x16xf32>
    %438 = arith.mulf %431, %418 : vector<2x16xf32>
    %439 = arith.mulf %430, %436 : vector<2x16xf32>
    %440 = arith.addf %438, %439 : vector<2x16xf32>
    %441 = math.tanh %440 : vector<2x16xf32>
    %442 = arith.mulf %437, %441 : vector<2x16xf32>
    %443 = vector.extract_strided_slice %110 {offsets = [15, 0, 0], sizes = [1, 2, 128], strides = [1, 1, 1]} : vector<24x2x128xf32> to vector<1x2x128xf32>
    %444 = vector.shape_cast %443 : vector<1x2x128xf32> to vector<2x128xf32>
    %cst_137 = arith.constant dense<0.000000e+00> : vector<2x128xf32>
    %445 = tpu.matmul %442, %107, %cst_137 {dimension_numbers = #tpu.dot_dimension_numbers<[1], [0], [0], [1], [0, 0, 1, 1], [], []>} : vector<2x16xf32>, vector<16x128xf32>, vector<2x128xf32> -> vector<2x128xf32>
    %446 = arith.addf %444, %445 : vector<2x128xf32>
    %447 = arith.negf %446 : vector<2x128xf32>
    %448 = math.exp %447 : vector<2x128xf32>
    %cst_138 = arith.constant 1.000000e+00 : f32
    %449 = vector.broadcast %cst_138 : f32 to vector<2x128xf32>
    %450 = arith.addf %449, %448 : vector<2x128xf32>
    %451 = arith.divf %449, %450 : vector<2x128xf32>
    %452 = vector.extract_strided_slice %451 {offsets = [0, 0], sizes = [2, 16], strides = [1, 1]} : vector<2x128xf32> to vector<2x16xf32>
    %453 = vector.extract_strided_slice %451 {offsets = [0, 16], sizes = [2, 16], strides = [1, 1]} : vector<2x128xf32> to vector<2x16xf32>
    %454 = vector.extract_strided_slice %451 {offsets = [0, 32], sizes = [2, 16], strides = [1, 1]} : vector<2x128xf32> to vector<2x16xf32>
    %cst_139 = arith.constant 2.000000e+00 : f32
    %455 = vector.broadcast %cst_139 : f32 to vector<2x16xf32>
    %456 = arith.mulf %455, %454 : vector<2x16xf32>
    %cst_140 = arith.constant 1.000000e+00 : f32
    %457 = vector.broadcast %cst_140 : f32 to vector<2x16xf32>
    %458 = arith.subf %456, %457 : vector<2x16xf32>
    %459 = vector.extract_strided_slice %451 {offsets = [0, 48], sizes = [2, 16], strides = [1, 1]} : vector<2x128xf32> to vector<2x16xf32>
    %460 = arith.mulf %453, %440 : vector<2x16xf32>
    %461 = arith.mulf %452, %458 : vector<2x16xf32>
    %462 = arith.addf %460, %461 : vector<2x16xf32>
    %463 = math.tanh %462 : vector<2x16xf32>
    %464 = arith.mulf %459, %463 : vector<2x16xf32>
    %465 = vector.extract_strided_slice %110 {offsets = [16, 0, 0], sizes = [1, 2, 128], strides = [1, 1, 1]} : vector<24x2x128xf32> to vector<1x2x128xf32>
    %466 = vector.shape_cast %465 : vector<1x2x128xf32> to vector<2x128xf32>
    %cst_141 = arith.constant dense<0.000000e+00> : vector<2x128xf32>
    %467 = tpu.matmul %464, %107, %cst_141 {dimension_numbers = #tpu.dot_dimension_numbers<[1], [0], [0], [1], [0, 0, 1, 1], [], []>} : vector<2x16xf32>, vector<16x128xf32>, vector<2x128xf32> -> vector<2x128xf32>
    %468 = arith.addf %466, %467 : vector<2x128xf32>
    %469 = arith.negf %468 : vector<2x128xf32>
    %470 = math.exp %469 : vector<2x128xf32>
    %cst_142 = arith.constant 1.000000e+00 : f32
    %471 = vector.broadcast %cst_142 : f32 to vector<2x128xf32>
    %472 = arith.addf %471, %470 : vector<2x128xf32>
    %473 = arith.divf %471, %472 : vector<2x128xf32>
    %474 = vector.extract_strided_slice %473 {offsets = [0, 0], sizes = [2, 16], strides = [1, 1]} : vector<2x128xf32> to vector<2x16xf32>
    %475 = vector.extract_strided_slice %473 {offsets = [0, 16], sizes = [2, 16], strides = [1, 1]} : vector<2x128xf32> to vector<2x16xf32>
    %476 = vector.extract_strided_slice %473 {offsets = [0, 32], sizes = [2, 16], strides = [1, 1]} : vector<2x128xf32> to vector<2x16xf32>
    %cst_143 = arith.constant 2.000000e+00 : f32
    %477 = vector.broadcast %cst_143 : f32 to vector<2x16xf32>
    %478 = arith.mulf %477, %476 : vector<2x16xf32>
    %cst_144 = arith.constant 1.000000e+00 : f32
    %479 = vector.broadcast %cst_144 : f32 to vector<2x16xf32>
    %480 = arith.subf %478, %479 : vector<2x16xf32>
    %481 = vector.extract_strided_slice %473 {offsets = [0, 48], sizes = [2, 16], strides = [1, 1]} : vector<2x128xf32> to vector<2x16xf32>
    %482 = arith.mulf %475, %462 : vector<2x16xf32>
    %483 = arith.mulf %474, %480 : vector<2x16xf32>
    %484 = arith.addf %482, %483 : vector<2x16xf32>
    %485 = math.tanh %484 : vector<2x16xf32>
    %486 = arith.mulf %481, %485 : vector<2x16xf32>
    %487 = vector.extract_strided_slice %110 {offsets = [17, 0, 0], sizes = [1, 2, 128], strides = [1, 1, 1]} : vector<24x2x128xf32> to vector<1x2x128xf32>
    %488 = vector.shape_cast %487 : vector<1x2x128xf32> to vector<2x128xf32>
    %cst_145 = arith.constant dense<0.000000e+00> : vector<2x128xf32>
    %489 = tpu.matmul %486, %107, %cst_145 {dimension_numbers = #tpu.dot_dimension_numbers<[1], [0], [0], [1], [0, 0, 1, 1], [], []>} : vector<2x16xf32>, vector<16x128xf32>, vector<2x128xf32> -> vector<2x128xf32>
    %490 = arith.addf %488, %489 : vector<2x128xf32>
    %491 = arith.negf %490 : vector<2x128xf32>
    %492 = math.exp %491 : vector<2x128xf32>
    %cst_146 = arith.constant 1.000000e+00 : f32
    %493 = vector.broadcast %cst_146 : f32 to vector<2x128xf32>
    %494 = arith.addf %493, %492 : vector<2x128xf32>
    %495 = arith.divf %493, %494 : vector<2x128xf32>
    %496 = vector.extract_strided_slice %495 {offsets = [0, 0], sizes = [2, 16], strides = [1, 1]} : vector<2x128xf32> to vector<2x16xf32>
    %497 = vector.extract_strided_slice %495 {offsets = [0, 16], sizes = [2, 16], strides = [1, 1]} : vector<2x128xf32> to vector<2x16xf32>
    %498 = vector.extract_strided_slice %495 {offsets = [0, 32], sizes = [2, 16], strides = [1, 1]} : vector<2x128xf32> to vector<2x16xf32>
    %cst_147 = arith.constant 2.000000e+00 : f32
    %499 = vector.broadcast %cst_147 : f32 to vector<2x16xf32>
    %500 = arith.mulf %499, %498 : vector<2x16xf32>
    %cst_148 = arith.constant 1.000000e+00 : f32
    %501 = vector.broadcast %cst_148 : f32 to vector<2x16xf32>
    %502 = arith.subf %500, %501 : vector<2x16xf32>
    %503 = vector.extract_strided_slice %495 {offsets = [0, 48], sizes = [2, 16], strides = [1, 1]} : vector<2x128xf32> to vector<2x16xf32>
    %504 = arith.mulf %497, %484 : vector<2x16xf32>
    %505 = arith.mulf %496, %502 : vector<2x16xf32>
    %506 = arith.addf %504, %505 : vector<2x16xf32>
    %507 = math.tanh %506 : vector<2x16xf32>
    %508 = arith.mulf %503, %507 : vector<2x16xf32>
    %509 = vector.extract_strided_slice %110 {offsets = [18, 0, 0], sizes = [1, 2, 128], strides = [1, 1, 1]} : vector<24x2x128xf32> to vector<1x2x128xf32>
    %510 = vector.shape_cast %509 : vector<1x2x128xf32> to vector<2x128xf32>
    %cst_149 = arith.constant dense<0.000000e+00> : vector<2x128xf32>
    %511 = tpu.matmul %508, %107, %cst_149 {dimension_numbers = #tpu.dot_dimension_numbers<[1], [0], [0], [1], [0, 0, 1, 1], [], []>} : vector<2x16xf32>, vector<16x128xf32>, vector<2x128xf32> -> vector<2x128xf32>
    %512 = arith.addf %510, %511 : vector<2x128xf32>
    %513 = arith.negf %512 : vector<2x128xf32>
    %514 = math.exp %513 : vector<2x128xf32>
    %cst_150 = arith.constant 1.000000e+00 : f32
    %515 = vector.broadcast %cst_150 : f32 to vector<2x128xf32>
    %516 = arith.addf %515, %514 : vector<2x128xf32>
    %517 = arith.divf %515, %516 : vector<2x128xf32>
    %518 = vector.extract_strided_slice %517 {offsets = [0, 0], sizes = [2, 16], strides = [1, 1]} : vector<2x128xf32> to vector<2x16xf32>
    %519 = vector.extract_strided_slice %517 {offsets = [0, 16], sizes = [2, 16], strides = [1, 1]} : vector<2x128xf32> to vector<2x16xf32>
    %520 = vector.extract_strided_slice %517 {offsets = [0, 32], sizes = [2, 16], strides = [1, 1]} : vector<2x128xf32> to vector<2x16xf32>
    %cst_151 = arith.constant 2.000000e+00 : f32
    %521 = vector.broadcast %cst_151 : f32 to vector<2x16xf32>
    %522 = arith.mulf %521, %520 : vector<2x16xf32>
    %cst_152 = arith.constant 1.000000e+00 : f32
    %523 = vector.broadcast %cst_152 : f32 to vector<2x16xf32>
    %524 = arith.subf %522, %523 : vector<2x16xf32>
    %525 = vector.extract_strided_slice %517 {offsets = [0, 48], sizes = [2, 16], strides = [1, 1]} : vector<2x128xf32> to vector<2x16xf32>
    %526 = arith.mulf %519, %506 : vector<2x16xf32>
    %527 = arith.mulf %518, %524 : vector<2x16xf32>
    %528 = arith.addf %526, %527 : vector<2x16xf32>
    %529 = math.tanh %528 : vector<2x16xf32>
    %530 = arith.mulf %525, %529 : vector<2x16xf32>
    %531 = vector.extract_strided_slice %110 {offsets = [19, 0, 0], sizes = [1, 2, 128], strides = [1, 1, 1]} : vector<24x2x128xf32> to vector<1x2x128xf32>
    %532 = vector.shape_cast %531 : vector<1x2x128xf32> to vector<2x128xf32>
    %cst_153 = arith.constant dense<0.000000e+00> : vector<2x128xf32>
    %533 = tpu.matmul %530, %107, %cst_153 {dimension_numbers = #tpu.dot_dimension_numbers<[1], [0], [0], [1], [0, 0, 1, 1], [], []>} : vector<2x16xf32>, vector<16x128xf32>, vector<2x128xf32> -> vector<2x128xf32>
    %534 = arith.addf %532, %533 : vector<2x128xf32>
    %535 = arith.negf %534 : vector<2x128xf32>
    %536 = math.exp %535 : vector<2x128xf32>
    %cst_154 = arith.constant 1.000000e+00 : f32
    %537 = vector.broadcast %cst_154 : f32 to vector<2x128xf32>
    %538 = arith.addf %537, %536 : vector<2x128xf32>
    %539 = arith.divf %537, %538 : vector<2x128xf32>
    %540 = vector.extract_strided_slice %539 {offsets = [0, 0], sizes = [2, 16], strides = [1, 1]} : vector<2x128xf32> to vector<2x16xf32>
    %541 = vector.extract_strided_slice %539 {offsets = [0, 16], sizes = [2, 16], strides = [1, 1]} : vector<2x128xf32> to vector<2x16xf32>
    %542 = vector.extract_strided_slice %539 {offsets = [0, 32], sizes = [2, 16], strides = [1, 1]} : vector<2x128xf32> to vector<2x16xf32>
    %cst_155 = arith.constant 2.000000e+00 : f32
    %543 = vector.broadcast %cst_155 : f32 to vector<2x16xf32>
    %544 = arith.mulf %543, %542 : vector<2x16xf32>
    %cst_156 = arith.constant 1.000000e+00 : f32
    %545 = vector.broadcast %cst_156 : f32 to vector<2x16xf32>
    %546 = arith.subf %544, %545 : vector<2x16xf32>
    %547 = vector.extract_strided_slice %539 {offsets = [0, 48], sizes = [2, 16], strides = [1, 1]} : vector<2x128xf32> to vector<2x16xf32>
    %548 = arith.mulf %541, %528 : vector<2x16xf32>
    %549 = arith.mulf %540, %546 : vector<2x16xf32>
    %550 = arith.addf %548, %549 : vector<2x16xf32>
    %551 = math.tanh %550 : vector<2x16xf32>
    %552 = arith.mulf %547, %551 : vector<2x16xf32>
    %553 = vector.extract_strided_slice %110 {offsets = [20, 0, 0], sizes = [1, 2, 128], strides = [1, 1, 1]} : vector<24x2x128xf32> to vector<1x2x128xf32>
    %554 = vector.shape_cast %553 : vector<1x2x128xf32> to vector<2x128xf32>
    %cst_157 = arith.constant dense<0.000000e+00> : vector<2x128xf32>
    %555 = tpu.matmul %552, %107, %cst_157 {dimension_numbers = #tpu.dot_dimension_numbers<[1], [0], [0], [1], [0, 0, 1, 1], [], []>} : vector<2x16xf32>, vector<16x128xf32>, vector<2x128xf32> -> vector<2x128xf32>
    %556 = arith.addf %554, %555 : vector<2x128xf32>
    %557 = arith.negf %556 : vector<2x128xf32>
    %558 = math.exp %557 : vector<2x128xf32>
    %cst_158 = arith.constant 1.000000e+00 : f32
    %559 = vector.broadcast %cst_158 : f32 to vector<2x128xf32>
    %560 = arith.addf %559, %558 : vector<2x128xf32>
    %561 = arith.divf %559, %560 : vector<2x128xf32>
    %562 = vector.extract_strided_slice %561 {offsets = [0, 0], sizes = [2, 16], strides = [1, 1]} : vector<2x128xf32> to vector<2x16xf32>
    %563 = vector.extract_strided_slice %561 {offsets = [0, 16], sizes = [2, 16], strides = [1, 1]} : vector<2x128xf32> to vector<2x16xf32>
    %564 = vector.extract_strided_slice %561 {offsets = [0, 32], sizes = [2, 16], strides = [1, 1]} : vector<2x128xf32> to vector<2x16xf32>
    %cst_159 = arith.constant 2.000000e+00 : f32
    %565 = vector.broadcast %cst_159 : f32 to vector<2x16xf32>
    %566 = arith.mulf %565, %564 : vector<2x16xf32>
    %cst_160 = arith.constant 1.000000e+00 : f32
    %567 = vector.broadcast %cst_160 : f32 to vector<2x16xf32>
    %568 = arith.subf %566, %567 : vector<2x16xf32>
    %569 = vector.extract_strided_slice %561 {offsets = [0, 48], sizes = [2, 16], strides = [1, 1]} : vector<2x128xf32> to vector<2x16xf32>
    %570 = arith.mulf %563, %550 : vector<2x16xf32>
    %571 = arith.mulf %562, %568 : vector<2x16xf32>
    %572 = arith.addf %570, %571 : vector<2x16xf32>
    %573 = math.tanh %572 : vector<2x16xf32>
    %574 = arith.mulf %569, %573 : vector<2x16xf32>
    %575 = vector.extract_strided_slice %110 {offsets = [21, 0, 0], sizes = [1, 2, 128], strides = [1, 1, 1]} : vector<24x2x128xf32> to vector<1x2x128xf32>
    %576 = vector.shape_cast %575 : vector<1x2x128xf32> to vector<2x128xf32>
    %cst_161 = arith.constant dense<0.000000e+00> : vector<2x128xf32>
    %577 = tpu.matmul %574, %107, %cst_161 {dimension_numbers = #tpu.dot_dimension_numbers<[1], [0], [0], [1], [0, 0, 1, 1], [], []>} : vector<2x16xf32>, vector<16x128xf32>, vector<2x128xf32> -> vector<2x128xf32>
    %578 = arith.addf %576, %577 : vector<2x128xf32>
    %579 = arith.negf %578 : vector<2x128xf32>
    %580 = math.exp %579 : vector<2x128xf32>
    %cst_162 = arith.constant 1.000000e+00 : f32
    %581 = vector.broadcast %cst_162 : f32 to vector<2x128xf32>
    %582 = arith.addf %581, %580 : vector<2x128xf32>
    %583 = arith.divf %581, %582 : vector<2x128xf32>
    %584 = vector.extract_strided_slice %583 {offsets = [0, 0], sizes = [2, 16], strides = [1, 1]} : vector<2x128xf32> to vector<2x16xf32>
    %585 = vector.extract_strided_slice %583 {offsets = [0, 16], sizes = [2, 16], strides = [1, 1]} : vector<2x128xf32> to vector<2x16xf32>
    %586 = vector.extract_strided_slice %583 {offsets = [0, 32], sizes = [2, 16], strides = [1, 1]} : vector<2x128xf32> to vector<2x16xf32>
    %cst_163 = arith.constant 2.000000e+00 : f32
    %587 = vector.broadcast %cst_163 : f32 to vector<2x16xf32>
    %588 = arith.mulf %587, %586 : vector<2x16xf32>
    %cst_164 = arith.constant 1.000000e+00 : f32
    %589 = vector.broadcast %cst_164 : f32 to vector<2x16xf32>
    %590 = arith.subf %588, %589 : vector<2x16xf32>
    %591 = vector.extract_strided_slice %583 {offsets = [0, 48], sizes = [2, 16], strides = [1, 1]} : vector<2x128xf32> to vector<2x16xf32>
    %592 = arith.mulf %585, %572 : vector<2x16xf32>
    %593 = arith.mulf %584, %590 : vector<2x16xf32>
    %594 = arith.addf %592, %593 : vector<2x16xf32>
    %595 = math.tanh %594 : vector<2x16xf32>
    %596 = arith.mulf %591, %595 : vector<2x16xf32>
    %597 = vector.extract_strided_slice %110 {offsets = [22, 0, 0], sizes = [1, 2, 128], strides = [1, 1, 1]} : vector<24x2x128xf32> to vector<1x2x128xf32>
    %598 = vector.shape_cast %597 : vector<1x2x128xf32> to vector<2x128xf32>
    %cst_165 = arith.constant dense<0.000000e+00> : vector<2x128xf32>
    %599 = tpu.matmul %596, %107, %cst_165 {dimension_numbers = #tpu.dot_dimension_numbers<[1], [0], [0], [1], [0, 0, 1, 1], [], []>} : vector<2x16xf32>, vector<16x128xf32>, vector<2x128xf32> -> vector<2x128xf32>
    %600 = arith.addf %598, %599 : vector<2x128xf32>
    %601 = arith.negf %600 : vector<2x128xf32>
    %602 = math.exp %601 : vector<2x128xf32>
    %cst_166 = arith.constant 1.000000e+00 : f32
    %603 = vector.broadcast %cst_166 : f32 to vector<2x128xf32>
    %604 = arith.addf %603, %602 : vector<2x128xf32>
    %605 = arith.divf %603, %604 : vector<2x128xf32>
    %606 = vector.extract_strided_slice %605 {offsets = [0, 0], sizes = [2, 16], strides = [1, 1]} : vector<2x128xf32> to vector<2x16xf32>
    %607 = vector.extract_strided_slice %605 {offsets = [0, 16], sizes = [2, 16], strides = [1, 1]} : vector<2x128xf32> to vector<2x16xf32>
    %608 = vector.extract_strided_slice %605 {offsets = [0, 32], sizes = [2, 16], strides = [1, 1]} : vector<2x128xf32> to vector<2x16xf32>
    %cst_167 = arith.constant 2.000000e+00 : f32
    %609 = vector.broadcast %cst_167 : f32 to vector<2x16xf32>
    %610 = arith.mulf %609, %608 : vector<2x16xf32>
    %cst_168 = arith.constant 1.000000e+00 : f32
    %611 = vector.broadcast %cst_168 : f32 to vector<2x16xf32>
    %612 = arith.subf %610, %611 : vector<2x16xf32>
    %613 = vector.extract_strided_slice %605 {offsets = [0, 48], sizes = [2, 16], strides = [1, 1]} : vector<2x128xf32> to vector<2x16xf32>
    %614 = arith.mulf %607, %594 : vector<2x16xf32>
    %615 = arith.mulf %606, %612 : vector<2x16xf32>
    %616 = arith.addf %614, %615 : vector<2x16xf32>
    %617 = math.tanh %616 : vector<2x16xf32>
    %618 = arith.mulf %613, %617 : vector<2x16xf32>
    %619 = vector.extract_strided_slice %110 {offsets = [23, 0, 0], sizes = [1, 2, 128], strides = [1, 1, 1]} : vector<24x2x128xf32> to vector<1x2x128xf32>
    %620 = vector.shape_cast %619 : vector<1x2x128xf32> to vector<2x128xf32>
    %cst_169 = arith.constant dense<0.000000e+00> : vector<2x128xf32>
    %621 = tpu.matmul %618, %107, %cst_169 {dimension_numbers = #tpu.dot_dimension_numbers<[1], [0], [0], [1], [0, 0, 1, 1], [], []>} : vector<2x16xf32>, vector<16x128xf32>, vector<2x128xf32> -> vector<2x128xf32>
    %622 = arith.addf %620, %621 : vector<2x128xf32>
    %623 = arith.negf %622 : vector<2x128xf32>
    %624 = math.exp %623 : vector<2x128xf32>
    %cst_170 = arith.constant 1.000000e+00 : f32
    %625 = vector.broadcast %cst_170 : f32 to vector<2x128xf32>
    %626 = arith.addf %625, %624 : vector<2x128xf32>
    %627 = arith.divf %625, %626 : vector<2x128xf32>
    %628 = vector.extract_strided_slice %627 {offsets = [0, 0], sizes = [2, 16], strides = [1, 1]} : vector<2x128xf32> to vector<2x16xf32>
    %629 = vector.extract_strided_slice %627 {offsets = [0, 16], sizes = [2, 16], strides = [1, 1]} : vector<2x128xf32> to vector<2x16xf32>
    %630 = vector.extract_strided_slice %627 {offsets = [0, 32], sizes = [2, 16], strides = [1, 1]} : vector<2x128xf32> to vector<2x16xf32>
    %cst_171 = arith.constant 2.000000e+00 : f32
    %631 = vector.broadcast %cst_171 : f32 to vector<2x16xf32>
    %632 = arith.mulf %631, %630 : vector<2x16xf32>
    %cst_172 = arith.constant 1.000000e+00 : f32
    %633 = vector.broadcast %cst_172 : f32 to vector<2x16xf32>
    %634 = arith.subf %632, %633 : vector<2x16xf32>
    %635 = vector.extract_strided_slice %627 {offsets = [0, 48], sizes = [2, 16], strides = [1, 1]} : vector<2x128xf32> to vector<2x16xf32>
    %636 = arith.mulf %629, %616 : vector<2x16xf32>
    %637 = arith.mulf %628, %634 : vector<2x16xf32>
    %638 = arith.addf %636, %637 : vector<2x16xf32>
    %639 = math.tanh %638 : vector<2x16xf32>
    %640 = arith.mulf %635, %639 : vector<2x16xf32>
    %c0_173 = arith.constant 0 : index
    %c0_174 = arith.constant 0 : index
    %641 = vector.load %arg13[%c0_173, %c0_174] : memref<16x128xf32, #tpu.memory_space<vmem>>, vector<16x128xf32>
    %cst_175 = arith.constant dense<0.000000e+00> : vector<2x128xf32>
    %642 = tpu.matmul %640, %641, %cst_175 {dimension_numbers = #tpu.dot_dimension_numbers<[1], [0], [0], [1], [0, 0, 1, 1], [], []>} : vector<2x16xf32>, vector<16x128xf32>, vector<2x128xf32> -> vector<2x128xf32>
    %c0_176 = arith.constant 0 : index
    %c0_177 = arith.constant 0 : index
    %643 = vector.load %arg14[%c0_176, %c0_177] : memref<1x128xf32, #tpu.memory_space<vmem>>, vector<1x128xf32>
    %644 = vector.broadcast %643 : vector<1x128xf32> to vector<2x128xf32>
    %645 = arith.addf %642, %644 : vector<2x128xf32>
    %c0_178 = arith.constant 0 : index
    %c0_179 = arith.constant 0 : index
    %646 = vector.load %arg15[%c0_178, %c0_179] : memref<2x128xf32, #tpu.memory_space<vmem>>, vector<2x128xf32>
    tpu.vector_store %arg15[%c0_178, %c0_179], %645 {strides = array<i32>} : memref<2x128xf32, #tpu.memory_space<vmem>>, vector<2x128xf32>,
    return
  }
}

</mosaic_0001>

<llo_original>
// kernel: cnn_forward.1
$region0: #{cnn_forward.1}
  #allocation0 [shape = 'u32[]', space=smem, size = 0x4, offset = 0x4, fixed_abs, tag = 'smem constant byte address 0x4 - core index']
  #allocation1 [shape = 'u32[144,128]{1,0:T(1,128)}', space=vmem, size = 0x12000, scoped, tag = 'internal scratch']
  %s0 = inlined_call_operand.vmem [shape: bf16[2,16,32], index: 0, kind: input, shape index: {}]
  %s1 = inlined_call_operand.vmem [shape: bf16[3,32,128], index: 1, kind: input, shape index: {}]
  %s2 = inlined_call_operand.hbm [shape: f32[1,128], index: 2, kind: input, shape index: {}]
  %s3 = inlined_call_operand.vmem [shape: f32[8,14], index: 3, kind: input, shape index: {}]
  %s4 = inlined_call_operand.vmem [shape: bf16[4,32,128], index: 4, kind: input, shape index: {}]
  %s5 = inlined_call_operand.hbm [shape: f32[1,128], index: 5, kind: input, shape index: {}]
  %s6 = inlined_call_operand.vmem [shape: f32[8,13], index: 6, kind: input, shape index: {}]
  %s7 = inlined_call_operand.vmem [shape: bf16[5,32,128], index: 7, kind: input, shape index: {}]
  %s8 = inlined_call_operand.hbm [shape: f32[1,128], index: 8, kind: input, shape index: {}]
  %s9 = inlined_call_operand.vmem [shape: f32[8,12], index: 9, kind: input, shape index: {}]
  %s10 = inlined_call_operand.vmem [shape: bf16[128,128], index: 10, kind: input, shape index: {}]
  %s11 = inlined_call_operand.vmem [shape: f32[16,128], index: 11, kind: input, shape index: {}]
  %s12 = inlined_call_operand.hbm [shape: f32[1,128], index: 12, kind: input, shape index: {}]
  %s13 = inlined_call_operand.vmem [shape: f32[16,128], index: 13, kind: input, shape index: {}]
  %s14 = inlined_call_operand.hbm [shape: f32[1,128], index: 14, kind: input, shape index: {}]
  %s15 = inlined_call_operand.vmem [shape: f32[2,128], index: 15, kind: output, shape index: {}]
  %s16 = sld [smem:[#allocation0]]
  $region90: #{cnn_forward.1} parent=0
    _
  %s18 = ssub.s32 1, %s16
  %s19 = scalar_select 0, %s18, %s16
  $region1: #{cnn_forward.1} parent=0
    #allocation2 [shape = 'u8[512]{0}', space=vmem, size = 0x400, scoped, tag = 'input window, operand 2, single buffered']
    #allocation3 [shape = 's32[1]{0}', space=sflag, size = 0x4, scoped, tag = 'scoped memory for cnn_forward.1']
    #allocation4 [shape = 'u8[512]{0}', space=vmem, size = 0x400, scoped, tag = 'input window, operand 5, single buffered']
    #allocation5 [shape = 's32[1]{0}', space=sflag, size = 0x4, scoped, tag = 'scoped memory for cnn_forward.1']
    #allocation6 [shape = 'u8[512]{0}', space=vmem, size = 0x400, scoped, tag = 'input window, operand 8, single buffered']
    #allocation7 [shape = 'u8[512]{0}', space=vmem, size = 0x400, scoped, tag = 'input window, operand 12, single buffered']
    #allocation8 [shape = 's32[1]{0}', space=sflag, size = 0x4, scoped, tag = 'scoped memory for cnn_forward.1']
    #allocation9 [shape = 'u8[512]{0}', space=vmem, size = 0x400, scoped, tag = 'input window, operand 14, single buffered']
    %20 = vsyncpa [#allocation3], 0
    %21 = vsyncpa [#allocation5], 0
    %22 = vsyncpa [#allocation8], 0
    // Predicated region
    $region2: #{cnn_forward.1} parent=1 // pred_check
      _
    $region3: #{cnn_forward.1} parent=1 // pred_check_branch
      %24 = sbr.rel (0) target = $region5
    $region4: #{cnn_forward.1} parent=1 // pred_region
      _
    $region5: #{cnn_forward.1} parent=1 // pred_fallthru
      _
    // Predicated region
    $region6: #{cnn_forward.1} parent=1 // pred_check
      _
    $region7: #{cnn_forward.1} parent=1 // pred_check_branch
      %26 = sbr.rel (0) target = $region9
    $region8: #{cnn_forward.1} parent=1 // pred_region
      _
    $region9: #{cnn_forward.1} parent=1 // pred_fallthru
      _
    // Predicated region
    $region10: #{cnn_forward.1} parent=1 // pred_check
      _
    $region11: #{cnn_forward.1} parent=1 // pred_check_branch
      %28 = sbr.rel (0) target = $region13
    $region12: #{cnn_forward.1} parent=1 // pred_region
      %s30 = ssub.s32 16, 16
      %31 = vsyncadd [#allocation3], %s30
      %s33 = sshll.u32 [#allocation2], 4
      %s34 = int_to_ptr.vmem [resolvable:$true] %s33
      %36 = dma.hbm_to_vmem [thread:$0]  %s2, 16, %s34, [#allocation3]
    $region13: #{cnn_forward.1} parent=1 // pred_fallthru
      _
    // Predicated region
    $region14: #{cnn_forward.1} parent=1 // pred_check
      _
    $region15: #{cnn_forward.1} parent=1 // pred_check_branch
      %38 = sbr.rel (0) target = $region17
    $region16: #{cnn_forward.1} parent=1 // pred_region
      _
    $region17: #{cnn_forward.1} parent=1 // pred_fallthru
      _
    // Predicated region
    $region18: #{cnn_forward.1} parent=1 // pred_check
      _
    $region19: #{cnn_forward.1} parent=1 // pred_check_branch
      %40 = sbr.rel (0) target = $region21
    $region20: #{cnn_forward.1} parent=1 // pred_region
      _
    $region21: #{cnn_forward.1} parent=1 // pred_fallthru
      _
    // Predicated region
    $region22: #{cnn_forward.1} parent=1 // pred_check
      _
    $region23: #{cnn_forward.1} parent=1 // pred_check_branch
      %42 = sbr.rel (0) target = $region25
    $region24: #{cnn_forward.1} parent=1 // pred_region
      %s44 = ssub.s32 16, 16
      %45 = vsyncadd [#allocation5], %s44
      %s47 = sshll.u32 [#allocation4], 4
      %s48 = int_to_ptr.vmem [resolvable:$true] %s47
      %50 = dma.hbm_to_vmem [thread:$0]  %s5, 16, %s48, [#allocation5]
    $region25: #{cnn_forward.1} parent=1 // pred_fallthru
      _
    // Predicated region
    $region26: #{cnn_forward.1} parent=1 // pred_check
      _
    $region27: #{cnn_forward.1} parent=1 // pred_check_branch
      %52 = sbr.rel (0) target = $region29
    $region28: #{cnn_forward.1} parent=1 // pred_region
      _
    $region29: #{cnn_forward.1} parent=1 // pred_fallthru
      _
    // Predicated region
    $region30: #{cnn_forward.1} parent=1 // pred_check
      _
    $region31: #{cnn_forward.1} parent=1 // pred_check_branch
      %54 = sbr.rel (0) target = $region33
    $region32: #{cnn_forward.1} parent=1 // pred_region
      _
    $region33: #{cnn_forward.1} parent=1 // pred_fallthru
      _
    // Predicated region
    $region34: #{cnn_forward.1} parent=1 // pred_check
      _
    $region35: #{cnn_forward.1} parent=1 // pred_check_branch
      %56 = sbr.rel (0) target = $region37
    $region36: #{cnn_forward.1} parent=1 // pred_region
      %s58 = ssub.s32 16, 16
      %59 = vsyncadd [#allocation5], %s58
      %s61 = sshll.u32 [#allocation6], 4
      %s62 = int_to_ptr.vmem [resolvable:$true] %s61
      %64 = dma.hbm_to_vmem [thread:$0]  %s8, 16, %s62, [#allocation5]
    $region37: #{cnn_forward.1} parent=1 // pred_fallthru
      _
    // Predicated region
    $region38: #{cnn_forward.1} parent=1 // pred_check
      _
    $region39: #{cnn_forward.1} parent=1 // pred_check_branch
      %66 = sbr.rel (0) target = $region41
    $region40: #{cnn_forward.1} parent=1 // pred_region
      _
    $region41: #{cnn_forward.1} parent=1 // pred_fallthru
      _
    // Predicated region
    $region42: #{cnn_forward.1} parent=1 // pred_check
      _
    $region43: #{cnn_forward.1} parent=1 // pred_check_branch
      %68 = sbr.rel (0) target = $region45
    $region44: #{cnn_forward.1} parent=1 // pred_region
      _
    $region45: #{cnn_forward.1} parent=1 // pred_fallthru
      _
    // Predicated region
    $region46: #{cnn_forward.1} parent=1 // pred_check
      _
    $region47: #{cnn_forward.1} parent=1 // pred_check_branch
      %70 = sbr.rel (0) target = $region49
    $region48: #{cnn_forward.1} parent=1 // pred_region
      _
    $region49: #{cnn_forward.1} parent=1 // pred_fallthru
      _
    // Predicated region
    $region50: #{cnn_forward.1} parent=1 // pred_check
      _
    $region51: #{cnn_forward.1} parent=1 // pred_check_branch
      %72 = sbr.rel (0) target = $region53
    $region52: #{cnn_forward.1} parent=1 // pred_region
      %s74 = ssub.s32 16, 16
      %75 = vsyncadd [#allocation8], %s74
      %s77 = sshll.u32 [#allocation7], 4
      %s78 = int_to_ptr.vmem [resolvable:$true] %s77
      %80 = dma.hbm_to_vmem [thread:$0]  %s12, 16, %s78, [#allocation8]
    $region53: #{cnn_forward.1} parent=1 // pred_fallthru
      _
    // Predicated region
    $region54: #{cnn_forward.1} parent=1 // pred_check
      _
    $region55: #{cnn_forward.1} parent=1 // pred_check_branch
      %82 = sbr.rel (0) target = $region57
    $region56: #{cnn_forward.1} parent=1 // pred_region
      _
    $region57: #{cnn_forward.1} parent=1 // pred_fallthru
      _
    // Predicated region
    $region58: #{cnn_forward.1} parent=1 // pred_check
      _
    $region59: #{cnn_forward.1} parent=1 // pred_check_branch
      %84 = sbr.rel (0) target = $region61
    $region60: #{cnn_forward.1} parent=1 // pred_region
      %s86 = ssub.s32 16, 16
      %87 = vsyncadd [#allocation8], %s86
      %s89 = sshll.u32 [#allocation9], 4
      %s90 = int_to_ptr.vmem [resolvable:$true] %s89
      %92 = dma.hbm_to_vmem [thread:$0]  %s14, 16, %s90, [#allocation8]
    $region61: #{cnn_forward.1} parent=1 // pred_fallthru
      _
    // Predicated region
    $region62: #{cnn_forward.1} parent=1 // pred_check
      _
    $region63: #{cnn_forward.1} parent=1 // pred_check_branch
      %94 = sbr.rel (0) target = $region65
    $region64: #{cnn_forward.1} parent=1 // pred_region
      %95 = dma.done [#allocation3], 16
    $region65: #{cnn_forward.1} parent=1 // pred_fallthru
      _
    // Predicated region
    $region66: #{cnn_forward.1} parent=1 // pred_check
      _
    $region67: #{cnn_forward.1} parent=1 // pred_check_branch
      %97 = sbr.rel (0) target = $region69
    $region68: #{cnn_forward.1} parent=1 // pred_region
      %98 = dma.done [#allocation5], 16
    $region69: #{cnn_forward.1} parent=1 // pred_fallthru
      _
    // Predicated region
    $region70: #{cnn_forward.1} parent=1 // pred_check
      _
    $region71: #{cnn_forward.1} parent=1 // pred_check_branch
      %100 = sbr.rel (0) target = $region73
    $region72: #{cnn_forward.1} parent=1 // pred_region
      %101 = dma.done [#allocation5], 16
    $region73: #{cnn_forward.1} parent=1 // pred_fallthru
      _
    // Predicated region
    $region74: #{cnn_forward.1} parent=1 // pred_check
      _
    $region75: #{cnn_forward.1} parent=1 // pred_check_branch
      %103 = sbr.rel (0) target = $region77
    $region76: #{cnn_forward.1} parent=1 // pred_region
      %104 = dma.done [#allocation8], 16
    $region77: #{cnn_forward.1} parent=1 // pred_fallthru
      _
    // Predicated region
    $region78: #{cnn_forward.1} parent=1 // pred_check
      _
    $region79: #{cnn_forward.1} parent=1 // pred_check_branch
      %106 = sbr.rel (0) target = $region81
    $region80: #{cnn_forward.1} parent=1 // pred_region
      %107 = dma.done [#allocation8], 16
    $region81: #{cnn_forward.1} parent=1 // pred_fallthru
      _
    %v109 = vld [vmem:[%s0] sm:$0xf]
    %v110 = vld [vmem:[%s0 + $0x4] sm:$0xf]
    %v111 = vld [vmem:[%s0 + $0x8] sm:$0xf]
    %v112 = vld [vmem:[%s0 + $0xc] sm:$0xf]
    %v113 = vld [vmem:[%s1] sm:$0xf]
    %v114 = vld [vmem:[%s1 + $0x4] sm:$0xf]
    %v115 = vld [vmem:[%s1 + $0x8] sm:$0xf]
    %v116 = vld [vmem:[%s1 + $0xc] sm:$0xf]
    %s117 = scalar_lea.vmem %s1, 16
    %v118 = vld [vmem:[%s117] sm:$0xf]
    %v119 = vld [vmem:[%s117 + $0x4] sm:$0xf]
    %v120 = vld [vmem:[%s117 + $0x8] sm:$0xf]
    %v121 = vld [vmem:[%s117 + $0xc] sm:$0xf]
    %v127 = vunpack.c.l.s4 1966171168
    %v128 = vunpack.c.0.s8 %v127
    %v129 = vlaneseq
    %v130 = vshrl.u32 %v129, 7
    %v131 = vsub.s32 %v128, %v130
    %v132 = vrot.slane %v109, %v131
    %v133 = vcombine.high %v132, %v132
    %v135 = vunpack.c.l.s4 1966171168
    %v136 = vunpack.c.0.s8 %v135
    %v137 = vlaneseq
    %v138 = vshrl.u32 %v137, 7
    %v139 = vsub.s32 %v136, %v138
    %v140 = vrot.slane %v132, %v139
    %v142 = vunpack.c.l.s4 1966171168
    %v143 = vunpack.c.0.s8 %v142
    %v144 = vlaneseq
    %v145 = vshrl.u32 %v144, 7
    %v146 = vsub.s32 %v143, %v145
    %v147 = vrot.slane %v133, %v146
    %v148 = vcombine.high %v140, %v140
    %v149 = vcombine.high %v147, %v147
    %v151 = vunpack.c.l.s4 1966171168
    %v152 = vunpack.c.0.s8 %v151
    %v153 = vlaneseq
    %v154 = vshrl.u32 %v153, 7
    %v155 = vsub.s32 %v152, %v154
    %v156 = vrot.slane %v110, %v155
    %v157 = vcombine.high %v156, %v156
    %v159 = vunpack.c.l.s4 1966171168
    %v160 = vunpack.c.0.s8 %v159
    %v161 = vlaneseq
    %v162 = vshrl.u32 %v161, 7
    %v163 = vsub.s32 %v160, %v162
    %v164 = vrot.slane %v156, %v163
    %v166 = vunpack.c.l.s4 1966171168
    %v167 = vunpack.c.0.s8 %v166
    %v168 = vlaneseq
    %v169 = vshrl.u32 %v168, 7
    %v170 = vsub.s32 %v167, %v169
    %v171 = vrot.slane %v157, %v170
    %v172 = vcombine.high %v164, %v164
    %v173 = vcombine.high %v171, %v171
    %v175 = vunpack.c.l.s4 1966171168
    %v176 = vunpack.c.0.s8 %v175
    %v177 = vlaneseq
    %v178 = vshrl.u32 %v177, 7
    %v179 = vsub.s32 %v176, %v178
    %v180 = vrot.slane %v111, %v179
    %v181 = vcombine.high %v180, %v180
    %v183 = vunpack.c.l.s4 1966171168
    %v184 = vunpack.c.0.s8 %v183
    %v185 = vlaneseq
    %v186 = vshrl.u32 %v185, 7
    %v187 = vsub.s32 %v184, %v186
    %v188 = vrot.slane %v180, %v187
    %v190 = vunpack.c.l.s4 1966171168
    %v191 = vunpack.c.0.s8 %v190
    %v192 = vlaneseq
    %v193 = vshrl.u32 %v192, 7
    %v194 = vsub.s32 %v191, %v193
    %v195 = vrot.slane %v181, %v194
    %v196 = vcombine.high %v188, %v188
    %v197 = vcombine.high %v195, %v195
    %v199 = vunpack.c.l.s4 1966171168
    %v200 = vunpack.c.0.s8 %v199
    %v201 = vlaneseq
    %v202 = vshrl.u32 %v201, 7
    %v203 = vsub.s32 %v200, %v202
    %v204 = vrot.slane %v112, %v203
    %v205 = vcombine.high %v204, %v204
    %v207 = vunpack.c.l.s4 1966171168
    %v208 = vunpack.c.0.s8 %v207
    %v209 = vlaneseq
    %v210 = vshrl.u32 %v209, 7
    %v211 = vsub.s32 %v208, %v210
    %v212 = vrot.slane %v204, %v211
    %v214 = vunpack.c.l.s4 1966171168
    %v215 = vunpack.c.0.s8 %v214
    %v216 = vlaneseq
    %v217 = vshrl.u32 %v216, 7
    %v218 = vsub.s32 %v215, %v217
    %v219 = vrot.slane %v205, %v218
    %v220 = vcombine.high %v212, %v212
    %v221 = vcombine.high %v219, %v219
    %vm222 = vsmask.f32 256
    %vm223 = vsmask.f32 1284
    %vm224 = vmor %vm222, %vm223
    %vm225 = vsmask.f32 2312
    %vm226 = vmor %vm224, %vm225
    %vm227 = vsmask.f32 3340
    %vm228 = vmor %vm226, %vm227
    %vm229 = vsmask.f32 4368
    %vm230 = vmor %vm228, %vm229
    %vm231 = vsmask.f32 5396
    %vm232 = vmor %vm230, %vm231
    %vm233 = vsmask.f32 6424
    %vm234 = vmor %vm232, %vm233
    %vm235 = vsmask.f32 7452
    %vm236 = vmor %vm234, %vm235
    %v238 = vshrl.u32 %v140, 16
    %v240 = vrot.slane %v238, 7
    %v241 = vrot.slane %v240, 1
    %v243 = vshll.u32 %v147, 16
    %v245 = vsel %vm236, %v241, %v243
    %v246 = vshrl.u32 %v147, 16
    %v248 = vrot.slane %v246, 7
    %v249 = vrot.slane %v248, 1
    %v251 = vshll.u32 %v148, 16
    %v253 = vsel %vm236, %v249, %v251
    %v254 = vshrl.u32 %v148, 16
    %v256 = vrot.slane %v254, 7
    %v257 = vrot.slane %v256, 1
    %v259 = vshll.u32 %v149, 16
    %v261 = vsel %vm236, %v257, %v259
    %v262 = vshrl.u32 %v149, 16
    %v264 = vrot.slane %v262, 7
    %v265 = vrot.slane %v264, 1
    %v267 = vshll.u32 %v164, 16
    %v269 = vsel %vm236, %v265, %v267
    %v270 = vshrl.u32 %v164, 16
    %v272 = vrot.slane %v270, 7
    %v273 = vrot.slane %v272, 1
    %v275 = vshll.u32 %v171, 16
    %v277 = vsel %vm236, %v273, %v275
    %v278 = vshrl.u32 %v171, 16
    %v280 = vrot.slane %v278, 7
    %v281 = vrot.slane %v280, 1
    %v283 = vshll.u32 %v172, 16
    %v285 = vsel %vm236, %v281, %v283
    %v286 = vshrl.u32 %v172, 16
    %v288 = vrot.slane %v286, 7
    %v289 = vrot.slane %v288, 1
    %v291 = vshll.u32 %v173, 16
    %v293 = vsel %vm236, %v289, %v291
    %v295 = vshrl.u32 %v188, 16
    %v297 = vrot.slane %v295, 7
    %v298 = vrot.slane %v297, 1
    %v300 = vshll.u32 %v195, 16
    %v302 = vsel %vm236, %v298, %v300
    %v303 = vshrl.u32 %v195, 16
    %v305 = vrot.slane %v303, 7
    %v306 = vrot.slane %v305, 1
    %v308 = vshll.u32 %v196, 16
    %v310 = vsel %vm236, %v306, %v308
    %v311 = vshrl.u32 %v196, 16
    %v313 = vrot.slane %v311, 7
    %v314 = vrot.slane %v313, 1
    %v316 = vshll.u32 %v197, 16
    %v318 = vsel %vm236, %v314, %v316
    %v319 = vshrl.u32 %v197, 16
    %v321 = vrot.slane %v319, 7
    %v322 = vrot.slane %v321, 1
    %v324 = vshll.u32 %v212, 16
    %v326 = vsel %vm236, %v322, %v324
    %v327 = vshrl.u32 %v212, 16
    %v329 = vrot.slane %v327, 7
    %v330 = vrot.slane %v329, 1
    %v332 = vshll.u32 %v219, 16
    %v334 = vsel %vm236, %v330, %v332
    %v335 = vshrl.u32 %v219, 16
    %v337 = vrot.slane %v335, 7
    %v338 = vrot.slane %v337, 1
    %v340 = vshll.u32 %v220, 16
    %v342 = vsel %vm236, %v338, %v340
    %v343 = vshrl.u32 %v220, 16
    %v345 = vrot.slane %v343, 7
    %v346 = vrot.slane %v345, 1
    %v348 = vshll.u32 %v221, 16
    %v350 = vsel %vm236, %v346, %v348
    %v351 = vcombine.low %v245, %v253
    %v352 = vcombine.low %v261, %v269
    %v353 = vcombine.low %v277, %v285
    %v354 = vcombine.low %v293, %v302
    %v356 = vunpack.c.l.s4 1966171168
    %v357 = vunpack.c.0.s8 %v356
    %v358 = vlaneseq
    %v359 = vshrl.u32 %v358, 7
    %v360 = vsub.s32 %v357, %v359
    %v361 = vrot.slane %v351, %v360
    %v363 = vunpack.c.l.s4 1966171168
    %v364 = vunpack.c.0.s8 %v363
    %v365 = vlaneseq
    %v366 = vshrl.u32 %v365, 7
    %v367 = vsub.s32 %v364, %v366
    %v368 = vrot.slane %v352, %v367
    %v370 = vunpack.c.l.s4 1966171168
    %v371 = vunpack.c.0.s8 %v370
    %v372 = vlaneseq
    %v373 = vshrl.u32 %v372, 7
    %v374 = vsub.s32 %v371, %v373
    %v375 = vrot.slane %v353, %v374
    %v377 = vunpack.c.l.s4 1966171168
    %v378 = vunpack.c.0.s8 %v377
    %v379 = vlaneseq
    %v380 = vshrl.u32 %v379, 7
    %v381 = vsub.s32 %v378, %v380
    %v382 = vrot.slane %v354, %v381
    %v383 = vcombine.low %v361, %v368
    %v384 = vcombine.low %v375, %v382
    %v386 = vunpack.c.l.s4 1966171168
    %v387 = vunpack.c.0.s8 %v386
    %v388 = vlaneseq
    %v389 = vshrl.u32 %v388, 7
    %v390 = vsub.s32 %v387, %v389
    %v391 = vrot.slane %v383, %v390
    %v393 = vunpack.c.l.s4 1966171168
    %v394 = vunpack.c.0.s8 %v393
    %v395 = vlaneseq
    %v396 = vshrl.u32 %v395, 7
    %v397 = vsub.s32 %v394, %v396
    %v398 = vrot.slane %v384, %v397
    %v399 = vcombine.low %v391, %v398
    %v400 = vcombine.low %v310, %v318
    %v401 = vcombine.low %v326, %v334
    %v402 = vcombine.low %v342, %v350
    %v404 = vunpack.c.l.s4 1966171168
    %v405 = vunpack.c.0.s8 %v404
    %v406 = vlaneseq
    %v407 = vshrl.u32 %v406, 7
    %v408 = vsub.s32 %v405, %v407
    %v409 = vrot.slane %v400, %v408
    %v411 = vunpack.c.l.s4 1966171168
    %v412 = vunpack.c.0.s8 %v411
    %v413 = vlaneseq
    %v414 = vshrl.u32 %v413, 7
    %v415 = vsub.s32 %v412, %v414
    %v416 = vrot.slane %v401, %v415
    %v418 = vunpack.c.l.s4 1966171168
    %v419 = vunpack.c.0.s8 %v418
    %v420 = vlaneseq
    %v421 = vshrl.u32 %v420, 7
    %v422 = vsub.s32 %v419, %v421
    %v423 = vrot.slane %v402, %v422
    %v424 = vcombine.low %v409, %v416
    %v426 = vunpack.c.l.s4 1966171168
    %v427 = vunpack.c.0.s8 %v426
    %v428 = vlaneseq
    %v429 = vshrl.u32 %v428, 7
    %v430 = vsub.s32 %v427, %v429
    %v431 = vrot.slane %v424, %v430
    %v433 = vunpack.c.l.s4 1966171168
    %v434 = vunpack.c.0.s8 %v433
    %v435 = vlaneseq
    %v436 = vshrl.u32 %v435, 7
    %v437 = vsub.s32 %v434, %v436
    %v438 = vrot.slane %v423, %v437
    %v439 = vcombine.low %v431, %v438
    %v444 = vunpack.c.l.b16 %v118
    %v445 = vunpack.c.l.b16 %v119
    %v446 = vunpack.c.l.b16 %v120
    %v447 = vunpack.c.l.b16 %v121
    %v448 = vpack.c.b16 %v445, %v444
    %v449 = vpack.c.b16 %v447, %v446
    %vm452 = vcmask 261120
    %v454 = vsel %vm452, %v399, 0
    %v457 = vsel %vm452, %v439, 0
    %459 = vmatprep.subr.bf16.mxu0 0
    %460 = vmatpush1.bf16.msra.mxu0 %v448
    %461 = vmatprep.subr.bf16.mxu0 0
    %462 = vmatpush1.bf16.msra.mxu0 %v449
    %463 = vmatprep.subr.bf16.mxu0 0
    %464 = vmatpush1.bf16.msra.mxu0 0
    %465 = vmatprep.subr.bf16.mxu0 0
    %466 = vmatpush1.bf16.msra.mxu0 0
    %467 = vmatprep.subr.bf16.mxu0 0
    %468 = vmatpush1.bf16.msra.mxu0 0
    %469 = vmatprep.subr.bf16.mxu0 0
    %470 = vmatpush1.bf16.msra.mxu0 0
    %471 = vmatprep.subr.bf16.mxu0 0
    %472 = vmatpush1.bf16.msra.mxu0 0
    %473 = vmatprep.subr.bf16.mxu0 0
    %474 = vmatpush1.bf16.msra.mxu0 0
    %475 = vmatprep.subr.bf16.mxu0 0
    %476 = vmatpush1.bf16.msra.mxu0 0
    %477 = vmatprep.subr.bf16.mxu0 0
    %478 = vmatpush1.bf16.msra.mxu0 0
    %479 = vmatprep.subr.bf16.mxu0 0
    %480 = vmatpush1.bf16.msra.mxu0 0
    %481 = vmatprep.subr.bf16.mxu0 0
    %482 = vmatpush1.bf16.msra.mxu0 0
    %483 = vmatprep.subr.bf16.mxu0 0
    %484 = vmatpush1.bf16.msra.mxu0 0
    %485 = vmatprep.subr.bf16.mxu0 0
    %486 = vmatpush1.bf16.msra.mxu0 0
    %487 = vmatprep.subr.bf16.mxu0 0
    %488 = vmatpush1.bf16.msra.mxu0 0
    %489 = vmatprep.subr.bf16.mxu0 0
    %490 = vmatpush1.bf16.msra.mxu0 0
    %491 = vmatprep.mubr.bf16.mxu0 0
    %492 = vmatmul.mubr.bf16.gmra.mrb[0].mxu0 %v454
    %v493 = vpop.f32.mrb[0].mxu0
    %v494 = vadd.f32 0.0, %v493
    %v495 = vpop.f32.mrb[0].mxu0
    %v496 = vpop.f32.mrb[0].mxu0
    %v497 = vadd.f32 0.0, %v496
    %v498 = vpop.f32.mrb[0].mxu0
    %499 = vmatprep.mubr.bf16.mxu0 0
    %500 = vmatmul.mubr.bf16.gmra.mrb[0].mxu0 %v457
    %v501 = vpop.f32.mrb[0].mxu0
    %v502 = vadd.f32 0.0, %v501
    %v503 = vpop.f32.mrb[0].mxu0
    %v504 = vpop.f32.mrb[0].mxu0
    %v505 = vadd.f32 0.0, %v504
    %v506 = vpop.f32.mrb[0].mxu0
    %507 = vdwg.mxu0
    %v508 = vcombine.low %v140, %v147
    %v509 = vcombine.low %v148, %v149
    %v510 = vcombine.low %v164, %v171
    %v511 = vcombine.low %v172, %v188
    %v513 = vunpack.c.l.s4 1966171168
    %v514 = vunpack.c.0.s8 %v513
    %v515 = vlaneseq
    %v516 = vshrl.u32 %v515, 7
    %v517 = vsub.s32 %v514, %v516
    %v518 = vrot.slane %v508, %v517
    %v520 = vunpack.c.l.s4 1966171168
    %v521 = vunpack.c.0.s8 %v520
    %v522 = vlaneseq
    %v523 = vshrl.u32 %v522, 7
    %v524 = vsub.s32 %v521, %v523
    %v525 = vrot.slane %v509, %v524
    %v527 = vunpack.c.l.s4 1966171168
    %v528 = vunpack.c.0.s8 %v527
    %v529 = vlaneseq
    %v530 = vshrl.u32 %v529, 7
    %v531 = vsub.s32 %v528, %v530
    %v532 = vrot.slane %v510, %v531
    %v534 = vunpack.c.l.s4 1966171168
    %v535 = vunpack.c.0.s8 %v534
    %v536 = vlaneseq
    %v537 = vshrl.u32 %v536, 7
    %v538 = vsub.s32 %v535, %v537
    %v539 = vrot.slane %v511, %v538
    %v540 = vcombine.low %v518, %v525
    %v541 = vcombine.low %v532, %v539
    %v543 = vunpack.c.l.s4 1966171168
    %v544 = vunpack.c.0.s8 %v543
    %v545 = vlaneseq
    %v546 = vshrl.u32 %v545, 7
    %v547 = vsub.s32 %v544, %v546
    %v548 = vrot.slane %v540, %v547
    %v550 = vunpack.c.l.s4 1966171168
    %v551 = vunpack.c.0.s8 %v550
    %v552 = vlaneseq
    %v553 = vshrl.u32 %v552, 7
    %v554 = vsub.s32 %v551, %v553
    %v555 = vrot.slane %v541, %v554
    %v556 = vcombine.low %v548, %v555
    %v557 = vcombine.low %v195, %v196
    %v558 = vcombine.low %v197, %v212
    %v559 = vcombine.low %v219, %v220
    %v561 = vunpack.c.l.s4 1966171168
    %v562 = vunpack.c.0.s8 %v561
    %v563 = vlaneseq
    %v564 = vshrl.u32 %v563, 7
    %v565 = vsub.s32 %v562, %v564
    %v566 = vrot.slane %v557, %v565
    %v568 = vunpack.c.l.s4 1966171168
    %v569 = vunpack.c.0.s8 %v568
    %v570 = vlaneseq
    %v571 = vshrl.u32 %v570, 7
    %v572 = vsub.s32 %v569, %v571
    %v573 = vrot.slane %v558, %v572
    %v575 = vunpack.c.l.s4 1966171168
    %v576 = vunpack.c.0.s8 %v575
    %v577 = vlaneseq
    %v578 = vshrl.u32 %v577, 7
    %v579 = vsub.s32 %v576, %v578
    %v580 = vrot.slane %v559, %v579
    %v581 = vcombine.low %v566, %v573
    %v583 = vunpack.c.l.s4 1966171168
    %v584 = vunpack.c.0.s8 %v583
    %v585 = vlaneseq
    %v586 = vshrl.u32 %v585, 7
    %v587 = vsub.s32 %v584, %v586
    %v588 = vrot.slane %v581, %v587
    %v590 = vunpack.c.l.s4 1966171168
    %v591 = vunpack.c.0.s8 %v590
    %v592 = vlaneseq
    %v593 = vshrl.u32 %v592, 7
    %v594 = vsub.s32 %v591, %v593
    %v595 = vrot.slane %v580, %v594
    %v596 = vcombine.low %v588, %v595
    %v601 = vunpack.c.l.b16 %v113
    %v602 = vunpack.c.l.b16 %v114
    %v603 = vunpack.c.l.b16 %v115
    %v604 = vunpack.c.l.b16 %v116
    %v605 = vpack.c.b16 %v602, %v601
    %v606 = vpack.c.b16 %v604, %v603
    %v610 = vsel %vm452, %v556, 0
    %v613 = vsel %vm452, %v596, 0
    %615 = vmatprep.subr.bf16.mxu0 0
    %616 = vmatpush1.bf16.msra.mxu0 %v605
    %617 = vmatprep.subr.bf16.mxu0 0
    %618 = vmatpush1.bf16.msra.mxu0 %v606
    %619 = vmatprep.subr.bf16.mxu0 0
    %620 = vmatpush1.bf16.msra.mxu0 0
    %621 = vmatprep.subr.bf16.mxu0 0
    %622 = vmatpush1.bf16.msra.mxu0 0
    %623 = vmatprep.subr.bf16.mxu0 0
    %624 = vmatpush1.bf16.msra.mxu0 0
    %625 = vmatprep.subr.bf16.mxu0 0
    %626 = vmatpush1.bf16.msra.mxu0 0
    %627 = vmatprep.subr.bf16.mxu0 0
    %628 = vmatpush1.bf16.msra.mxu0 0
    %629 = vmatprep.subr.bf16.mxu0 0
    %630 = vmatpush1.bf16.msra.mxu0 0
    %631 = vmatprep.subr.bf16.mxu0 0
    %632 = vmatpush1.bf16.msra.mxu0 0
    %633 = vmatprep.subr.bf16.mxu0 0
    %634 = vmatpush1.bf16.msra.mxu0 0
    %635 = vmatprep.subr.bf16.mxu0 0
    %636 = vmatpush1.bf16.msra.mxu0 0
    %637 = vmatprep.subr.bf16.mxu0 0
    %638 = vmatpush1.bf16.msra.mxu0 0
    %639 = vmatprep.subr.bf16.mxu0 0
    %640 = vmatpush1.bf16.msra.mxu0 0
    %641 = vmatprep.subr.bf16.mxu0 0
    %642 = vmatpush1.bf16.msra.mxu0 0
    %643 = vmatprep.subr.bf16.mxu0 0
    %644 = vmatpush1.bf16.msra.mxu0 0
    %645 = vmatprep.subr.bf16.mxu0 0
    %646 = vmatpush1.bf16.msra.mxu0 0
    %647 = vmatprep.mubr.bf16.mxu0 0
    %648 = vmatmul.mubr.bf16.gmra.mrb[0].mxu0 %v610
    %v649 = vpop.f32.mrb[0].mxu0
    %v650 = vadd.f32 %v494, %v649
    %v651 = vpop.f32.mrb[0].mxu0
    %v652 = vpop.f32.mrb[0].mxu0
    %v653 = vadd.f32 %v497, %v652
    %v654 = vpop.f32.mrb[0].mxu0
    %655 = vmatprep.mubr.bf16.mxu0 0
    %656 = vmatmul.mubr.bf16.gmra.mrb[0].mxu0 %v613
    %v657 = vpop.f32.mrb[0].mxu0
    %v658 = vadd.f32 %v502, %v657
    %v659 = vpop.f32.mrb[0].mxu0
    %v660 = vpop.f32.mrb[0].mxu0
    %v661 = vadd.f32 %v505, %v660
    %v662 = vpop.f32.mrb[0].mxu0
    %663 = vdwg.mxu0
    %v668 = vcombine.high %v650, %v650
    %v670 = vunpack.c.l.s4 1983009808
    %v671 = vunpack.c.0.s8 %v670
    %v672 = vlaneseq
    %v673 = vshrl.u32 %v672, 7
    %v674 = vsub.s32 %v671, %v673
    %v675 = vrot.slane %v650, %v674
    %v677 = vunpack.c.l.s4 1983009808
    %v678 = vunpack.c.0.s8 %v677
    %v679 = vlaneseq
    %v680 = vshrl.u32 %v679, 7
    %v681 = vsub.s32 %v678, %v680
    %v682 = vrot.slane %v668, %v681
    %v683 = vcombine.high %v675, %v675
    %v684 = vcombine.high %v682, %v682
    %v685 = vcombine.high %v653, %v653
    %v687 = vunpack.c.l.s4 1983009808
    %v688 = vunpack.c.0.s8 %v687
    %v689 = vlaneseq
    %v690 = vshrl.u32 %v689, 7
    %v691 = vsub.s32 %v688, %v690
    %v692 = vrot.slane %v653, %v691
    %v694 = vunpack.c.l.s4 1983009808
    %v695 = vunpack.c.0.s8 %v694
    %v696 = vlaneseq
    %v697 = vshrl.u32 %v696, 7
    %v698 = vsub.s32 %v695, %v697
    %v699 = vrot.slane %v685, %v698
    %v700 = vcombine.high %v692, %v692
    %v701 = vcombine.high %v699, %v699
    %v702 = vcombine.high %v658, %v658
    %v704 = vunpack.c.l.s4 1983009808
    %v705 = vunpack.c.0.s8 %v704
    %v706 = vlaneseq
    %v707 = vshrl.u32 %v706, 7
    %v708 = vsub.s32 %v705, %v707
    %v709 = vrot.slane %v658, %v708
    %v711 = vunpack.c.l.s4 1983009808
    %v712 = vunpack.c.0.s8 %v711
    %v713 = vlaneseq
    %v714 = vshrl.u32 %v713, 7
    %v715 = vsub.s32 %v712, %v714
    %v716 = vrot.slane %v702, %v715
    %v717 = vcombine.high %v709, %v709
    %v718 = vcombine.high %v716, %v716
    %v720 = vunpack.c.l.s4 1983009808
    %v721 = vunpack.c.0.s8 %v720
    %v722 = vlaneseq
    %v723 = vshrl.u32 %v722, 7
    %v724 = vsub.s32 %v721, %v723
    %v725 = vrot.slane %v661, %v724
    %v726 = vcombine.high %v725, %v725
    %s741 = scalar_lea.vmem %s1, 32
    %v742 = vld [vmem:[%s741] sm:$0xf]
    %v743 = vld [vmem:[%s741 + $0x4] sm:$0xf]
    %v744 = vld [vmem:[%s741 + $0x8] sm:$0xf]
    %v745 = vld [vmem:[%s741 + $0xc] sm:$0xf]
    %v746 = vcombine.low %v147, %v148
    %v747 = vcombine.low %v149, %v164
    %v748 = vcombine.low %v171, %v172
    %v749 = vcombine.low %v173, %v195
    %v751 = vunpack.c.l.s4 1966171168
    %v752 = vunpack.c.0.s8 %v751
    %v753 = vlaneseq
    %v754 = vshrl.u32 %v753, 7
    %v755 = vsub.s32 %v752, %v754
    %v756 = vrot.slane %v746, %v755
    %v758 = vunpack.c.l.s4 1966171168
    %v759 = vunpack.c.0.s8 %v758
    %v760 = vlaneseq
    %v761 = vshrl.u32 %v760, 7
    %v762 = vsub.s32 %v759, %v761
    %v763 = vrot.slane %v747, %v762
    %v765 = vunpack.c.l.s4 1966171168
    %v766 = vunpack.c.0.s8 %v765
    %v767 = vlaneseq
    %v768 = vshrl.u32 %v767, 7
    %v769 = vsub.s32 %v766, %v768
    %v770 = vrot.slane %v748, %v769
    %v772 = vunpack.c.l.s4 1966171168
    %v773 = vunpack.c.0.s8 %v772
    %v774 = vlaneseq
    %v775 = vshrl.u32 %v774, 7
    %v776 = vsub.s32 %v773, %v775
    %v777 = vrot.slane %v749, %v776
    %v778 = vcombine.low %v756, %v763
    %v779 = vcombine.low %v770, %v777
    %v781 = vunpack.c.l.s4 1966171168
    %v782 = vunpack.c.0.s8 %v781
    %v783 = vlaneseq
    %v784 = vshrl.u32 %v783, 7
    %v785 = vsub.s32 %v782, %v784
    %v786 = vrot.slane %v778, %v785
    %v788 = vunpack.c.l.s4 1966171168
    %v789 = vunpack.c.0.s8 %v788
    %v790 = vlaneseq
    %v791 = vshrl.u32 %v790, 7
    %v792 = vsub.s32 %v789, %v791
    %v793 = vrot.slane %v779, %v792
    %v794 = vcombine.low %v786, %v793
    %v795 = vcombine.low %v196, %v197
    %v796 = vcombine.low %v212, %v219
    %v797 = vcombine.low %v220, %v221
    %v799 = vunpack.c.l.s4 1966171168
    %v800 = vunpack.c.0.s8 %v799
    %v801 = vlaneseq
    %v802 = vshrl.u32 %v801, 7
    %v803 = vsub.s32 %v800, %v802
    %v804 = vrot.slane %v795, %v803
    %v806 = vunpack.c.l.s4 1966171168
    %v807 = vunpack.c.0.s8 %v806
    %v808 = vlaneseq
    %v809 = vshrl.u32 %v808, 7
    %v810 = vsub.s32 %v807, %v809
    %v811 = vrot.slane %v796, %v810
    %v813 = vunpack.c.l.s4 1966171168
    %v814 = vunpack.c.0.s8 %v813
    %v815 = vlaneseq
    %v816 = vshrl.u32 %v815, 7
    %v817 = vsub.s32 %v814, %v816
    %v818 = vrot.slane %v797, %v817
    %v819 = vcombine.low %v804, %v811
    %v821 = vunpack.c.l.s4 1966171168
    %v822 = vunpack.c.0.s8 %v821
    %v823 = vlaneseq
    %v824 = vshrl.u32 %v823, 7
    %v825 = vsub.s32 %v822, %v824
    %v826 = vrot.slane %v819, %v825
    %v828 = vunpack.c.l.s4 1966171168
    %v829 = vunpack.c.0.s8 %v828
    %v830 = vlaneseq
    %v831 = vshrl.u32 %v830, 7
    %v832 = vsub.s32 %v829, %v831
    %v833 = vrot.slane %v818, %v832
    %v834 = vcombine.low %v826, %v833
    %v839 = vunpack.c.l.b16 %v742
    %v840 = vunpack.c.l.b16 %v743
    %v841 = vunpack.c.l.b16 %v744
    %v842 = vunpack.c.l.b16 %v745
    %v843 = vpack.c.b16 %v840, %v839
    %v844 = vpack.c.b16 %v842, %v841
    %v848 = vsel %vm452, %v794, 0
    %v851 = vsel %vm452, %v834, 0
    %853 = vmatprep.subr.bf16.mxu0 0
    %854 = vmatpush1.bf16.msra.mxu0 %v843
    %855 = vmatprep.subr.bf16.mxu0 0
    %856 = vmatpush1.bf16.msra.mxu0 %v844
    %857 = vmatprep.subr.bf16.mxu0 0
    %858 = vmatpush1.bf16.msra.mxu0 0
    %859 = vmatprep.subr.bf16.mxu0 0
    %860 = vmatpush1.bf16.msra.mxu0 0
    %861 = vmatprep.subr.bf16.mxu0 0
    %862 = vmatpush1.bf16.msra.mxu0 0
    %863 = vmatprep.subr.bf16.mxu0 0
    %864 = vmatpush1.bf16.msra.mxu0 0
    %865 = vmatprep.subr.bf16.mxu0 0
    %866 = vmatpush1.bf16.msra.mxu0 0
    %867 = vmatprep.subr.bf16.mxu0 0
    %868 = vmatpush1.bf16.msra.mxu0 0
    %869 = vmatprep.subr.bf16.mxu0 0
    %870 = vmatpush1.bf16.msra.mxu0 0
    %871 = vmatprep.subr.bf16.mxu0 0
    %872 = vmatpush1.bf16.msra.mxu0 0
    %873 = vmatprep.subr.bf16.mxu0 0
    %874 = vmatpush1.bf16.msra.mxu0 0
    %875 = vmatprep.subr.bf16.mxu0 0
    %876 = vmatpush1.bf16.msra.mxu0 0
    %877 = vmatprep.subr.bf16.mxu0 0
    %878 = vmatpush1.bf16.msra.mxu0 0
    %879 = vmatprep.subr.bf16.mxu0 0
    %880 = vmatpush1.bf16.msra.mxu0 0
    %881 = vmatprep.subr.bf16.mxu0 0
    %882 = vmatpush1.bf16.msra.mxu0 0
    %883 = vmatprep.subr.bf16.mxu0 0
    %884 = vmatpush1.bf16.msra.mxu0 0
    %885 = vmatprep.mubr.bf16.mxu0 0
    %886 = vmatmul.mubr.bf16.gmra.mrb[0].mxu0 %v848
    %v887 = vpop.f32.mrb[0].mxu0
    %v888 = vadd.f32 0.0, %v887
    %v889 = vpop.f32.mrb[0].mxu0
    %v890 = vpop.f32.mrb[0].mxu0
    %v891 = vadd.f32 0.0, %v890
    %v892 = vpop.f32.mrb[0].mxu0
    %893 = vmatprep.mubr.bf16.mxu0 0
    %894 = vmatmul.mubr.bf16.gmra.mrb[0].mxu0 %v851
    %v895 = vpop.f32.mrb[0].mxu0
    %v896 = vadd.f32 0.0, %v895
    %v897 = vpop.f32.mrb[0].mxu0
    %v898 = vpop.f32.mrb[0].mxu0
    %v899 = vadd.f32 0.0, %v898
    %v900 = vpop.f32.mrb[0].mxu0
    %901 = vdwg.mxu0
    %v906 = vcombine.high %v888, %v888
    %v908 = vunpack.c.l.s4 1983009808
    %v909 = vunpack.c.0.s8 %v908
    %v910 = vlaneseq
    %v911 = vshrl.u32 %v910, 7
    %v912 = vsub.s32 %v909, %v911
    %v913 = vrot.slane %v888, %v912
    %v915 = vunpack.c.l.s4 1983009808
    %v916 = vunpack.c.0.s8 %v915
    %v917 = vlaneseq
    %v918 = vshrl.u32 %v917, 7
    %v919 = vsub.s32 %v916, %v918
    %v920 = vrot.slane %v906, %v919
    %v921 = vcombine.high %v913, %v913
    %v922 = vcombine.high %v920, %v920
    %v923 = vcombine.high %v891, %v891
    %v925 = vunpack.c.l.s4 1983009808
    %v926 = vunpack.c.0.s8 %v925
    %v927 = vlaneseq
    %v928 = vshrl.u32 %v927, 7
    %v929 = vsub.s32 %v926, %v928
    %v930 = vrot.slane %v891, %v929
    %v932 = vunpack.c.l.s4 1983009808
    %v933 = vunpack.c.0.s8 %v932
    %v934 = vlaneseq
    %v935 = vshrl.u32 %v934, 7
    %v936 = vsub.s32 %v933, %v935
    %v937 = vrot.slane %v923, %v936
    %v938 = vcombine.high %v930, %v930
    %v939 = vcombine.high %v937, %v937
    %v940 = vcombine.high %v896, %v896
    %v942 = vunpack.c.l.s4 1983009808
    %v943 = vunpack.c.0.s8 %v942
    %v944 = vlaneseq
    %v945 = vshrl.u32 %v944, 7
    %v946 = vsub.s32 %v943, %v945
    %v947 = vrot.slane %v896, %v946
    %v949 = vunpack.c.l.s4 1983009808
    %v950 = vunpack.c.0.s8 %v949
    %v951 = vlaneseq
    %v952 = vshrl.u32 %v951, 7
    %v953 = vsub.s32 %v950, %v952
    %v954 = vrot.slane %v940, %v953
    %v955 = vcombine.high %v947, %v947
    %v956 = vcombine.high %v954, %v954
    %v958 = vunpack.c.l.s4 1983009808
    %v959 = vunpack.c.0.s8 %v958
    %v960 = vlaneseq
    %v961 = vshrl.u32 %v960, 7
    %v962 = vsub.s32 %v959, %v961
    %v963 = vrot.slane %v899, %v962
    %v964 = vcombine.high %v963, %v963
    %v979 = vadd.f32 %v675, %v913
    %v980 = vadd.f32 %v683, %v921
    %v981 = vadd.f32 %v682, %v920
    %v982 = vadd.f32 %v684, %v922
    %v983 = vadd.f32 %v692, %v930
    %v984 = vadd.f32 %v700, %v938
    %v985 = vadd.f32 %v699, %v937
    %v986 = vadd.f32 %v701, %v939
    %v987 = vadd.f32 %v709, %v947
    %v988 = vadd.f32 %v717, %v955
    %v989 = vadd.f32 %v716, %v954
    %v990 = vadd.f32 %v718, %v956
    %v991 = vadd.f32 %v725, %v963
    %v992 = vadd.f32 %v726, %v964
    %v993 = vld [vmem:[#allocation2] sm:$0x1]
    %v995 = vlaneseq
    %v996 = vshrl.u32 %v995, 7
    %v997 = vsub.s32 0, %v996
    %v998 = vrot.slane %v993, %v997
    %v999 = vcombine.high %v998, %v998
    %v1001 = vunpack.c.l.s4 1983009808
    %v1002 = vunpack.c.0.s8 %v1001
    %v1003 = vlaneseq
    %v1004 = vshrl.u32 %v1003, 7
    %v1005 = vsub.s32 %v1002, %v1004
    %v1006 = vrot.slane %v998, %v1005
    %v1008 = vunpack.c.l.s4 1983009808
    %v1009 = vunpack.c.0.s8 %v1008
    %v1010 = vlaneseq
    %v1011 = vshrl.u32 %v1010, 7
    %v1012 = vsub.s32 %v1009, %v1011
    %v1013 = vrot.slane %v999, %v1012
    %v1014 = vcombine.high %v1006, %v1006
    %v1015 = vcombine.high %v1013, %v1013
    %v1020 = vadd.f32 %v979, %v1006
    %v1021 = vadd.f32 %v980, %v1014
    %v1022 = vadd.f32 %v981, %v1013
    %v1023 = vadd.f32 %v982, %v1015
    %v1024 = vadd.f32 %v983, %v1006
    %v1025 = vadd.f32 %v984, %v1014
    %v1026 = vadd.f32 %v985, %v1013
    %v1027 = vadd.f32 %v986, %v1006
    %v1028 = vadd.f32 %v987, %v1014
    %v1029 = vadd.f32 %v988, %v1013
    %v1030 = vadd.f32 %v989, %v1015
    %v1031 = vadd.f32 %v990, %v1006
    %v1032 = vadd.f32 %v991, %v1014
    %v1033 = vadd.f32 %v992, %v1013
    %v1034 = vmax.f32 %v1020, 0.0
    %v1035 = vmax.f32 %v1021, 0.0
    %v1036 = vmax.f32 %v1022, 0.0
    %v1037 = vmax.f32 %v1023, 0.0
    %v1038 = vmax.f32 %v1024, 0.0
    %v1039 = vmax.f32 %v1025, 0.0
    %v1040 = vmax.f32 %v1026, 0.0
    %v1041 = vmax.f32 %v1027, 0.0
    %v1042 = vmax.f32 %v1028, 0.0
    %v1043 = vmax.f32 %v1029, 0.0
    %v1044 = vmax.f32 %v1030, 0.0
    %v1045 = vmax.f32 %v1031, 0.0
    %v1046 = vmax.f32 %v1032, 0.0
    %v1047 = vmax.f32 %v1033, 0.0
    %v1048 = vld [vmem:[%s3] sm:$0xff]
    %v1049 = vcombine.low %v1034, %v1041
    %v1051 = vunpack.c.l.s4 1934713408
    %v1052 = vunpack.c.0.s8 %v1051
    %v1053 = vlaneseq
    %v1054 = vshrl.u32 %v1053, 7
    %v1055 = vsub.s32 %v1052, %v1054
    %v1056 = vrot.slane %v1049, %v1055
    %v1057 = vcombine.high %v1056, 0.0
    %v1058 = vcombine.low %v1035, %v1042
    %v1060 = vunpack.c.l.s4 1934713408
    %v1061 = vunpack.c.0.s8 %v1060
    %v1062 = vlaneseq
    %v1063 = vshrl.u32 %v1062, 7
    %v1064 = vsub.s32 %v1061, %v1063
    %v1065 = vrot.slane %v1058, %v1064
    %v1066 = vcombine.high %v1065, 0.0
    %v1067 = vcombine.low %v1036, %v1043
    %v1069 = vunpack.c.l.s4 1934713408
    %v1070 = vunpack.c.0.s8 %v1069
    %v1071 = vlaneseq
    %v1072 = vshrl.u32 %v1071, 7
    %v1073 = vsub.s32 %v1070, %v1072
    %v1074 = vrot.slane %v1067, %v1073
    %v1075 = vcombine.high %v1074, 0.0
    %v1076 = vcombine.low %v1037, %v1044
    %v1078 = vunpack.c.l.s4 1934713408
    %v1079 = vunpack.c.0.s8 %v1078
    %v1080 = vlaneseq
    %v1081 = vshrl.u32 %v1080, 7
    %v1082 = vsub.s32 %v1079, %v1081
    %v1083 = vrot.slane %v1076, %v1082
    %v1084 = vcombine.high %v1083, 0.0
    %v1085 = vcombine.low %v1038, %v1045
    %v1087 = vunpack.c.l.s4 1934713408
    %v1088 = vunpack.c.0.s8 %v1087
    %v1089 = vlaneseq
    %v1090 = vshrl.u32 %v1089, 7
    %v1091 = vsub.s32 %v1088, %v1090
    %v1092 = vrot.slane %v1085, %v1091
    %v1093 = vcombine.high %v1092, 0.0
    %v1094 = vcombine.low %v1039, %v1046
    %v1096 = vunpack.c.l.s4 1934713408
    %v1097 = vunpack.c.0.s8 %v1096
    %v1098 = vlaneseq
    %v1099 = vshrl.u32 %v1098, 7
    %v1100 = vsub.s32 %v1097, %v1099
    %v1101 = vrot.slane %v1094, %v1100
    %v1102 = vcombine.high %v1101, 0.0
    %v1103 = vcombine.low %v1040, %v1047
    %v1105 = vunpack.c.l.s4 1934713408
    %v1106 = vunpack.c.0.s8 %v1105
    %v1107 = vlaneseq
    %v1108 = vshrl.u32 %v1107, 7
    %v1109 = vsub.s32 %v1106, %v1108
    %v1110 = vrot.slane %v1103, %v1109
    %v1111 = vcombine.high %v1110, 0.0
    %v1112 = vcombine.low %v1056, %v1057
    %v1114 = vunpack.c.l.s4 1934713408
    %v1115 = vunpack.c.0.s8 %v1114
    %v1116 = vlaneseq
    %v1117 = vshrl.u32 %v1116, 7
    %v1118 = vsub.s32 %v1115, %v1117
    %v1119 = vrot.slane %v1112, %v1118
    %v1120 = vcombine.high %v1119, 0.0
    %v1121 = vcombine.low %v1065, %v1066
    %v1123 = vunpack.c.l.s4 1934713408
    %v1124 = vunpack.c.0.s8 %v1123
    %v1125 = vlaneseq
    %v1126 = vshrl.u32 %v1125, 7
    %v1127 = vsub.s32 %v1124, %v1126
    %v1128 = vrot.slane %v1121, %v1127
    %v1129 = vcombine.high %v1128, 0.0
    %v1130 = vcombine.low %v1074, %v1075
    %v1132 = vunpack.c.l.s4 1934713408
    %v1133 = vunpack.c.0.s8 %v1132
    %v1134 = vlaneseq
    %v1135 = vshrl.u32 %v1134, 7
    %v1136 = vsub.s32 %v1133, %v1135
    %v1137 = vrot.slane %v1130, %v1136
    %v1138 = vcombine.high %v1137, 0.0
    %v1139 = vcombine.low %v1083, %v1084
    %v1141 = vunpack.c.l.s4 1934713408
    %v1142 = vunpack.c.0.s8 %v1141
    %v1143 = vlaneseq
    %v1144 = vshrl.u32 %v1143, 7
    %v1145 = vsub.s32 %v1142, %v1144
    %v1146 = vrot.slane %v1139, %v1145
    %v1147 = vcombine.high %v1146, 0.0
    %v1148 = vcombine.low %v1092, %v1093
    %v1150 = vunpack.c.l.s4 1934713408
    %v1151 = vunpack.c.0.s8 %v1150
    %v1152 = vlaneseq
    %v1153 = vshrl.u32 %v1152, 7
    %v1154 = vsub.s32 %v1151, %v1153
    %v1155 = vrot.slane %v1148, %v1154
    %v1156 = vcombine.high %v1155, 0.0
    %v1157 = vcombine.low %v1101, %v1102
    %v1159 = vunpack.c.l.s4 1934713408
    %v1160 = vunpack.c.0.s8 %v1159
    %v1161 = vlaneseq
    %v1162 = vshrl.u32 %v1161, 7
    %v1163 = vsub.s32 %v1160, %v1162
    %v1164 = vrot.slane %v1157, %v1163
    %v1165 = vcombine.high %v1164, 0.0
    %v1166 = vcombine.low %v1110, %v1111
    %v1168 = vunpack.c.l.s4 1934713408
    %v1169 = vunpack.c.0.s8 %v1168
    %v1170 = vlaneseq
    %v1171 = vshrl.u32 %v1170, 7
    %v1172 = vsub.s32 %v1169, %v1171
    %v1173 = vrot.slane %v1166, %v1172
    %v1174 = vcombine.high %v1173, 0.0
    %v1182 = vcombine.low %v1119, %v1128
    %v1183 = vcombine.low %v1137, %v1146
    %v1185 = vunpack.c.l.s4 1983009808
    %v1186 = vunpack.c.0.s8 %v1185
    %v1187 = vlaneseq
    %v1188 = vshrl.u32 %v1187, 7
    %v1189 = vsub.s32 %v1186, %v1188
    %v1190 = vrot.slane %v1182, %v1189
    %v1192 = vunpack.c.l.s4 1983009808
    %v1193 = vunpack.c.0.s8 %v1192
    %v1194 = vlaneseq
    %v1195 = vshrl.u32 %v1194, 7
    %v1196 = vsub.s32 %v1193, %v1195
    %v1197 = vrot.slane %v1183, %v1196
    %v1198 = vcombine.low %v1190, %v1197
    %v1199 = vcombine.low %v1155, %v1164
    %v1201 = vunpack.c.l.s4 1983009808
    %v1202 = vunpack.c.0.s8 %v1201
    %v1203 = vlaneseq
    %v1204 = vshrl.u32 %v1203, 7
    %v1205 = vsub.s32 %v1202, %v1204
    %v1206 = vrot.slane %v1199, %v1205
    %v1208 = vunpack.c.l.s4 1983009808
    %v1209 = vunpack.c.0.s8 %v1208
    %v1210 = vlaneseq
    %v1211 = vshrl.u32 %v1210, 7
    %v1212 = vsub.s32 %v1209, %v1211
    %v1213 = vrot.slane %v1173, %v1212
    %v1214 = vcombine.low %v1206, %v1213
    %v1223 = vcombine.low %v1120, %v1129
    %v1224 = vcombine.low %v1138, %v1147
    %v1226 = vunpack.c.l.s4 1983009808
    %v1227 = vunpack.c.0.s8 %v1226
    %v1228 = vlaneseq
    %v1229 = vshrl.u32 %v1228, 7
    %v1230 = vsub.s32 %v1227, %v1229
    %v1231 = vrot.slane %v1223, %v1230
    %v1233 = vunpack.c.l.s4 1983009808
    %v1234 = vunpack.c.0.s8 %v1233
    %v1235 = vlaneseq
    %v1236 = vshrl.u32 %v1235, 7
    %v1237 = vsub.s32 %v1234, %v1236
    %v1238 = vrot.slane %v1224, %v1237
    %v1239 = vcombine.low %v1231, %v1238
    %v1240 = vcombine.low %v1156, %v1165
    %v1242 = vunpack.c.l.s4 1983009808
    %v1243 = vunpack.c.0.s8 %v1242
    %v1244 = vlaneseq
    %v1245 = vshrl.u32 %v1244, 7
    %v1246 = vsub.s32 %v1243, %v1245
    %v1247 = vrot.slane %v1240, %v1246
    %v1249 = vunpack.c.l.s4 1983009808
    %v1250 = vunpack.c.0.s8 %v1249
    %v1251 = vlaneseq
    %v1252 = vshrl.u32 %v1251, 7
    %v1253 = vsub.s32 %v1250, %v1252
    %v1254 = vrot.slane %v1174, %v1253
    %v1255 = vcombine.low %v1247, %v1254
    %v1257 = vcombine.low 0.0, 0.0
    %v1259 = vunpack.c.l.s4 1983009808
    %v1260 = vunpack.c.0.s8 %v1259
    %v1261 = vlaneseq
    %v1262 = vshrl.u32 %v1261, 7
    %v1263 = vsub.s32 %v1260, %v1262
    %v1264 = vrot.slane %v1257, %v1263
    %v1265 = vcombine.low %v1264, %v1264
    %v1267 = vunpack.c.l.s4 1934713408
    %v1268 = vunpack.c.0.s8 %v1267
    %v1269 = vlaneseq
    %v1270 = vshrl.u32 %v1269, 7
    %v1271 = vsub.s32 %v1268, %v1270
    %v1272 = vrot.slane %v1265, %v1271
    %v1273 = vcombine.low %v1272, %v1272
    %v1274 = vcombine.high %v1272, %v1272
    %vm1275 = vcmask 113664
    %v1277 = vsel %vm1275, %v1048, 0
    %vm1279 = vcmask 1045504
    %v1280 = vsel %vm1279, %v1214, 0
    %v1282 = vsel %vm1279, %v1255, 0
    %1284 = vmatprep.subr.mxu0 %v1239
    %1285 = vmatpush1.msra.mxu0 %v1198
    %1286 = vmatprep.subr.mxu0 %v1282
    %1287 = vmatpush1.msra.mxu0 %v1280
    %1288 = vmatprep.subr.mxu0 0.0
    %1289 = vmatpush1.msra.mxu0 0.0
    %1290 = vmatprep.subr.mxu0 0.0
    %1291 = vmatpush1.msra.mxu0 0.0
    %1292 = vmatprep.subr.mxu0 0.0
    %1293 = vmatpush1.msra.mxu0 0.0
    %1294 = vmatprep.subr.mxu0 0.0
    %1295 = vmatpush1.msra.mxu0 0.0
    %1296 = vmatprep.subr.mxu0 0.0
    %1297 = vmatpush1.msra.mxu0 0.0
    %1298 = vmatprep.subr.mxu0 0.0
    %1299 = vmatpush1.msra.mxu0 0.0
    %1300 = vmatprep.subr.mxu0 0.0
    %1301 = vmatpush1.msra.mxu0 0.0
    %1302 = vmatprep.subr.mxu0 0.0
    %1303 = vmatpush1.msra.mxu0 0.0
    %1304 = vmatprep.subr.mxu0 0.0
    %1305 = vmatpush1.msra.mxu0 0.0
    %1306 = vmatprep.subr.mxu0 0.0
    %1307 = vmatpush1.msra.mxu0 0.0
    %1308 = vmatprep.subr.mxu0 0.0
    %1309 = vmatpush1.msra.mxu0 0.0
    %1310 = vmatprep.subr.mxu0 0.0
    %1311 = vmatpush1.msra.mxu0 0.0
    %1312 = vmatprep.subr.mxu0 0.0
    %1313 = vmatpush1.msra.mxu0 0.0
    %1314 = vmatprep.subr.mxu0 0.0
    %1315 = vmatpush1.msra.mxu0 0.0
    %1316 = vmatprep.subr.mxu0 0.0
    %1317 = vmatpush1.msra.mxu0 0.0
    %1318 = vmatprep.subr.mxu0 0.0
    %1319 = vmatpush1.msra.mxu0 0.0
    %1320 = vmatprep.subr.mxu0 0.0
    %1321 = vmatpush1.msra.mxu0 0.0
    %1322 = vmatprep.subr.mxu0 0.0
    %1323 = vmatpush1.msra.mxu0 0.0
    %1324 = vmatprep.subr.mxu0 0.0
    %1325 = vmatpush1.msra.mxu0 0.0
    %1326 = vmatprep.subr.mxu0 0.0
    %1327 = vmatpush1.msra.mxu0 0.0
    %1328 = vmatprep.subr.mxu0 0.0
    %1329 = vmatpush1.msra.mxu0 0.0
    %1330 = vmatprep.subr.mxu0 0.0
    %1331 = vmatpush1.msra.mxu0 0.0
    %1332 = vmatprep.subr.mxu0 0.0
    %1333 = vmatpush1.msra.mxu0 0.0
    %1334 = vmatprep.subr.mxu0 0.0
    %1335 = vmatpush1.msra.mxu0 0.0
    %1336 = vmatprep.subr.mxu0 0.0
    %1337 = vmatpush1.msra.mxu0 0.0
    %1338 = vmatprep.subr.mxu0 0.0
    %1339 = vmatpush1.msra.mxu0 0.0
    %1340 = vmatprep.subr.mxu0 0.0
    %1341 = vmatpush1.msra.mxu0 0.0
    %1342 = vmatprep.subr.mxu0 0.0
    %1343 = vmatpush1.msra.mxu0 0.0
    %1344 = vmatprep.subr.mxu0 0.0
    %1345 = vmatpush1.msra.mxu0 0.0
    %1346 = vmatprep.subr.mxu0 0.0
    %1347 = vmatpush1.msra.mxu0 0.0
    %1348 = vmatprep.mubr.f32.mxu0 0.0
    %1349 = vmatmul.mubr.f32.gmra.mrb[0].mxu0 %v1277
    %v1350 = vpop.f32.mrb[0].mxu0
    %v1351 = vadd.f32 %v1273, %v1350
    %v1352 = vpop.f32.mrb[0].mxu0
    %v1353 = vadd.f32 %v1274, %v1352
    %1354 = vdwg.mxu0
    %v1355 = vcombine.high %v1351, 0.0
    %v1357 = vunpack.c.l.s4 1983009808
    %v1358 = vunpack.c.0.s8 %v1357
    %v1359 = vlaneseq
    %v1360 = vshrl.u32 %v1359, 7
    %v1361 = vsub.s32 %v1358, %v1360
    %v1362 = vrot.slane %v1351, %v1361
    %v1364 = vunpack.c.l.s4 1983009808
    %v1365 = vunpack.c.0.s8 %v1364
    %v1366 = vlaneseq
    %v1367 = vshrl.u32 %v1366, 7
    %v1368 = vsub.s32 %v1365, %v1367
    %v1369 = vrot.slane %v1355, %v1368
    %v1370 = vcombine.high %v1353, 0.0
    %v1372 = vunpack.c.l.s4 1983009808
    %v1373 = vunpack.c.0.s8 %v1372
    %v1374 = vlaneseq
    %v1375 = vshrl.u32 %v1374, 7
    %v1376 = vsub.s32 %v1373, %v1375
    %v1377 = vrot.slane %v1353, %v1376
    %v1379 = vunpack.c.l.s4 1983009808
    %v1380 = vunpack.c.0.s8 %v1379
    %v1381 = vlaneseq
    %v1382 = vshrl.u32 %v1381, 7
    %v1383 = vsub.s32 %v1380, %v1382
    %v1384 = vrot.slane %v1370, %v1383
    %v1385 = vcombine.low %v1362, %v1377
    %v1386 = vcombine.high %v1362, %v1377
    %v1388 = vunpack.c.l.s4 1934713408
    %v1389 = vunpack.c.0.s8 %v1388
    %v1390 = vlaneseq
    %v1391 = vshrl.u32 %v1390, 7
    %v1392 = vsub.s32 %v1389, %v1391
    %v1393 = vrot.slane %v1385, %v1392
    %v1395 = vunpack.c.l.s4 1934713408
    %v1396 = vunpack.c.0.s8 %v1395
    %v1397 = vlaneseq
    %v1398 = vshrl.u32 %v1397, 7
    %v1399 = vsub.s32 %v1396, %v1398
    %v1400 = vrot.slane %v1386, %v1399
    %v1401 = vcombine.low %v1369, %v1384
    %v1402 = vcombine.high %v1369, %v1384
    %v1404 = vunpack.c.l.s4 1934713408
    %v1405 = vunpack.c.0.s8 %v1404
    %v1406 = vlaneseq
    %v1407 = vshrl.u32 %v1406, 7
    %v1408 = vsub.s32 %v1405, %v1407
    %v1409 = vrot.slane %v1401, %v1408
    %v1411 = vunpack.c.l.s4 1934713408
    %v1412 = vunpack.c.0.s8 %v1411
    %v1413 = vlaneseq
    %v1414 = vshrl.u32 %v1413, 7
    %v1415 = vsub.s32 %v1412, %v1414
    %v1416 = vrot.slane %v1402, %v1415
    %v1417 = vcombine.high %v1393, 0.0
    %v1418 = vcombine.high %v1400, 0.0
    %v1419 = vcombine.high %v1409, 0.0
    %v1420 = vcombine.high %v1416, 0.0
    %v1421 = vld [vmem:[%s4] sm:$0xf]
    %v1422 = vld [vmem:[%s4 + $0x4] sm:$0xf]
    %v1423 = vld [vmem:[%s4 + $0x8] sm:$0xf]
    %v1424 = vld [vmem:[%s4 + $0xc] sm:$0xf]
    %s1425 = scalar_lea.vmem %s4, 16
    %v1426 = vld [vmem:[%s1425] sm:$0xf]
    %v1427 = vld [vmem:[%s1425 + $0x4] sm:$0xf]
    %v1428 = vld [vmem:[%s1425 + $0x8] sm:$0xf]
    %v1429 = vld [vmem:[%s1425 + $0xc] sm:$0xf]
    %v1430 = vunpack.i.h.s16 %v140
    %v1431 = vunpack.i.l.s16 %v147
    %v1432 = vunpack.i.h.s16 %v147
    %v1433 = vunpack.i.l.s16 %v148
    %v1434 = vunpack.i.h.s16 %v148
    %v1435 = vunpack.i.l.s16 %v149
    %v1436 = vunpack.i.h.s16 %v149
    %v1437 = vunpack.i.l.s16 %v164
    %v1438 = vunpack.i.h.s16 %v164
    %v1439 = vunpack.i.l.s16 %v171
    %v1440 = vunpack.i.h.s16 %v171
    %v1441 = vunpack.i.l.s16 %v172
    %v1442 = vunpack.i.h.s16 %v172
    %v1443 = vunpack.i.h.s16 %v188
    %v1444 = vunpack.i.l.s16 %v195
    %v1445 = vunpack.i.h.s16 %v195
    %v1446 = vunpack.i.l.s16 %v196
    %v1447 = vunpack.i.h.s16 %v196
    %v1448 = vunpack.i.l.s16 %v197
    %v1449 = vunpack.i.h.s16 %v197
    %v1450 = vunpack.i.l.s16 %v212
    %v1451 = vunpack.i.h.s16 %v212
    %v1452 = vunpack.i.l.s16 %v219
    %v1453 = vunpack.i.h.s16 %v219
    %v1454 = vunpack.i.l.s16 %v220
    %v1455 = vunpack.i.h.s16 %v220
    %v1456 = vpack.i.b16 %v1431, %v1430
    %v1457 = vpack.i.b16 %v1433, %v1432
    %v1458 = vpack.i.b16 %v1435, %v1434
    %v1459 = vpack.i.b16 %v1437, %v1436
    %v1460 = vpack.i.b16 %v1439, %v1438
    %v1461 = vpack.i.b16 %v1441, %v1440
    %v1462 = vpack.i.b16 %v1443, %v1442
    %v1463 = vpack.i.b16 %v1445, %v1444
    %v1464 = vpack.i.b16 %v1447, %v1446
    %v1465 = vpack.i.b16 %v1449, %v1448
    %v1466 = vpack.i.b16 %v1451, %v1450
    %v1467 = vpack.i.b16 %v1453, %v1452
    %v1468 = vpack.i.b16 %v1455, %v1454
    %v1469 = vcombine.low %v1456, %v1457
    %v1470 = vcombine.low %v1458, %v1459
    %v1471 = vcombine.low %v1460, %v1461
    %v1472 = vcombine.low %v1462, %v1463
    %v1474 = vunpack.c.l.s4 1966171168
    %v1475 = vunpack.c.0.s8 %v1474
    %v1476 = vlaneseq
    %v1477 = vshrl.u32 %v1476, 7
    %v1478 = vsub.s32 %v1475, %v1477
    %v1479 = vrot.slane %v1469, %v1478
    %v1481 = vunpack.c.l.s4 1966171168
    %v1482 = vunpack.c.0.s8 %v1481
    %v1483 = vlaneseq
    %v1484 = vshrl.u32 %v1483, 7
    %v1485 = vsub.s32 %v1482, %v1484
    %v1486 = vrot.slane %v1470, %v1485
    %v1488 = vunpack.c.l.s4 1966171168
    %v1489 = vunpack.c.0.s8 %v1488
    %v1490 = vlaneseq
    %v1491 = vshrl.u32 %v1490, 7
    %v1492 = vsub.s32 %v1489, %v1491
    %v1493 = vrot.slane %v1471, %v1492
    %v1495 = vunpack.c.l.s4 1966171168
    %v1496 = vunpack.c.0.s8 %v1495
    %v1497 = vlaneseq
    %v1498 = vshrl.u32 %v1497, 7
    %v1499 = vsub.s32 %v1496, %v1498
    %v1500 = vrot.slane %v1472, %v1499
    %v1501 = vcombine.low %v1479, %v1486
    %v1502 = vcombine.low %v1493, %v1500
    %v1504 = vunpack.c.l.s4 1966171168
    %v1505 = vunpack.c.0.s8 %v1504
    %v1506 = vlaneseq
    %v1507 = vshrl.u32 %v1506, 7
    %v1508 = vsub.s32 %v1505, %v1507
    %v1509 = vrot.slane %v1501, %v1508
    %v1511 = vunpack.c.l.s4 1966171168
    %v1512 = vunpack.c.0.s8 %v1511
    %v1513 = vlaneseq
    %v1514 = vshrl.u32 %v1513, 7
    %v1515 = vsub.s32 %v1512, %v1514
    %v1516 = vrot.slane %v1502, %v1515
    %v1517 = vcombine.low %v1509, %v1516
    %v1518 = vcombine.low %v1464, %v1465
    %v1519 = vcombine.low %v1466, %v1467
    %v1521 = vunpack.c.l.s4 1966171168
    %v1522 = vunpack.c.0.s8 %v1521
    %v1523 = vlaneseq
    %v1524 = vshrl.u32 %v1523, 7
    %v1525 = vsub.s32 %v1522, %v1524
    %v1526 = vrot.slane %v1518, %v1525
    %v1528 = vunpack.c.l.s4 1966171168
    %v1529 = vunpack.c.0.s8 %v1528
    %v1530 = vlaneseq
    %v1531 = vshrl.u32 %v1530, 7
    %v1532 = vsub.s32 %v1529, %v1531
    %v1533 = vrot.slane %v1519, %v1532
    %v1535 = vunpack.c.l.s4 1966171168
    %v1536 = vunpack.c.0.s8 %v1535
    %v1537 = vlaneseq
    %v1538 = vshrl.u32 %v1537, 7
    %v1539 = vsub.s32 %v1536, %v1538
    %v1540 = vrot.slane %v1468, %v1539
    %v1541 = vcombine.low %v1526, %v1533
    %v1543 = vunpack.c.l.s4 1966171168
    %v1544 = vunpack.c.0.s8 %v1543
    %v1545 = vlaneseq
    %v1546 = vshrl.u32 %v1545, 7
    %v1547 = vsub.s32 %v1544, %v1546
    %v1548 = vrot.slane %v1541, %v1547
    %v1550 = vunpack.c.l.s4 1966171168
    %v1551 = vunpack.c.0.s8 %v1550
    %v1552 = vlaneseq
    %v1553 = vshrl.u32 %v1552, 7
    %v1554 = vsub.s32 %v1551, %v1553
    %v1555 = vrot.slane %v1540, %v1554
    %v1556 = vcombine.low %v1548, %v1555
    %v1561 = vunpack.c.l.b16 %v1426
    %v1562 = vunpack.c.l.b16 %v1427
    %v1563 = vunpack.c.l.b16 %v1428
    %v1564 = vunpack.c.l.b16 %v1429
    %v1565 = vpack.c.b16 %v1562, %v1561
    %v1566 = vpack.c.b16 %v1564, %v1563
    %v1570 = vsel %vm452, %v1517, 0
    %v1573 = vsel %vm452, %v1556, 0
    %1575 = vmatprep.subr.bf16.mxu0 0
    %1576 = vmatpush1.bf16.msra.mxu0 %v1565
    %1577 = vmatprep.subr.bf16.mxu0 0
    %1578 = vmatpush1.bf16.msra.mxu0 %v1566
    %1579 = vmatprep.subr.bf16.mxu0 0
    %1580 = vmatpush1.bf16.msra.mxu0 0
    %1581 = vmatprep.subr.bf16.mxu0 0
    %1582 = vmatpush1.bf16.msra.mxu0 0
    %1583 = vmatprep.subr.bf16.mxu0 0
    %1584 = vmatpush1.bf16.msra.mxu0 0
    %1585 = vmatprep.subr.bf16.mxu0 0
    %1586 = vmatpush1.bf16.msra.mxu0 0
    %1587 = vmatprep.subr.bf16.mxu0 0
    %1588 = vmatpush1.bf16.msra.mxu0 0
    %1589 = vmatprep.subr.bf16.mxu0 0
    %1590 = vmatpush1.bf16.msra.mxu0 0
    %1591 = vmatprep.subr.bf16.mxu0 0
    %1592 = vmatpush1.bf16.msra.mxu0 0
    %1593 = vmatprep.subr.bf16.mxu0 0
    %1594 = vmatpush1.bf16.msra.mxu0 0
    %1595 = vmatprep.subr.bf16.mxu0 0
    %1596 = vmatpush1.bf16.msra.mxu0 0
    %1597 = vmatprep.subr.bf16.mxu0 0
    %1598 = vmatpush1.bf16.msra.mxu0 0
    %1599 = vmatprep.subr.bf16.mxu0 0
    %1600 = vmatpush1.bf16.msra.mxu0 0
    %1601 = vmatprep.subr.bf16.mxu0 0
    %1602 = vmatpush1.bf16.msra.mxu0 0
    %1603 = vmatprep.subr.bf16.mxu0 0
    %1604 = vmatpush1.bf16.msra.mxu0 0
    %1605 = vmatprep.subr.bf16.mxu0 0
    %1606 = vmatpush1.bf16.msra.mxu0 0
    %1607 = vmatprep.mubr.bf16.mxu0 0
    %1608 = vmatmul.mubr.bf16.gmra.mrb[0].mxu0 %v1570
    %v1609 = vpop.f32.mrb[0].mxu0
    %v1610 = vadd.f32 0.0, %v1609
    %v1611 = vpop.f32.mrb[0].mxu0
    %v1612 = vpop.f32.mrb[0].mxu0
    %v1613 = vadd.f32 0.0, %v1612
    %v1614 = vpop.f32.mrb[0].mxu0
    %1615 = vmatprep.mubr.bf16.mxu0 0
    %1616 = vmatmul.mubr.bf16.gmra.mrb[0].mxu0 %v1573
    %v1617 = vpop.f32.mrb[0].mxu0
    %v1618 = vadd.f32 0.0, %v1617
    %v1619 = vpop.f32.mrb[0].mxu0
    %v1620 = vpop.f32.mrb[0].mxu0
    %v1621 = vadd.f32 0.0, %v1620
    %v1622 = vpop.f32.mrb[0].mxu0
    %1623 = vdwg.mxu0
    %v1624 = vunpack.i.l.s16 %v140
    %v1625 = vunpack.i.l.s16 %v188
    %v1626 = vpack.i.b16 %v1430, %v1624
    %v1627 = vpack.i.b16 %v1432, %v1431
    %v1628 = vpack.i.b16 %v1434, %v1433
    %v1629 = vpack.i.b16 %v1436, %v1435
    %v1630 = vpack.i.b16 %v1438, %v1437
    %v1631 = vpack.i.b16 %v1440, %v1439
    %v1632 = vpack.i.b16 %v1625, %v1441
    %v1633 = vpack.i.b16 %v1444, %v1443
    %v1634 = vpack.i.b16 %v1446, %v1445
    %v1635 = vpack.i.b16 %v1448, %v1447
    %v1636 = vpack.i.b16 %v1450, %v1449
    %v1637 = vpack.i.b16 %v1452, %v1451
    %v1638 = vpack.i.b16 %v1454, %v1453
    %v1639 = vcombine.low %v1626, %v1627
    %v1640 = vcombine.low %v1628, %v1629
    %v1641 = vcombine.low %v1630, %v1631
    %v1642 = vcombine.low %v1632, %v1633
    %v1644 = vunpack.c.l.s4 1966171168
    %v1645 = vunpack.c.0.s8 %v1644
    %v1646 = vlaneseq
    %v1647 = vshrl.u32 %v1646, 7
    %v1648 = vsub.s32 %v1645, %v1647
    %v1649 = vrot.slane %v1639, %v1648
    %v1651 = vunpack.c.l.s4 1966171168
    %v1652 = vunpack.c.0.s8 %v1651
    %v1653 = vlaneseq
    %v1654 = vshrl.u32 %v1653, 7
    %v1655 = vsub.s32 %v1652, %v1654
    %v1656 = vrot.slane %v1640, %v1655
    %v1658 = vunpack.c.l.s4 1966171168
    %v1659 = vunpack.c.0.s8 %v1658
    %v1660 = vlaneseq
    %v1661 = vshrl.u32 %v1660, 7
    %v1662 = vsub.s32 %v1659, %v1661
    %v1663 = vrot.slane %v1641, %v1662
    %v1665 = vunpack.c.l.s4 1966171168
    %v1666 = vunpack.c.0.s8 %v1665
    %v1667 = vlaneseq
    %v1668 = vshrl.u32 %v1667, 7
    %v1669 = vsub.s32 %v1666, %v1668
    %v1670 = vrot.slane %v1642, %v1669
    %v1671 = vcombine.low %v1649, %v1656
    %v1672 = vcombine.low %v1663, %v1670
    %v1674 = vunpack.c.l.s4 1966171168
    %v1675 = vunpack.c.0.s8 %v1674
    %v1676 = vlaneseq
    %v1677 = vshrl.u32 %v1676, 7
    %v1678 = vsub.s32 %v1675, %v1677
    %v1679 = vrot.slane %v1671, %v1678
    %v1681 = vunpack.c.l.s4 1966171168
    %v1682 = vunpack.c.0.s8 %v1681
    %v1683 = vlaneseq
    %v1684 = vshrl.u32 %v1683, 7
    %v1685 = vsub.s32 %v1682, %v1684
    %v1686 = vrot.slane %v1672, %v1685
    %v1687 = vcombine.low %v1679, %v1686
    %v1688 = vcombine.low %v1634, %v1635
    %v1689 = vcombine.low %v1636, %v1637
    %v1691 = vunpack.c.l.s4 1966171168
    %v1692 = vunpack.c.0.s8 %v1691
    %v1693 = vlaneseq
    %v1694 = vshrl.u32 %v1693, 7
    %v1695 = vsub.s32 %v1692, %v1694
    %v1696 = vrot.slane %v1688, %v1695
    %v1698 = vunpack.c.l.s4 1966171168
    %v1699 = vunpack.c.0.s8 %v1698
    %v1700 = vlaneseq
    %v1701 = vshrl.u32 %v1700, 7
    %v1702 = vsub.s32 %v1699, %v1701
    %v1703 = vrot.slane %v1689, %v1702
    %v1705 = vunpack.c.l.s4 1966171168
    %v1706 = vunpack.c.0.s8 %v1705
    %v1707 = vlaneseq
    %v1708 = vshrl.u32 %v1707, 7
    %v1709 = vsub.s32 %v1706, %v1708
    %v1710 = vrot.slane %v1638, %v1709
    %v1711 = vcombine.low %v1696, %v1703
    %v1713 = vunpack.c.l.s4 1966171168
    %v1714 = vunpack.c.0.s8 %v1713
    %v1715 = vlaneseq
    %v1716 = vshrl.u32 %v1715, 7
    %v1717 = vsub.s32 %v1714, %v1716
    %v1718 = vrot.slane %v1711, %v1717
    %v1720 = vunpack.c.l.s4 1966171168
    %v1721 = vunpack.c.0.s8 %v1720
    %v1722 = vlaneseq
    %v1723 = vshrl.u32 %v1722, 7
    %v1724 = vsub.s32 %v1721, %v1723
    %v1725 = vrot.slane %v1710, %v1724
    %v1726 = vcombine.low %v1718, %v1725
    %v1731 = vunpack.c.l.b16 %v1421
    %v1732 = vunpack.c.l.b16 %v1422
    %v1733 = vunpack.c.l.b16 %v1423
    %v1734 = vunpack.c.l.b16 %v1424
    %v1735 = vpack.c.b16 %v1732, %v1731
    %v1736 = vpack.c.b16 %v1734, %v1733
    %v1740 = vsel %vm452, %v1687, 0
    %v1743 = vsel %vm452, %v1726, 0
    %1745 = vmatprep.subr.bf16.mxu0 0
    %1746 = vmatpush1.bf16.msra.mxu0 %v1735
    %1747 = vmatprep.subr.bf16.mxu0 0
    %1748 = vmatpush1.bf16.msra.mxu0 %v1736
    %1749 = vmatprep.subr.bf16.mxu0 0
    %1750 = vmatpush1.bf16.msra.mxu0 0
    %1751 = vmatprep.subr.bf16.mxu0 0
    %1752 = vmatpush1.bf16.msra.mxu0 0
    %1753 = vmatprep.subr.bf16.mxu0 0
    %1754 = vmatpush1.bf16.msra.mxu0 0
    %1755 = vmatprep.subr.bf16.mxu0 0
    %1756 = vmatpush1.bf16.msra.mxu0 0
    %1757 = vmatprep.subr.bf16.mxu0 0
    %1758 = vmatpush1.bf16.msra.mxu0 0
    %1759 = vmatprep.subr.bf16.mxu0 0
    %1760 = vmatpush1.bf16.msra.mxu0 0
    %1761 = vmatprep.subr.bf16.mxu0 0
    %1762 = vmatpush1.bf16.msra.mxu0 0
    %1763 = vmatprep.subr.bf16.mxu0 0
    %1764 = vmatpush1.bf16.msra.mxu0 0
    %1765 = vmatprep.subr.bf16.mxu0 0
    %1766 = vmatpush1.bf16.msra.mxu0 0
    %1767 = vmatprep.subr.bf16.mxu0 0
    %1768 = vmatpush1.bf16.msra.mxu0 0
    %1769 = vmatprep.subr.bf16.mxu0 0
    %1770 = vmatpush1.bf16.msra.mxu0 0
    %1771 = vmatprep.subr.bf16.mxu0 0
    %1772 = vmatpush1.bf16.msra.mxu0 0
    %1773 = vmatprep.subr.bf16.mxu0 0
    %1774 = vmatpush1.bf16.msra.mxu0 0
    %1775 = vmatprep.subr.bf16.mxu0 0
    %1776 = vmatpush1.bf16.msra.mxu0 0
    %1777 = vmatprep.mubr.bf16.mxu0 0
    %1778 = vmatmul.mubr.bf16.gmra.mrb[0].mxu0 %v1740
    %v1779 = vpop.f32.mrb[0].mxu0
    %v1780 = vadd.f32 %v1610, %v1779
    %v1781 = vpop.f32.mrb[0].mxu0
    %v1782 = vpop.f32.mrb[0].mxu0
    %v1783 = vadd.f32 %v1613, %v1782
    %v1784 = vpop.f32.mrb[0].mxu0
    %1785 = vmatprep.mubr.bf16.mxu0 0
    %1786 = vmatmul.mubr.bf16.gmra.mrb[0].mxu0 %v1743
    %v1787 = vpop.f32.mrb[0].mxu0
    %v1788 = vadd.f32 %v1618, %v1787
    %v1789 = vpop.f32.mrb[0].mxu0
    %v1790 = vpop.f32.mrb[0].mxu0
    %v1791 = vadd.f32 %v1621, %v1790
    %v1792 = vpop.f32.mrb[0].mxu0
    %1793 = vdwg.mxu0
    %v1798 = vcombine.high %v1780, %v1780
    %v1800 = vunpack.c.l.s4 1966171168
    %v1801 = vunpack.c.0.s8 %v1800
    %v1802 = vlaneseq
    %v1803 = vshrl.u32 %v1802, 7
    %v1804 = vsub.s32 %v1801, %v1803
    %v1805 = vrot.slane %v1780, %v1804
    %v1807 = vunpack.c.l.s4 1966171168
    %v1808 = vunpack.c.0.s8 %v1807
    %v1809 = vlaneseq
    %v1810 = vshrl.u32 %v1809, 7
    %v1811 = vsub.s32 %v1808, %v1810
    %v1812 = vrot.slane %v1798, %v1811
    %v1813 = vcombine.high %v1805, %v1805
    %v1814 = vcombine.high %v1812, %v1812
    %v1816 = vunpack.c.l.s4 1966171168
    %v1817 = vunpack.c.0.s8 %v1816
    %v1818 = vlaneseq
    %v1819 = vshrl.u32 %v1818, 7
    %v1820 = vsub.s32 %v1817, %v1819
    %v1821 = vrot.slane %v1805, %v1820
    %v1823 = vunpack.c.l.s4 1966171168
    %v1824 = vunpack.c.0.s8 %v1823
    %v1825 = vlaneseq
    %v1826 = vshrl.u32 %v1825, 7
    %v1827 = vsub.s32 %v1824, %v1826
    %v1828 = vrot.slane %v1812, %v1827
    %v1830 = vunpack.c.l.s4 1966171168
    %v1831 = vunpack.c.0.s8 %v1830
    %v1832 = vlaneseq
    %v1833 = vshrl.u32 %v1832, 7
    %v1834 = vsub.s32 %v1831, %v1833
    %v1835 = vrot.slane %v1813, %v1834
    %v1837 = vunpack.c.l.s4 1966171168
    %v1838 = vunpack.c.0.s8 %v1837
    %v1839 = vlaneseq
    %v1840 = vshrl.u32 %v1839, 7
    %v1841 = vsub.s32 %v1838, %v1840
    %v1842 = vrot.slane %v1814, %v1841
    %v1843 = vcombine.high %v1821, %v1821
    %v1844 = vcombine.high %v1828, %v1828
    %v1845 = vcombine.high %v1835, %v1835
    %v1846 = vcombine.high %v1842, %v1842
    %v1847 = vcombine.high %v1783, %v1783
    %v1849 = vunpack.c.l.s4 1966171168
    %v1850 = vunpack.c.0.s8 %v1849
    %v1851 = vlaneseq
    %v1852 = vshrl.u32 %v1851, 7
    %v1853 = vsub.s32 %v1850, %v1852
    %v1854 = vrot.slane %v1783, %v1853
    %v1856 = vunpack.c.l.s4 1966171168
    %v1857 = vunpack.c.0.s8 %v1856
    %v1858 = vlaneseq
    %v1859 = vshrl.u32 %v1858, 7
    %v1860 = vsub.s32 %v1857, %v1859
    %v1861 = vrot.slane %v1847, %v1860
    %v1862 = vcombine.high %v1854, %v1854
    %v1863 = vcombine.high %v1861, %v1861
    %v1865 = vunpack.c.l.s4 1966171168
    %v1866 = vunpack.c.0.s8 %v1865
    %v1867 = vlaneseq
    %v1868 = vshrl.u32 %v1867, 7
    %v1869 = vsub.s32 %v1866, %v1868
    %v1870 = vrot.slane %v1854, %v1869
    %v1872 = vunpack.c.l.s4 1966171168
    %v1873 = vunpack.c.0.s8 %v1872
    %v1874 = vlaneseq
    %v1875 = vshrl.u32 %v1874, 7
    %v1876 = vsub.s32 %v1873, %v1875
    %v1877 = vrot.slane %v1861, %v1876
    %v1879 = vunpack.c.l.s4 1966171168
    %v1880 = vunpack.c.0.s8 %v1879
    %v1881 = vlaneseq
    %v1882 = vshrl.u32 %v1881, 7
    %v1883 = vsub.s32 %v1880, %v1882
    %v1884 = vrot.slane %v1862, %v1883
    %v1886 = vunpack.c.l.s4 1966171168
    %v1887 = vunpack.c.0.s8 %v1886
    %v1888 = vlaneseq
    %v1889 = vshrl.u32 %v1888, 7
    %v1890 = vsub.s32 %v1887, %v1889
    %v1891 = vrot.slane %v1863, %v1890
    %v1892 = vcombine.high %v1870, %v1870
    %v1893 = vcombine.high %v1877, %v1877
    %v1894 = vcombine.high %v1884, %v1884
    %v1895 = vcombine.high %v1891, %v1891
    %v1896 = vcombine.high %v1788, %v1788
    %v1898 = vunpack.c.l.s4 1966171168
    %v1899 = vunpack.c.0.s8 %v1898
    %v1900 = vlaneseq
    %v1901 = vshrl.u32 %v1900, 7
    %v1902 = vsub.s32 %v1899, %v1901
    %v1903 = vrot.slane %v1788, %v1902
    %v1905 = vunpack.c.l.s4 1966171168
    %v1906 = vunpack.c.0.s8 %v1905
    %v1907 = vlaneseq
    %v1908 = vshrl.u32 %v1907, 7
    %v1909 = vsub.s32 %v1906, %v1908
    %v1910 = vrot.slane %v1896, %v1909
    %v1911 = vcombine.high %v1903, %v1903
    %v1912 = vcombine.high %v1910, %v1910
    %v1914 = vunpack.c.l.s4 1966171168
    %v1915 = vunpack.c.0.s8 %v1914
    %v1916 = vlaneseq
    %v1917 = vshrl.u32 %v1916, 7
    %v1918 = vsub.s32 %v1915, %v1917
    %v1919 = vrot.slane %v1903, %v1918
    %v1921 = vunpack.c.l.s4 1966171168
    %v1922 = vunpack.c.0.s8 %v1921
    %v1923 = vlaneseq
    %v1924 = vshrl.u32 %v1923, 7
    %v1925 = vsub.s32 %v1922, %v1924
    %v1926 = vrot.slane %v1910, %v1925
    %v1928 = vunpack.c.l.s4 1966171168
    %v1929 = vunpack.c.0.s8 %v1928
    %v1930 = vlaneseq
    %v1931 = vshrl.u32 %v1930, 7
    %v1932 = vsub.s32 %v1929, %v1931
    %v1933 = vrot.slane %v1911, %v1932
    %v1935 = vunpack.c.l.s4 1966171168
    %v1936 = vunpack.c.0.s8 %v1935
    %v1937 = vlaneseq
    %v1938 = vshrl.u32 %v1937, 7
    %v1939 = vsub.s32 %v1936, %v1938
    %v1940 = vrot.slane %v1912, %v1939
    %v1941 = vcombine.high %v1919, %v1919
    %v1942 = vcombine.high %v1926, %v1926
    %v1943 = vcombine.high %v1933, %v1933
    %v1944 = vcombine.high %v1940, %v1940
    %v1946 = vunpack.c.l.s4 1966171168
    %v1947 = vunpack.c.0.s8 %v1946
    %v1948 = vlaneseq
    %v1949 = vshrl.u32 %v1948, 7
    %v1950 = vsub.s32 %v1947, %v1949
    %v1951 = vrot.slane %v1791, %v1950
    %v1952 = vcombine.high %v1951, %v1951
    %v1954 = vunpack.c.l.s4 1966171168
    %v1955 = vunpack.c.0.s8 %v1954
    %v1956 = vlaneseq
    %v1957 = vshrl.u32 %v1956, 7
    %v1958 = vsub.s32 %v1955, %v1957
    %v1959 = vrot.slane %v1951, %v1958
    %v1961 = vunpack.c.l.s4 1966171168
    %v1962 = vunpack.c.0.s8 %v1961
    %v1963 = vlaneseq
    %v1964 = vshrl.u32 %v1963, 7
    %v1965 = vsub.s32 %v1962, %v1964
    %v1966 = vrot.slane %v1952, %v1965
    %s1993 = scalar_lea.vmem %s4, 32
    %v1994 = vld [vmem:[%s1993] sm:$0xf]
    %v1995 = vld [vmem:[%s1993 + $0x4] sm:$0xf]
    %v1996 = vld [vmem:[%s1993 + $0x8] sm:$0xf]
    %v1997 = vld [vmem:[%s1993 + $0xc] sm:$0xf]
    %v1998 = vunpack.i.l.s16 %v173
    %v1999 = vunpack.i.l.s16 %v221
    %v2000 = vpack.i.b16 %v1442, %v1441
    %v2001 = vpack.i.b16 %v1444, %v1998
    %v2002 = vpack.i.b16 %v1999, %v1455
    %v2003 = vcombine.low %v1627, %v1628
    %v2004 = vcombine.low %v1629, %v1630
    %v2005 = vcombine.low %v1631, %v2000
    %v2006 = vcombine.low %v2001, %v1634
    %v2008 = vunpack.c.l.s4 1966171168
    %v2009 = vunpack.c.0.s8 %v2008
    %v2010 = vlaneseq
    %v2011 = vshrl.u32 %v2010, 7
    %v2012 = vsub.s32 %v2009, %v2011
    %v2013 = vrot.slane %v2003, %v2012
    %v2015 = vunpack.c.l.s4 1966171168
    %v2016 = vunpack.c.0.s8 %v2015
    %v2017 = vlaneseq
    %v2018 = vshrl.u32 %v2017, 7
    %v2019 = vsub.s32 %v2016, %v2018
    %v2020 = vrot.slane %v2004, %v2019
    %v2022 = vunpack.c.l.s4 1966171168
    %v2023 = vunpack.c.0.s8 %v2022
    %v2024 = vlaneseq
    %v2025 = vshrl.u32 %v2024, 7
    %v2026 = vsub.s32 %v2023, %v2025
    %v2027 = vrot.slane %v2005, %v2026
    %v2029 = vunpack.c.l.s4 1966171168
    %v2030 = vunpack.c.0.s8 %v2029
    %v2031 = vlaneseq
    %v2032 = vshrl.u32 %v2031, 7
    %v2033 = vsub.s32 %v2030, %v2032
    %v2034 = vrot.slane %v2006, %v2033
    %v2035 = vcombine.low %v2013, %v2020
    %v2036 = vcombine.low %v2027, %v2034
    %v2038 = vunpack.c.l.s4 1966171168
    %v2039 = vunpack.c.0.s8 %v2038
    %v2040 = vlaneseq
    %v2041 = vshrl.u32 %v2040, 7
    %v2042 = vsub.s32 %v2039, %v2041
    %v2043 = vrot.slane %v2035, %v2042
    %v2045 = vunpack.c.l.s4 1966171168
    %v2046 = vunpack.c.0.s8 %v2045
    %v2047 = vlaneseq
    %v2048 = vshrl.u32 %v2047, 7
    %v2049 = vsub.s32 %v2046, %v2048
    %v2050 = vrot.slane %v2036, %v2049
    %v2051 = vcombine.low %v2043, %v2050
    %v2052 = vcombine.low %v1635, %v1636
    %v2053 = vcombine.low %v1637, %v1638
    %v2055 = vunpack.c.l.s4 1966171168
    %v2056 = vunpack.c.0.s8 %v2055
    %v2057 = vlaneseq
    %v2058 = vshrl.u32 %v2057, 7
    %v2059 = vsub.s32 %v2056, %v2058
    %v2060 = vrot.slane %v2052, %v2059
    %v2062 = vunpack.c.l.s4 1966171168
    %v2063 = vunpack.c.0.s8 %v2062
    %v2064 = vlaneseq
    %v2065 = vshrl.u32 %v2064, 7
    %v2066 = vsub.s32 %v2063, %v2065
    %v2067 = vrot.slane %v2053, %v2066
    %v2069 = vunpack.c.l.s4 1966171168
    %v2070 = vunpack.c.0.s8 %v2069
    %v2071 = vlaneseq
    %v2072 = vshrl.u32 %v2071, 7
    %v2073 = vsub.s32 %v2070, %v2072
    %v2074 = vrot.slane %v2002, %v2073
    %v2075 = vcombine.low %v2060, %v2067
    %v2077 = vunpack.c.l.s4 1966171168
    %v2078 = vunpack.c.0.s8 %v2077
    %v2079 = vlaneseq
    %v2080 = vshrl.u32 %v2079, 7
    %v2081 = vsub.s32 %v2078, %v2080
    %v2082 = vrot.slane %v2075, %v2081
    %v2084 = vunpack.c.l.s4 1966171168
    %v2085 = vunpack.c.0.s8 %v2084
    %v2086 = vlaneseq
    %v2087 = vshrl.u32 %v2086, 7
    %v2088 = vsub.s32 %v2085, %v2087
    %v2089 = vrot.slane %v2074, %v2088
    %v2090 = vcombine.low %v2082, %v2089
    %v2095 = vunpack.c.l.b16 %v1994
    %v2096 = vunpack.c.l.b16 %v1995
    %v2097 = vunpack.c.l.b16 %v1996
    %v2098 = vunpack.c.l.b16 %v1997
    %v2099 = vpack.c.b16 %v2096, %v2095
    %v2100 = vpack.c.b16 %v2098, %v2097
    %v2104 = vsel %vm452, %v2051, 0
    %v2107 = vsel %vm452, %v2090, 0
    %2109 = vmatprep.subr.bf16.mxu0 0
    %2110 = vmatpush1.bf16.msra.mxu0 %v2099
    %2111 = vmatprep.subr.bf16.mxu0 0
    %2112 = vmatpush1.bf16.msra.mxu0 %v2100
    %2113 = vmatprep.subr.bf16.mxu0 0
    %2114 = vmatpush1.bf16.msra.mxu0 0
    %2115 = vmatprep.subr.bf16.mxu0 0
    %2116 = vmatpush1.bf16.msra.mxu0 0
    %2117 = vmatprep.subr.bf16.mxu0 0
    %2118 = vmatpush1.bf16.msra.mxu0 0
    %2119 = vmatprep.subr.bf16.mxu0 0
    %2120 = vmatpush1.bf16.msra.mxu0 0
    %2121 = vmatprep.subr.bf16.mxu0 0
    %2122 = vmatpush1.bf16.msra.mxu0 0
    %2123 = vmatprep.subr.bf16.mxu0 0
    %2124 = vmatpush1.bf16.msra.mxu0 0
    %2125 = vmatprep.subr.bf16.mxu0 0
    %2126 = vmatpush1.bf16.msra.mxu0 0
    %2127 = vmatprep.subr.bf16.mxu0 0
    %2128 = vmatpush1.bf16.msra.mxu0 0
    %2129 = vmatprep.subr.bf16.mxu0 0
    %2130 = vmatpush1.bf16.msra.mxu0 0
    %2131 = vmatprep.subr.bf16.mxu0 0
    %2132 = vmatpush1.bf16.msra.mxu0 0
    %2133 = vmatprep.subr.bf16.mxu0 0
    %2134 = vmatpush1.bf16.msra.mxu0 0
    %2135 = vmatprep.subr.bf16.mxu0 0
    %2136 = vmatpush1.bf16.msra.mxu0 0
    %2137 = vmatprep.subr.bf16.mxu0 0
    %2138 = vmatpush1.bf16.msra.mxu0 0
    %2139 = vmatprep.subr.bf16.mxu0 0
    %2140 = vmatpush1.bf16.msra.mxu0 0
    %2141 = vmatprep.mubr.bf16.mxu0 0
    %2142 = vmatmul.mubr.bf16.gmra.mrb[0].mxu0 %v2104
    %v2143 = vpop.f32.mrb[0].mxu0
    %v2144 = vadd.f32 0.0, %v2143
    %v2145 = vpop.f32.mrb[0].mxu0
    %v2146 = vpop.f32.mrb[0].mxu0
    %v2147 = vadd.f32 0.0, %v2146
    %v2148 = vpop.f32.mrb[0].mxu0
    %2149 = vmatprep.mubr.bf16.mxu0 0
    %2150 = vmatmul.mubr.bf16.gmra.mrb[0].mxu0 %v2107
    %v2151 = vpop.f32.mrb[0].mxu0
    %v2152 = vadd.f32 0.0, %v2151
    %v2153 = vpop.f32.mrb[0].mxu0
    %v2154 = vpop.f32.mrb[0].mxu0
    %v2155 = vadd.f32 0.0, %v2154
    %v2156 = vpop.f32.mrb[0].mxu0
    %2157 = vdwg.mxu0
    %v2162 = vcombine.high %v2144, %v2144
    %v2164 = vunpack.c.l.s4 1966171168
    %v2165 = vunpack.c.0.s8 %v2164
    %v2166 = vlaneseq
    %v2167 = vshrl.u32 %v2166, 7
    %v2168 = vsub.s32 %v2165, %v2167
    %v2169 = vrot.slane %v2144, %v2168
    %v2171 = vunpack.c.l.s4 1966171168
    %v2172 = vunpack.c.0.s8 %v2171
    %v2173 = vlaneseq
    %v2174 = vshrl.u32 %v2173, 7
    %v2175 = vsub.s32 %v2172, %v2174
    %v2176 = vrot.slane %v2162, %v2175
    %v2177 = vcombine.high %v2169, %v2169
    %v2178 = vcombine.high %v2176, %v2176
    %v2180 = vunpack.c.l.s4 1966171168
    %v2181 = vunpack.c.0.s8 %v2180
    %v2182 = vlaneseq
    %v2183 = vshrl.u32 %v2182, 7
    %v2184 = vsub.s32 %v2181, %v2183
    %v2185 = vrot.slane %v2169, %v2184
    %v2187 = vunpack.c.l.s4 1966171168
    %v2188 = vunpack.c.0.s8 %v2187
    %v2189 = vlaneseq
    %v2190 = vshrl.u32 %v2189, 7
    %v2191 = vsub.s32 %v2188, %v2190
    %v2192 = vrot.slane %v2176, %v2191
    %v2194 = vunpack.c.l.s4 1966171168
    %v2195 = vunpack.c.0.s8 %v2194
    %v2196 = vlaneseq
    %v2197 = vshrl.u32 %v2196, 7
    %v2198 = vsub.s32 %v2195, %v2197
    %v2199 = vrot.slane %v2177, %v2198
    %v2201 = vunpack.c.l.s4 1966171168
    %v2202 = vunpack.c.0.s8 %v2201
    %v2203 = vlaneseq
    %v2204 = vshrl.u32 %v2203, 7
    %v2205 = vsub.s32 %v2202, %v2204
    %v2206 = vrot.slane %v2178, %v2205
    %v2207 = vcombine.high %v2185, %v2185
    %v2208 = vcombine.high %v2192, %v2192
    %v2209 = vcombine.high %v2199, %v2199
    %v2210 = vcombine.high %v2206, %v2206
    %v2211 = vcombine.high %v2147, %v2147
    %v2213 = vunpack.c.l.s4 1966171168
    %v2214 = vunpack.c.0.s8 %v2213
    %v2215 = vlaneseq
    %v2216 = vshrl.u32 %v2215, 7
    %v2217 = vsub.s32 %v2214, %v2216
    %v2218 = vrot.slane %v2147, %v2217
    %v2220 = vunpack.c.l.s4 1966171168
    %v2221 = vunpack.c.0.s8 %v2220
    %v2222 = vlaneseq
    %v2223 = vshrl.u32 %v2222, 7
    %v2224 = vsub.s32 %v2221, %v2223
    %v2225 = vrot.slane %v2211, %v2224
    %v2226 = vcombine.high %v2218, %v2218
    %v2227 = vcombine.high %v2225, %v2225
    %v2229 = vunpack.c.l.s4 1966171168
    %v2230 = vunpack.c.0.s8 %v2229
    %v2231 = vlaneseq
    %v2232 = vshrl.u32 %v2231, 7
    %v2233 = vsub.s32 %v2230, %v2232
    %v2234 = vrot.slane %v2218, %v2233
    %v2236 = vunpack.c.l.s4 1966171168
    %v2237 = vunpack.c.0.s8 %v2236
    %v2238 = vlaneseq
    %v2239 = vshrl.u32 %v2238, 7
    %v2240 = vsub.s32 %v2237, %v2239
    %v2241 = vrot.slane %v2225, %v2240
    %v2243 = vunpack.c.l.s4 1966171168
    %v2244 = vunpack.c.0.s8 %v2243
    %v2245 = vlaneseq
    %v2246 = vshrl.u32 %v2245, 7
    %v2247 = vsub.s32 %v2244, %v2246
    %v2248 = vrot.slane %v2226, %v2247
    %v2250 = vunpack.c.l.s4 1966171168
    %v2251 = vunpack.c.0.s8 %v2250
    %v2252 = vlaneseq
    %v2253 = vshrl.u32 %v2252, 7
    %v2254 = vsub.s32 %v2251, %v2253
    %v2255 = vrot.slane %v2227, %v2254
    %v2256 = vcombine.high %v2234, %v2234
    %v2257 = vcombine.high %v2241, %v2241
    %v2258 = vcombine.high %v2248, %v2248
    %v2259 = vcombine.high %v2255, %v2255
    %v2260 = vcombine.high %v2152, %v2152
    %v2262 = vunpack.c.l.s4 1966171168
    %v2263 = vunpack.c.0.s8 %v2262
    %v2264 = vlaneseq
    %v2265 = vshrl.u32 %v2264, 7
    %v2266 = vsub.s32 %v2263, %v2265
    %v2267 = vrot.slane %v2152, %v2266
    %v2269 = vunpack.c.l.s4 1966171168
    %v2270 = vunpack.c.0.s8 %v2269
    %v2271 = vlaneseq
    %v2272 = vshrl.u32 %v2271, 7
    %v2273 = vsub.s32 %v2270, %v2272
    %v2274 = vrot.slane %v2260, %v2273
    %v2275 = vcombine.high %v2267, %v2267
    %v2276 = vcombine.high %v2274, %v2274
    %v2278 = vunpack.c.l.s4 1966171168
    %v2279 = vunpack.c.0.s8 %v2278
    %v2280 = vlaneseq
    %v2281 = vshrl.u32 %v2280, 7
    %v2282 = vsub.s32 %v2279, %v2281
    %v2283 = vrot.slane %v2267, %v2282
    %v2285 = vunpack.c.l.s4 1966171168
    %v2286 = vunpack.c.0.s8 %v2285
    %v2287 = vlaneseq
    %v2288 = vshrl.u32 %v2287, 7
    %v2289 = vsub.s32 %v2286, %v2288
    %v2290 = vrot.slane %v2274, %v2289
    %v2292 = vunpack.c.l.s4 1966171168
    %v2293 = vunpack.c.0.s8 %v2292
    %v2294 = vlaneseq
    %v2295 = vshrl.u32 %v2294, 7
    %v2296 = vsub.s32 %v2293, %v2295
    %v2297 = vrot.slane %v2275, %v2296
    %v2299 = vunpack.c.l.s4 1966171168
    %v2300 = vunpack.c.0.s8 %v2299
    %v2301 = vlaneseq
    %v2302 = vshrl.u32 %v2301, 7
    %v2303 = vsub.s32 %v2300, %v2302
    %v2304 = vrot.slane %v2276, %v2303
    %v2305 = vcombine.high %v2283, %v2283
    %v2306 = vcombine.high %v2290, %v2290
    %v2307 = vcombine.high %v2297, %v2297
    %v2308 = vcombine.high %v2304, %v2304
    %v2310 = vunpack.c.l.s4 1966171168
    %v2311 = vunpack.c.0.s8 %v2310
    %v2312 = vlaneseq
    %v2313 = vshrl.u32 %v2312, 7
    %v2314 = vsub.s32 %v2311, %v2313
    %v2315 = vrot.slane %v2155, %v2314
    %v2316 = vcombine.high %v2315, %v2315
    %v2318 = vunpack.c.l.s4 1966171168
    %v2319 = vunpack.c.0.s8 %v2318
    %v2320 = vlaneseq
    %v2321 = vshrl.u32 %v2320, 7
    %v2322 = vsub.s32 %v2319, %v2321
    %v2323 = vrot.slane %v2315, %v2322
    %v2325 = vunpack.c.l.s4 1966171168
    %v2326 = vunpack.c.0.s8 %v2325
    %v2327 = vlaneseq
    %v2328 = vshrl.u32 %v2327, 7
    %v2329 = vsub.s32 %v2326, %v2328
    %v2330 = vrot.slane %v2316, %v2329
    %v2357 = vadd.f32 %v1821, %v2185
    %v2358 = vadd.f32 %v1835, %v2199
    %v2359 = vadd.f32 %v1843, %v2207
    %v2360 = vadd.f32 %v1845, %v2209
    %v2361 = vadd.f32 %v1828, %v2192
    %v2362 = vadd.f32 %v1842, %v2206
    %v2363 = vadd.f32 %v1844, %v2208
    %v2364 = vadd.f32 %v1846, %v2210
    %v2365 = vadd.f32 %v1870, %v2234
    %v2366 = vadd.f32 %v1884, %v2248
    %v2367 = vadd.f32 %v1892, %v2256
    %v2368 = vadd.f32 %v1894, %v2258
    %v2369 = vadd.f32 %v1877, %v2241
    %v2370 = vadd.f32 %v1891, %v2255
    %v2371 = vadd.f32 %v1893, %v2257
    %v2372 = vadd.f32 %v1895, %v2259
    %v2373 = vadd.f32 %v1919, %v2283
    %v2374 = vadd.f32 %v1933, %v2297
    %v2375 = vadd.f32 %v1941, %v2305
    %v2376 = vadd.f32 %v1943, %v2307
    %v2377 = vadd.f32 %v1926, %v2290
    %v2378 = vadd.f32 %v1940, %v2304
    %v2379 = vadd.f32 %v1942, %v2306
    %v2380 = vadd.f32 %v1944, %v2308
    %v2381 = vadd.f32 %v1959, %v2323
    %v2382 = vadd.f32 %v1966, %v2330
    %s2383 = scalar_lea.vmem %s4, 48
    %v2384 = vld [vmem:[%s2383] sm:$0xf]
    %v2385 = vld [vmem:[%s2383 + $0x4] sm:$0xf]
    %v2386 = vld [vmem:[%s2383 + $0x8] sm:$0xf]
    %v2387 = vld [vmem:[%s2383 + $0xc] sm:$0xf]
    %v2388 = vunpack.i.h.s16 %v173
    %v2389 = vunpack.i.h.s16 %v221
    %v2390 = vpack.i.b16 %v1998, %v1442
    %v2391 = vpack.i.b16 %v1445, %v2388
    %v2392 = vpack.i.b16 %v2389, %v1999
    %v2393 = vcombine.low %v1457, %v1458
    %v2394 = vcombine.low %v1459, %v1460
    %v2395 = vcombine.low %v1461, %v2390
    %v2396 = vcombine.low %v2391, %v1464
    %v2398 = vunpack.c.l.s4 1966171168
    %v2399 = vunpack.c.0.s8 %v2398
    %v2400 = vlaneseq
    %v2401 = vshrl.u32 %v2400, 7
    %v2402 = vsub.s32 %v2399, %v2401
    %v2403 = vrot.slane %v2393, %v2402
    %v2405 = vunpack.c.l.s4 1966171168
    %v2406 = vunpack.c.0.s8 %v2405
    %v2407 = vlaneseq
    %v2408 = vshrl.u32 %v2407, 7
    %v2409 = vsub.s32 %v2406, %v2408
    %v2410 = vrot.slane %v2394, %v2409
    %v2412 = vunpack.c.l.s4 1966171168
    %v2413 = vunpack.c.0.s8 %v2412
    %v2414 = vlaneseq
    %v2415 = vshrl.u32 %v2414, 7
    %v2416 = vsub.s32 %v2413, %v2415
    %v2417 = vrot.slane %v2395, %v2416
    %v2419 = vunpack.c.l.s4 1966171168
    %v2420 = vunpack.c.0.s8 %v2419
    %v2421 = vlaneseq
    %v2422 = vshrl.u32 %v2421, 7
    %v2423 = vsub.s32 %v2420, %v2422
    %v2424 = vrot.slane %v2396, %v2423
    %v2425 = vcombine.low %v2403, %v2410
    %v2426 = vcombine.low %v2417, %v2424
    %v2428 = vunpack.c.l.s4 1966171168
    %v2429 = vunpack.c.0.s8 %v2428
    %v2430 = vlaneseq
    %v2431 = vshrl.u32 %v2430, 7
    %v2432 = vsub.s32 %v2429, %v2431
    %v2433 = vrot.slane %v2425, %v2432
    %v2435 = vunpack.c.l.s4 1966171168
    %v2436 = vunpack.c.0.s8 %v2435
    %v2437 = vlaneseq
    %v2438 = vshrl.u32 %v2437, 7
    %v2439 = vsub.s32 %v2436, %v2438
    %v2440 = vrot.slane %v2426, %v2439
    %v2441 = vcombine.low %v2433, %v2440
    %v2442 = vcombine.low %v1465, %v1466
    %v2443 = vcombine.low %v1467, %v1468
    %v2445 = vunpack.c.l.s4 1966171168
    %v2446 = vunpack.c.0.s8 %v2445
    %v2447 = vlaneseq
    %v2448 = vshrl.u32 %v2447, 7
    %v2449 = vsub.s32 %v2446, %v2448
    %v2450 = vrot.slane %v2442, %v2449
    %v2452 = vunpack.c.l.s4 1966171168
    %v2453 = vunpack.c.0.s8 %v2452
    %v2454 = vlaneseq
    %v2455 = vshrl.u32 %v2454, 7
    %v2456 = vsub.s32 %v2453, %v2455
    %v2457 = vrot.slane %v2443, %v2456
    %v2459 = vunpack.c.l.s4 1966171168
    %v2460 = vunpack.c.0.s8 %v2459
    %v2461 = vlaneseq
    %v2462 = vshrl.u32 %v2461, 7
    %v2463 = vsub.s32 %v2460, %v2462
    %v2464 = vrot.slane %v2392, %v2463
    %v2465 = vcombine.low %v2450, %v2457
    %v2467 = vunpack.c.l.s4 1966171168
    %v2468 = vunpack.c.0.s8 %v2467
    %v2469 = vlaneseq
    %v2470 = vshrl.u32 %v2469, 7
    %v2471 = vsub.s32 %v2468, %v2470
    %v2472 = vrot.slane %v2465, %v2471
    %v2474 = vunpack.c.l.s4 1966171168
    %v2475 = vunpack.c.0.s8 %v2474
    %v2476 = vlaneseq
    %v2477 = vshrl.u32 %v2476, 7
    %v2478 = vsub.s32 %v2475, %v2477
    %v2479 = vrot.slane %v2464, %v2478
    %v2480 = vcombine.low %v2472, %v2479
    %v2485 = vunpack.c.l.b16 %v2384
    %v2486 = vunpack.c.l.b16 %v2385
    %v2487 = vunpack.c.l.b16 %v2386
    %v2488 = vunpack.c.l.b16 %v2387
    %v2489 = vpack.c.b16 %v2486, %v2485
    %v2490 = vpack.c.b16 %v2488, %v2487
    %v2494 = vsel %vm452, %v2441, 0
    %v2497 = vsel %vm452, %v2480, 0
    %2499 = vmatprep.subr.bf16.mxu0 0
    %2500 = vmatpush1.bf16.msra.mxu0 %v2489
    %2501 = vmatprep.subr.bf16.mxu0 0
    %2502 = vmatpush1.bf16.msra.mxu0 %v2490
    %2503 = vmatprep.subr.bf16.mxu0 0
    %2504 = vmatpush1.bf16.msra.mxu0 0
    %2505 = vmatprep.subr.bf16.mxu0 0
    %2506 = vmatpush1.bf16.msra.mxu0 0
    %2507 = vmatprep.subr.bf16.mxu0 0
    %2508 = vmatpush1.bf16.msra.mxu0 0
    %2509 = vmatprep.subr.bf16.mxu0 0
    %2510 = vmatpush1.bf16.msra.mxu0 0
    %2511 = vmatprep.subr.bf16.mxu0 0
    %2512 = vmatpush1.bf16.msra.mxu0 0
    %2513 = vmatprep.subr.bf16.mxu0 0
    %2514 = vmatpush1.bf16.msra.mxu0 0
    %2515 = vmatprep.subr.bf16.mxu0 0
    %2516 = vmatpush1.bf16.msra.mxu0 0
    %2517 = vmatprep.subr.bf16.mxu0 0
    %2518 = vmatpush1.bf16.msra.mxu0 0
    %2519 = vmatprep.subr.bf16.mxu0 0
    %2520 = vmatpush1.bf16.msra.mxu0 0
    %2521 = vmatprep.subr.bf16.mxu0 0
    %2522 = vmatpush1.bf16.msra.mxu0 0
    %2523 = vmatprep.subr.bf16.mxu0 0
    %2524 = vmatpush1.bf16.msra.mxu0 0
    %2525 = vmatprep.subr.bf16.mxu0 0
    %2526 = vmatpush1.bf16.msra.mxu0 0
    %2527 = vmatprep.subr.bf16.mxu0 0
    %2528 = vmatpush1.bf16.msra.mxu0 0
    %2529 = vmatprep.subr.bf16.mxu0 0
    %2530 = vmatpush1.bf16.msra.mxu0 0
    %2531 = vmatprep.mubr.bf16.mxu0 0
    %2532 = vmatmul.mubr.bf16.gmra.mrb[0].mxu0 %v2494
    %v2533 = vpop.f32.mrb[0].mxu0
    %v2534 = vadd.f32 0.0, %v2533
    %v2535 = vpop.f32.mrb[0].mxu0
    %v2536 = vpop.f32.mrb[0].mxu0
    %v2537 = vadd.f32 0.0, %v2536
    %v2538 = vpop.f32.mrb[0].mxu0
    %2539 = vmatprep.mubr.bf16.mxu0 0
    %2540 = vmatmul.mubr.bf16.gmra.mrb[0].mxu0 %v2497
    %v2541 = vpop.f32.mrb[0].mxu0
    %v2542 = vadd.f32 0.0, %v2541
    %v2543 = vpop.f32.mrb[0].mxu0
    %v2544 = vpop.f32.mrb[0].mxu0
    %v2545 = vadd.f32 0.0, %v2544
    %v2546 = vpop.f32.mrb[0].mxu0
    %2547 = vdwg.mxu0
    %v2552 = vcombine.high %v2534, %v2534
    %v2554 = vunpack.c.l.s4 1966171168
    %v2555 = vunpack.c.0.s8 %v2554
    %v2556 = vlaneseq
    %v2557 = vshrl.u32 %v2556, 7
    %v2558 = vsub.s32 %v2555, %v2557
    %v2559 = vrot.slane %v2534, %v2558
    %v2561 = vunpack.c.l.s4 1966171168
    %v2562 = vunpack.c.0.s8 %v2561
    %v2563 = vlaneseq
    %v2564 = vshrl.u32 %v2563, 7
    %v2565 = vsub.s32 %v2562, %v2564
    %v2566 = vrot.slane %v2552, %v2565
    %v2567 = vcombine.high %v2559, %v2559
    %v2568 = vcombine.high %v2566, %v2566
    %v2570 = vunpack.c.l.s4 1966171168
    %v2571 = vunpack.c.0.s8 %v2570
    %v2572 = vlaneseq
    %v2573 = vshrl.u32 %v2572, 7
    %v2574 = vsub.s32 %v2571, %v2573
    %v2575 = vrot.slane %v2559, %v2574
    %v2577 = vunpack.c.l.s4 1966171168
    %v2578 = vunpack.c.0.s8 %v2577
    %v2579 = vlaneseq
    %v2580 = vshrl.u32 %v2579, 7
    %v2581 = vsub.s32 %v2578, %v2580
    %v2582 = vrot.slane %v2566, %v2581
    %v2584 = vunpack.c.l.s4 1966171168
    %v2585 = vunpack.c.0.s8 %v2584
    %v2586 = vlaneseq
    %v2587 = vshrl.u32 %v2586, 7
    %v2588 = vsub.s32 %v2585, %v2587
    %v2589 = vrot.slane %v2567, %v2588
    %v2591 = vunpack.c.l.s4 1966171168
    %v2592 = vunpack.c.0.s8 %v2591
    %v2593 = vlaneseq
    %v2594 = vshrl.u32 %v2593, 7
    %v2595 = vsub.s32 %v2592, %v2594
    %v2596 = vrot.slane %v2568, %v2595
    %v2597 = vcombine.high %v2575, %v2575
    %v2598 = vcombine.high %v2582, %v2582
    %v2599 = vcombine.high %v2589, %v2589
    %v2600 = vcombine.high %v2596, %v2596
    %v2601 = vcombine.high %v2537, %v2537
    %v2603 = vunpack.c.l.s4 1966171168
    %v2604 = vunpack.c.0.s8 %v2603
    %v2605 = vlaneseq
    %v2606 = vshrl.u32 %v2605, 7
    %v2607 = vsub.s32 %v2604, %v2606
    %v2608 = vrot.slane %v2537, %v2607
    %v2610 = vunpack.c.l.s4 1966171168
    %v2611 = vunpack.c.0.s8 %v2610
    %v2612 = vlaneseq
    %v2613 = vshrl.u32 %v2612, 7
    %v2614 = vsub.s32 %v2611, %v2613
    %v2615 = vrot.slane %v2601, %v2614
    %v2616 = vcombine.high %v2608, %v2608
    %v2617 = vcombine.high %v2615, %v2615
    %v2619 = vunpack.c.l.s4 1966171168
    %v2620 = vunpack.c.0.s8 %v2619
    %v2621 = vlaneseq
    %v2622 = vshrl.u32 %v2621, 7
    %v2623 = vsub.s32 %v2620, %v2622
    %v2624 = vrot.slane %v2608, %v2623
    %v2626 = vunpack.c.l.s4 1966171168
    %v2627 = vunpack.c.0.s8 %v2626
    %v2628 = vlaneseq
    %v2629 = vshrl.u32 %v2628, 7
    %v2630 = vsub.s32 %v2627, %v2629
    %v2631 = vrot.slane %v2615, %v2630
    %v2633 = vunpack.c.l.s4 1966171168
    %v2634 = vunpack.c.0.s8 %v2633
    %v2635 = vlaneseq
    %v2636 = vshrl.u32 %v2635, 7
    %v2637 = vsub.s32 %v2634, %v2636
    %v2638 = vrot.slane %v2616, %v2637
    %v2640 = vunpack.c.l.s4 1966171168
    %v2641 = vunpack.c.0.s8 %v2640
    %v2642 = vlaneseq
    %v2643 = vshrl.u32 %v2642, 7
    %v2644 = vsub.s32 %v2641, %v2643
    %v2645 = vrot.slane %v2617, %v2644
    %v2646 = vcombine.high %v2624, %v2624
    %v2647 = vcombine.high %v2631, %v2631
    %v2648 = vcombine.high %v2638, %v2638
    %v2649 = vcombine.high %v2645, %v2645
    %v2650 = vcombine.high %v2542, %v2542
    %v2652 = vunpack.c.l.s4 1966171168
    %v2653 = vunpack.c.0.s8 %v2652
    %v2654 = vlaneseq
    %v2655 = vshrl.u32 %v2654, 7
    %v2656 = vsub.s32 %v2653, %v2655
    %v2657 = vrot.slane %v2542, %v2656
    %v2659 = vunpack.c.l.s4 1966171168
    %v2660 = vunpack.c.0.s8 %v2659
    %v2661 = vlaneseq
    %v2662 = vshrl.u32 %v2661, 7
    %v2663 = vsub.s32 %v2660, %v2662
    %v2664 = vrot.slane %v2650, %v2663
    %v2665 = vcombine.high %v2657, %v2657
    %v2666 = vcombine.high %v2664, %v2664
    %v2668 = vunpack.c.l.s4 1966171168
    %v2669 = vunpack.c.0.s8 %v2668
    %v2670 = vlaneseq
    %v2671 = vshrl.u32 %v2670, 7
    %v2672 = vsub.s32 %v2669, %v2671
    %v2673 = vrot.slane %v2657, %v2672
    %v2675 = vunpack.c.l.s4 1966171168
    %v2676 = vunpack.c.0.s8 %v2675
    %v2677 = vlaneseq
    %v2678 = vshrl.u32 %v2677, 7
    %v2679 = vsub.s32 %v2676, %v2678
    %v2680 = vrot.slane %v2664, %v2679
    %v2682 = vunpack.c.l.s4 1966171168
    %v2683 = vunpack.c.0.s8 %v2682
    %v2684 = vlaneseq
    %v2685 = vshrl.u32 %v2684, 7
    %v2686 = vsub.s32 %v2683, %v2685
    %v2687 = vrot.slane %v2665, %v2686
    %v2689 = vunpack.c.l.s4 1966171168
    %v2690 = vunpack.c.0.s8 %v2689
    %v2691 = vlaneseq
    %v2692 = vshrl.u32 %v2691, 7
    %v2693 = vsub.s32 %v2690, %v2692
    %v2694 = vrot.slane %v2666, %v2693
    %v2695 = vcombine.high %v2673, %v2673
    %v2696 = vcombine.high %v2680, %v2680
    %v2697 = vcombine.high %v2687, %v2687
    %v2698 = vcombine.high %v2694, %v2694
    %v2700 = vunpack.c.l.s4 1966171168
    %v2701 = vunpack.c.0.s8 %v2700
    %v2702 = vlaneseq
    %v2703 = vshrl.u32 %v2702, 7
    %v2704 = vsub.s32 %v2701, %v2703
    %v2705 = vrot.slane %v2545, %v2704
    %v2706 = vcombine.high %v2705, %v2705
    %v2708 = vunpack.c.l.s4 1966171168
    %v2709 = vunpack.c.0.s8 %v2708
    %v2710 = vlaneseq
    %v2711 = vshrl.u32 %v2710, 7
    %v2712 = vsub.s32 %v2709, %v2711
    %v2713 = vrot.slane %v2705, %v2712
    %v2715 = vunpack.c.l.s4 1966171168
    %v2716 = vunpack.c.0.s8 %v2715
    %v2717 = vlaneseq
    %v2718 = vshrl.u32 %v2717, 7
    %v2719 = vsub.s32 %v2716, %v2718
    %v2720 = vrot.slane %v2706, %v2719
    %v2747 = vadd.f32 %v2357, %v2575
    %v2748 = vadd.f32 %v2358, %v2589
    %v2749 = vadd.f32 %v2359, %v2597
    %v2750 = vadd.f32 %v2360, %v2599
    %v2751 = vadd.f32 %v2361, %v2582
    %v2752 = vadd.f32 %v2362, %v2596
    %v2753 = vadd.f32 %v2363, %v2598
    %v2754 = vadd.f32 %v2364, %v2600
    %v2755 = vadd.f32 %v2365, %v2624
    %v2756 = vadd.f32 %v2366, %v2638
    %v2757 = vadd.f32 %v2367, %v2646
    %v2758 = vadd.f32 %v2368, %v2648
    %v2759 = vadd.f32 %v2369, %v2631
    %v2760 = vadd.f32 %v2370, %v2645
    %v2761 = vadd.f32 %v2371, %v2647
    %v2762 = vadd.f32 %v2372, %v2649
    %v2763 = vadd.f32 %v2373, %v2673
    %v2764 = vadd.f32 %v2374, %v2687
    %v2765 = vadd.f32 %v2375, %v2695
    %v2766 = vadd.f32 %v2376, %v2697
    %v2767 = vadd.f32 %v2377, %v2680
    %v2768 = vadd.f32 %v2378, %v2694
    %v2769 = vadd.f32 %v2379, %v2696
    %v2770 = vadd.f32 %v2380, %v2698
    %v2771 = vadd.f32 %v2381, %v2713
    %v2772 = vadd.f32 %v2382, %v2720
    %v2773 = vld [vmem:[#allocation4] sm:$0x1]
    %v2775 = vlaneseq
    %v2776 = vshrl.u32 %v2775, 7
    %v2777 = vsub.s32 0, %v2776
    %v2778 = vrot.slane %v2773, %v2777
    %v2779 = vcombine.high %v2778, %v2778
    %v2781 = vunpack.c.l.s4 1966171168
    %v2782 = vunpack.c.0.s8 %v2781
    %v2783 = vlaneseq
    %v2784 = vshrl.u32 %v2783, 7
    %v2785 = vsub.s32 %v2782, %v2784
    %v2786 = vrot.slane %v2778, %v2785
    %v2788 = vunpack.c.l.s4 1966171168
    %v2789 = vunpack.c.0.s8 %v2788
    %v2790 = vlaneseq
    %v2791 = vshrl.u32 %v2790, 7
    %v2792 = vsub.s32 %v2789, %v2791
    %v2793 = vrot.slane %v2779, %v2792
    %v2794 = vcombine.high %v2786, %v2786
    %v2795 = vcombine.high %v2793, %v2793
    %v2797 = vunpack.c.l.s4 1966171168
    %v2798 = vunpack.c.0.s8 %v2797
    %v2799 = vlaneseq
    %v2800 = vshrl.u32 %v2799, 7
    %v2801 = vsub.s32 %v2798, %v2800
    %v2802 = vrot.slane %v2786, %v2801
    %v2804 = vunpack.c.l.s4 1966171168
    %v2805 = vunpack.c.0.s8 %v2804
    %v2806 = vlaneseq
    %v2807 = vshrl.u32 %v2806, 7
    %v2808 = vsub.s32 %v2805, %v2807
    %v2809 = vrot.slane %v2793, %v2808
    %v2811 = vunpack.c.l.s4 1966171168
    %v2812 = vunpack.c.0.s8 %v2811
    %v2813 = vlaneseq
    %v2814 = vshrl.u32 %v2813, 7
    %v2815 = vsub.s32 %v2812, %v2814
    %v2816 = vrot.slane %v2794, %v2815
    %v2818 = vunpack.c.l.s4 1966171168
    %v2819 = vunpack.c.0.s8 %v2818
    %v2820 = vlaneseq
    %v2821 = vshrl.u32 %v2820, 7
    %v2822 = vsub.s32 %v2819, %v2821
    %v2823 = vrot.slane %v2795, %v2822
    %v2824 = vcombine.high %v2802, %v2802
    %v2825 = vcombine.high %v2809, %v2809
    %v2826 = vcombine.high %v2816, %v2816
    %v2827 = vcombine.high %v2823, %v2823
    %v2836 = vadd.f32 %v2747, %v2802
    %v2837 = vadd.f32 %v2748, %v2816
    %v2838 = vadd.f32 %v2749, %v2824
    %v2839 = vadd.f32 %v2750, %v2826
    %v2840 = vadd.f32 %v2751, %v2809
    %v2841 = vadd.f32 %v2752, %v2823
    %v2842 = vadd.f32 %v2753, %v2825
    %v2843 = vadd.f32 %v2754, %v2827
    %v2844 = vadd.f32 %v2755, %v2802
    %v2845 = vadd.f32 %v2756, %v2816
    %v2846 = vadd.f32 %v2757, %v2824
    %v2847 = vadd.f32 %v2758, %v2826
    %v2848 = vadd.f32 %v2759, %v2809
    %v2849 = vadd.f32 %v2760, %v2802
    %v2850 = vadd.f32 %v2761, %v2816
    %v2851 = vadd.f32 %v2762, %v2824
    %v2852 = vadd.f32 %v2763, %v2826
    %v2853 = vadd.f32 %v2764, %v2809
    %v2854 = vadd.f32 %v2765, %v2823
    %v2855 = vadd.f32 %v2766, %v2825
    %v2856 = vadd.f32 %v2767, %v2827
    %v2857 = vadd.f32 %v2768, %v2802
    %v2858 = vadd.f32 %v2769, %v2816
    %v2859 = vadd.f32 %v2770, %v2824
    %v2860 = vadd.f32 %v2771, %v2826
    %v2861 = vadd.f32 %v2772, %v2809
    %v2862 = vmax.f32 %v2836, 0.0
    %v2863 = vmax.f32 %v2837, 0.0
    %v2864 = vmax.f32 %v2838, 0.0
    %v2865 = vmax.f32 %v2839, 0.0
    %v2866 = vmax.f32 %v2840, 0.0
    %v2867 = vmax.f32 %v2841, 0.0
    %v2868 = vmax.f32 %v2842, 0.0
    %v2869 = vmax.f32 %v2843, 0.0
    %v2870 = vmax.f32 %v2844, 0.0
    %v2871 = vmax.f32 %v2845, 0.0
    %v2872 = vmax.f32 %v2846, 0.0
    %v2873 = vmax.f32 %v2847, 0.0
    %v2874 = vmax.f32 %v2848, 0.0
    %v2875 = vmax.f32 %v2849, 0.0
    %v2876 = vmax.f32 %v2850, 0.0
    %v2877 = vmax.f32 %v2851, 0.0
    %v2878 = vmax.f32 %v2852, 0.0
    %v2879 = vmax.f32 %v2853, 0.0
    %v2880 = vmax.f32 %v2854, 0.0
    %v2881 = vmax.f32 %v2855, 0.0
    %v2882 = vmax.f32 %v2856, 0.0
    %v2883 = vmax.f32 %v2857, 0.0
    %v2884 = vmax.f32 %v2858, 0.0
    %v2885 = vmax.f32 %v2859, 0.0
    %v2886 = vmax.f32 %v2860, 0.0
    %v2887 = vmax.f32 %v2861, 0.0
    %v2888 = vld [vmem:[%s6] sm:$0xff]
    %v2902 = vcombine.low %v2862, %v2863
    %v2903 = vcombine.low %v2864, %v2865
    %v2904 = vcombine.low %v2866, %v2867
    %v2905 = vcombine.low %v2868, %v2869
    %v2907 = vunpack.c.l.s4 1966171168
    %v2908 = vunpack.c.0.s8 %v2907
    %v2909 = vlaneseq
    %v2910 = vshrl.u32 %v2909, 7
    %v2911 = vsub.s32 %v2908, %v2910
    %v2912 = vrot.slane %v2902, %v2911
    %v2914 = vunpack.c.l.s4 1966171168
    %v2915 = vunpack.c.0.s8 %v2914
    %v2916 = vlaneseq
    %v2917 = vshrl.u32 %v2916, 7
    %v2918 = vsub.s32 %v2915, %v2917
    %v2919 = vrot.slane %v2903, %v2918
    %v2921 = vunpack.c.l.s4 1966171168
    %v2922 = vunpack.c.0.s8 %v2921
    %v2923 = vlaneseq
    %v2924 = vshrl.u32 %v2923, 7
    %v2925 = vsub.s32 %v2922, %v2924
    %v2926 = vrot.slane %v2904, %v2925
    %v2928 = vunpack.c.l.s4 1966171168
    %v2929 = vunpack.c.0.s8 %v2928
    %v2930 = vlaneseq
    %v2931 = vshrl.u32 %v2930, 7
    %v2932 = vsub.s32 %v2929, %v2931
    %v2933 = vrot.slane %v2905, %v2932
    %v2934 = vcombine.low %v2912, %v2919
    %v2935 = vcombine.low %v2926, %v2933
    %v2937 = vunpack.c.l.s4 1966171168
    %v2938 = vunpack.c.0.s8 %v2937
    %v2939 = vlaneseq
    %v2940 = vshrl.u32 %v2939, 7
    %v2941 = vsub.s32 %v2938, %v2940
    %v2942 = vrot.slane %v2934, %v2941
    %v2944 = vunpack.c.l.s4 1966171168
    %v2945 = vunpack.c.0.s8 %v2944
    %v2946 = vlaneseq
    %v2947 = vshrl.u32 %v2946, 7
    %v2948 = vsub.s32 %v2945, %v2947
    %v2949 = vrot.slane %v2935, %v2948
    %v2950 = vcombine.low %v2942, %v2949
    %v2951 = vcombine.low %v2870, %v2871
    %v2952 = vcombine.low %v2872, %v2873
    %v2954 = vunpack.c.l.s4 1966171168
    %v2955 = vunpack.c.0.s8 %v2954
    %v2956 = vlaneseq
    %v2957 = vshrl.u32 %v2956, 7
    %v2958 = vsub.s32 %v2955, %v2957
    %v2959 = vrot.slane %v2951, %v2958
    %v2961 = vunpack.c.l.s4 1966171168
    %v2962 = vunpack.c.0.s8 %v2961
    %v2963 = vlaneseq
    %v2964 = vshrl.u32 %v2963, 7
    %v2965 = vsub.s32 %v2962, %v2964
    %v2966 = vrot.slane %v2952, %v2965
    %v2968 = vunpack.c.l.s4 1966171168
    %v2969 = vunpack.c.0.s8 %v2968
    %v2970 = vlaneseq
    %v2971 = vshrl.u32 %v2970, 7
    %v2972 = vsub.s32 %v2969, %v2971
    %v2973 = vrot.slane %v2874, %v2972
    %v2974 = vcombine.low %v2959, %v2966
    %v2976 = vunpack.c.l.s4 1966171168
    %v2977 = vunpack.c.0.s8 %v2976
    %v2978 = vlaneseq
    %v2979 = vshrl.u32 %v2978, 7
    %v2980 = vsub.s32 %v2977, %v2979
    %v2981 = vrot.slane %v2974, %v2980
    %v2983 = vunpack.c.l.s4 1966171168
    %v2984 = vunpack.c.0.s8 %v2983
    %v2985 = vlaneseq
    %v2986 = vshrl.u32 %v2985, 7
    %v2987 = vsub.s32 %v2984, %v2986
    %v2988 = vrot.slane %v2973, %v2987
    %v2989 = vcombine.low %v2981, %v2988
    %v3004 = vcombine.low %v2875, %v2876
    %v3005 = vcombine.low %v2877, %v2878
    %v3006 = vcombine.low %v2879, %v2880
    %v3007 = vcombine.low %v2881, %v2882
    %v3009 = vunpack.c.l.s4 1966171168
    %v3010 = vunpack.c.0.s8 %v3009
    %v3011 = vlaneseq
    %v3012 = vshrl.u32 %v3011, 7
    %v3013 = vsub.s32 %v3010, %v3012
    %v3014 = vrot.slane %v3004, %v3013
    %v3016 = vunpack.c.l.s4 1966171168
    %v3017 = vunpack.c.0.s8 %v3016
    %v3018 = vlaneseq
    %v3019 = vshrl.u32 %v3018, 7
    %v3020 = vsub.s32 %v3017, %v3019
    %v3021 = vrot.slane %v3005, %v3020
    %v3023 = vunpack.c.l.s4 1966171168
    %v3024 = vunpack.c.0.s8 %v3023
    %v3025 = vlaneseq
    %v3026 = vshrl.u32 %v3025, 7
    %v3027 = vsub.s32 %v3024, %v3026
    %v3028 = vrot.slane %v3006, %v3027
    %v3030 = vunpack.c.l.s4 1966171168
    %v3031 = vunpack.c.0.s8 %v3030
    %v3032 = vlaneseq
    %v3033 = vshrl.u32 %v3032, 7
    %v3034 = vsub.s32 %v3031, %v3033
    %v3035 = vrot.slane %v3007, %v3034
    %v3036 = vcombine.low %v3014, %v3021
    %v3037 = vcombine.low %v3028, %v3035
    %v3039 = vunpack.c.l.s4 1966171168
    %v3040 = vunpack.c.0.s8 %v3039
    %v3041 = vlaneseq
    %v3042 = vshrl.u32 %v3041, 7
    %v3043 = vsub.s32 %v3040, %v3042
    %v3044 = vrot.slane %v3036, %v3043
    %v3046 = vunpack.c.l.s4 1966171168
    %v3047 = vunpack.c.0.s8 %v3046
    %v3048 = vlaneseq
    %v3049 = vshrl.u32 %v3048, 7
    %v3050 = vsub.s32 %v3047, %v3049
    %v3051 = vrot.slane %v3037, %v3050
    %v3052 = vcombine.low %v3044, %v3051
    %v3053 = vcombine.low %v2883, %v2884
    %v3054 = vcombine.low %v2885, %v2886
    %v3056 = vunpack.c.l.s4 1966171168
    %v3057 = vunpack.c.0.s8 %v3056
    %v3058 = vlaneseq
    %v3059 = vshrl.u32 %v3058, 7
    %v3060 = vsub.s32 %v3057, %v3059
    %v3061 = vrot.slane %v3053, %v3060
    %v3063 = vunpack.c.l.s4 1966171168
    %v3064 = vunpack.c.0.s8 %v3063
    %v3065 = vlaneseq
    %v3066 = vshrl.u32 %v3065, 7
    %v3067 = vsub.s32 %v3064, %v3066
    %v3068 = vrot.slane %v3054, %v3067
    %v3070 = vunpack.c.l.s4 1966171168
    %v3071 = vunpack.c.0.s8 %v3070
    %v3072 = vlaneseq
    %v3073 = vshrl.u32 %v3072, 7
    %v3074 = vsub.s32 %v3071, %v3073
    %v3075 = vrot.slane %v2887, %v3074
    %v3076 = vcombine.low %v3061, %v3068
    %v3078 = vunpack.c.l.s4 1966171168
    %v3079 = vunpack.c.0.s8 %v3078
    %v3080 = vlaneseq
    %v3081 = vshrl.u32 %v3080, 7
    %v3082 = vsub.s32 %v3079, %v3081
    %v3083 = vrot.slane %v3076, %v3082
    %v3085 = vunpack.c.l.s4 1966171168
    %v3086 = vunpack.c.0.s8 %v3085
    %v3087 = vlaneseq
    %v3088 = vshrl.u32 %v3087, 7
    %v3089 = vsub.s32 %v3086, %v3088
    %v3090 = vrot.slane %v3075, %v3089
    %v3091 = vcombine.low %v3083, %v3090
    %vm3093 = vcmask 105472
    %v3095 = vsel %vm3093, %v2888, 0
    %vm3097 = vcmask 1044480
    %v3098 = vsel %vm3097, %v2989, 0
    %v3100 = vsel %vm3097, %v3091, 0
    %3102 = vmatprep.subr.mxu0 %v3052
    %3103 = vmatpush1.msra.mxu0 %v2950
    %3104 = vmatprep.subr.mxu0 %v3100
    %3105 = vmatpush1.msra.mxu0 %v3098
    %3106 = vmatprep.subr.mxu0 0.0
    %3107 = vmatpush1.msra.mxu0 0.0
    %3108 = vmatprep.subr.mxu0 0.0
    %3109 = vmatpush1.msra.mxu0 0.0
    %3110 = vmatprep.subr.mxu0 0.0
    %3111 = vmatpush1.msra.mxu0 0.0
    %3112 = vmatprep.subr.mxu0 0.0
    %3113 = vmatpush1.msra.mxu0 0.0
    %3114 = vmatprep.subr.mxu0 0.0
    %3115 = vmatpush1.msra.mxu0 0.0
    %3116 = vmatprep.subr.mxu0 0.0
    %3117 = vmatpush1.msra.mxu0 0.0
    %3118 = vmatprep.subr.mxu0 0.0
    %3119 = vmatpush1.msra.mxu0 0.0
    %3120 = vmatprep.subr.mxu0 0.0
    %3121 = vmatpush1.msra.mxu0 0.0
    %3122 = vmatprep.subr.mxu0 0.0
    %3123 = vmatpush1.msra.mxu0 0.0
    %3124 = vmatprep.subr.mxu0 0.0
    %3125 = vmatpush1.msra.mxu0 0.0
    %3126 = vmatprep.subr.mxu0 0.0
    %3127 = vmatpush1.msra.mxu0 0.0
    %3128 = vmatprep.subr.mxu0 0.0
    %3129 = vmatpush1.msra.mxu0 0.0
    %3130 = vmatprep.subr.mxu0 0.0
    %3131 = vmatpush1.msra.mxu0 0.0
    %3132 = vmatprep.subr.mxu0 0.0
    %3133 = vmatpush1.msra.mxu0 0.0
    %3134 = vmatprep.subr.mxu0 0.0
    %3135 = vmatpush1.msra.mxu0 0.0
    %3136 = vmatprep.subr.mxu0 0.0
    %3137 = vmatpush1.msra.mxu0 0.0
    %3138 = vmatprep.subr.mxu0 0.0
    %3139 = vmatpush1.msra.mxu0 0.0
    %3140 = vmatprep.subr.mxu0 0.0
    %3141 = vmatpush1.msra.mxu0 0.0
    %3142 = vmatprep.subr.mxu0 0.0
    %3143 = vmatpush1.msra.mxu0 0.0
    %3144 = vmatprep.subr.mxu0 0.0
    %3145 = vmatpush1.msra.mxu0 0.0
    %3146 = vmatprep.subr.mxu0 0.0
    %3147 = vmatpush1.msra.mxu0 0.0
    %3148 = vmatprep.subr.mxu0 0.0
    %3149 = vmatpush1.msra.mxu0 0.0
    %3150 = vmatprep.subr.mxu0 0.0
    %3151 = vmatpush1.msra.mxu0 0.0
    %3152 = vmatprep.subr.mxu0 0.0
    %3153 = vmatpush1.msra.mxu0 0.0
    %3154 = vmatprep.subr.mxu0 0.0
    %3155 = vmatpush1.msra.mxu0 0.0
    %3156 = vmatprep.subr.mxu0 0.0
    %3157 = vmatpush1.msra.mxu0 0.0
    %3158 = vmatprep.subr.mxu0 0.0
    %3159 = vmatpush1.msra.mxu0 0.0
    %3160 = vmatprep.subr.mxu0 0.0
    %3161 = vmatpush1.msra.mxu0 0.0
    %3162 = vmatprep.subr.mxu0 0.0
    %3163 = vmatpush1.msra.mxu0 0.0
    %3164 = vmatprep.subr.mxu0 0.0
    %3165 = vmatpush1.msra.mxu0 0.0
    %3166 = vmatprep.mubr.f32.mxu0 0.0
    %3167 = vmatmul.mubr.f32.gmra.mrb[0].mxu0 %v3095
    %v3168 = vpop.f32.mrb[0].mxu0
    %v3169 = vadd.f32 %v1273, %v3168
    %v3170 = vpop.f32.mrb[0].mxu0
    %v3171 = vadd.f32 %v1274, %v3170
    %3172 = vdwg.mxu0
    %v3173 = vcombine.high %v3169, 0.0
    %v3175 = vunpack.c.l.s4 1983009808
    %v3176 = vunpack.c.0.s8 %v3175
    %v3177 = vlaneseq
    %v3178 = vshrl.u32 %v3177, 7
    %v3179 = vsub.s32 %v3176, %v3178
    %v3180 = vrot.slane %v3169, %v3179
    %v3182 = vunpack.c.l.s4 1983009808
    %v3183 = vunpack.c.0.s8 %v3182
    %v3184 = vlaneseq
    %v3185 = vshrl.u32 %v3184, 7
    %v3186 = vsub.s32 %v3183, %v3185
    %v3187 = vrot.slane %v3173, %v3186
    %v3188 = vcombine.high %v3171, 0.0
    %v3190 = vunpack.c.l.s4 1983009808
    %v3191 = vunpack.c.0.s8 %v3190
    %v3192 = vlaneseq
    %v3193 = vshrl.u32 %v3192, 7
    %v3194 = vsub.s32 %v3191, %v3193
    %v3195 = vrot.slane %v3171, %v3194
    %v3197 = vunpack.c.l.s4 1983009808
    %v3198 = vunpack.c.0.s8 %v3197
    %v3199 = vlaneseq
    %v3200 = vshrl.u32 %v3199, 7
    %v3201 = vsub.s32 %v3198, %v3200
    %v3202 = vrot.slane %v3188, %v3201
    %v3203 = vcombine.low %v3180, %v3195
    %v3204 = vcombine.high %v3180, %v3195
    %v3206 = vunpack.c.l.s4 1934713408
    %v3207 = vunpack.c.0.s8 %v3206
    %v3208 = vlaneseq
    %v3209 = vshrl.u32 %v3208, 7
    %v3210 = vsub.s32 %v3207, %v3209
    %v3211 = vrot.slane %v3203, %v3210
    %v3213 = vunpack.c.l.s4 1934713408
    %v3214 = vunpack.c.0.s8 %v3213
    %v3215 = vlaneseq
    %v3216 = vshrl.u32 %v3215, 7
    %v3217 = vsub.s32 %v3214, %v3216
    %v3218 = vrot.slane %v3204, %v3217
    %v3219 = vcombine.low %v3187, %v3202
    %v3220 = vcombine.high %v3187, %v3202
    %v3222 = vunpack.c.l.s4 1934713408
    %v3223 = vunpack.c.0.s8 %v3222
    %v3224 = vlaneseq
    %v3225 = vshrl.u32 %v3224, 7
    %v3226 = vsub.s32 %v3223, %v3225
    %v3227 = vrot.slane %v3219, %v3226
    %v3229 = vunpack.c.l.s4 1934713408
    %v3230 = vunpack.c.0.s8 %v3229
    %v3231 = vlaneseq
    %v3232 = vshrl.u32 %v3231, 7
    %v3233 = vsub.s32 %v3230, %v3232
    %v3234 = vrot.slane %v3220, %v3233
    %v3235 = vcombine.high %v3211, 0.0
    %v3236 = vcombine.high %v3218, 0.0
    %v3237 = vcombine.high %v3227, 0.0
    %v3238 = vcombine.high %v3234, 0.0
    %v3239 = vld [vmem:[%s7] sm:$0xf]
    %v3240 = vld [vmem:[%s7 + $0x4] sm:$0xf]
    %v3241 = vld [vmem:[%s7 + $0x8] sm:$0xf]
    %v3242 = vld [vmem:[%s7 + $0xc] sm:$0xf]
    %s3243 = scalar_lea.vmem %s7, 16
    %v3244 = vld [vmem:[%s3243] sm:$0xf]
    %v3245 = vld [vmem:[%s3243 + $0x4] sm:$0xf]
    %v3246 = vld [vmem:[%s3243 + $0x8] sm:$0xf]
    %v3247 = vld [vmem:[%s3243 + $0xc] sm:$0xf]
    %v3249 = vunpack.c.l.s4 1983009808
    %v3250 = vunpack.c.0.s8 %v3249
    %v3251 = vlaneseq
    %v3252 = vshrl.u32 %v3251, 7
    %v3253 = vsub.s32 %v3250, %v3252
    %v3254 = vrot.slane %v109, %v3253
    %v3255 = vcombine.high %v3254, %v3254
    %v3257 = vunpack.c.l.s4 1983009808
    %v3258 = vunpack.c.0.s8 %v3257
    %v3259 = vlaneseq
    %v3260 = vshrl.u32 %v3259, 7
    %v3261 = vsub.s32 %v3258, %v3260
    %v3262 = vrot.slane %v110, %v3261
    %v3263 = vcombine.high %v3262, %v3262
    %v3265 = vunpack.c.l.s4 1983009808
    %v3266 = vunpack.c.0.s8 %v3265
    %v3267 = vlaneseq
    %v3268 = vshrl.u32 %v3267, 7
    %v3269 = vsub.s32 %v3266, %v3268
    %v3270 = vrot.slane %v111, %v3269
    %v3271 = vcombine.high %v3270, %v3270
    %v3273 = vunpack.c.l.s4 1983009808
    %v3274 = vunpack.c.0.s8 %v3273
    %v3275 = vlaneseq
    %v3276 = vshrl.u32 %v3275, 7
    %v3277 = vsub.s32 %v3274, %v3276
    %v3278 = vrot.slane %v112, %v3277
    %v3279 = vcombine.high %v3278, %v3278
    %vm3280 = vsmask.f32 1280
    %vm3281 = vsmask.f32 3336
    %vm3282 = vmor %vm3280, %vm3281
    %vm3283 = vsmask.f32 5392
    %vm3284 = vmor %vm3282, %vm3283
    %vm3285 = vsmask.f32 7448
    %vm3286 = vmor %vm3284, %vm3285
    %v3288 = vshrl.u32 %v3254, 16
    %v3290 = vrot.slane %v3288, 6
    %v3291 = vshll.u32 %v3254, 16
    %v3293 = vrot.slane %v3291, 7
    %v3294 = vor.u32 %v3290, %v3293
    %v3295 = vrot.slane %v3294, 2
    %v3297 = vshll.u32 %v3255, 16
    %v3299 = vrot.slane %v3297, 7
    %v3300 = vsel %vm3286, %v3295, %v3299
    %v3301 = vshrl.u32 %v3255, 16
    %v3303 = vrot.slane %v3301, 6
    %v3304 = vor.u32 %v3303, %v3299
    %v3305 = vrot.slane %v3304, 2
    %v3307 = vshll.u32 %v3262, 16
    %v3309 = vrot.slane %v3307, 7
    %v3310 = vsel %vm3286, %v3305, %v3309
    %v3311 = vshrl.u32 %v3262, 16
    %v3313 = vrot.slane %v3311, 6
    %v3314 = vor.u32 %v3313, %v3309
    %v3315 = vrot.slane %v3314, 2
    %v3317 = vshll.u32 %v3263, 16
    %v3319 = vrot.slane %v3317, 7
    %v3320 = vsel %vm3286, %v3315, %v3319
    %v3322 = vshrl.u32 %v3270, 16
    %v3324 = vrot.slane %v3322, 6
    %v3325 = vshll.u32 %v3270, 16
    %v3327 = vrot.slane %v3325, 7
    %v3328 = vor.u32 %v3324, %v3327
    %v3329 = vrot.slane %v3328, 2
    %v3331 = vshll.u32 %v3271, 16
    %v3333 = vrot.slane %v3331, 7
    %v3334 = vsel %vm3286, %v3329, %v3333
    %v3335 = vshrl.u32 %v3271, 16
    %v3337 = vrot.slane %v3335, 6
    %v3338 = vor.u32 %v3337, %v3333
    %v3339 = vrot.slane %v3338, 2
    %v3341 = vshll.u32 %v3278, 16
    %v3343 = vrot.slane %v3341, 7
    %v3344 = vsel %vm3286, %v3339, %v3343
    %v3345 = vshrl.u32 %v3278, 16
    %v3347 = vrot.slane %v3345, 6
    %v3348 = vor.u32 %v3347, %v3343
    %v3349 = vrot.slane %v3348, 2
    %v3351 = vshll.u32 %v3279, 16
    %v3353 = vrot.slane %v3351, 7
    %v3354 = vsel %vm3286, %v3349, %v3353
    %v3355 = vcombine.low %v3300, %v3310
    %v3356 = vcombine.low %v3320, %v3334
    %v3358 = vunpack.c.l.s4 1983009808
    %v3359 = vunpack.c.0.s8 %v3358
    %v3360 = vlaneseq
    %v3361 = vshrl.u32 %v3360, 7
    %v3362 = vsub.s32 %v3359, %v3361
    %v3363 = vrot.slane %v3355, %v3362
    %v3365 = vunpack.c.l.s4 1983009808
    %v3366 = vunpack.c.0.s8 %v3365
    %v3367 = vlaneseq
    %v3368 = vshrl.u32 %v3367, 7
    %v3369 = vsub.s32 %v3366, %v3368
    %v3370 = vrot.slane %v3356, %v3369
    %v3371 = vcombine.low %v3363, %v3370
    %v3372 = vcombine.low %v3344, %v3354
    %v3374 = vunpack.c.l.s4 1983009808
    %v3375 = vunpack.c.0.s8 %v3374
    %v3376 = vlaneseq
    %v3377 = vshrl.u32 %v3376, 7
    %v3378 = vsub.s32 %v3375, %v3377
    %v3379 = vrot.slane %v3372, %v3378
    %v3384 = vunpack.c.l.b16 %v3244
    %v3385 = vunpack.c.l.b16 %v3245
    %v3386 = vunpack.c.l.b16 %v3246
    %v3387 = vunpack.c.l.b16 %v3247
    %v3388 = vpack.c.b16 %v3385, %v3384
    %v3389 = vpack.c.b16 %v3387, %v3386
    %v3393 = vsel %vm452, %v3371, 0
    %v3396 = vsel %vm452, %v3379, 0
    %3398 = vmatprep.subr.bf16.mxu0 0
    %3399 = vmatpush1.bf16.msra.mxu0 %v3388
    %3400 = vmatprep.subr.bf16.mxu0 0
    %3401 = vmatpush1.bf16.msra.mxu0 %v3389
    %3402 = vmatprep.subr.bf16.mxu0 0
    %3403 = vmatpush1.bf16.msra.mxu0 0
    %3404 = vmatprep.subr.bf16.mxu0 0
    %3405 = vmatpush1.bf16.msra.mxu0 0
    %3406 = vmatprep.subr.bf16.mxu0 0
    %3407 = vmatpush1.bf16.msra.mxu0 0
    %3408 = vmatprep.subr.bf16.mxu0 0
    %3409 = vmatpush1.bf16.msra.mxu0 0
    %3410 = vmatprep.subr.bf16.mxu0 0
    %3411 = vmatpush1.bf16.msra.mxu0 0
    %3412 = vmatprep.subr.bf16.mxu0 0
    %3413 = vmatpush1.bf16.msra.mxu0 0
    %3414 = vmatprep.subr.bf16.mxu0 0
    %3415 = vmatpush1.bf16.msra.mxu0 0
    %3416 = vmatprep.subr.bf16.mxu0 0
    %3417 = vmatpush1.bf16.msra.mxu0 0
    %3418 = vmatprep.subr.bf16.mxu0 0
    %3419 = vmatpush1.bf16.msra.mxu0 0
    %3420 = vmatprep.subr.bf16.mxu0 0
    %3421 = vmatpush1.bf16.msra.mxu0 0
    %3422 = vmatprep.subr.bf16.mxu0 0
    %3423 = vmatpush1.bf16.msra.mxu0 0
    %3424 = vmatprep.subr.bf16.mxu0 0
    %3425 = vmatpush1.bf16.msra.mxu0 0
    %3426 = vmatprep.subr.bf16.mxu0 0
    %3427 = vmatpush1.bf16.msra.mxu0 0
    %3428 = vmatprep.subr.bf16.mxu0 0
    %3429 = vmatpush1.bf16.msra.mxu0 0
    %3430 = vmatprep.mubr.bf16.mxu0 0
    %3431 = vmatmul.mubr.bf16.gmra.mrb[0].mxu0 %v3393
    %v3432 = vpop.f32.mrb[0].mxu0
    %v3433 = vadd.f32 0.0, %v3432
    %v3434 = vpop.f32.mrb[0].mxu0
    %v3435 = vpop.f32.mrb[0].mxu0
    %v3436 = vadd.f32 0.0, %v3435
    %v3437 = vpop.f32.mrb[0].mxu0
    %3438 = vmatprep.mubr.bf16.mxu0 0
    %3439 = vmatmul.mubr.bf16.gmra.mrb[0].mxu0 %v3396
    %v3440 = vpop.f32.mrb[0].mxu0
    %v3441 = vadd.f32 0.0, %v3440
    %v3442 = vpop.f32.mrb[0].mxu0
    %v3443 = vpop.f32.mrb[0].mxu0
    %v3444 = vpop.f32.mrb[0].mxu0
    %3445 = vdwg.mxu0
    %v3446 = vcombine.low %v3254, %v3255
    %v3447 = vcombine.low %v3262, %v3270
    %v3449 = vunpack.c.l.s4 1983009808
    %v3450 = vunpack.c.0.s8 %v3449
    %v3451 = vlaneseq
    %v3452 = vshrl.u32 %v3451, 7
    %v3453 = vsub.s32 %v3450, %v3452
    %v3454 = vrot.slane %v3446, %v3453
    %v3456 = vunpack.c.l.s4 1983009808
    %v3457 = vunpack.c.0.s8 %v3456
    %v3458 = vlaneseq
    %v3459 = vshrl.u32 %v3458, 7
    %v3460 = vsub.s32 %v3457, %v3459
    %v3461 = vrot.slane %v3447, %v3460
    %v3462 = vcombine.low %v3454, %v3461
    %v3463 = vcombine.low %v3271, %v3278
    %v3465 = vunpack.c.l.s4 1983009808
    %v3466 = vunpack.c.0.s8 %v3465
    %v3467 = vlaneseq
    %v3468 = vshrl.u32 %v3467, 7
    %v3469 = vsub.s32 %v3466, %v3468
    %v3470 = vrot.slane %v3463, %v3469
    %v3475 = vunpack.c.l.b16 %v3239
    %v3476 = vunpack.c.l.b16 %v3240
    %v3477 = vunpack.c.l.b16 %v3241
    %v3478 = vunpack.c.l.b16 %v3242
    %v3479 = vpack.c.b16 %v3476, %v3475
    %v3480 = vpack.c.b16 %v3478, %v3477
    %v3484 = vsel %vm452, %v3462, 0
    %v3487 = vsel %vm452, %v3470, 0
    %3489 = vmatprep.subr.bf16.mxu0 0
    %3490 = vmatpush1.bf16.msra.mxu0 %v3479
    %3491 = vmatprep.subr.bf16.mxu0 0
    %3492 = vmatpush1.bf16.msra.mxu0 %v3480
    %3493 = vmatprep.subr.bf16.mxu0 0
    %3494 = vmatpush1.bf16.msra.mxu0 0
    %3495 = vmatprep.subr.bf16.mxu0 0
    %3496 = vmatpush1.bf16.msra.mxu0 0
    %3497 = vmatprep.subr.bf16.mxu0 0
    %3498 = vmatpush1.bf16.msra.mxu0 0
    %3499 = vmatprep.subr.bf16.mxu0 0
    %3500 = vmatpush1.bf16.msra.mxu0 0
    %3501 = vmatprep.subr.bf16.mxu0 0
    %3502 = vmatpush1.bf16.msra.mxu0 0
    %3503 = vmatprep.subr.bf16.mxu0 0
    %3504 = vmatpush1.bf16.msra.mxu0 0
    %3505 = vmatprep.subr.bf16.mxu0 0
    %3506 = vmatpush1.bf16.msra.mxu0 0
    %3507 = vmatprep.subr.bf16.mxu0 0
    %3508 = vmatpush1.bf16.msra.mxu0 0
    %3509 = vmatprep.subr.bf16.mxu0 0
    %3510 = vmatpush1.bf16.msra.mxu0 0
    %3511 = vmatprep.subr.bf16.mxu0 0
    %3512 = vmatpush1.bf16.msra.mxu0 0
    %3513 = vmatprep.subr.bf16.mxu0 0
    %3514 = vmatpush1.bf16.msra.mxu0 0
    %3515 = vmatprep.subr.bf16.mxu0 0
    %3516 = vmatpush1.bf16.msra.mxu0 0
    %3517 = vmatprep.subr.bf16.mxu0 0
    %3518 = vmatpush1.bf16.msra.mxu0 0
    %3519 = vmatprep.subr.bf16.mxu0 0
    %3520 = vmatpush1.bf16.msra.mxu0 0
    %3521 = vmatprep.mubr.bf16.mxu0 0
    %3522 = vmatmul.mubr.bf16.gmra.mrb[0].mxu0 %v3484
    %v3523 = vpop.f32.mrb[0].mxu0
    %v3524 = vadd.f32 %v3433, %v3523
    %v3525 = vpop.f32.mrb[0].mxu0
    %v3526 = vpop.f32.mrb[0].mxu0
    %v3527 = vadd.f32 %v3436, %v3526
    %v3528 = vpop.f32.mrb[0].mxu0
    %3529 = vmatprep.mubr.bf16.mxu0 0
    %3530 = vmatmul.mubr.bf16.gmra.mrb[0].mxu0 %v3487
    %v3531 = vpop.f32.mrb[0].mxu0
    %v3532 = vadd.f32 %v3441, %v3531
    %v3533 = vpop.f32.mrb[0].mxu0
    %v3534 = vpop.f32.mrb[0].mxu0
    %v3535 = vpop.f32.mrb[0].mxu0
    %3536 = vdwg.mxu0
    %v3540 = vcombine.high %v3524, %v3524
    %v3541 = vcombine.high %v3527, %v3527
    %v3542 = vcombine.high %v3532, %v3532
    %s3546 = scalar_lea.vmem %s7, 32
    %v3547 = vld [vmem:[%s3546] sm:$0xf]
    %v3548 = vld [vmem:[%s3546 + $0x4] sm:$0xf]
    %v3549 = vld [vmem:[%s3546 + $0x8] sm:$0xf]
    %v3550 = vld [vmem:[%s3546 + $0xc] sm:$0xf]
    %vm3551 = vcmask 1040384
    %vm3552 = vcmask 1042434
    %vm3553 = vmor %vm3551, %vm3552
    %vm3554 = vcmask 1044484
    %vm3555 = vmor %vm3553, %vm3554
    %vm3556 = vcmask 1046534
    %vm3557 = vmor %vm3555, %vm3556
    %v3558 = vrot.slane %v3254, 7
    %v3559 = vrot.slane %v3558, 2
    %v3560 = vrot.slane %v3255, 7
    %v3561 = vsel %vm3557, %v3559, %v3560
    %v3562 = vrot.slane %v3560, 2
    %v3563 = vrot.slane %v3262, 7
    %v3564 = vsel %vm3557, %v3562, %v3563
    %v3565 = vrot.slane %v3563, 2
    %v3566 = vrot.slane %v3263, 7
    %v3567 = vsel %vm3557, %v3565, %v3566
    %v3568 = vrot.slane %v3270, 7
    %v3569 = vrot.slane %v3568, 2
    %v3570 = vrot.slane %v3271, 7
    %v3571 = vsel %vm3557, %v3569, %v3570
    %v3572 = vrot.slane %v3570, 2
    %v3573 = vrot.slane %v3278, 7
    %v3574 = vsel %vm3557, %v3572, %v3573
    %v3575 = vrot.slane %v3573, 2
    %v3576 = vrot.slane %v3279, 7
    %v3577 = vsel %vm3557, %v3575, %v3576
    %v3578 = vcombine.low %v3561, %v3564
    %v3579 = vcombine.low %v3567, %v3571
    %v3581 = vunpack.c.l.s4 1983009808
    %v3582 = vunpack.c.0.s8 %v3581
    %v3583 = vlaneseq
    %v3584 = vshrl.u32 %v3583, 7
    %v3585 = vsub.s32 %v3582, %v3584
    %v3586 = vrot.slane %v3578, %v3585
    %v3588 = vunpack.c.l.s4 1983009808
    %v3589 = vunpack.c.0.s8 %v3588
    %v3590 = vlaneseq
    %v3591 = vshrl.u32 %v3590, 7
    %v3592 = vsub.s32 %v3589, %v3591
    %v3593 = vrot.slane %v3579, %v3592
    %v3594 = vcombine.low %v3586, %v3593
    %v3595 = vcombine.low %v3574, %v3577
    %v3597 = vunpack.c.l.s4 1983009808
    %v3598 = vunpack.c.0.s8 %v3597
    %v3599 = vlaneseq
    %v3600 = vshrl.u32 %v3599, 7
    %v3601 = vsub.s32 %v3598, %v3600
    %v3602 = vrot.slane %v3595, %v3601
    %v3607 = vunpack.c.l.b16 %v3547
    %v3608 = vunpack.c.l.b16 %v3548
    %v3609 = vunpack.c.l.b16 %v3549
    %v3610 = vunpack.c.l.b16 %v3550
    %v3611 = vpack.c.b16 %v3608, %v3607
    %v3612 = vpack.c.b16 %v3610, %v3609
    %v3616 = vsel %vm452, %v3594, 0
    %v3619 = vsel %vm452, %v3602, 0
    %3621 = vmatprep.subr.bf16.mxu0 0
    %3622 = vmatpush1.bf16.msra.mxu0 %v3611
    %3623 = vmatprep.subr.bf16.mxu0 0
    %3624 = vmatpush1.bf16.msra.mxu0 %v3612
    %3625 = vmatprep.subr.bf16.mxu0 0
    %3626 = vmatpush1.bf16.msra.mxu0 0
    %3627 = vmatprep.subr.bf16.mxu0 0
    %3628 = vmatpush1.bf16.msra.mxu0 0
    %3629 = vmatprep.subr.bf16.mxu0 0
    %3630 = vmatpush1.bf16.msra.mxu0 0
    %3631 = vmatprep.subr.bf16.mxu0 0
    %3632 = vmatpush1.bf16.msra.mxu0 0
    %3633 = vmatprep.subr.bf16.mxu0 0
    %3634 = vmatpush1.bf16.msra.mxu0 0
    %3635 = vmatprep.subr.bf16.mxu0 0
    %3636 = vmatpush1.bf16.msra.mxu0 0
    %3637 = vmatprep.subr.bf16.mxu0 0
    %3638 = vmatpush1.bf16.msra.mxu0 0
    %3639 = vmatprep.subr.bf16.mxu0 0
    %3640 = vmatpush1.bf16.msra.mxu0 0
    %3641 = vmatprep.subr.bf16.mxu0 0
    %3642 = vmatpush1.bf16.msra.mxu0 0
    %3643 = vmatprep.subr.bf16.mxu0 0
    %3644 = vmatpush1.bf16.msra.mxu0 0
    %3645 = vmatprep.subr.bf16.mxu0 0
    %3646 = vmatpush1.bf16.msra.mxu0 0
    %3647 = vmatprep.subr.bf16.mxu0 0
    %3648 = vmatpush1.bf16.msra.mxu0 0
    %3649 = vmatprep.subr.bf16.mxu0 0
    %3650 = vmatpush1.bf16.msra.mxu0 0
    %3651 = vmatprep.subr.bf16.mxu0 0
    %3652 = vmatpush1.bf16.msra.mxu0 0
    %3653 = vmatprep.mubr.bf16.mxu0 0
    %3654 = vmatmul.mubr.bf16.gmra.mrb[0].mxu0 %v3616
    %v3655 = vpop.f32.mrb[0].mxu0
    %v3656 = vadd.f32 0.0, %v3655
    %v3657 = vpop.f32.mrb[0].mxu0
    %v3658 = vpop.f32.mrb[0].mxu0
    %v3659 = vadd.f32 0.0, %v3658
    %v3660 = vpop.f32.mrb[0].mxu0
    %3661 = vmatprep.mubr.bf16.mxu0 0
    %3662 = vmatmul.mubr.bf16.gmra.mrb[0].mxu0 %v3619
    %v3663 = vpop.f32.mrb[0].mxu0
    %v3664 = vadd.f32 0.0, %v3663
    %v3665 = vpop.f32.mrb[0].mxu0
    %v3666 = vpop.f32.mrb[0].mxu0
    %v3667 = vpop.f32.mrb[0].mxu0
    %3668 = vdwg.mxu0
    %v3672 = vcombine.high %v3656, %v3656
    %v3673 = vcombine.high %v3659, %v3659
    %v3674 = vcombine.high %v3664, %v3664
    %v3678 = vadd.f32 %v3524, %v3656
    %v3679 = vadd.f32 %v3540, %v3672
    %v3680 = vadd.f32 %v3527, %v3659
    %v3681 = vadd.f32 %v3541, %v3673
    %v3682 = vadd.f32 %v3532, %v3664
    %v3683 = vadd.f32 %v3542, %v3674
    %s3684 = scalar_lea.vmem %s7, 48
    %v3685 = vld [vmem:[%s3684] sm:$0xf]
    %v3686 = vld [vmem:[%s3684 + $0x4] sm:$0xf]
    %v3687 = vld [vmem:[%s3684 + $0x8] sm:$0xf]
    %v3688 = vld [vmem:[%s3684 + $0xc] sm:$0xf]
    %vm3689 = vmor %vm222, %vm225
    %vm3690 = vmor %vm3689, %vm229
    %vm3691 = vmor %vm3690, %vm233
    %v3692 = vrot.slane %v3288, 7
    %v3693 = vrot.slane %v3692, 2
    %v3694 = vrot.slane %v3301, 7
    %v3695 = vor.u32 %v3694, %v3297
    %v3696 = vsel %vm3691, %v3693, %v3695
    %v3697 = vrot.slane %v3694, 2
    %v3698 = vrot.slane %v3311, 7
    %v3699 = vor.u32 %v3698, %v3307
    %v3700 = vsel %vm3691, %v3697, %v3699
    %v3701 = vrot.slane %v3698, 2
    %v3702 = vshrl.u32 %v3263, 16
    %v3704 = vrot.slane %v3702, 7
    %v3705 = vor.u32 %v3704, %v3317
    %v3706 = vsel %vm3691, %v3701, %v3705
    %v3707 = vrot.slane %v3322, 7
    %v3708 = vrot.slane %v3707, 2
    %v3709 = vrot.slane %v3335, 7
    %v3710 = vor.u32 %v3709, %v3331
    %v3711 = vsel %vm3691, %v3708, %v3710
    %v3712 = vrot.slane %v3709, 2
    %v3713 = vrot.slane %v3345, 7
    %v3714 = vor.u32 %v3713, %v3341
    %v3715 = vsel %vm3691, %v3712, %v3714
    %v3716 = vrot.slane %v3713, 2
    %v3717 = vshrl.u32 %v3279, 16
    %v3719 = vrot.slane %v3717, 7
    %v3720 = vor.u32 %v3719, %v3351
    %v3721 = vsel %vm3691, %v3716, %v3720
    %v3722 = vcombine.low %v3696, %v3700
    %v3723 = vcombine.low %v3706, %v3711
    %v3725 = vunpack.c.l.s4 1983009808
    %v3726 = vunpack.c.0.s8 %v3725
    %v3727 = vlaneseq
    %v3728 = vshrl.u32 %v3727, 7
    %v3729 = vsub.s32 %v3726, %v3728
    %v3730 = vrot.slane %v3722, %v3729
    %v3732 = vunpack.c.l.s4 1983009808
    %v3733 = vunpack.c.0.s8 %v3732
    %v3734 = vlaneseq
    %v3735 = vshrl.u32 %v3734, 7
    %v3736 = vsub.s32 %v3733, %v3735
    %v3737 = vrot.slane %v3723, %v3736
    %v3738 = vcombine.low %v3730, %v3737
    %v3739 = vcombine.low %v3715, %v3721
    %v3741 = vunpack.c.l.s4 1983009808
    %v3742 = vunpack.c.0.s8 %v3741
    %v3743 = vlaneseq
    %v3744 = vshrl.u32 %v3743, 7
    %v3745 = vsub.s32 %v3742, %v3744
    %v3746 = vrot.slane %v3739, %v3745
    %v3751 = vunpack.c.l.b16 %v3685
    %v3752 = vunpack.c.l.b16 %v3686
    %v3753 = vunpack.c.l.b16 %v3687
    %v3754 = vunpack.c.l.b16 %v3688
    %v3755 = vpack.c.b16 %v3752, %v3751
    %v3756 = vpack.c.b16 %v3754, %v3753
    %v3760 = vsel %vm452, %v3738, 0
    %v3763 = vsel %vm452, %v3746, 0
    %3765 = vmatprep.subr.bf16.mxu0 0
    %3766 = vmatpush1.bf16.msra.mxu0 %v3755
    %3767 = vmatprep.subr.bf16.mxu0 0
    %3768 = vmatpush1.bf16.msra.mxu0 %v3756
    %3769 = vmatprep.subr.bf16.mxu0 0
    %3770 = vmatpush1.bf16.msra.mxu0 0
    %3771 = vmatprep.subr.bf16.mxu0 0
    %3772 = vmatpush1.bf16.msra.mxu0 0
    %3773 = vmatprep.subr.bf16.mxu0 0
    %3774 = vmatpush1.bf16.msra.mxu0 0
    %3775 = vmatprep.subr.bf16.mxu0 0
    %3776 = vmatpush1.bf16.msra.mxu0 0
    %3777 = vmatprep.subr.bf16.mxu0 0
    %3778 = vmatpush1.bf16.msra.mxu0 0
    %3779 = vmatprep.subr.bf16.mxu0 0
    %3780 = vmatpush1.bf16.msra.mxu0 0
    %3781 = vmatprep.subr.bf16.mxu0 0
    %3782 = vmatpush1.bf16.msra.mxu0 0
    %3783 = vmatprep.subr.bf16.mxu0 0
    %3784 = vmatpush1.bf16.msra.mxu0 0
    %3785 = vmatprep.subr.bf16.mxu0 0
    %3786 = vmatpush1.bf16.msra.mxu0 0
    %3787 = vmatprep.subr.bf16.mxu0 0
    %3788 = vmatpush1.bf16.msra.mxu0 0
    %3789 = vmatprep.subr.bf16.mxu0 0
    %3790 = vmatpush1.bf16.msra.mxu0 0
    %3791 = vmatprep.subr.bf16.mxu0 0
    %3792 = vmatpush1.bf16.msra.mxu0 0
    %3793 = vmatprep.subr.bf16.mxu0 0
    %3794 = vmatpush1.bf16.msra.mxu0 0
    %3795 = vmatprep.subr.bf16.mxu0 0
    %3796 = vmatpush1.bf16.msra.mxu0 0
    %3797 = vmatprep.mubr.bf16.mxu0 0
    %3798 = vmatmul.mubr.bf16.gmra.mrb[0].mxu0 %v3760
    %v3799 = vpop.f32.mrb[0].mxu0
    %v3800 = vadd.f32 0.0, %v3799
    %v3801 = vpop.f32.mrb[0].mxu0
    %v3802 = vpop.f32.mrb[0].mxu0
    %v3803 = vadd.f32 0.0, %v3802
    %v3804 = vpop.f32.mrb[0].mxu0
    %3805 = vmatprep.mubr.bf16.mxu0 0
    %3806 = vmatmul.mubr.bf16.gmra.mrb[0].mxu0 %v3763
    %v3807 = vpop.f32.mrb[0].mxu0
    %v3808 = vadd.f32 0.0, %v3807
    %v3809 = vpop.f32.mrb[0].mxu0
    %v3810 = vpop.f32.mrb[0].mxu0
    %v3811 = vpop.f32.mrb[0].mxu0
    %3812 = vdwg.mxu0
    %v3816 = vcombine.high %v3800, %v3800
    %v3817 = vcombine.high %v3803, %v3803
    %v3818 = vcombine.high %v3808, %v3808
    %v3822 = vadd.f32 %v3678, %v3800
    %v3823 = vadd.f32 %v3679, %v3816
    %v3824 = vadd.f32 %v3680, %v3803
    %v3825 = vadd.f32 %v3681, %v3817
    %v3826 = vadd.f32 %v3682, %v3808
    %v3827 = vadd.f32 %v3683, %v3818
    %s3828 = scalar_lea.vmem %s7, 64
    %v3829 = vld [vmem:[%s3828] sm:$0xf]
    %v3830 = vld [vmem:[%s3828 + $0x4] sm:$0xf]
    %v3831 = vld [vmem:[%s3828 + $0x8] sm:$0xf]
    %v3832 = vld [vmem:[%s3828 + $0xc] sm:$0xf]
    %v3833 = vcombine.low %v3255, %v3262
    %v3834 = vcombine.low %v3263, %v3271
    %v3836 = vunpack.c.l.s4 1983009808
    %v3837 = vunpack.c.0.s8 %v3836
    %v3838 = vlaneseq
    %v3839 = vshrl.u32 %v3838, 7
    %v3840 = vsub.s32 %v3837, %v3839
    %v3841 = vrot.slane %v3833, %v3840
    %v3843 = vunpack.c.l.s4 1983009808
    %v3844 = vunpack.c.0.s8 %v3843
    %v3845 = vlaneseq
    %v3846 = vshrl.u32 %v3845, 7
    %v3847 = vsub.s32 %v3844, %v3846
    %v3848 = vrot.slane %v3834, %v3847
    %v3849 = vcombine.low %v3841, %v3848
    %v3850 = vcombine.low %v3278, %v3279
    %v3852 = vunpack.c.l.s4 1983009808
    %v3853 = vunpack.c.0.s8 %v3852
    %v3854 = vlaneseq
    %v3855 = vshrl.u32 %v3854, 7
    %v3856 = vsub.s32 %v3853, %v3855
    %v3857 = vrot.slane %v3850, %v3856
    %v3862 = vunpack.c.l.b16 %v3829
    %v3863 = vunpack.c.l.b16 %v3830
    %v3864 = vunpack.c.l.b16 %v3831
    %v3865 = vunpack.c.l.b16 %v3832
    %v3866 = vpack.c.b16 %v3863, %v3862
    %v3867 = vpack.c.b16 %v3865, %v3864
    %v3871 = vsel %vm452, %v3849, 0
    %v3874 = vsel %vm452, %v3857, 0
    %3876 = vmatprep.subr.bf16.mxu0 0
    %3877 = vmatpush1.bf16.msra.mxu0 %v3866
    %3878 = vmatprep.subr.bf16.mxu0 0
    %3879 = vmatpush1.bf16.msra.mxu0 %v3867
    %3880 = vmatprep.subr.bf16.mxu0 0
    %3881 = vmatpush1.bf16.msra.mxu0 0
    %3882 = vmatprep.subr.bf16.mxu0 0
    %3883 = vmatpush1.bf16.msra.mxu0 0
    %3884 = vmatprep.subr.bf16.mxu0 0
    %3885 = vmatpush1.bf16.msra.mxu0 0
    %3886 = vmatprep.subr.bf16.mxu0 0
    %3887 = vmatpush1.bf16.msra.mxu0 0
    %3888 = vmatprep.subr.bf16.mxu0 0
    %3889 = vmatpush1.bf16.msra.mxu0 0
    %3890 = vmatprep.subr.bf16.mxu0 0
    %3891 = vmatpush1.bf16.msra.mxu0 0
    %3892 = vmatprep.subr.bf16.mxu0 0
    %3893 = vmatpush1.bf16.msra.mxu0 0
    %3894 = vmatprep.subr.bf16.mxu0 0
    %3895 = vmatpush1.bf16.msra.mxu0 0
    %3896 = vmatprep.subr.bf16.mxu0 0
    %3897 = vmatpush1.bf16.msra.mxu0 0
    %3898 = vmatprep.subr.bf16.mxu0 0
    %3899 = vmatpush1.bf16.msra.mxu0 0
    %3900 = vmatprep.subr.bf16.mxu0 0
    %3901 = vmatpush1.bf16.msra.mxu0 0
    %3902 = vmatprep.subr.bf16.mxu0 0
    %3903 = vmatpush1.bf16.msra.mxu0 0
    %3904 = vmatprep.subr.bf16.mxu0 0
    %3905 = vmatpush1.bf16.msra.mxu0 0
    %3906 = vmatprep.subr.bf16.mxu0 0
    %3907 = vmatpush1.bf16.msra.mxu0 0
    %3908 = vmatprep.mubr.bf16.mxu0 0
    %3909 = vmatmul.mubr.bf16.gmra.mrb[0].mxu0 %v3871
    %v3910 = vpop.f32.mrb[0].mxu0
    %v3911 = vadd.f32 0.0, %v3910
    %v3912 = vpop.f32.mrb[0].mxu0
    %v3913 = vpop.f32.mrb[0].mxu0
    %v3914 = vadd.f32 0.0, %v3913
    %v3915 = vpop.f32.mrb[0].mxu0
    %3916 = vmatprep.mubr.bf16.mxu0 0
    %3917 = vmatmul.mubr.bf16.gmra.mrb[0].mxu0 %v3874
    %v3918 = vpop.f32.mrb[0].mxu0
    %v3919 = vadd.f32 0.0, %v3918
    %v3920 = vpop.f32.mrb[0].mxu0
    %v3921 = vpop.f32.mrb[0].mxu0
    %v3922 = vpop.f32.mrb[0].mxu0
    %3923 = vdwg.mxu0
    %v3927 = vcombine.high %v3911, %v3911
    %v3928 = vcombine.high %v3914, %v3914
    %v3929 = vcombine.high %v3919, %v3919
    %v3933 = vadd.f32 %v3822, %v3911
    %v3934 = vadd.f32 %v3823, %v3927
    %v3935 = vadd.f32 %v3824, %v3914
    %v3936 = vadd.f32 %v3825, %v3928
    %v3937 = vadd.f32 %v3826, %v3919
    %v3938 = vadd.f32 %v3827, %v3929
    %v3939 = vld [vmem:[#allocation6] sm:$0x1]
    %v3941 = vlaneseq
    %v3942 = vshrl.u32 %v3941, 7
    %v3943 = vsub.s32 0, %v3942
    %v3944 = vrot.slane %v3939, %v3943
    %v3946 = vcombine.high %v3944, %v3944
    %v3948 = vadd.f32 %v3933, %v3944
    %v3949 = vadd.f32 %v3934, %v3946
    %v3950 = vadd.f32 %v3935, %v3944
    %v3951 = vadd.f32 %v3936, %v3944
    %v3952 = vadd.f32 %v3937, %v3946
    %v3953 = vadd.f32 %v3938, %v3944
    %v3954 = vld [vmem:[%s9] sm:$0xff]
    %v3955 = vmax.f32 %v3948, 0.0
    %v3957 = vunpack.c.l.s4 1983009808
    %v3958 = vunpack.c.0.s8 %v3957
    %v3959 = vlaneseq
    %v3960 = vshrl.u32 %v3959, 7
    %v3961 = vsub.s32 %v3958, %v3960
    %v3962 = vrot.slane %v3955, %v3961
    %v3963 = vmax.f32 %v3951, 0.0
    %v3965 = vunpack.c.l.s4 1983009808
    %v3966 = vunpack.c.0.s8 %v3965
    %v3967 = vlaneseq
    %v3968 = vshrl.u32 %v3967, 7
    %v3969 = vsub.s32 %v3966, %v3968
    %v3970 = vrot.slane %v3963, %v3969
    %v3971 = vcombine.low %v3962, %v3970
    %v3972 = vcombine.high %v3962, %v3970
    %v3974 = vunpack.c.l.s4 1934713408
    %v3975 = vunpack.c.0.s8 %v3974
    %v3976 = vlaneseq
    %v3977 = vshrl.u32 %v3976, 7
    %v3978 = vsub.s32 %v3975, %v3977
    %v3979 = vrot.slane %v3971, %v3978
    %v3981 = vunpack.c.l.s4 1934713408
    %v3982 = vunpack.c.0.s8 %v3981
    %v3983 = vlaneseq
    %v3984 = vshrl.u32 %v3983, 7
    %v3985 = vsub.s32 %v3982, %v3984
    %v3986 = vrot.slane %v3972, %v3985
    %v3987 = vcombine.high %v3979, 0.0
    %v3988 = vcombine.high %v3986, 0.0
    %v3989 = vmax.f32 %v3949, 0.0
    %v3991 = vunpack.c.l.s4 1983009808
    %v3992 = vunpack.c.0.s8 %v3991
    %v3993 = vlaneseq
    %v3994 = vshrl.u32 %v3993, 7
    %v3995 = vsub.s32 %v3992, %v3994
    %v3996 = vrot.slane %v3989, %v3995
    %v3997 = vmax.f32 %v3952, 0.0
    %v3999 = vunpack.c.l.s4 1983009808
    %v4000 = vunpack.c.0.s8 %v3999
    %v4001 = vlaneseq
    %v4002 = vshrl.u32 %v4001, 7
    %v4003 = vsub.s32 %v4000, %v4002
    %v4004 = vrot.slane %v3997, %v4003
    %v4005 = vcombine.low %v3996, %v4004
    %v4006 = vcombine.high %v3996, %v4004
    %v4008 = vunpack.c.l.s4 1934713408
    %v4009 = vunpack.c.0.s8 %v4008
    %v4010 = vlaneseq
    %v4011 = vshrl.u32 %v4010, 7
    %v4012 = vsub.s32 %v4009, %v4011
    %v4013 = vrot.slane %v4005, %v4012
    %v4015 = vunpack.c.l.s4 1934713408
    %v4016 = vunpack.c.0.s8 %v4015
    %v4017 = vlaneseq
    %v4018 = vshrl.u32 %v4017, 7
    %v4019 = vsub.s32 %v4016, %v4018
    %v4020 = vrot.slane %v4006, %v4019
    %v4021 = vcombine.high %v4013, 0.0
    %v4022 = vcombine.high %v4020, 0.0
    %v4023 = vmax.f32 %v3950, 0.0
    %v4025 = vunpack.c.l.s4 1983009808
    %v4026 = vunpack.c.0.s8 %v4025
    %v4027 = vlaneseq
    %v4028 = vshrl.u32 %v4027, 7
    %v4029 = vsub.s32 %v4026, %v4028
    %v4030 = vrot.slane %v4023, %v4029
    %v4031 = vmax.f32 %v3953, 0.0
    %v4033 = vunpack.c.l.s4 1983009808
    %v4034 = vunpack.c.0.s8 %v4033
    %v4035 = vlaneseq
    %v4036 = vshrl.u32 %v4035, 7
    %v4037 = vsub.s32 %v4034, %v4036
    %v4038 = vrot.slane %v4031, %v4037
    %v4039 = vcombine.low %v4030, %v4038
    %v4040 = vcombine.high %v4030, %v4038
    %v4042 = vunpack.c.l.s4 1934713408
    %v4043 = vunpack.c.0.s8 %v4042
    %v4044 = vlaneseq
    %v4045 = vshrl.u32 %v4044, 7
    %v4046 = vsub.s32 %v4043, %v4045
    %v4047 = vrot.slane %v4039, %v4046
    %v4049 = vunpack.c.l.s4 1934713408
    %v4050 = vunpack.c.0.s8 %v4049
    %v4051 = vlaneseq
    %v4052 = vshrl.u32 %v4051, 7
    %v4053 = vsub.s32 %v4050, %v4052
    %v4054 = vrot.slane %v4040, %v4053
    %v4055 = vcombine.high %v4047, 0.0
    %v4056 = vcombine.high %v4054, 0.0
    %v4057 = vcombine.low %v3979, %v3986
    %v4059 = vunpack.c.l.s4 1983009808
    %v4060 = vunpack.c.0.s8 %v4059
    %v4061 = vlaneseq
    %v4062 = vshrl.u32 %v4061, 7
    %v4063 = vsub.s32 %v4060, %v4062
    %v4064 = vrot.slane %v4057, %v4063
    %v4065 = vcombine.low %v3987, %v3988
    %v4067 = vunpack.c.l.s4 1983009808
    %v4068 = vunpack.c.0.s8 %v4067
    %v4069 = vlaneseq
    %v4070 = vshrl.u32 %v4069, 7
    %v4071 = vsub.s32 %v4068, %v4070
    %v4072 = vrot.slane %v4065, %v4071
    %v4073 = vcombine.low %v4064, %v4072
    %v4075 = vunpack.c.l.s4 1934713408
    %v4076 = vunpack.c.0.s8 %v4075
    %v4077 = vlaneseq
    %v4078 = vshrl.u32 %v4077, 7
    %v4079 = vsub.s32 %v4076, %v4078
    %v4080 = vrot.slane %v4073, %v4079
    %v4081 = vcombine.high %v4080, 0.0
    %v4082 = vcombine.low %v4013, %v4020
    %v4084 = vunpack.c.l.s4 1983009808
    %v4085 = vunpack.c.0.s8 %v4084
    %v4086 = vlaneseq
    %v4087 = vshrl.u32 %v4086, 7
    %v4088 = vsub.s32 %v4085, %v4087
    %v4089 = vrot.slane %v4082, %v4088
    %v4090 = vcombine.low %v4021, %v4022
    %v4092 = vunpack.c.l.s4 1983009808
    %v4093 = vunpack.c.0.s8 %v4092
    %v4094 = vlaneseq
    %v4095 = vshrl.u32 %v4094, 7
    %v4096 = vsub.s32 %v4093, %v4095
    %v4097 = vrot.slane %v4090, %v4096
    %v4098 = vcombine.low %v4089, %v4097
    %v4100 = vunpack.c.l.s4 1934713408
    %v4101 = vunpack.c.0.s8 %v4100
    %v4102 = vlaneseq
    %v4103 = vshrl.u32 %v4102, 7
    %v4104 = vsub.s32 %v4101, %v4103
    %v4105 = vrot.slane %v4098, %v4104
    %v4106 = vcombine.high %v4105, 0.0
    %v4107 = vcombine.low %v4047, %v4054
    %v4109 = vunpack.c.l.s4 1983009808
    %v4110 = vunpack.c.0.s8 %v4109
    %v4111 = vlaneseq
    %v4112 = vshrl.u32 %v4111, 7
    %v4113 = vsub.s32 %v4110, %v4112
    %v4114 = vrot.slane %v4107, %v4113
    %v4115 = vcombine.low %v4055, %v4056
    %v4117 = vunpack.c.l.s4 1983009808
    %v4118 = vunpack.c.0.s8 %v4117
    %v4119 = vlaneseq
    %v4120 = vshrl.u32 %v4119, 7
    %v4121 = vsub.s32 %v4118, %v4120
    %v4122 = vrot.slane %v4115, %v4121
    %v4123 = vcombine.low %v4114, %v4122
    %v4125 = vunpack.c.l.s4 1934713408
    %v4126 = vunpack.c.0.s8 %v4125
    %v4127 = vlaneseq
    %v4128 = vshrl.u32 %v4127, 7
    %v4129 = vsub.s32 %v4126, %v4128
    %v4130 = vrot.slane %v4123, %v4129
    %v4131 = vcombine.high %v4130, 0.0
    %v4135 = vcombine.low %v4080, %v4105
    %v4140 = vcombine.low %v4081, %v4106
    %vm4142 = vcmask 97280
    %v4144 = vsel %vm4142, %v3954, 0
    %vm4146 = vcmask 1043456
    %v4147 = vsel %vm4146, %v4130, 0
    %v4149 = vsel %vm4146, %v4131, 0
    %4151 = vmatprep.subr.mxu0 %v4140
    %4152 = vmatpush1.msra.mxu0 %v4135
    %4153 = vmatprep.subr.mxu0 %v4149
    %4154 = vmatpush1.msra.mxu0 %v4147
    %4155 = vmatprep.subr.mxu0 0.0
    %4156 = vmatpush1.msra.mxu0 0.0
    %4157 = vmatprep.subr.mxu0 0.0
    %4158 = vmatpush1.msra.mxu0 0.0
    %4159 = vmatprep.subr.mxu0 0.0
    %4160 = vmatpush1.msra.mxu0 0.0
    %4161 = vmatprep.subr.mxu0 0.0
    %4162 = vmatpush1.msra.mxu0 0.0
    %4163 = vmatprep.subr.mxu0 0.0
    %4164 = vmatpush1.msra.mxu0 0.0
    %4165 = vmatprep.subr.mxu0 0.0
    %4166 = vmatpush1.msra.mxu0 0.0
    %4167 = vmatprep.subr.mxu0 0.0
    %4168 = vmatpush1.msra.mxu0 0.0
    %4169 = vmatprep.subr.mxu0 0.0
    %4170 = vmatpush1.msra.mxu0 0.0
    %4171 = vmatprep.subr.mxu0 0.0
    %4172 = vmatpush1.msra.mxu0 0.0
    %4173 = vmatprep.subr.mxu0 0.0
    %4174 = vmatpush1.msra.mxu0 0.0
    %4175 = vmatprep.subr.mxu0 0.0
    %4176 = vmatpush1.msra.mxu0 0.0
    %4177 = vmatprep.subr.mxu0 0.0
    %4178 = vmatpush1.msra.mxu0 0.0
    %4179 = vmatprep.subr.mxu0 0.0
    %4180 = vmatpush1.msra.mxu0 0.0
    %4181 = vmatprep.subr.mxu0 0.0
    %4182 = vmatpush1.msra.mxu0 0.0
    %4183 = vmatprep.subr.mxu0 0.0
    %4184 = vmatpush1.msra.mxu0 0.0
    %4185 = vmatprep.subr.mxu0 0.0
    %4186 = vmatpush1.msra.mxu0 0.0
    %4187 = vmatprep.subr.mxu0 0.0
    %4188 = vmatpush1.msra.mxu0 0.0
    %4189 = vmatprep.subr.mxu0 0.0
    %4190 = vmatpush1.msra.mxu0 0.0
    %4191 = vmatprep.subr.mxu0 0.0
    %4192 = vmatpush1.msra.mxu0 0.0
    %4193 = vmatprep.subr.mxu0 0.0
    %4194 = vmatpush1.msra.mxu0 0.0
    %4195 = vmatprep.subr.mxu0 0.0
    %4196 = vmatpush1.msra.mxu0 0.0
    %4197 = vmatprep.subr.mxu0 0.0
    %4198 = vmatpush1.msra.mxu0 0.0
    %4199 = vmatprep.subr.mxu0 0.0
    %4200 = vmatpush1.msra.mxu0 0.0
    %4201 = vmatprep.subr.mxu0 0.0
    %4202 = vmatpush1.msra.mxu0 0.0
    %4203 = vmatprep.subr.mxu0 0.0
    %4204 = vmatpush1.msra.mxu0 0.0
    %4205 = vmatprep.subr.mxu0 0.0
    %4206 = vmatpush1.msra.mxu0 0.0
    %4207 = vmatprep.subr.mxu0 0.0
    %4208 = vmatpush1.msra.mxu0 0.0
    %4209 = vmatprep.subr.mxu0 0.0
    %4210 = vmatpush1.msra.mxu0 0.0
    %4211 = vmatprep.subr.mxu0 0.0
    %4212 = vmatpush1.msra.mxu0 0.0
    %4213 = vmatprep.subr.mxu0 0.0
    %4214 = vmatpush1.msra.mxu0 0.0
    %4215 = vmatprep.mubr.f32.mxu0 0.0
    %4216 = vmatmul.mubr.f32.gmra.mrb[0].mxu0 %v4144
    %v4217 = vpop.f32.mrb[0].mxu0
    %v4218 = vadd.f32 %v1273, %v4217
    %v4219 = vpop.f32.mrb[0].mxu0
    %v4220 = vadd.f32 %v1274, %v4219
    %4221 = vdwg.mxu0
    %v4222 = vcombine.high %v4218, 0.0
    %v4224 = vunpack.c.l.s4 1983009808
    %v4225 = vunpack.c.0.s8 %v4224
    %v4226 = vlaneseq
    %v4227 = vshrl.u32 %v4226, 7
    %v4228 = vsub.s32 %v4225, %v4227
    %v4229 = vrot.slane %v4218, %v4228
    %v4231 = vunpack.c.l.s4 1983009808
    %v4232 = vunpack.c.0.s8 %v4231
    %v4233 = vlaneseq
    %v4234 = vshrl.u32 %v4233, 7
    %v4235 = vsub.s32 %v4232, %v4234
    %v4236 = vrot.slane %v4222, %v4235
    %v4237 = vcombine.high %v4220, 0.0
    %v4239 = vunpack.c.l.s4 1983009808
    %v4240 = vunpack.c.0.s8 %v4239
    %v4241 = vlaneseq
    %v4242 = vshrl.u32 %v4241, 7
    %v4243 = vsub.s32 %v4240, %v4242
    %v4244 = vrot.slane %v4220, %v4243
    %v4246 = vunpack.c.l.s4 1983009808
    %v4247 = vunpack.c.0.s8 %v4246
    %v4248 = vlaneseq
    %v4249 = vshrl.u32 %v4248, 7
    %v4250 = vsub.s32 %v4247, %v4249
    %v4251 = vrot.slane %v4237, %v4250
    %v4252 = vcombine.low %v4229, %v4244
    %v4253 = vcombine.high %v4229, %v4244
    %v4255 = vunpack.c.l.s4 1934713408
    %v4256 = vunpack.c.0.s8 %v4255
    %v4257 = vlaneseq
    %v4258 = vshrl.u32 %v4257, 7
    %v4259 = vsub.s32 %v4256, %v4258
    %v4260 = vrot.slane %v4252, %v4259
    %v4262 = vunpack.c.l.s4 1934713408
    %v4263 = vunpack.c.0.s8 %v4262
    %v4264 = vlaneseq
    %v4265 = vshrl.u32 %v4264, 7
    %v4266 = vsub.s32 %v4263, %v4265
    %v4267 = vrot.slane %v4253, %v4266
    %v4268 = vcombine.low %v4236, %v4251
    %v4269 = vcombine.high %v4236, %v4251
    %v4271 = vunpack.c.l.s4 1934713408
    %v4272 = vunpack.c.0.s8 %v4271
    %v4273 = vlaneseq
    %v4274 = vshrl.u32 %v4273, 7
    %v4275 = vsub.s32 %v4272, %v4274
    %v4276 = vrot.slane %v4268, %v4275
    %v4278 = vunpack.c.l.s4 1934713408
    %v4279 = vunpack.c.0.s8 %v4278
    %v4280 = vlaneseq
    %v4281 = vshrl.u32 %v4280, 7
    %v4282 = vsub.s32 %v4279, %v4281
    %v4283 = vrot.slane %v4269, %v4282
    %v4284 = vcombine.high %v4260, 0.0
    %v4285 = vcombine.high %v4267, 0.0
    %v4286 = vcombine.high %v4276, 0.0
    %v4287 = vcombine.high %v4283, 0.0
    %v4288 = vpack.c.bf16 %v1393, %v1393
    %v4289 = vpack.c.bf16 %v1417, %v1417
    %v4290 = vpack.c.bf16 %v1400, %v1400
    %v4291 = vpack.c.bf16 %v1418, %v1418
    %v4292 = vpack.c.bf16 %v1409, %v1409
    %v4293 = vpack.c.bf16 %v1419, %v1419
    %v4294 = vpack.c.bf16 %v1416, %v1416
    %v4295 = vpack.c.bf16 %v1420, %v1420
    %v4296 = vpack.c.bf16 %v3211, %v3211
    %v4297 = vpack.c.bf16 %v3235, %v3235
    %v4298 = vpack.c.bf16 %v3218, %v3218
    %v4299 = vpack.c.bf16 %v3236, %v3236
    %v4300 = vpack.c.bf16 %v3227, %v3227
    %v4301 = vpack.c.bf16 %v3237, %v3237
    %v4302 = vpack.c.bf16 %v3234, %v3234
    %v4303 = vpack.c.bf16 %v3238, %v3238
    %v4304 = vpack.c.bf16 %v4260, %v4260
    %v4305 = vpack.c.bf16 %v4284, %v4284
    %v4306 = vpack.c.bf16 %v4267, %v4267
    %v4307 = vpack.c.bf16 %v4285, %v4285
    %v4308 = vpack.c.bf16 %v4276, %v4276
    %v4309 = vpack.c.bf16 %v4286, %v4286
    %v4310 = vpack.c.bf16 %v4283, %v4283
    %v4311 = vpack.c.bf16 %v4287, %v4287
    %v4312 = vld [vmem:[%s10] sm:$0xf]
    %v4313 = vld [vmem:[%s10 + $0x4] sm:$0xf]
    %v4314 = vld [vmem:[%s10 + $0x8] sm:$0xf]
    %v4315 = vld [vmem:[%s10 + $0xc] sm:$0xf]
    %v4316 = vld [vmem:[%s10 + $0x10] sm:$0xf]
    %v4317 = vld [vmem:[%s10 + $0x14] sm:$0xf]
    %v4318 = vld [vmem:[%s10 + $0x18] sm:$0xf]
    %v4319 = vld [vmem:[%s10 + $0x1c] sm:$0xf]
    %v4320 = vld [vmem:[%s10 + $0x20] sm:$0xf]
    %v4321 = vld [vmem:[%s10 + $0x24] sm:$0xf]
    %v4322 = vld [vmem:[%s10 + $0x28] sm:$0xf]
    %v4323 = vld [vmem:[%s10 + $0x2c] sm:$0xf]
    %v4324 = vld [vmem:[%s10 + $0x30] sm:$0xf]
    %v4325 = vld [vmem:[%s10 + $0x34] sm:$0xf]
    %v4326 = vld [vmem:[%s10 + $0x38] sm:$0xf]
    %v4327 = vld [vmem:[%s10 + $0x3c] sm:$0xf]
    %v4328 = vld [vmem:[#allocation7] sm:$0x1]
    %v4330 = vlaneseq
    %v4331 = vshrl.u32 %v4330, 7
    %v4332 = vsub.s32 0, %v4331
    %v4333 = vrot.slane %v4328, %v4332
    %v4358 = vcombine.low %v4288, %v4289
    %v4359 = vcombine.low %v4290, %v4291
    %v4360 = vcombine.low %v4292, %v4293
    %v4361 = vcombine.low %v4294, %v4295
    %v4363 = vunpack.c.l.s4 1966171168
    %v4364 = vunpack.c.0.s8 %v4363
    %v4365 = vlaneseq
    %v4366 = vshrl.u32 %v4365, 7
    %v4367 = vsub.s32 %v4364, %v4366
    %v4368 = vrot.slane %v4358, %v4367
    %v4370 = vunpack.c.l.s4 1966171168
    %v4371 = vunpack.c.0.s8 %v4370
    %v4372 = vlaneseq
    %v4373 = vshrl.u32 %v4372, 7
    %v4374 = vsub.s32 %v4371, %v4373
    %v4375 = vrot.slane %v4359, %v4374
    %v4377 = vunpack.c.l.s4 1966171168
    %v4378 = vunpack.c.0.s8 %v4377
    %v4379 = vlaneseq
    %v4380 = vshrl.u32 %v4379, 7
    %v4381 = vsub.s32 %v4378, %v4380
    %v4382 = vrot.slane %v4360, %v4381
    %v4384 = vunpack.c.l.s4 1966171168
    %v4385 = vunpack.c.0.s8 %v4384
    %v4386 = vlaneseq
    %v4387 = vshrl.u32 %v4386, 7
    %v4388 = vsub.s32 %v4385, %v4387
    %v4389 = vrot.slane %v4361, %v4388
    %v4390 = vcombine.low %v4368, %v4375
    %v4391 = vcombine.low %v4382, %v4389
    %v4393 = vunpack.c.l.s4 1966171168
    %v4394 = vunpack.c.0.s8 %v4393
    %v4395 = vlaneseq
    %v4396 = vshrl.u32 %v4395, 7
    %v4397 = vsub.s32 %v4394, %v4396
    %v4398 = vrot.slane %v4390, %v4397
    %v4400 = vunpack.c.l.s4 1966171168
    %v4401 = vunpack.c.0.s8 %v4400
    %v4402 = vlaneseq
    %v4403 = vshrl.u32 %v4402, 7
    %v4404 = vsub.s32 %v4401, %v4403
    %v4405 = vrot.slane %v4391, %v4404
    %v4406 = vcombine.low %v4398, %v4405
    %v4407 = vcombine.low %v4296, %v4297
    %v4408 = vcombine.low %v4298, %v4299
    %v4409 = vcombine.low %v4300, %v4301
    %v4410 = vcombine.low %v4302, %v4303
    %v4412 = vunpack.c.l.s4 1966171168
    %v4413 = vunpack.c.0.s8 %v4412
    %v4414 = vlaneseq
    %v4415 = vshrl.u32 %v4414, 7
    %v4416 = vsub.s32 %v4413, %v4415
    %v4417 = vrot.slane %v4407, %v4416
    %v4419 = vunpack.c.l.s4 1966171168
    %v4420 = vunpack.c.0.s8 %v4419
    %v4421 = vlaneseq
    %v4422 = vshrl.u32 %v4421, 7
    %v4423 = vsub.s32 %v4420, %v4422
    %v4424 = vrot.slane %v4408, %v4423
    %v4426 = vunpack.c.l.s4 1966171168
    %v4427 = vunpack.c.0.s8 %v4426
    %v4428 = vlaneseq
    %v4429 = vshrl.u32 %v4428, 7
    %v4430 = vsub.s32 %v4427, %v4429
    %v4431 = vrot.slane %v4409, %v4430
    %v4433 = vunpack.c.l.s4 1966171168
    %v4434 = vunpack.c.0.s8 %v4433
    %v4435 = vlaneseq
    %v4436 = vshrl.u32 %v4435, 7
    %v4437 = vsub.s32 %v4434, %v4436
    %v4438 = vrot.slane %v4410, %v4437
    %v4439 = vcombine.low %v4417, %v4424
    %v4440 = vcombine.low %v4431, %v4438
    %v4442 = vunpack.c.l.s4 1966171168
    %v4443 = vunpack.c.0.s8 %v4442
    %v4444 = vlaneseq
    %v4445 = vshrl.u32 %v4444, 7
    %v4446 = vsub.s32 %v4443, %v4445
    %v4447 = vrot.slane %v4439, %v4446
    %v4449 = vunpack.c.l.s4 1966171168
    %v4450 = vunpack.c.0.s8 %v4449
    %v4451 = vlaneseq
    %v4452 = vshrl.u32 %v4451, 7
    %v4453 = vsub.s32 %v4450, %v4452
    %v4454 = vrot.slane %v4440, %v4453
    %v4455 = vcombine.low %v4447, %v4454
    %v4456 = vcombine.low %v4304, %v4305
    %v4457 = vcombine.low %v4306, %v4307
    %v4458 = vcombine.low %v4308, %v4309
    %v4459 = vcombine.low %v4310, %v4311
    %v4461 = vunpack.c.l.s4 1966171168
    %v4462 = vunpack.c.0.s8 %v4461
    %v4463 = vlaneseq
    %v4464 = vshrl.u32 %v4463, 7
    %v4465 = vsub.s32 %v4462, %v4464
    %v4466 = vrot.slane %v4456, %v4465
    %v4468 = vunpack.c.l.s4 1966171168
    %v4469 = vunpack.c.0.s8 %v4468
    %v4470 = vlaneseq
    %v4471 = vshrl.u32 %v4470, 7
    %v4472 = vsub.s32 %v4469, %v4471
    %v4473 = vrot.slane %v4457, %v4472
    %v4475 = vunpack.c.l.s4 1966171168
    %v4476 = vunpack.c.0.s8 %v4475
    %v4477 = vlaneseq
    %v4478 = vshrl.u32 %v4477, 7
    %v4479 = vsub.s32 %v4476, %v4478
    %v4480 = vrot.slane %v4458, %v4479
    %v4482 = vunpack.c.l.s4 1966171168
    %v4483 = vunpack.c.0.s8 %v4482
    %v4484 = vlaneseq
    %v4485 = vshrl.u32 %v4484, 7
    %v4486 = vsub.s32 %v4483, %v4485
    %v4487 = vrot.slane %v4459, %v4486
    %v4488 = vcombine.low %v4466, %v4473
    %v4489 = vcombine.low %v4480, %v4487
    %v4491 = vunpack.c.l.s4 1966171168
    %v4492 = vunpack.c.0.s8 %v4491
    %v4493 = vlaneseq
    %v4494 = vshrl.u32 %v4493, 7
    %v4495 = vsub.s32 %v4492, %v4494
    %v4496 = vrot.slane %v4488, %v4495
    %v4498 = vunpack.c.l.s4 1966171168
    %v4499 = vunpack.c.0.s8 %v4498
    %v4500 = vlaneseq
    %v4501 = vshrl.u32 %v4500, 7
    %v4502 = vsub.s32 %v4499, %v4501
    %v4503 = vrot.slane %v4489, %v4502
    %v4504 = vcombine.low %v4496, %v4503
    %v4524 = vunpack.c.l.b16 %v4312
    %v4525 = vunpack.c.l.b16 %v4313
    %v4526 = vunpack.c.l.b16 %v4314
    %v4527 = vunpack.c.l.b16 %v4315
    %v4528 = vunpack.c.l.b16 %v4316
    %v4529 = vunpack.c.l.b16 %v4317
    %v4530 = vunpack.c.l.b16 %v4318
    %v4531 = vunpack.c.l.b16 %v4319
    %v4532 = vunpack.c.l.b16 %v4320
    %v4533 = vunpack.c.l.b16 %v4321
    %v4534 = vunpack.c.l.b16 %v4322
    %v4535 = vunpack.c.l.b16 %v4323
    %v4536 = vunpack.c.l.b16 %v4324
    %v4537 = vunpack.c.l.b16 %v4325
    %v4538 = vunpack.c.l.b16 %v4326
    %v4539 = vunpack.c.l.b16 %v4327
    %v4540 = vpack.c.b16 %v4525, %v4524
    %v4541 = vpack.c.b16 %v4527, %v4526
    %v4542 = vpack.c.b16 %v4529, %v4528
    %v4543 = vpack.c.b16 %v4531, %v4530
    %v4544 = vpack.c.b16 %v4533, %v4532
    %v4545 = vpack.c.b16 %v4535, %v4534
    %v4546 = vpack.c.b16 %v4537, %v4536
    %v4547 = vpack.c.b16 %v4539, %v4538
    %v4556 = vcombine.low %v4333, %v4333
    %v4558 = vunpack.c.l.s4 1983009808
    %v4559 = vunpack.c.0.s8 %v4558
    %v4560 = vlaneseq
    %v4561 = vshrl.u32 %v4560, 7
    %v4562 = vsub.s32 %v4559, %v4561
    %v4563 = vrot.slane %v4556, %v4562
    %v4564 = vcombine.low %v4563, %v4563
    %4566 = vmatprep.subr.bf16.mxu0 0
    %4567 = vmatpush1.bf16.msra.mxu0 %v4540
    %4568 = vmatprep.subr.bf16.mxu0 0
    %4569 = vmatpush1.bf16.msra.mxu0 %v4541
    %4570 = vmatprep.subr.bf16.mxu0 0
    %4571 = vmatpush1.bf16.msra.mxu0 %v4542
    %4572 = vmatprep.subr.bf16.mxu0 0
    %4573 = vmatpush1.bf16.msra.mxu0 %v4543
    %4574 = vmatprep.subr.bf16.mxu0 0
    %4575 = vmatpush1.bf16.msra.mxu0 %v4544
    %4576 = vmatprep.subr.bf16.mxu0 0
    %4577 = vmatpush1.bf16.msra.mxu0 %v4545
    %4578 = vmatprep.subr.bf16.mxu0 0
    %4579 = vmatpush1.bf16.msra.mxu0 %v4546
    %4580 = vmatprep.subr.bf16.mxu0 0
    %4581 = vmatpush1.bf16.msra.mxu0 %v4547
    %4582 = vmatprep.subr.bf16.mxu0 0
    %4583 = vmatpush1.bf16.msra.mxu0 0
    %4584 = vmatprep.subr.bf16.mxu0 0
    %4585 = vmatpush1.bf16.msra.mxu0 0
    %4586 = vmatprep.subr.bf16.mxu0 0
    %4587 = vmatpush1.bf16.msra.mxu0 0
    %4588 = vmatprep.subr.bf16.mxu0 0
    %4589 = vmatpush1.bf16.msra.mxu0 0
    %4590 = vmatprep.subr.bf16.mxu0 0
    %4591 = vmatpush1.bf16.msra.mxu0 0
    %4592 = vmatprep.subr.bf16.mxu0 0
    %4593 = vmatpush1.bf16.msra.mxu0 0
    %4594 = vmatprep.subr.bf16.mxu0 0
    %4595 = vmatpush1.bf16.msra.mxu0 0
    %4596 = vmatprep.subr.bf16.mxu0 0
    %4597 = vmatpush1.bf16.msra.mxu0 0
    %4598 = vmatprep.mubr.bf16.mxu0 0
    %4599 = vmatmul.mubr.bf16.gmra.mrb[0].mxu0 %v4406
    %v4600 = vpop.f32.mrb[0].mxu0
    %v4601 = vadd.f32 %v4564, %v4600
    %v4602 = vpop.f32.mrb[0].mxu0
    %v4603 = vpop.f32.mrb[0].mxu0
    %v4604 = vadd.f32 %v4564, %v4603
    %v4605 = vpop.f32.mrb[0].mxu0
    %4606 = vmatprep.mubr.bf16.mxu0 0
    %4607 = vmatmul.mubr.bf16.gmra.mrb[0].mxu0 %v4455
    %v4608 = vpop.f32.mrb[0].mxu0
    %v4609 = vadd.f32 %v4564, %v4608
    %v4610 = vpop.f32.mrb[0].mxu0
    %v4611 = vpop.f32.mrb[0].mxu0
    %v4612 = vadd.f32 %v4564, %v4611
    %v4613 = vpop.f32.mrb[0].mxu0
    %4614 = vmatprep.mubr.bf16.mxu0 0
    %4615 = vmatmul.mubr.bf16.gmra.mrb[0].mxu0 %v4504
    %v4616 = vpop.f32.mrb[0].mxu0
    %v4617 = vadd.f32 %v4564, %v4616
    %v4618 = vpop.f32.mrb[0].mxu0
    %v4619 = vpop.f32.mrb[0].mxu0
    %v4620 = vadd.f32 %v4564, %v4619
    %v4621 = vpop.f32.mrb[0].mxu0
    %4622 = vdwg.mxu0
    %v4629 = vcombine.high %v4601, %v4601
    %v4631 = vunpack.c.l.s4 1983009808
    %v4632 = vunpack.c.0.s8 %v4631
    %v4633 = vlaneseq
    %v4634 = vshrl.u32 %v4633, 7
    %v4635 = vsub.s32 %v4632, %v4634
    %v4636 = vrot.slane %v4601, %v4635
    %v4638 = vunpack.c.l.s4 1983009808
    %v4639 = vunpack.c.0.s8 %v4638
    %v4640 = vlaneseq
    %v4641 = vshrl.u32 %v4640, 7
    %v4642 = vsub.s32 %v4639, %v4641
    %v4643 = vrot.slane %v4629, %v4642
    %v4644 = vcombine.high %v4636, %v4636
    %v4645 = vcombine.high %v4643, %v4643
    %v4646 = vcombine.high %v4604, %v4604
    %v4648 = vunpack.c.l.s4 1983009808
    %v4649 = vunpack.c.0.s8 %v4648
    %v4650 = vlaneseq
    %v4651 = vshrl.u32 %v4650, 7
    %v4652 = vsub.s32 %v4649, %v4651
    %v4653 = vrot.slane %v4604, %v4652
    %v4655 = vunpack.c.l.s4 1983009808
    %v4656 = vunpack.c.0.s8 %v4655
    %v4657 = vlaneseq
    %v4658 = vshrl.u32 %v4657, 7
    %v4659 = vsub.s32 %v4656, %v4658
    %v4660 = vrot.slane %v4646, %v4659
    %v4661 = vcombine.high %v4653, %v4653
    %v4662 = vcombine.high %v4660, %v4660
    %v4663 = vcombine.high %v4609, %v4609
    %v4665 = vunpack.c.l.s4 1983009808
    %v4666 = vunpack.c.0.s8 %v4665
    %v4667 = vlaneseq
    %v4668 = vshrl.u32 %v4667, 7
    %v4669 = vsub.s32 %v4666, %v4668
    %v4670 = vrot.slane %v4609, %v4669
    %v4672 = vunpack.c.l.s4 1983009808
    %v4673 = vunpack.c.0.s8 %v4672
    %v4674 = vlaneseq
    %v4675 = vshrl.u32 %v4674, 7
    %v4676 = vsub.s32 %v4673, %v4675
    %v4677 = vrot.slane %v4663, %v4676
    %v4678 = vcombine.high %v4670, %v4670
    %v4679 = vcombine.high %v4677, %v4677
    %v4680 = vcombine.high %v4612, %v4612
    %v4682 = vunpack.c.l.s4 1983009808
    %v4683 = vunpack.c.0.s8 %v4682
    %v4684 = vlaneseq
    %v4685 = vshrl.u32 %v4684, 7
    %v4686 = vsub.s32 %v4683, %v4685
    %v4687 = vrot.slane %v4612, %v4686
    %v4689 = vunpack.c.l.s4 1983009808
    %v4690 = vunpack.c.0.s8 %v4689
    %v4691 = vlaneseq
    %v4692 = vshrl.u32 %v4691, 7
    %v4693 = vsub.s32 %v4690, %v4692
    %v4694 = vrot.slane %v4680, %v4693
    %v4695 = vcombine.high %v4687, %v4687
    %v4696 = vcombine.high %v4694, %v4694
    %v4697 = vcombine.high %v4617, %v4617
    %v4699 = vunpack.c.l.s4 1983009808
    %v4700 = vunpack.c.0.s8 %v4699
    %v4701 = vlaneseq
    %v4702 = vshrl.u32 %v4701, 7
    %v4703 = vsub.s32 %v4700, %v4702
    %v4704 = vrot.slane %v4617, %v4703
    %v4706 = vunpack.c.l.s4 1983009808
    %v4707 = vunpack.c.0.s8 %v4706
    %v4708 = vlaneseq
    %v4709 = vshrl.u32 %v4708, 7
    %v4710 = vsub.s32 %v4707, %v4709
    %v4711 = vrot.slane %v4697, %v4710
    %v4712 = vcombine.high %v4704, %v4704
    %v4713 = vcombine.high %v4711, %v4711
    %v4714 = vcombine.high %v4620, %v4620
    %v4716 = vunpack.c.l.s4 1983009808
    %v4717 = vunpack.c.0.s8 %v4716
    %v4718 = vlaneseq
    %v4719 = vshrl.u32 %v4718, 7
    %v4720 = vsub.s32 %v4717, %v4719
    %v4721 = vrot.slane %v4620, %v4720
    %v4723 = vunpack.c.l.s4 1983009808
    %v4724 = vunpack.c.0.s8 %v4723
    %v4725 = vlaneseq
    %v4726 = vshrl.u32 %v4725, 7
    %v4727 = vsub.s32 %v4724, %v4726
    %v4728 = vrot.slane %v4714, %v4727
    %v4729 = vcombine.high %v4721, %v4721
    %v4730 = vcombine.high %v4728, %v4728
    %v4755 = vlaneseq
    %v4756 = vand.u32 %v4755, 127
    %vm4757 = vcmp.ge.s32.totalorder %v4756, 32
    %vm4758 = vcmp.lt.s32.totalorder %v4756, 48
    %vm4759 = vmand %vm4757, %vm4758
    %v4760 = vsel %vm4759, 2.0, 1.0
    %v4761 = vld [vmem:[%s11] sm:$0xff]
    %v4762 = vld [vmem:[%s11 + $0x8] sm:$0xff]
    %v4763 = vmul.f32 %v4761, %v4760
    %v4764 = vmul.f32 %v4762, %v4760
    %v4765 = vmul.f32 %v4636, %v4760
    %v4766 = vmul.f32 %v4644, %v4760
    %v4767 = vmul.f32 %v4643, %v4760
    %v4768 = vmul.f32 %v4645, %v4760
    %v4769 = vmul.f32 %v4653, %v4760
    %v4770 = vmul.f32 %v4661, %v4760
    %v4771 = vmul.f32 %v4660, %v4760
    %v4772 = vmul.f32 %v4662, %v4760
    %v4773 = vmul.f32 %v4670, %v4760
    %v4774 = vmul.f32 %v4678, %v4760
    %v4775 = vmul.f32 %v4677, %v4760
    %v4776 = vmul.f32 %v4679, %v4760
    %v4777 = vmul.f32 %v4687, %v4760
    %v4778 = vmul.f32 %v4695, %v4760
    %v4779 = vmul.f32 %v4694, %v4760
    %v4780 = vmul.f32 %v4696, %v4760
    %v4781 = vmul.f32 %v4704, %v4760
    %v4782 = vmul.f32 %v4712, %v4760
    %v4783 = vmul.f32 %v4711, %v4760
    %v4784 = vmul.f32 %v4713, %v4760
    %v4785 = vmul.f32 %v4721, %v4760
    %v4786 = vmul.f32 %v4729, %v4760
    %v4787 = vmul.f32 %v4728, %v4760
    %v4788 = vmul.f32 %v4730, %v4760
    %vm4789 = vcmask 130048
    %v4791 = vsel %vm4789, 0.0, 0
    %4793 = vmatprep.subr.mxu0 0.0
    %4794 = vmatpush1.msra.mxu0 %v4763
    %4795 = vmatprep.subr.mxu0 0.0
    %4796 = vmatpush1.msra.mxu0 %v4764
    %4797 = vmatprep.subr.mxu0 0.0
    %4798 = vmatpush1.msra.mxu0 0.0
    %4799 = vmatprep.subr.mxu0 0.0
    %4800 = vmatpush1.msra.mxu0 0.0
    %4801 = vmatprep.subr.mxu0 0.0
    %4802 = vmatpush1.msra.mxu0 0.0
    %4803 = vmatprep.subr.mxu0 0.0
    %4804 = vmatpush1.msra.mxu0 0.0
    %4805 = vmatprep.subr.mxu0 0.0
    %4806 = vmatpush1.msra.mxu0 0.0
    %4807 = vmatprep.subr.mxu0 0.0
    %4808 = vmatpush1.msra.mxu0 0.0
    %4809 = vmatprep.subr.mxu0 0.0
    %4810 = vmatpush1.msra.mxu0 0.0
    %4811 = vmatprep.subr.mxu0 0.0
    %4812 = vmatpush1.msra.mxu0 0.0
    %4813 = vmatprep.subr.mxu0 0.0
    %4814 = vmatpush1.msra.mxu0 0.0
    %4815 = vmatprep.subr.mxu0 0.0
    %4816 = vmatpush1.msra.mxu0 0.0
    %4817 = vmatprep.subr.mxu0 0.0
    %4818 = vmatpush1.msra.mxu0 0.0
    %4819 = vmatprep.subr.mxu0 0.0
    %4820 = vmatpush1.msra.mxu0 0.0
    %4821 = vmatprep.subr.mxu0 0.0
    %4822 = vmatpush1.msra.mxu0 0.0
    %4823 = vmatprep.subr.mxu0 0.0
    %4824 = vmatpush1.msra.mxu0 0.0
    %4825 = vmatprep.subr.mxu0 0.0
    %4826 = vmatpush1.msra.mxu0 0.0
    %4827 = vmatprep.subr.mxu0 0.0
    %4828 = vmatpush1.msra.mxu0 0.0
    %4829 = vmatprep.subr.mxu0 0.0
    %4830 = vmatpush1.msra.mxu0 0.0
    %4831 = vmatprep.subr.mxu0 0.0
    %4832 = vmatpush1.msra.mxu0 0.0
    %4833 = vmatprep.subr.mxu0 0.0
    %4834 = vmatpush1.msra.mxu0 0.0
    %4835 = vmatprep.subr.mxu0 0.0
    %4836 = vmatpush1.msra.mxu0 0.0
    %4837 = vmatprep.subr.mxu0 0.0
    %4838 = vmatpush1.msra.mxu0 0.0
    %4839 = vmatprep.subr.mxu0 0.0
    %4840 = vmatpush1.msra.mxu0 0.0
    %4841 = vmatprep.subr.mxu0 0.0
    %4842 = vmatpush1.msra.mxu0 0.0
    %4843 = vmatprep.subr.mxu0 0.0
    %4844 = vmatpush1.msra.mxu0 0.0
    %4845 = vmatprep.subr.mxu0 0.0
    %4846 = vmatpush1.msra.mxu0 0.0
    %4847 = vmatprep.subr.mxu0 0.0
    %4848 = vmatpush1.msra.mxu0 0.0
    %4849 = vmatprep.subr.mxu0 0.0
    %4850 = vmatpush1.msra.mxu0 0.0
    %4851 = vmatprep.subr.mxu0 0.0
    %4852 = vmatpush1.msra.mxu0 0.0
    %4853 = vmatprep.subr.mxu0 0.0
    %4854 = vmatpush1.msra.mxu0 0.0
    %4855 = vmatprep.subr.mxu0 0.0
    %4856 = vmatpush1.msra.mxu0 0.0
    %4857 = vmatprep.mubr.f32.mxu0 0.0
    %4858 = vmatmul.mubr.f32.gmra.mrb[0].mxu0 %v4791
    %v4859 = vpop.f32.mrb[0].mxu0
    %v4860 = vadd.f32 0.0, %v4859
    %v4861 = vpop.f32.mrb[0].mxu0
    %4862 = vdwg.mxu0
    %v4863 = vadd.f32 %v4765, %v4860
    %v4864 = vxor.u32 %v4863, 2147483648
    %v4865 = vmul.f32 %v4864, 1.442695
    %v4866 = vpow.pop %v4865
    %v4867 = vadd.f32 %v4866, 1.0
    %v4868 = vrcp.pop %v4867
    %v4869 = vmul.f32 1.0, %v4868
    %v4870 = vmul.f32 %v4869, 2.0
    %v4871 = vsub.f32 %v4870, 1.0
    %v4872 = vmul.f32 %v4869, 0.0
    %4874 = vrot.lane.b32.xlu0 %v4871, 96
    %v4875 = vpop.permute.xlu0 %4874
    %v4877 = vmul.f32 %v4869, %v4875
    %4879 = vrot.lane.b32.xlu0 %v4877, 16
    %v4880 = vpop.permute.xlu0 %4879
    %v4882 = vadd.f32 %v4872, %v4880
    %v4883 = vtanh.pop %v4882
    %4885 = vrot.lane.b32.xlu0 %v4883, 32
    %v4886 = vpop.permute.xlu0 %4885
    %v4888 = vmul.f32 %v4869, %v4886
    %v4891 = vunpack.c.l.s4 1983009808
    %v4892 = vunpack.c.0.s8 %v4891
    %v4893 = vlaneseq
    %v4894 = vshrl.u32 %v4893, 7
    %v4895 = vsub.s32 %v4892, %v4894
    %v4896 = vrot.slane %v4888, %v4895
    %4897 = vrot.lane.b32.xlu0 %v4896, 80
    %v4898 = vpop.permute.xlu0 %4897
    %v4899 = vsel %vm4789, %v4898, 0
    %4901 = vmatprep.subr.mxu0 0.0
    %4902 = vmatpush1.msra.mxu0 %v4763
    %4903 = vmatprep.subr.mxu0 0.0
    %4904 = vmatpush1.msra.mxu0 %v4764
    %4905 = vmatprep.subr.mxu0 0.0
    %4906 = vmatpush1.msra.mxu0 0.0
    %4907 = vmatprep.subr.mxu0 0.0
    %4908 = vmatpush1.msra.mxu0 0.0
    %4909 = vmatprep.subr.mxu0 0.0
    %4910 = vmatpush1.msra.mxu0 0.0
    %4911 = vmatprep.subr.mxu0 0.0
    %4912 = vmatpush1.msra.mxu0 0.0
    %4913 = vmatprep.subr.mxu0 0.0
    %4914 = vmatpush1.msra.mxu0 0.0
    %4915 = vmatprep.subr.mxu0 0.0
    %4916 = vmatpush1.msra.mxu0 0.0
    %4917 = vmatprep.subr.mxu0 0.0
    %4918 = vmatpush1.msra.mxu0 0.0
    %4919 = vmatprep.subr.mxu0 0.0
    %4920 = vmatpush1.msra.mxu0 0.0
    %4921 = vmatprep.subr.mxu0 0.0
    %4922 = vmatpush1.msra.mxu0 0.0
    %4923 = vmatprep.subr.mxu0 0.0
    %4924 = vmatpush1.msra.mxu0 0.0
    %4925 = vmatprep.subr.mxu0 0.0
    %4926 = vmatpush1.msra.mxu0 0.0
    %4927 = vmatprep.subr.mxu0 0.0
    %4928 = vmatpush1.msra.mxu0 0.0
    %4929 = vmatprep.subr.mxu0 0.0
    %4930 = vmatpush1.msra.mxu0 0.0
    %4931 = vmatprep.subr.mxu0 0.0
    %4932 = vmatpush1.msra.mxu0 0.0
    %4933 = vmatprep.subr.mxu0 0.0
    %4934 = vmatpush1.msra.mxu0 0.0
    %4935 = vmatprep.subr.mxu0 0.0
    %4936 = vmatpush1.msra.mxu0 0.0
    %4937 = vmatprep.subr.mxu0 0.0
    %4938 = vmatpush1.msra.mxu0 0.0
    %4939 = vmatprep.subr.mxu0 0.0
    %4940 = vmatpush1.msra.mxu0 0.0
    %4941 = vmatprep.subr.mxu0 0.0
    %4942 = vmatpush1.msra.mxu0 0.0
    %4943 = vmatprep.subr.mxu0 0.0
    %4944 = vmatpush1.msra.mxu0 0.0
    %4945 = vmatprep.subr.mxu0 0.0
    %4946 = vmatpush1.msra.mxu0 0.0
    %4947 = vmatprep.subr.mxu0 0.0
    %4948 = vmatpush1.msra.mxu0 0.0
    %4949 = vmatprep.subr.mxu0 0.0
    %4950 = vmatpush1.msra.mxu0 0.0
    %4951 = vmatprep.subr.mxu0 0.0
    %4952 = vmatpush1.msra.mxu0 0.0
    %4953 = vmatprep.subr.mxu0 0.0
    %4954 = vmatpush1.msra.mxu0 0.0
    %4955 = vmatprep.subr.mxu0 0.0
    %4956 = vmatpush1.msra.mxu0 0.0
    %4957 = vmatprep.subr.mxu0 0.0
    %4958 = vmatpush1.msra.mxu0 0.0
    %4959 = vmatprep.subr.mxu0 0.0
    %4960 = vmatpush1.msra.mxu0 0.0
    %4961 = vmatprep.subr.mxu0 0.0
    %4962 = vmatpush1.msra.mxu0 0.0
    %4963 = vmatprep.subr.mxu0 0.0
    %4964 = vmatpush1.msra.mxu0 0.0
    %4965 = vmatprep.mubr.f32.mxu0 0.0
    %4966 = vmatmul.mubr.f32.gmra.mrb[0].mxu0 %v4899
    %v4967 = vpop.f32.mrb[0].mxu0
    %v4968 = vadd.f32 0.0, %v4967
    %v4969 = vpop.f32.mrb[0].mxu0
    %4970 = vdwg.mxu0
    %v4971 = vadd.f32 %v4766, %v4968
    %v4972 = vxor.u32 %v4971, 2147483648
    %v4973 = vmul.f32 %v4972, 1.442695
    %v4974 = vpow.pop %v4973
    %v4975 = vadd.f32 %v4974, 1.0
    %v4976 = vrcp.pop %v4975
    %v4977 = vmul.f32 1.0, %v4976
    %v4978 = vmul.f32 %v4977, 2.0
    %v4979 = vsub.f32 %v4978, 1.0
    %v4980 = vmul.f32 %v4977, %v4882
    %4982 = vrot.lane.b32.xlu0 %v4979, 96
    %v4983 = vpop.permute.xlu0 %4982
    %v4985 = vmul.f32 %v4977, %v4983
    %4987 = vrot.lane.b32.xlu0 %v4985, 16
    %v4988 = vpop.permute.xlu0 %4987
    %v4990 = vadd.f32 %v4980, %v4988
    %v4991 = vtanh.pop %v4990
    %4993 = vrot.lane.b32.xlu0 %v4991, 32
    %v4994 = vpop.permute.xlu0 %4993
    %v4996 = vmul.f32 %v4977, %v4994
    %v4999 = vunpack.c.l.s4 1983009808
    %v5000 = vunpack.c.0.s8 %v4999
    %v5001 = vlaneseq
    %v5002 = vshrl.u32 %v5001, 7
    %v5003 = vsub.s32 %v5000, %v5002
    %v5004 = vrot.slane %v4996, %v5003
    %5005 = vrot.lane.b32.xlu0 %v5004, 80
    %v5006 = vpop.permute.xlu0 %5005
    %v5007 = vsel %vm4789, %v5006, 0
    %5009 = vmatprep.subr.mxu0 0.0
    %5010 = vmatpush1.msra.mxu0 %v4763
    %5011 = vmatprep.subr.mxu0 0.0
    %5012 = vmatpush1.msra.mxu0 %v4764
    %5013 = vmatprep.subr.mxu0 0.0
    %5014 = vmatpush1.msra.mxu0 0.0
    %5015 = vmatprep.subr.mxu0 0.0
    %5016 = vmatpush1.msra.mxu0 0.0
    %5017 = vmatprep.subr.mxu0 0.0
    %5018 = vmatpush1.msra.mxu0 0.0
    %5019 = vmatprep.subr.mxu0 0.0
    %5020 = vmatpush1.msra.mxu0 0.0
    %5021 = vmatprep.subr.mxu0 0.0
    %5022 = vmatpush1.msra.mxu0 0.0
    %5023 = vmatprep.subr.mxu0 0.0
    %5024 = vmatpush1.msra.mxu0 0.0
    %5025 = vmatprep.subr.mxu0 0.0
    %5026 = vmatpush1.msra.mxu0 0.0
    %5027 = vmatprep.subr.mxu0 0.0
    %5028 = vmatpush1.msra.mxu0 0.0
    %5029 = vmatprep.subr.mxu0 0.0
    %5030 = vmatpush1.msra.mxu0 0.0
    %5031 = vmatprep.subr.mxu0 0.0
    %5032 = vmatpush1.msra.mxu0 0.0
    %5033 = vmatprep.subr.mxu0 0.0
    %5034 = vmatpush1.msra.mxu0 0.0
    %5035 = vmatprep.subr.mxu0 0.0
    %5036 = vmatpush1.msra.mxu0 0.0
    %5037 = vmatprep.subr.mxu0 0.0
    %5038 = vmatpush1.msra.mxu0 0.0
    %5039 = vmatprep.subr.mxu0 0.0
    %5040 = vmatpush1.msra.mxu0 0.0
    %5041 = vmatprep.subr.mxu0 0.0
    %5042 = vmatpush1.msra.mxu0 0.0
    %5043 = vmatprep.subr.mxu0 0.0
    %5044 = vmatpush1.msra.mxu0 0.0
    %5045 = vmatprep.subr.mxu0 0.0
    %5046 = vmatpush1.msra.mxu0 0.0
    %5047 = vmatprep.subr.mxu0 0.0
    %5048 = vmatpush1.msra.mxu0 0.0
    %5049 = vmatprep.subr.mxu0 0.0
    %5050 = vmatpush1.msra.mxu0 0.0
    %5051 = vmatprep.subr.mxu0 0.0
    %5052 = vmatpush1.msra.mxu0 0.0
    %5053 = vmatprep.subr.mxu0 0.0
    %5054 = vmatpush1.msra.mxu0 0.0
    %5055 = vmatprep.subr.mxu0 0.0
    %5056 = vmatpush1.msra.mxu0 0.0
    %5057 = vmatprep.subr.mxu0 0.0
    %5058 = vmatpush1.msra.mxu0 0.0
    %5059 = vmatprep.subr.mxu0 0.0
    %5060 = vmatpush1.msra.mxu0 0.0
    %5061 = vmatprep.subr.mxu0 0.0
    %5062 = vmatpush1.msra.mxu0 0.0
    %5063 = vmatprep.subr.mxu0 0.0
    %5064 = vmatpush1.msra.mxu0 0.0
    %5065 = vmatprep.subr.mxu0 0.0
    %5066 = vmatpush1.msra.mxu0 0.0
    %5067 = vmatprep.subr.mxu0 0.0
    %5068 = vmatpush1.msra.mxu0 0.0
    %5069 = vmatprep.subr.mxu0 0.0
    %5070 = vmatpush1.msra.mxu0 0.0
    %5071 = vmatprep.subr.mxu0 0.0
    %5072 = vmatpush1.msra.mxu0 0.0
    %5073 = vmatprep.mubr.f32.mxu0 0.0
    %5074 = vmatmul.mubr.f32.gmra.mrb[0].mxu0 %v5007
    %v5075 = vpop.f32.mrb[0].mxu0
    %v5076 = vadd.f32 0.0, %v5075
    %v5077 = vpop.f32.mrb[0].mxu0
    %5078 = vdwg.mxu0
    %v5079 = vadd.f32 %v4767, %v5076
    %v5080 = vxor.u32 %v5079, 2147483648
    %v5081 = vmul.f32 %v5080, 1.442695
    %v5082 = vpow.pop %v5081
    %v5083 = vadd.f32 %v5082, 1.0
    %v5084 = vrcp.pop %v5083
    %v5085 = vmul.f32 1.0, %v5084
    %v5086 = vmul.f32 %v5085, 2.0
    %v5087 = vsub.f32 %v5086, 1.0
    %v5088 = vmul.f32 %v5085, %v4990
    %5090 = vrot.lane.b32.xlu0 %v5087, 96
    %v5091 = vpop.permute.xlu0 %5090
    %v5093 = vmul.f32 %v5085, %v5091
    %5095 = vrot.lane.b32.xlu0 %v5093, 16
    %v5096 = vpop.permute.xlu0 %5095
    %v5098 = vadd.f32 %v5088, %v5096
    %v5099 = vtanh.pop %v5098
    %5101 = vrot.lane.b32.xlu0 %v5099, 32
    %v5102 = vpop.permute.xlu0 %5101
    %v5104 = vmul.f32 %v5085, %v5102
    %v5107 = vunpack.c.l.s4 1983009808
    %v5108 = vunpack.c.0.s8 %v5107
    %v5109 = vlaneseq
    %v5110 = vshrl.u32 %v5109, 7
    %v5111 = vsub.s32 %v5108, %v5110
    %v5112 = vrot.slane %v5104, %v5111
    %5113 = vrot.lane.b32.xlu0 %v5112, 80
    %v5114 = vpop.permute.xlu0 %5113
    %v5115 = vsel %vm4789, %v5114, 0
    %5117 = vmatprep.subr.mxu0 0.0
    %5118 = vmatpush1.msra.mxu0 %v4763
    %5119 = vmatprep.subr.mxu0 0.0
    %5120 = vmatpush1.msra.mxu0 %v4764
    %5121 = vmatprep.subr.mxu0 0.0
    %5122 = vmatpush1.msra.mxu0 0.0
    %5123 = vmatprep.subr.mxu0 0.0
    %5124 = vmatpush1.msra.mxu0 0.0
    %5125 = vmatprep.subr.mxu0 0.0
    %5126 = vmatpush1.msra.mxu0 0.0
    %5127 = vmatprep.subr.mxu0 0.0
    %5128 = vmatpush1.msra.mxu0 0.0
    %5129 = vmatprep.subr.mxu0 0.0
    %5130 = vmatpush1.msra.mxu0 0.0
    %5131 = vmatprep.subr.mxu0 0.0
    %5132 = vmatpush1.msra.mxu0 0.0
    %5133 = vmatprep.subr.mxu0 0.0
    %5134 = vmatpush1.msra.mxu0 0.0
    %5135 = vmatprep.subr.mxu0 0.0
    %5136 = vmatpush1.msra.mxu0 0.0
    %5137 = vmatprep.subr.mxu0 0.0
    %5138 = vmatpush1.msra.mxu0 0.0
    %5139 = vmatprep.subr.mxu0 0.0
    %5140 = vmatpush1.msra.mxu0 0.0
    %5141 = vmatprep.subr.mxu0 0.0
    %5142 = vmatpush1.msra.mxu0 0.0
    %5143 = vmatprep.subr.mxu0 0.0
    %5144 = vmatpush1.msra.mxu0 0.0
    %5145 = vmatprep.subr.mxu0 0.0
    %5146 = vmatpush1.msra.mxu0 0.0
    %5147 = vmatprep.subr.mxu0 0.0
    %5148 = vmatpush1.msra.mxu0 0.0
    %5149 = vmatprep.subr.mxu0 0.0
    %5150 = vmatpush1.msra.mxu0 0.0
    %5151 = vmatprep.subr.mxu0 0.0
    %5152 = vmatpush1.msra.mxu0 0.0
    %5153 = vmatprep.subr.mxu0 0.0
    %5154 = vmatpush1.msra.mxu0 0.0
    %5155 = vmatprep.subr.mxu0 0.0
    %5156 = vmatpush1.msra.mxu0 0.0
    %5157 = vmatprep.subr.mxu0 0.0
    %5158 = vmatpush1.msra.mxu0 0.0
    %5159 = vmatprep.subr.mxu0 0.0
    %5160 = vmatpush1.msra.mxu0 0.0
    %5161 = vmatprep.subr.mxu0 0.0
    %5162 = vmatpush1.msra.mxu0 0.0
    %5163 = vmatprep.subr.mxu0 0.0
    %5164 = vmatpush1.msra.mxu0 0.0
    %5165 = vmatprep.subr.mxu0 0.0
    %5166 = vmatpush1.msra.mxu0 0.0
    %5167 = vmatprep.subr.mxu0 0.0
    %5168 = vmatpush1.msra.mxu0 0.0
    %5169 = vmatprep.subr.mxu0 0.0
    %5170 = vmatpush1.msra.mxu0 0.0
    %5171 = vmatprep.subr.mxu0 0.0
    %5172 = vmatpush1.msra.mxu0 0.0
    %5173 = vmatprep.subr.mxu0 0.0
    %5174 = vmatpush1.msra.mxu0 0.0
    %5175 = vmatprep.subr.mxu0 0.0
    %5176 = vmatpush1.msra.mxu0 0.0
    %5177 = vmatprep.subr.mxu0 0.0
    %5178 = vmatpush1.msra.mxu0 0.0
    %5179 = vmatprep.subr.mxu0 0.0
    %5180 = vmatpush1.msra.mxu0 0.0
    %5181 = vmatprep.mubr.f32.mxu0 0.0
    %5182 = vmatmul.mubr.f32.gmra.mrb[0].mxu0 %v5115
    %v5183 = vpop.f32.mrb[0].mxu0
    %v5184 = vadd.f32 0.0, %v5183
    %v5185 = vpop.f32.mrb[0].mxu0
    %5186 = vdwg.mxu0
    %v5187 = vadd.f32 %v4768, %v5184
    %v5188 = vxor.u32 %v5187, 2147483648
    %v5189 = vmul.f32 %v5188, 1.442695
    %v5190 = vpow.pop %v5189
    %v5191 = vadd.f32 %v5190, 1.0
    %v5192 = vrcp.pop %v5191
    %v5193 = vmul.f32 1.0, %v5192
    %v5194 = vmul.f32 %v5193, 2.0
    %v5195 = vsub.f32 %v5194, 1.0
    %v5196 = vmul.f32 %v5193, %v5098
    %5198 = vrot.lane.b32.xlu0 %v5195, 96
    %v5199 = vpop.permute.xlu0 %5198
    %v5201 = vmul.f32 %v5193, %v5199
    %5203 = vrot.lane.b32.xlu0 %v5201, 16
    %v5204 = vpop.permute.xlu0 %5203
    %v5206 = vadd.f32 %v5196, %v5204
    %v5207 = vtanh.pop %v5206
    %5209 = vrot.lane.b32.xlu0 %v5207, 32
    %v5210 = vpop.permute.xlu0 %5209
    %v5212 = vmul.f32 %v5193, %v5210
    %v5215 = vunpack.c.l.s4 1983009808
    %v5216 = vunpack.c.0.s8 %v5215
    %v5217 = vlaneseq
    %v5218 = vshrl.u32 %v5217, 7
    %v5219 = vsub.s32 %v5216, %v5218
    %v5220 = vrot.slane %v5212, %v5219
    %5221 = vrot.lane.b32.xlu0 %v5220, 80
    %v5222 = vpop.permute.xlu0 %5221
    %v5223 = vsel %vm4789, %v5222, 0
    %5225 = vmatprep.subr.mxu0 0.0
    %5226 = vmatpush1.msra.mxu0 %v4763
    %5227 = vmatprep.subr.mxu0 0.0
    %5228 = vmatpush1.msra.mxu0 %v4764
    %5229 = vmatprep.subr.mxu0 0.0
    %5230 = vmatpush1.msra.mxu0 0.0
    %5231 = vmatprep.subr.mxu0 0.0
    %5232 = vmatpush1.msra.mxu0 0.0
    %5233 = vmatprep.subr.mxu0 0.0
    %5234 = vmatpush1.msra.mxu0 0.0
    %5235 = vmatprep.subr.mxu0 0.0
    %5236 = vmatpush1.msra.mxu0 0.0
    %5237 = vmatprep.subr.mxu0 0.0
    %5238 = vmatpush1.msra.mxu0 0.0
    %5239 = vmatprep.subr.mxu0 0.0
    %5240 = vmatpush1.msra.mxu0 0.0
    %5241 = vmatprep.subr.mxu0 0.0
    %5242 = vmatpush1.msra.mxu0 0.0
    %5243 = vmatprep.subr.mxu0 0.0
    %5244 = vmatpush1.msra.mxu0 0.0
    %5245 = vmatprep.subr.mxu0 0.0
    %5246 = vmatpush1.msra.mxu0 0.0
    %5247 = vmatprep.subr.mxu0 0.0
    %5248 = vmatpush1.msra.mxu0 0.0
    %5249 = vmatprep.subr.mxu0 0.0
    %5250 = vmatpush1.msra.mxu0 0.0
    %5251 = vmatprep.subr.mxu0 0.0
    %5252 = vmatpush1.msra.mxu0 0.0
    %5253 = vmatprep.subr.mxu0 0.0
    %5254 = vmatpush1.msra.mxu0 0.0
    %5255 = vmatprep.subr.mxu0 0.0
    %5256 = vmatpush1.msra.mxu0 0.0
    %5257 = vmatprep.subr.mxu0 0.0
    %5258 = vmatpush1.msra.mxu0 0.0
    %5259 = vmatprep.subr.mxu0 0.0
    %5260 = vmatpush1.msra.mxu0 0.0
    %5261 = vmatprep.subr.mxu0 0.0
    %5262 = vmatpush1.msra.mxu0 0.0
    %5263 = vmatprep.subr.mxu0 0.0
    %5264 = vmatpush1.msra.mxu0 0.0
    %5265 = vmatprep.subr.mxu0 0.0
    %5266 = vmatpush1.msra.mxu0 0.0
    %5267 = vmatprep.subr.mxu0 0.0
    %5268 = vmatpush1.msra.mxu0 0.0
    %5269 = vmatprep.subr.mxu0 0.0
    %5270 = vmatpush1.msra.mxu0 0.0
    %5271 = vmatprep.subr.mxu0 0.0
    %5272 = vmatpush1.msra.mxu0 0.0
    %5273 = vmatprep.subr.mxu0 0.0
    %5274 = vmatpush1.msra.mxu0 0.0
    %5275 = vmatprep.subr.mxu0 0.0
    %5276 = vmatpush1.msra.mxu0 0.0
    %5277 = vmatprep.subr.mxu0 0.0
    %5278 = vmatpush1.msra.mxu0 0.0
    %5279 = vmatprep.subr.mxu0 0.0
    %5280 = vmatpush1.msra.mxu0 0.0
    %5281 = vmatprep.subr.mxu0 0.0
    %5282 = vmatpush1.msra.mxu0 0.0
    %5283 = vmatprep.subr.mxu0 0.0
    %5284 = vmatpush1.msra.mxu0 0.0
    %5285 = vmatprep.subr.mxu0 0.0
    %5286 = vmatpush1.msra.mxu0 0.0
    %5287 = vmatprep.subr.mxu0 0.0
    %5288 = vmatpush1.msra.mxu0 0.0
    %5289 = vmatprep.mubr.f32.mxu0 0.0
    %5290 = vmatmul.mubr.f32.gmra.mrb[0].mxu0 %v5223
    %v5291 = vpop.f32.mrb[0].mxu0
    %v5292 = vadd.f32 0.0, %v5291
    %v5293 = vpop.f32.mrb[0].mxu0
    %5294 = vdwg.mxu0
    %v5295 = vadd.f32 %v4769, %v5292
    %v5296 = vxor.u32 %v5295, 2147483648
    %v5297 = vmul.f32 %v5296, 1.442695
    %v5298 = vpow.pop %v5297
    %v5299 = vadd.f32 %v5298, 1.0
    %v5300 = vrcp.pop %v5299
    %v5301 = vmul.f32 1.0, %v5300
    %v5302 = vmul.f32 %v5301, 2.0
    %v5303 = vsub.f32 %v5302, 1.0
    %v5304 = vmul.f32 %v5301, %v5206
    %5306 = vrot.lane.b32.xlu0 %v5303, 96
    %v5307 = vpop.permute.xlu0 %5306
    %v5309 = vmul.f32 %v5301, %v5307
    %5311 = vrot.lane.b32.xlu0 %v5309, 16
    %v5312 = vpop.permute.xlu0 %5311
    %v5314 = vadd.f32 %v5304, %v5312
    %v5315 = vtanh.pop %v5314
    %5317 = vrot.lane.b32.xlu0 %v5315, 32
    %v5318 = vpop.permute.xlu0 %5317
    %v5320 = vmul.f32 %v5301, %v5318
    %v5323 = vunpack.c.l.s4 1983009808
    %v5324 = vunpack.c.0.s8 %v5323
    %v5325 = vlaneseq
    %v5326 = vshrl.u32 %v5325, 7
    %v5327 = vsub.s32 %v5324, %v5326
    %v5328 = vrot.slane %v5320, %v5327
    %5329 = vrot.lane.b32.xlu0 %v5328, 80
    %v5330 = vpop.permute.xlu0 %5329
    %v5331 = vsel %vm4789, %v5330, 0
    %5333 = vmatprep.subr.mxu0 0.0
    %5334 = vmatpush1.msra.mxu0 %v4763
    %5335 = vmatprep.subr.mxu0 0.0
    %5336 = vmatpush1.msra.mxu0 %v4764
    %5337 = vmatprep.subr.mxu0 0.0
    %5338 = vmatpush1.msra.mxu0 0.0
    %5339 = vmatprep.subr.mxu0 0.0
    %5340 = vmatpush1.msra.mxu0 0.0
    %5341 = vmatprep.subr.mxu0 0.0
    %5342 = vmatpush1.msra.mxu0 0.0
    %5343 = vmatprep.subr.mxu0 0.0
    %5344 = vmatpush1.msra.mxu0 0.0
    %5345 = vmatprep.subr.mxu0 0.0
    %5346 = vmatpush1.msra.mxu0 0.0
    %5347 = vmatprep.subr.mxu0 0.0
    %5348 = vmatpush1.msra.mxu0 0.0
    %5349 = vmatprep.subr.mxu0 0.0
    %5350 = vmatpush1.msra.mxu0 0.0
    %5351 = vmatprep.subr.mxu0 0.0
    %5352 = vmatpush1.msra.mxu0 0.0
    %5353 = vmatprep.subr.mxu0 0.0
    %5354 = vmatpush1.msra.mxu0 0.0
    %5355 = vmatprep.subr.mxu0 0.0
    %5356 = vmatpush1.msra.mxu0 0.0
    %5357 = vmatprep.subr.mxu0 0.0
    %5358 = vmatpush1.msra.mxu0 0.0
    %5359 = vmatprep.subr.mxu0 0.0
    %5360 = vmatpush1.msra.mxu0 0.0
    %5361 = vmatprep.subr.mxu0 0.0
    %5362 = vmatpush1.msra.mxu0 0.0
    %5363 = vmatprep.subr.mxu0 0.0
    %5364 = vmatpush1.msra.mxu0 0.0
    %5365 = vmatprep.subr.mxu0 0.0
    %5366 = vmatpush1.msra.mxu0 0.0
    %5367 = vmatprep.subr.mxu0 0.0
    %5368 = vmatpush1.msra.mxu0 0.0
    %5369 = vmatprep.subr.mxu0 0.0
    %5370 = vmatpush1.msra.mxu0 0.0
    %5371 = vmatprep.subr.mxu0 0.0
    %5372 = vmatpush1.msra.mxu0 0.0
    %5373 = vmatprep.subr.mxu0 0.0
    %5374 = vmatpush1.msra.mxu0 0.0
    %5375 = vmatprep.subr.mxu0 0.0
    %5376 = vmatpush1.msra.mxu0 0.0
    %5377 = vmatprep.subr.mxu0 0.0
    %5378 = vmatpush1.msra.mxu0 0.0
    %5379 = vmatprep.subr.mxu0 0.0
    %5380 = vmatpush1.msra.mxu0 0.0
    %5381 = vmatprep.subr.mxu0 0.0
    %5382 = vmatpush1.msra.mxu0 0.0
    %5383 = vmatprep.subr.mxu0 0.0
    %5384 = vmatpush1.msra.mxu0 0.0
    %5385 = vmatprep.subr.mxu0 0.0
    %5386 = vmatpush1.msra.mxu0 0.0
    %5387 = vmatprep.subr.mxu0 0.0
    %5388 = vmatpush1.msra.mxu0 0.0
    %5389 = vmatprep.subr.mxu0 0.0
    %5390 = vmatpush1.msra.mxu0 0.0
    %5391 = vmatprep.subr.mxu0 0.0
    %5392 = vmatpush1.msra.mxu0 0.0
    %5393 = vmatprep.subr.mxu0 0.0
    %5394 = vmatpush1.msra.mxu0 0.0
    %5395 = vmatprep.subr.mxu0 0.0
    %5396 = vmatpush1.msra.mxu0 0.0
    %5397 = vmatprep.mubr.f32.mxu0 0.0
    %5398 = vmatmul.mubr.f32.gmra.mrb[0].mxu0 %v5331
    %v5399 = vpop.f32.mrb[0].mxu0
    %v5400 = vadd.f32 0.0, %v5399
    %v5401 = vpop.f32.mrb[0].mxu0
    %5402 = vdwg.mxu0
    %v5403 = vadd.f32 %v4770, %v5400
    %v5404 = vxor.u32 %v5403, 2147483648
    %v5405 = vmul.f32 %v5404, 1.442695
    %v5406 = vpow.pop %v5405
    %v5407 = vadd.f32 %v5406, 1.0
    %v5408 = vrcp.pop %v5407
    %v5409 = vmul.f32 1.0, %v5408
    %v5410 = vmul.f32 %v5409, 2.0
    %v5411 = vsub.f32 %v5410, 1.0
    %v5412 = vmul.f32 %v5409, %v5314
    %5414 = vrot.lane.b32.xlu0 %v5411, 96
    %v5415 = vpop.permute.xlu0 %5414
    %v5417 = vmul.f32 %v5409, %v5415
    %5419 = vrot.lane.b32.xlu0 %v5417, 16
    %v5420 = vpop.permute.xlu0 %5419
    %v5422 = vadd.f32 %v5412, %v5420
    %v5423 = vtanh.pop %v5422
    %5425 = vrot.lane.b32.xlu0 %v5423, 32
    %v5426 = vpop.permute.xlu0 %5425
    %v5428 = vmul.f32 %v5409, %v5426
    %v5431 = vunpack.c.l.s4 1983009808
    %v5432 = vunpack.c.0.s8 %v5431
    %v5433 = vlaneseq
    %v5434 = vshrl.u32 %v5433, 7
    %v5435 = vsub.s32 %v5432, %v5434
    %v5436 = vrot.slane %v5428, %v5435
    %5437 = vrot.lane.b32.xlu0 %v5436, 80
    %v5438 = vpop.permute.xlu0 %5437
    %v5439 = vsel %vm4789, %v5438, 0
    %5441 = vmatprep.subr.mxu0 0.0
    %5442 = vmatpush1.msra.mxu0 %v4763
    %5443 = vmatprep.subr.mxu0 0.0
    %5444 = vmatpush1.msra.mxu0 %v4764
    %5445 = vmatprep.subr.mxu0 0.0
    %5446 = vmatpush1.msra.mxu0 0.0
    %5447 = vmatprep.subr.mxu0 0.0
    %5448 = vmatpush1.msra.mxu0 0.0
    %5449 = vmatprep.subr.mxu0 0.0
    %5450 = vmatpush1.msra.mxu0 0.0
    %5451 = vmatprep.subr.mxu0 0.0
    %5452 = vmatpush1.msra.mxu0 0.0
    %5453 = vmatprep.subr.mxu0 0.0
    %5454 = vmatpush1.msra.mxu0 0.0
    %5455 = vmatprep.subr.mxu0 0.0
    %5456 = vmatpush1.msra.mxu0 0.0
    %5457 = vmatprep.subr.mxu0 0.0
    %5458 = vmatpush1.msra.mxu0 0.0
    %5459 = vmatprep.subr.mxu0 0.0
    %5460 = vmatpush1.msra.mxu0 0.0
    %5461 = vmatprep.subr.mxu0 0.0
    %5462 = vmatpush1.msra.mxu0 0.0
    %5463 = vmatprep.subr.mxu0 0.0
    %5464 = vmatpush1.msra.mxu0 0.0
    %5465 = vmatprep.subr.mxu0 0.0
    %5466 = vmatpush1.msra.mxu0 0.0
    %5467 = vmatprep.subr.mxu0 0.0
    %5468 = vmatpush1.msra.mxu0 0.0
    %5469 = vmatprep.subr.mxu0 0.0
    %5470 = vmatpush1.msra.mxu0 0.0
    %5471 = vmatprep.subr.mxu0 0.0
    %5472 = vmatpush1.msra.mxu0 0.0
    %5473 = vmatprep.subr.mxu0 0.0
    %5474 = vmatpush1.msra.mxu0 0.0
    %5475 = vmatprep.subr.mxu0 0.0
    %5476 = vmatpush1.msra.mxu0 0.0
    %5477 = vmatprep.subr.mxu0 0.0
    %5478 = vmatpush1.msra.mxu0 0.0
    %5479 = vmatprep.subr.mxu0 0.0
    %5480 = vmatpush1.msra.mxu0 0.0
    %5481 = vmatprep.subr.mxu0 0.0
    %5482 = vmatpush1.msra.mxu0 0.0
    %5483 = vmatprep.subr.mxu0 0.0
    %5484 = vmatpush1.msra.mxu0 0.0
    %5485 = vmatprep.subr.mxu0 0.0
    %5486 = vmatpush1.msra.mxu0 0.0
    %5487 = vmatprep.subr.mxu0 0.0
    %5488 = vmatpush1.msra.mxu0 0.0
    %5489 = vmatprep.subr.mxu0 0.0
    %5490 = vmatpush1.msra.mxu0 0.0
    %5491 = vmatprep.subr.mxu0 0.0
    %5492 = vmatpush1.msra.mxu0 0.0
    %5493 = vmatprep.subr.mxu0 0.0
    %5494 = vmatpush1.msra.mxu0 0.0
    %5495 = vmatprep.subr.mxu0 0.0
    %5496 = vmatpush1.msra.mxu0 0.0
    %5497 = vmatprep.subr.mxu0 0.0
    %5498 = vmatpush1.msra.mxu0 0.0
    %5499 = vmatprep.subr.mxu0 0.0
    %5500 = vmatpush1.msra.mxu0 0.0
    %5501 = vmatprep.subr.mxu0 0.0
    %5502 = vmatpush1.msra.mxu0 0.0
    %5503 = vmatprep.subr.mxu0 0.0
    %5504 = vmatpush1.msra.mxu0 0.0
    %5505 = vmatprep.mubr.f32.mxu0 0.0
    %5506 = vmatmul.mubr.f32.gmra.mrb[0].mxu0 %v5439
    %v5507 = vpop.f32.mrb[0].mxu0
    %v5508 = vadd.f32 0.0, %v5507
    %v5509 = vpop.f32.mrb[0].mxu0
    %5510 = vdwg.mxu0
    %v5511 = vadd.f32 %v4771, %v5508
    %v5512 = vxor.u32 %v5511, 2147483648
    %v5513 = vmul.f32 %v5512, 1.442695
    %v5514 = vpow.pop %v5513
    %v5515 = vadd.f32 %v5514, 1.0
    %v5516 = vrcp.pop %v5515
    %v5517 = vmul.f32 1.0, %v5516
    %v5518 = vmul.f32 %v5517, 2.0
    %v5519 = vsub.f32 %v5518, 1.0
    %v5520 = vmul.f32 %v5517, %v5422
    %5522 = vrot.lane.b32.xlu0 %v5519, 96
    %v5523 = vpop.permute.xlu0 %5522
    %v5525 = vmul.f32 %v5517, %v5523
    %5527 = vrot.lane.b32.xlu0 %v5525, 16
    %v5528 = vpop.permute.xlu0 %5527
    %v5530 = vadd.f32 %v5520, %v5528
    %v5531 = vtanh.pop %v5530
    %5533 = vrot.lane.b32.xlu0 %v5531, 32
    %v5534 = vpop.permute.xlu0 %5533
    %v5536 = vmul.f32 %v5517, %v5534
    %v5539 = vunpack.c.l.s4 1983009808
    %v5540 = vunpack.c.0.s8 %v5539
    %v5541 = vlaneseq
    %v5542 = vshrl.u32 %v5541, 7
    %v5543 = vsub.s32 %v5540, %v5542
    %v5544 = vrot.slane %v5536, %v5543
    %5545 = vrot.lane.b32.xlu0 %v5544, 80
    %v5546 = vpop.permute.xlu0 %5545
    %v5547 = vsel %vm4789, %v5546, 0
    %5549 = vmatprep.subr.mxu0 0.0
    %5550 = vmatpush1.msra.mxu0 %v4763
    %5551 = vmatprep.subr.mxu0 0.0
    %5552 = vmatpush1.msra.mxu0 %v4764
    %5553 = vmatprep.subr.mxu0 0.0
    %5554 = vmatpush1.msra.mxu0 0.0
    %5555 = vmatprep.subr.mxu0 0.0
    %5556 = vmatpush1.msra.mxu0 0.0
    %5557 = vmatprep.subr.mxu0 0.0
    %5558 = vmatpush1.msra.mxu0 0.0
    %5559 = vmatprep.subr.mxu0 0.0
    %5560 = vmatpush1.msra.mxu0 0.0
    %5561 = vmatprep.subr.mxu0 0.0
    %5562 = vmatpush1.msra.mxu0 0.0
    %5563 = vmatprep.subr.mxu0 0.0
    %5564 = vmatpush1.msra.mxu0 0.0
    %5565 = vmatprep.subr.mxu0 0.0
    %5566 = vmatpush1.msra.mxu0 0.0
    %5567 = vmatprep.subr.mxu0 0.0
    %5568 = vmatpush1.msra.mxu0 0.0
    %5569 = vmatprep.subr.mxu0 0.0
    %5570 = vmatpush1.msra.mxu0 0.0
    %5571 = vmatprep.subr.mxu0 0.0
    %5572 = vmatpush1.msra.mxu0 0.0
    %5573 = vmatprep.subr.mxu0 0.0
    %5574 = vmatpush1.msra.mxu0 0.0
    %5575 = vmatprep.subr.mxu0 0.0
    %5576 = vmatpush1.msra.mxu0 0.0
    %5577 = vmatprep.subr.mxu0 0.0
    %5578 = vmatpush1.msra.mxu0 0.0
    %5579 = vmatprep.subr.mxu0 0.0
    %5580 = vmatpush1.msra.mxu0 0.0
    %5581 = vmatprep.subr.mxu0 0.0
    %5582 = vmatpush1.msra.mxu0 0.0
    %5583 = vmatprep.subr.mxu0 0.0
    %5584 = vmatpush1.msra.mxu0 0.0
    %5585 = vmatprep.subr.mxu0 0.0
    %5586 = vmatpush1.msra.mxu0 0.0
    %5587 = vmatprep.subr.mxu0 0.0
    %5588 = vmatpush1.msra.mxu0 0.0
    %5589 = vmatprep.subr.mxu0 0.0
    %5590 = vmatpush1.msra.mxu0 0.0
    %5591 = vmatprep.subr.mxu0 0.0
    %5592 = vmatpush1.msra.mxu0 0.0
    %5593 = vmatprep.subr.mxu0 0.0
    %5594 = vmatpush1.msra.mxu0 0.0
    %5595 = vmatprep.subr.mxu0 0.0
    %5596 = vmatpush1.msra.mxu0 0.0
    %5597 = vmatprep.subr.mxu0 0.0
    %5598 = vmatpush1.msra.mxu0 0.0
    %5599 = vmatprep.subr.mxu0 0.0
    %5600 = vmatpush1.msra.mxu0 0.0
    %5601 = vmatprep.subr.mxu0 0.0
    %5602 = vmatpush1.msra.mxu0 0.0
    %5603 = vmatprep.subr.mxu0 0.0
    %5604 = vmatpush1.msra.mxu0 0.0
    %5605 = vmatprep.subr.mxu0 0.0
    %5606 = vmatpush1.msra.mxu0 0.0
    %5607 = vmatprep.subr.mxu0 0.0
    %5608 = vmatpush1.msra.mxu0 0.0
    %5609 = vmatprep.subr.mxu0 0.0
    %5610 = vmatpush1.msra.mxu0 0.0
    %5611 = vmatprep.subr.mxu0 0.0
    %5612 = vmatpush1.msra.mxu0 0.0
    %5613 = vmatprep.mubr.f32.mxu0 0.0
    %5614 = vmatmul.mubr.f32.gmra.mrb[0].mxu0 %v5547
    %v5615 = vpop.f32.mrb[0].mxu0
    %v5616 = vadd.f32 0.0, %v5615
    %v5617 = vpop.f32.mrb[0].mxu0
    %5618 = vdwg.mxu0
    %v5619 = vadd.f32 %v4772, %v5616
    %v5620 = vxor.u32 %v5619, 2147483648
    %v5621 = vmul.f32 %v5620, 1.442695
    %v5622 = vpow.pop %v5621
    %v5623 = vadd.f32 %v5622, 1.0
    %v5624 = vrcp.pop %v5623
    %v5625 = vmul.f32 1.0, %v5624
    %v5626 = vmul.f32 %v5625, 2.0
    %v5627 = vsub.f32 %v5626, 1.0
    %v5628 = vmul.f32 %v5625, %v5530
    %5630 = vrot.lane.b32.xlu0 %v5627, 96
    %v5631 = vpop.permute.xlu0 %5630
    %v5633 = vmul.f32 %v5625, %v5631
    %5635 = vrot.lane.b32.xlu0 %v5633, 16
    %v5636 = vpop.permute.xlu0 %5635
    %v5638 = vadd.f32 %v5628, %v5636
    %v5639 = vtanh.pop %v5638
    %5641 = vrot.lane.b32.xlu0 %v5639, 32
    %v5642 = vpop.permute.xlu0 %5641
    %v5644 = vmul.f32 %v5625, %v5642
    %v5647 = vunpack.c.l.s4 1983009808
    %v5648 = vunpack.c.0.s8 %v5647
    %v5649 = vlaneseq
    %v5650 = vshrl.u32 %v5649, 7
    %v5651 = vsub.s32 %v5648, %v5650
    %v5652 = vrot.slane %v5644, %v5651
    %5653 = vrot.lane.b32.xlu0 %v5652, 80
    %v5654 = vpop.permute.xlu0 %5653
    %v5655 = vsel %vm4789, %v5654, 0
    %5657 = vmatprep.subr.mxu0 0.0
    %5658 = vmatpush1.msra.mxu0 %v4763
    %5659 = vmatprep.subr.mxu0 0.0
    %5660 = vmatpush1.msra.mxu0 %v4764
    %5661 = vmatprep.subr.mxu0 0.0
    %5662 = vmatpush1.msra.mxu0 0.0
    %5663 = vmatprep.subr.mxu0 0.0
    %5664 = vmatpush1.msra.mxu0 0.0
    %5665 = vmatprep.subr.mxu0 0.0
    %5666 = vmatpush1.msra.mxu0 0.0
    %5667 = vmatprep.subr.mxu0 0.0
    %5668 = vmatpush1.msra.mxu0 0.0
    %5669 = vmatprep.subr.mxu0 0.0
    %5670 = vmatpush1.msra.mxu0 0.0
    %5671 = vmatprep.subr.mxu0 0.0
    %5672 = vmatpush1.msra.mxu0 0.0
    %5673 = vmatprep.subr.mxu0 0.0
    %5674 = vmatpush1.msra.mxu0 0.0
    %5675 = vmatprep.subr.mxu0 0.0
    %5676 = vmatpush1.msra.mxu0 0.0
    %5677 = vmatprep.subr.mxu0 0.0
    %5678 = vmatpush1.msra.mxu0 0.0
    %5679 = vmatprep.subr.mxu0 0.0
    %5680 = vmatpush1.msra.mxu0 0.0
    %5681 = vmatprep.subr.mxu0 0.0
    %5682 = vmatpush1.msra.mxu0 0.0
    %5683 = vmatprep.subr.mxu0 0.0
    %5684 = vmatpush1.msra.mxu0 0.0
    %5685 = vmatprep.subr.mxu0 0.0
    %5686 = vmatpush1.msra.mxu0 0.0
    %5687 = vmatprep.subr.mxu0 0.0
    %5688 = vmatpush1.msra.mxu0 0.0
    %5689 = vmatprep.subr.mxu0 0.0
    %5690 = vmatpush1.msra.mxu0 0.0
    %5691 = vmatprep.subr.mxu0 0.0
    %5692 = vmatpush1.msra.mxu0 0.0
    %5693 = vmatprep.subr.mxu0 0.0
    %5694 = vmatpush1.msra.mxu0 0.0
    %5695 = vmatprep.subr.mxu0 0.0
    %5696 = vmatpush1.msra.mxu0 0.0
    %5697 = vmatprep.subr.mxu0 0.0
    %5698 = vmatpush1.msra.mxu0 0.0
    %5699 = vmatprep.subr.mxu0 0.0
    %5700 = vmatpush1.msra.mxu0 0.0
    %5701 = vmatprep.subr.mxu0 0.0
    %5702 = vmatpush1.msra.mxu0 0.0
    %5703 = vmatprep.subr.mxu0 0.0
    %5704 = vmatpush1.msra.mxu0 0.0
    %5705 = vmatprep.subr.mxu0 0.0
    %5706 = vmatpush1.msra.mxu0 0.0
    %5707 = vmatprep.subr.mxu0 0.0
    %5708 = vmatpush1.msra.mxu0 0.0
    %5709 = vmatprep.subr.mxu0 0.0
    %5710 = vmatpush1.msra.mxu0 0.0
    %5711 = vmatprep.subr.mxu0 0.0
    %5712 = vmatpush1.msra.mxu0 0.0
    %5713 = vmatprep.subr.mxu0 0.0
    %5714 = vmatpush1.msra.mxu0 0.0
    %5715 = vmatprep.subr.mxu0 0.0
    %5716 = vmatpush1.msra.mxu0 0.0
    %5717 = vmatprep.subr.mxu0 0.0
    %5718 = vmatpush1.msra.mxu0 0.0
    %5719 = vmatprep.subr.mxu0 0.0
    %5720 = vmatpush1.msra.mxu0 0.0
    %5721 = vmatprep.mubr.f32.mxu0 0.0
    %5722 = vmatmul.mubr.f32.gmra.mrb[0].mxu0 %v5655
    %v5723 = vpop.f32.mrb[0].mxu0
    %v5724 = vadd.f32 0.0, %v5723
    %v5725 = vpop.f32.mrb[0].mxu0
    %5726 = vdwg.mxu0
    %v5727 = vadd.f32 %v4773, %v5724
    %v5728 = vxor.u32 %v5727, 2147483648
    %v5729 = vmul.f32 %v5728, 1.442695
    %v5730 = vpow.pop %v5729
    %v5731 = vadd.f32 %v5730, 1.0
    %v5732 = vrcp.pop %v5731
    %v5733 = vmul.f32 1.0, %v5732
    %v5734 = vmul.f32 %v5733, 2.0
    %v5735 = vsub.f32 %v5734, 1.0
    %v5736 = vmul.f32 %v5733, %v5638
    %5738 = vrot.lane.b32.xlu0 %v5735, 96
    %v5739 = vpop.permute.xlu0 %5738
    %v5741 = vmul.f32 %v5733, %v5739
    %5743 = vrot.lane.b32.xlu0 %v5741, 16
    %v5744 = vpop.permute.xlu0 %5743
    %v5746 = vadd.f32 %v5736, %v5744
    %v5747 = vtanh.pop %v5746
    %5749 = vrot.lane.b32.xlu0 %v5747, 32
    %v5750 = vpop.permute.xlu0 %5749
    %v5752 = vmul.f32 %v5733, %v5750
    %v5755 = vunpack.c.l.s4 1983009808
    %v5756 = vunpack.c.0.s8 %v5755
    %v5757 = vlaneseq
    %v5758 = vshrl.u32 %v5757, 7
    %v5759 = vsub.s32 %v5756, %v5758
    %v5760 = vrot.slane %v5752, %v5759
    %5761 = vrot.lane.b32.xlu0 %v5760, 80
    %v5762 = vpop.permute.xlu0 %5761
    %v5763 = vsel %vm4789, %v5762, 0
    %5765 = vmatprep.subr.mxu0 0.0
    %5766 = vmatpush1.msra.mxu0 %v4763
    %5767 = vmatprep.subr.mxu0 0.0
    %5768 = vmatpush1.msra.mxu0 %v4764
    %5769 = vmatprep.subr.mxu0 0.0
    %5770 = vmatpush1.msra.mxu0 0.0
    %5771 = vmatprep.subr.mxu0 0.0
    %5772 = vmatpush1.msra.mxu0 0.0
    %5773 = vmatprep.subr.mxu0 0.0
    %5774 = vmatpush1.msra.mxu0 0.0
    %5775 = vmatprep.subr.mxu0 0.0
    %5776 = vmatpush1.msra.mxu0 0.0
    %5777 = vmatprep.subr.mxu0 0.0
    %5778 = vmatpush1.msra.mxu0 0.0
    %5779 = vmatprep.subr.mxu0 0.0
    %5780 = vmatpush1.msra.mxu0 0.0
    %5781 = vmatprep.subr.mxu0 0.0
    %5782 = vmatpush1.msra.mxu0 0.0
    %5783 = vmatprep.subr.mxu0 0.0
    %5784 = vmatpush1.msra.mxu0 0.0
    %5785 = vmatprep.subr.mxu0 0.0
    %5786 = vmatpush1.msra.mxu0 0.0
    %5787 = vmatprep.subr.mxu0 0.0
    %5788 = vmatpush1.msra.mxu0 0.0
    %5789 = vmatprep.subr.mxu0 0.0
    %5790 = vmatpush1.msra.mxu0 0.0
    %5791 = vmatprep.subr.mxu0 0.0
    %5792 = vmatpush1.msra.mxu0 0.0
    %5793 = vmatprep.subr.mxu0 0.0
    %5794 = vmatpush1.msra.mxu0 0.0
    %5795 = vmatprep.subr.mxu0 0.0
    %5796 = vmatpush1.msra.mxu0 0.0
    %5797 = vmatprep.subr.mxu0 0.0
    %5798 = vmatpush1.msra.mxu0 0.0
    %5799 = vmatprep.subr.mxu0 0.0
    %5800 = vmatpush1.msra.mxu0 0.0
    %5801 = vmatprep.subr.mxu0 0.0
    %5802 = vmatpush1.msra.mxu0 0.0
    %5803 = vmatprep.subr.mxu0 0.0
    %5804 = vmatpush1.msra.mxu0 0.0
    %5805 = vmatprep.subr.mxu0 0.0
    %5806 = vmatpush1.msra.mxu0 0.0
    %5807 = vmatprep.subr.mxu0 0.0
    %5808 = vmatpush1.msra.mxu0 0.0
    %5809 = vmatprep.subr.mxu0 0.0
    %5810 = vmatpush1.msra.mxu0 0.0
    %5811 = vmatprep.subr.mxu0 0.0
    %5812 = vmatpush1.msra.mxu0 0.0
    %5813 = vmatprep.subr.mxu0 0.0
    %5814 = vmatpush1.msra.mxu0 0.0
    %5815 = vmatprep.subr.mxu0 0.0
    %5816 = vmatpush1.msra.mxu0 0.0
    %5817 = vmatprep.subr.mxu0 0.0
    %5818 = vmatpush1.msra.mxu0 0.0
    %5819 = vmatprep.subr.mxu0 0.0
    %5820 = vmatpush1.msra.mxu0 0.0
    %5821 = vmatprep.subr.mxu0 0.0
    %5822 = vmatpush1.msra.mxu0 0.0
    %5823 = vmatprep.subr.mxu0 0.0
    %5824 = vmatpush1.msra.mxu0 0.0
    %5825 = vmatprep.subr.mxu0 0.0
    %5826 = vmatpush1.msra.mxu0 0.0
    %5827 = vmatprep.subr.mxu0 0.0
    %5828 = vmatpush1.msra.mxu0 0.0
    %5829 = vmatprep.mubr.f32.mxu0 0.0
    %5830 = vmatmul.mubr.f32.gmra.mrb[0].mxu0 %v5763
    %v5831 = vpop.f32.mrb[0].mxu0
    %v5832 = vadd.f32 0.0, %v5831
    %v5833 = vpop.f32.mrb[0].mxu0
    %5834 = vdwg.mxu0
    %v5835 = vadd.f32 %v4774, %v5832
    %v5836 = vxor.u32 %v5835, 2147483648
    %v5837 = vmul.f32 %v5836, 1.442695
    %v5838 = vpow.pop %v5837
    %v5839 = vadd.f32 %v5838, 1.0
    %v5840 = vrcp.pop %v5839
    %v5841 = vmul.f32 1.0, %v5840
    %v5842 = vmul.f32 %v5841, 2.0
    %v5843 = vsub.f32 %v5842, 1.0
    %v5844 = vmul.f32 %v5841, %v5746
    %5846 = vrot.lane.b32.xlu0 %v5843, 96
    %v5847 = vpop.permute.xlu0 %5846
    %v5849 = vmul.f32 %v5841, %v5847
    %5851 = vrot.lane.b32.xlu0 %v5849, 16
    %v5852 = vpop.permute.xlu0 %5851
    %v5854 = vadd.f32 %v5844, %v5852
    %v5855 = vtanh.pop %v5854
    %5857 = vrot.lane.b32.xlu0 %v5855, 32
    %v5858 = vpop.permute.xlu0 %5857
    %v5860 = vmul.f32 %v5841, %v5858
    %v5863 = vunpack.c.l.s4 1983009808
    %v5864 = vunpack.c.0.s8 %v5863
    %v5865 = vlaneseq
    %v5866 = vshrl.u32 %v5865, 7
    %v5867 = vsub.s32 %v5864, %v5866
    %v5868 = vrot.slane %v5860, %v5867
    %5869 = vrot.lane.b32.xlu0 %v5868, 80
    %v5870 = vpop.permute.xlu0 %5869
    %v5871 = vsel %vm4789, %v5870, 0
    %5873 = vmatprep.subr.mxu0 0.0
    %5874 = vmatpush1.msra.mxu0 %v4763
    %5875 = vmatprep.subr.mxu0 0.0
    %5876 = vmatpush1.msra.mxu0 %v4764
    %5877 = vmatprep.subr.mxu0 0.0
    %5878 = vmatpush1.msra.mxu0 0.0
    %5879 = vmatprep.subr.mxu0 0.0
    %5880 = vmatpush1.msra.mxu0 0.0
    %5881 = vmatprep.subr.mxu0 0.0
    %5882 = vmatpush1.msra.mxu0 0.0
    %5883 = vmatprep.subr.mxu0 0.0
    %5884 = vmatpush1.msra.mxu0 0.0
    %5885 = vmatprep.subr.mxu0 0.0
    %5886 = vmatpush1.msra.mxu0 0.0
    %5887 = vmatprep.subr.mxu0 0.0
    %5888 = vmatpush1.msra.mxu0 0.0
    %5889 = vmatprep.subr.mxu0 0.0
    %5890 = vmatpush1.msra.mxu0 0.0
    %5891 = vmatprep.subr.mxu0 0.0
    %5892 = vmatpush1.msra.mxu0 0.0
    %5893 = vmatprep.subr.mxu0 0.0
    %5894 = vmatpush1.msra.mxu0 0.0
    %5895 = vmatprep.subr.mxu0 0.0
    %5896 = vmatpush1.msra.mxu0 0.0
    %5897 = vmatprep.subr.mxu0 0.0
    %5898 = vmatpush1.msra.mxu0 0.0
    %5899 = vmatprep.subr.mxu0 0.0
    %5900 = vmatpush1.msra.mxu0 0.0
    %5901 = vmatprep.subr.mxu0 0.0
    %5902 = vmatpush1.msra.mxu0 0.0
    %5903 = vmatprep.subr.mxu0 0.0
    %5904 = vmatpush1.msra.mxu0 0.0
    %5905 = vmatprep.subr.mxu0 0.0
    %5906 = vmatpush1.msra.mxu0 0.0
    %5907 = vmatprep.subr.mxu0 0.0
    %5908 = vmatpush1.msra.mxu0 0.0
    %5909 = vmatprep.subr.mxu0 0.0
    %5910 = vmatpush1.msra.mxu0 0.0
    %5911 = vmatprep.subr.mxu0 0.0
    %5912 = vmatpush1.msra.mxu0 0.0
    %5913 = vmatprep.subr.mxu0 0.0
    %5914 = vmatpush1.msra.mxu0 0.0
    %5915 = vmatprep.subr.mxu0 0.0
    %5916 = vmatpush1.msra.mxu0 0.0
    %5917 = vmatprep.subr.mxu0 0.0
    %5918 = vmatpush1.msra.mxu0 0.0
    %5919 = vmatprep.subr.mxu0 0.0
    %5920 = vmatpush1.msra.mxu0 0.0
    %5921 = vmatprep.subr.mxu0 0.0
    %5922 = vmatpush1.msra.mxu0 0.0
    %5923 = vmatprep.subr.mxu0 0.0
    %5924 = vmatpush1.msra.mxu0 0.0
    %5925 = vmatprep.subr.mxu0 0.0
    %5926 = vmatpush1.msra.mxu0 0.0
    %5927 = vmatprep.subr.mxu0 0.0
    %5928 = vmatpush1.msra.mxu0 0.0
    %5929 = vmatprep.subr.mxu0 0.0
    %5930 = vmatpush1.msra.mxu0 0.0
    %5931 = vmatprep.subr.mxu0 0.0
    %5932 = vmatpush1.msra.mxu0 0.0
    %5933 = vmatprep.subr.mxu0 0.0
    %5934 = vmatpush1.msra.mxu0 0.0
    %5935 = vmatprep.subr.mxu0 0.0
    %5936 = vmatpush1.msra.mxu0 0.0
    %5937 = vmatprep.mubr.f32.mxu0 0.0
    %5938 = vmatmul.mubr.f32.gmra.mrb[0].mxu0 %v5871
    %v5939 = vpop.f32.mrb[0].mxu0
    %v5940 = vadd.f32 0.0, %v5939
    %v5941 = vpop.f32.mrb[0].mxu0
    %5942 = vdwg.mxu0
    %v5943 = vadd.f32 %v4775, %v5940
    %v5944 = vxor.u32 %v5943, 2147483648
    %v5945 = vmul.f32 %v5944, 1.442695
    %v5946 = vpow.pop %v5945
    %v5947 = vadd.f32 %v5946, 1.0
    %v5948 = vrcp.pop %v5947
    %v5949 = vmul.f32 1.0, %v5948
    %v5950 = vmul.f32 %v5949, 2.0
    %v5951 = vsub.f32 %v5950, 1.0
    %v5952 = vmul.f32 %v5949, %v5854
    %5954 = vrot.lane.b32.xlu0 %v5951, 96
    %v5955 = vpop.permute.xlu0 %5954
    %v5957 = vmul.f32 %v5949, %v5955
    %5959 = vrot.lane.b32.xlu0 %v5957, 16
    %v5960 = vpop.permute.xlu0 %5959
    %v5962 = vadd.f32 %v5952, %v5960
    %v5963 = vtanh.pop %v5962
    %5965 = vrot.lane.b32.xlu0 %v5963, 32
    %v5966 = vpop.permute.xlu0 %5965
    %v5968 = vmul.f32 %v5949, %v5966
    %v5971 = vunpack.c.l.s4 1983009808
    %v5972 = vunpack.c.0.s8 %v5971
    %v5973 = vlaneseq
    %v5974 = vshrl.u32 %v5973, 7
    %v5975 = vsub.s32 %v5972, %v5974
    %v5976 = vrot.slane %v5968, %v5975
    %5977 = vrot.lane.b32.xlu0 %v5976, 80
    %v5978 = vpop.permute.xlu0 %5977
    %v5979 = vsel %vm4789, %v5978, 0
    %5981 = vmatprep.subr.mxu0 0.0
    %5982 = vmatpush1.msra.mxu0 %v4763
    %5983 = vmatprep.subr.mxu0 0.0
    %5984 = vmatpush1.msra.mxu0 %v4764
    %5985 = vmatprep.subr.mxu0 0.0
    %5986 = vmatpush1.msra.mxu0 0.0
    %5987 = vmatprep.subr.mxu0 0.0
    %5988 = vmatpush1.msra.mxu0 0.0
    %5989 = vmatprep.subr.mxu0 0.0
    %5990 = vmatpush1.msra.mxu0 0.0
    %5991 = vmatprep.subr.mxu0 0.0
    %5992 = vmatpush1.msra.mxu0 0.0
    %5993 = vmatprep.subr.mxu0 0.0
    %5994 = vmatpush1.msra.mxu0 0.0
    %5995 = vmatprep.subr.mxu0 0.0
    %5996 = vmatpush1.msra.mxu0 0.0
    %5997 = vmatprep.subr.mxu0 0.0
    %5998 = vmatpush1.msra.mxu0 0.0
    %5999 = vmatprep.subr.mxu0 0.0
    %6000 = vmatpush1.msra.mxu0 0.0
    %6001 = vmatprep.subr.mxu0 0.0
    %6002 = vmatpush1.msra.mxu0 0.0
    %6003 = vmatprep.subr.mxu0 0.0
    %6004 = vmatpush1.msra.mxu0 0.0
    %6005 = vmatprep.subr.mxu0 0.0
    %6006 = vmatpush1.msra.mxu0 0.0
    %6007 = vmatprep.subr.mxu0 0.0
    %6008 = vmatpush1.msra.mxu0 0.0
    %6009 = vmatprep.subr.mxu0 0.0
    %6010 = vmatpush1.msra.mxu0 0.0
    %6011 = vmatprep.subr.mxu0 0.0
    %6012 = vmatpush1.msra.mxu0 0.0
    %6013 = vmatprep.subr.mxu0 0.0
    %6014 = vmatpush1.msra.mxu0 0.0
    %6015 = vmatprep.subr.mxu0 0.0
    %6016 = vmatpush1.msra.mxu0 0.0
    %6017 = vmatprep.subr.mxu0 0.0
    %6018 = vmatpush1.msra.mxu0 0.0
    %6019 = vmatprep.subr.mxu0 0.0
    %6020 = vmatpush1.msra.mxu0 0.0
    %6021 = vmatprep.subr.mxu0 0.0
    %6022 = vmatpush1.msra.mxu0 0.0
    %6023 = vmatprep.subr.mxu0 0.0
    %6024 = vmatpush1.msra.mxu0 0.0
    %6025 = vmatprep.subr.mxu0 0.0
    %6026 = vmatpush1.msra.mxu0 0.0
    %6027 = vmatprep.subr.mxu0 0.0
    %6028 = vmatpush1.msra.mxu0 0.0
    %6029 = vmatprep.subr.mxu0 0.0
    %6030 = vmatpush1.msra.mxu0 0.0
    %6031 = vmatprep.subr.mxu0 0.0
    %6032 = vmatpush1.msra.mxu0 0.0
    %6033 = vmatprep.subr.mxu0 0.0
    %6034 = vmatpush1.msra.mxu0 0.0
    %6035 = vmatprep.subr.mxu0 0.0
    %6036 = vmatpush1.msra.mxu0 0.0
    %6037 = vmatprep.subr.mxu0 0.0
    %6038 = vmatpush1.msra.mxu0 0.0
    %6039 = vmatprep.subr.mxu0 0.0
    %6040 = vmatpush1.msra.mxu0 0.0
    %6041 = vmatprep.subr.mxu0 0.0
    %6042 = vmatpush1.msra.mxu0 0.0
    %6043 = vmatprep.subr.mxu0 0.0
    %6044 = vmatpush1.msra.mxu0 0.0
    %6045 = vmatprep.mubr.f32.mxu0 0.0
    %6046 = vmatmul.mubr.f32.gmra.mrb[0].mxu0 %v5979
    %v6047 = vpop.f32.mrb[0].mxu0
    %v6048 = vadd.f32 0.0, %v6047
    %v6049 = vpop.f32.mrb[0].mxu0
    %6050 = vdwg.mxu0
    %v6051 = vadd.f32 %v4776, %v6048
    %v6052 = vxor.u32 %v6051, 2147483648
    %v6053 = vmul.f32 %v6052, 1.442695
    %v6054 = vpow.pop %v6053
    %v6055 = vadd.f32 %v6054, 1.0
    %v6056 = vrcp.pop %v6055
    %v6057 = vmul.f32 1.0, %v6056
    %v6058 = vmul.f32 %v6057, 2.0
    %v6059 = vsub.f32 %v6058, 1.0
    %v6060 = vmul.f32 %v6057, %v5962
    %6062 = vrot.lane.b32.xlu0 %v6059, 96
    %v6063 = vpop.permute.xlu0 %6062
    %v6065 = vmul.f32 %v6057, %v6063
    %6067 = vrot.lane.b32.xlu0 %v6065, 16
    %v6068 = vpop.permute.xlu0 %6067
    %v6070 = vadd.f32 %v6060, %v6068
    %v6071 = vtanh.pop %v6070
    %6073 = vrot.lane.b32.xlu0 %v6071, 32
    %v6074 = vpop.permute.xlu0 %6073
    %v6076 = vmul.f32 %v6057, %v6074
    %v6079 = vunpack.c.l.s4 1983009808
    %v6080 = vunpack.c.0.s8 %v6079
    %v6081 = vlaneseq
    %v6082 = vshrl.u32 %v6081, 7
    %v6083 = vsub.s32 %v6080, %v6082
    %v6084 = vrot.slane %v6076, %v6083
    %6085 = vrot.lane.b32.xlu0 %v6084, 80
    %v6086 = vpop.permute.xlu0 %6085
    %v6087 = vsel %vm4789, %v6086, 0
    %6089 = vmatprep.subr.mxu0 0.0
    %6090 = vmatpush1.msra.mxu0 %v4763
    %6091 = vmatprep.subr.mxu0 0.0
    %6092 = vmatpush1.msra.mxu0 %v4764
    %6093 = vmatprep.subr.mxu0 0.0
    %6094 = vmatpush1.msra.mxu0 0.0
    %6095 = vmatprep.subr.mxu0 0.0
    %6096 = vmatpush1.msra.mxu0 0.0
    %6097 = vmatprep.subr.mxu0 0.0
    %6098 = vmatpush1.msra.mxu0 0.0
    %6099 = vmatprep.subr.mxu0 0.0
    %6100 = vmatpush1.msra.mxu0 0.0
    %6101 = vmatprep.subr.mxu0 0.0
    %6102 = vmatpush1.msra.mxu0 0.0
    %6103 = vmatprep.subr.mxu0 0.0
    %6104 = vmatpush1.msra.mxu0 0.0
    %6105 = vmatprep.subr.mxu0 0.0
    %6106 = vmatpush1.msra.mxu0 0.0
    %6107 = vmatprep.subr.mxu0 0.0
    %6108 = vmatpush1.msra.mxu0 0.0
    %6109 = vmatprep.subr.mxu0 0.0
    %6110 = vmatpush1.msra.mxu0 0.0
    %6111 = vmatprep.subr.mxu0 0.0
    %6112 = vmatpush1.msra.mxu0 0.0
    %6113 = vmatprep.subr.mxu0 0.0
    %6114 = vmatpush1.msra.mxu0 0.0
    %6115 = vmatprep.subr.mxu0 0.0
    %6116 = vmatpush1.msra.mxu0 0.0
    %6117 = vmatprep.subr.mxu0 0.0
    %6118 = vmatpush1.msra.mxu0 0.0
    %6119 = vmatprep.subr.mxu0 0.0
    %6120 = vmatpush1.msra.mxu0 0.0
    %6121 = vmatprep.subr.mxu0 0.0
    %6122 = vmatpush1.msra.mxu0 0.0
    %6123 = vmatprep.subr.mxu0 0.0
    %6124 = vmatpush1.msra.mxu0 0.0
    %6125 = vmatprep.subr.mxu0 0.0
    %6126 = vmatpush1.msra.mxu0 0.0
    %6127 = vmatprep.subr.mxu0 0.0
    %6128 = vmatpush1.msra.mxu0 0.0
    %6129 = vmatprep.subr.mxu0 0.0
    %6130 = vmatpush1.msra.mxu0 0.0
    %6131 = vmatprep.subr.mxu0 0.0
    %6132 = vmatpush1.msra.mxu0 0.0
    %6133 = vmatprep.subr.mxu0 0.0
    %6134 = vmatpush1.msra.mxu0 0.0
    %6135 = vmatprep.subr.mxu0 0.0
    %6136 = vmatpush1.msra.mxu0 0.0
    %6137 = vmatprep.subr.mxu0 0.0
    %6138 = vmatpush1.msra.mxu0 0.0
    %6139 = vmatprep.subr.mxu0 0.0
    %6140 = vmatpush1.msra.mxu0 0.0
    %6141 = vmatprep.subr.mxu0 0.0
    %6142 = vmatpush1.msra.mxu0 0.0
    %6143 = vmatprep.subr.mxu0 0.0
    %6144 = vmatpush1.msra.mxu0 0.0
    %6145 = vmatprep.subr.mxu0 0.0
    %6146 = vmatpush1.msra.mxu0 0.0
    %6147 = vmatprep.subr.mxu0 0.0
    %6148 = vmatpush1.msra.mxu0 0.0
    %6149 = vmatprep.subr.mxu0 0.0
    %6150 = vmatpush1.msra.mxu0 0.0
    %6151 = vmatprep.subr.mxu0 0.0
    %6152 = vmatpush1.msra.mxu0 0.0
    %6153 = vmatprep.mubr.f32.mxu0 0.0
    %6154 = vmatmul.mubr.f32.gmra.mrb[0].mxu0 %v6087
    %v6155 = vpop.f32.mrb[0].mxu0
    %v6156 = vadd.f32 0.0, %v6155
    %v6157 = vpop.f32.mrb[0].mxu0
    %6158 = vdwg.mxu0
    %v6159 = vadd.f32 %v4777, %v6156
    %v6160 = vxor.u32 %v6159, 2147483648
    %v6161 = vmul.f32 %v6160, 1.442695
    %v6162 = vpow.pop %v6161
    %v6163 = vadd.f32 %v6162, 1.0
    %v6164 = vrcp.pop %v6163
    %v6165 = vmul.f32 1.0, %v6164
    %v6166 = vmul.f32 %v6165, 2.0
    %v6167 = vsub.f32 %v6166, 1.0
    %v6168 = vmul.f32 %v6165, %v6070
    %6170 = vrot.lane.b32.xlu0 %v6167, 96
    %v6171 = vpop.permute.xlu0 %6170
    %v6173 = vmul.f32 %v6165, %v6171
    %6175 = vrot.lane.b32.xlu0 %v6173, 16
    %v6176 = vpop.permute.xlu0 %6175
    %v6178 = vadd.f32 %v6168, %v6176
    %v6179 = vtanh.pop %v6178
    %6181 = vrot.lane.b32.xlu0 %v6179, 32
    %v6182 = vpop.permute.xlu0 %6181
    %v6184 = vmul.f32 %v6165, %v6182
    %v6187 = vunpack.c.l.s4 1983009808
    %v6188 = vunpack.c.0.s8 %v6187
    %v6189 = vlaneseq
    %v6190 = vshrl.u32 %v6189, 7
    %v6191 = vsub.s32 %v6188, %v6190
    %v6192 = vrot.slane %v6184, %v6191
    %6193 = vrot.lane.b32.xlu0 %v6192, 80
    %v6194 = vpop.permute.xlu0 %6193
    %v6195 = vsel %vm4789, %v6194, 0
    %6197 = vmatprep.subr.mxu0 0.0
    %6198 = vmatpush1.msra.mxu0 %v4763
    %6199 = vmatprep.subr.mxu0 0.0
    %6200 = vmatpush1.msra.mxu0 %v4764
    %6201 = vmatprep.subr.mxu0 0.0
    %6202 = vmatpush1.msra.mxu0 0.0
    %6203 = vmatprep.subr.mxu0 0.0
    %6204 = vmatpush1.msra.mxu0 0.0
    %6205 = vmatprep.subr.mxu0 0.0
    %6206 = vmatpush1.msra.mxu0 0.0
    %6207 = vmatprep.subr.mxu0 0.0
    %6208 = vmatpush1.msra.mxu0 0.0
    %6209 = vmatprep.subr.mxu0 0.0
    %6210 = vmatpush1.msra.mxu0 0.0
    %6211 = vmatprep.subr.mxu0 0.0
    %6212 = vmatpush1.msra.mxu0 0.0
    %6213 = vmatprep.subr.mxu0 0.0
    %6214 = vmatpush1.msra.mxu0 0.0
    %6215 = vmatprep.subr.mxu0 0.0
    %6216 = vmatpush1.msra.mxu0 0.0
    %6217 = vmatprep.subr.mxu0 0.0
    %6218 = vmatpush1.msra.mxu0 0.0
    %6219 = vmatprep.subr.mxu0 0.0
    %6220 = vmatpush1.msra.mxu0 0.0
    %6221 = vmatprep.subr.mxu0 0.0
    %6222 = vmatpush1.msra.mxu0 0.0
    %6223 = vmatprep.subr.mxu0 0.0
    %6224 = vmatpush1.msra.mxu0 0.0
    %6225 = vmatprep.subr.mxu0 0.0
    %6226 = vmatpush1.msra.mxu0 0.0
    %6227 = vmatprep.subr.mxu0 0.0
    %6228 = vmatpush1.msra.mxu0 0.0
    %6229 = vmatprep.subr.mxu0 0.0
    %6230 = vmatpush1.msra.mxu0 0.0
    %6231 = vmatprep.subr.mxu0 0.0
    %6232 = vmatpush1.msra.mxu0 0.0
    %6233 = vmatprep.subr.mxu0 0.0
    %6234 = vmatpush1.msra.mxu0 0.0
    %6235 = vmatprep.subr.mxu0 0.0
    %6236 = vmatpush1.msra.mxu0 0.0
    %6237 = vmatprep.subr.mxu0 0.0
    %6238 = vmatpush1.msra.mxu0 0.0
    %6239 = vmatprep.subr.mxu0 0.0
    %6240 = vmatpush1.msra.mxu0 0.0
    %6241 = vmatprep.subr.mxu0 0.0
    %6242 = vmatpush1.msra.mxu0 0.0
    %6243 = vmatprep.subr.mxu0 0.0
    %6244 = vmatpush1.msra.mxu0 0.0
    %6245 = vmatprep.subr.mxu0 0.0
    %6246 = vmatpush1.msra.mxu0 0.0
    %6247 = vmatprep.subr.mxu0 0.0
    %6248 = vmatpush1.msra.mxu0 0.0
    %6249 = vmatprep.subr.mxu0 0.0
    %6250 = vmatpush1.msra.mxu0 0.0
    %6251 = vmatprep.subr.mxu0 0.0
    %6252 = vmatpush1.msra.mxu0 0.0
    %6253 = vmatprep.subr.mxu0 0.0
    %6254 = vmatpush1.msra.mxu0 0.0
    %6255 = vmatprep.subr.mxu0 0.0
    %6256 = vmatpush1.msra.mxu0 0.0
    %6257 = vmatprep.subr.mxu0 0.0
    %6258 = vmatpush1.msra.mxu0 0.0
    %6259 = vmatprep.subr.mxu0 0.0
    %6260 = vmatpush1.msra.mxu0 0.0
    %6261 = vmatprep.mubr.f32.mxu0 0.0
    %6262 = vmatmul.mubr.f32.gmra.mrb[0].mxu0 %v6195
    %v6263 = vpop.f32.mrb[0].mxu0
    %v6264 = vadd.f32 0.0, %v6263
    %v6265 = vpop.f32.mrb[0].mxu0
    %6266 = vdwg.mxu0
    %v6267 = vadd.f32 %v4778, %v6264
    %v6268 = vxor.u32 %v6267, 2147483648
    %v6269 = vmul.f32 %v6268, 1.442695
    %v6270 = vpow.pop %v6269
    %v6271 = vadd.f32 %v6270, 1.0
    %v6272 = vrcp.pop %v6271
    %v6273 = vmul.f32 1.0, %v6272
    %v6274 = vmul.f32 %v6273, 2.0
    %v6275 = vsub.f32 %v6274, 1.0
    %v6276 = vmul.f32 %v6273, %v6178
    %6278 = vrot.lane.b32.xlu0 %v6275, 96
    %v6279 = vpop.permute.xlu0 %6278
    %v6281 = vmul.f32 %v6273, %v6279
    %6283 = vrot.lane.b32.xlu0 %v6281, 16
    %v6284 = vpop.permute.xlu0 %6283
    %v6286 = vadd.f32 %v6276, %v6284
    %v6287 = vtanh.pop %v6286
    %6289 = vrot.lane.b32.xlu0 %v6287, 32
    %v6290 = vpop.permute.xlu0 %6289
    %v6292 = vmul.f32 %v6273, %v6290
    %v6295 = vunpack.c.l.s4 1983009808
    %v6296 = vunpack.c.0.s8 %v6295
    %v6297 = vlaneseq
    %v6298 = vshrl.u32 %v6297, 7
    %v6299 = vsub.s32 %v6296, %v6298
    %v6300 = vrot.slane %v6292, %v6299
    %6301 = vrot.lane.b32.xlu0 %v6300, 80
    %v6302 = vpop.permute.xlu0 %6301
    %v6303 = vsel %vm4789, %v6302, 0
    %6305 = vmatprep.subr.mxu0 0.0
    %6306 = vmatpush1.msra.mxu0 %v4763
    %6307 = vmatprep.subr.mxu0 0.0
    %6308 = vmatpush1.msra.mxu0 %v4764
    %6309 = vmatprep.subr.mxu0 0.0
    %6310 = vmatpush1.msra.mxu0 0.0
    %6311 = vmatprep.subr.mxu0 0.0
    %6312 = vmatpush1.msra.mxu0 0.0
    %6313 = vmatprep.subr.mxu0 0.0
    %6314 = vmatpush1.msra.mxu0 0.0
    %6315 = vmatprep.subr.mxu0 0.0
    %6316 = vmatpush1.msra.mxu0 0.0
    %6317 = vmatprep.subr.mxu0 0.0
    %6318 = vmatpush1.msra.mxu0 0.0
    %6319 = vmatprep.subr.mxu0 0.0
    %6320 = vmatpush1.msra.mxu0 0.0
    %6321 = vmatprep.subr.mxu0 0.0
    %6322 = vmatpush1.msra.mxu0 0.0
    %6323 = vmatprep.subr.mxu0 0.0
    %6324 = vmatpush1.msra.mxu0 0.0
    %6325 = vmatprep.subr.mxu0 0.0
    %6326 = vmatpush1.msra.mxu0 0.0
    %6327 = vmatprep.subr.mxu0 0.0
    %6328 = vmatpush1.msra.mxu0 0.0
    %6329 = vmatprep.subr.mxu0 0.0
    %6330 = vmatpush1.msra.mxu0 0.0
    %6331 = vmatprep.subr.mxu0 0.0
    %6332 = vmatpush1.msra.mxu0 0.0
    %6333 = vmatprep.subr.mxu0 0.0
    %6334 = vmatpush1.msra.mxu0 0.0
    %6335 = vmatprep.subr.mxu0 0.0
    %6336 = vmatpush1.msra.mxu0 0.0
    %6337 = vmatprep.subr.mxu0 0.0
    %6338 = vmatpush1.msra.mxu0 0.0
    %6339 = vmatprep.subr.mxu0 0.0
    %6340 = vmatpush1.msra.mxu0 0.0
    %6341 = vmatprep.subr.mxu0 0.0
    %6342 = vmatpush1.msra.mxu0 0.0
    %6343 = vmatprep.subr.mxu0 0.0
    %6344 = vmatpush1.msra.mxu0 0.0
    %6345 = vmatprep.subr.mxu0 0.0
    %6346 = vmatpush1.msra.mxu0 0.0
    %6347 = vmatprep.subr.mxu0 0.0
    %6348 = vmatpush1.msra.mxu0 0.0
    %6349 = vmatprep.subr.mxu0 0.0
    %6350 = vmatpush1.msra.mxu0 0.0
    %6351 = vmatprep.subr.mxu0 0.0
    %6352 = vmatpush1.msra.mxu0 0.0
    %6353 = vmatprep.subr.mxu0 0.0
    %6354 = vmatpush1.msra.mxu0 0.0
    %6355 = vmatprep.subr.mxu0 0.0
    %6356 = vmatpush1.msra.mxu0 0.0
    %6357 = vmatprep.subr.mxu0 0.0
    %6358 = vmatpush1.msra.mxu0 0.0
    %6359 = vmatprep.subr.mxu0 0.0
    %6360 = vmatpush1.msra.mxu0 0.0
    %6361 = vmatprep.subr.mxu0 0.0
    %6362 = vmatpush1.msra.mxu0 0.0
    %6363 = vmatprep.subr.mxu0 0.0
    %6364 = vmatpush1.msra.mxu0 0.0
    %6365 = vmatprep.subr.mxu0 0.0
    %6366 = vmatpush1.msra.mxu0 0.0
    %6367 = vmatprep.subr.mxu0 0.0
    %6368 = vmatpush1.msra.mxu0 0.0
    %6369 = vmatprep.mubr.f32.mxu0 0.0
    %6370 = vmatmul.mubr.f32.gmra.mrb[0].mxu0 %v6303
    %v6371 = vpop.f32.mrb[0].mxu0
    %v6372 = vadd.f32 0.0, %v6371
    %v6373 = vpop.f32.mrb[0].mxu0
    %6374 = vdwg.mxu0
    %v6375 = vadd.f32 %v4779, %v6372
    %v6376 = vxor.u32 %v6375, 2147483648
    %v6377 = vmul.f32 %v6376, 1.442695
    %v6378 = vpow.pop %v6377
    %v6379 = vadd.f32 %v6378, 1.0
    %v6380 = vrcp.pop %v6379
    %v6381 = vmul.f32 1.0, %v6380
    %v6382 = vmul.f32 %v6381, 2.0
    %v6383 = vsub.f32 %v6382, 1.0
    %v6384 = vmul.f32 %v6381, %v6286
    %6386 = vrot.lane.b32.xlu0 %v6383, 96
    %v6387 = vpop.permute.xlu0 %6386
    %v6389 = vmul.f32 %v6381, %v6387
    %6391 = vrot.lane.b32.xlu0 %v6389, 16
    %v6392 = vpop.permute.xlu0 %6391
    %v6394 = vadd.f32 %v6384, %v6392
    %v6395 = vtanh.pop %v6394
    %6397 = vrot.lane.b32.xlu0 %v6395, 32
    %v6398 = vpop.permute.xlu0 %6397
    %v6400 = vmul.f32 %v6381, %v6398
    %v6403 = vunpack.c.l.s4 1983009808
    %v6404 = vunpack.c.0.s8 %v6403
    %v6405 = vlaneseq
    %v6406 = vshrl.u32 %v6405, 7
    %v6407 = vsub.s32 %v6404, %v6406
    %v6408 = vrot.slane %v6400, %v6407
    %6409 = vrot.lane.b32.xlu0 %v6408, 80
    %v6410 = vpop.permute.xlu0 %6409
    %v6411 = vsel %vm4789, %v6410, 0
    %6413 = vmatprep.subr.mxu0 0.0
    %6414 = vmatpush1.msra.mxu0 %v4763
    %6415 = vmatprep.subr.mxu0 0.0
    %6416 = vmatpush1.msra.mxu0 %v4764
    %6417 = vmatprep.subr.mxu0 0.0
    %6418 = vmatpush1.msra.mxu0 0.0
    %6419 = vmatprep.subr.mxu0 0.0
    %6420 = vmatpush1.msra.mxu0 0.0
    %6421 = vmatprep.subr.mxu0 0.0
    %6422 = vmatpush1.msra.mxu0 0.0
    %6423 = vmatprep.subr.mxu0 0.0
    %6424 = vmatpush1.msra.mxu0 0.0
    %6425 = vmatprep.subr.mxu0 0.0
    %6426 = vmatpush1.msra.mxu0 0.0
    %6427 = vmatprep.subr.mxu0 0.0
    %6428 = vmatpush1.msra.mxu0 0.0
    %6429 = vmatprep.subr.mxu0 0.0
    %6430 = vmatpush1.msra.mxu0 0.0
    %6431 = vmatprep.subr.mxu0 0.0
    %6432 = vmatpush1.msra.mxu0 0.0
    %6433 = vmatprep.subr.mxu0 0.0
    %6434 = vmatpush1.msra.mxu0 0.0
    %6435 = vmatprep.subr.mxu0 0.0
    %6436 = vmatpush1.msra.mxu0 0.0
    %6437 = vmatprep.subr.mxu0 0.0
    %6438 = vmatpush1.msra.mxu0 0.0
    %6439 = vmatprep.subr.mxu0 0.0
    %6440 = vmatpush1.msra.mxu0 0.0
    %6441 = vmatprep.subr.mxu0 0.0
    %6442 = vmatpush1.msra.mxu0 0.0
    %6443 = vmatprep.subr.mxu0 0.0
    %6444 = vmatpush1.msra.mxu0 0.0
    %6445 = vmatprep.subr.mxu0 0.0
    %6446 = vmatpush1.msra.mxu0 0.0
    %6447 = vmatprep.subr.mxu0 0.0
    %6448 = vmatpush1.msra.mxu0 0.0
    %6449 = vmatprep.subr.mxu0 0.0
    %6450 = vmatpush1.msra.mxu0 0.0
    %6451 = vmatprep.subr.mxu0 0.0
    %6452 = vmatpush1.msra.mxu0 0.0
    %6453 = vmatprep.subr.mxu0 0.0
    %6454 = vmatpush1.msra.mxu0 0.0
    %6455 = vmatprep.subr.mxu0 0.0
    %6456 = vmatpush1.msra.mxu0 0.0
    %6457 = vmatprep.subr.mxu0 0.0
    %6458 = vmatpush1.msra.mxu0 0.0
    %6459 = vmatprep.subr.mxu0 0.0
    %6460 = vmatpush1.msra.mxu0 0.0
    %6461 = vmatprep.subr.mxu0 0.0
    %6462 = vmatpush1.msra.mxu0 0.0
    %6463 = vmatprep.subr.mxu0 0.0
    %6464 = vmatpush1.msra.mxu0 0.0
    %6465 = vmatprep.subr.mxu0 0.0
    %6466 = vmatpush1.msra.mxu0 0.0
    %6467 = vmatprep.subr.mxu0 0.0
    %6468 = vmatpush1.msra.mxu0 0.0
    %6469 = vmatprep.subr.mxu0 0.0
    %6470 = vmatpush1.msra.mxu0 0.0
    %6471 = vmatprep.subr.mxu0 0.0
    %6472 = vmatpush1.msra.mxu0 0.0
    %6473 = vmatprep.subr.mxu0 0.0
    %6474 = vmatpush1.msra.mxu0 0.0
    %6475 = vmatprep.subr.mxu0 0.0
    %6476 = vmatpush1.msra.mxu0 0.0
    %6477 = vmatprep.mubr.f32.mxu0 0.0
    %6478 = vmatmul.mubr.f32.gmra.mrb[0].mxu0 %v6411
    %v6479 = vpop.f32.mrb[0].mxu0
    %v6480 = vadd.f32 0.0, %v6479
    %v6481 = vpop.f32.mrb[0].mxu0
    %6482 = vdwg.mxu0
    %v6483 = vadd.f32 %v4780, %v6480
    %v6484 = vxor.u32 %v6483, 2147483648
    %v6485 = vmul.f32 %v6484, 1.442695
    %v6486 = vpow.pop %v6485
    %v6487 = vadd.f32 %v6486, 1.0
    %v6488 = vrcp.pop %v6487
    %v6489 = vmul.f32 1.0, %v6488
    %v6490 = vmul.f32 %v6489, 2.0
    %v6491 = vsub.f32 %v6490, 1.0
    %v6492 = vmul.f32 %v6489, %v6394
    %6494 = vrot.lane.b32.xlu0 %v6491, 96
    %v6495 = vpop.permute.xlu0 %6494
    %v6497 = vmul.f32 %v6489, %v6495
    %6499 = vrot.lane.b32.xlu0 %v6497, 16
    %v6500 = vpop.permute.xlu0 %6499
    %v6502 = vadd.f32 %v6492, %v6500
    %v6503 = vtanh.pop %v6502
    %6505 = vrot.lane.b32.xlu0 %v6503, 32
    %v6506 = vpop.permute.xlu0 %6505
    %v6508 = vmul.f32 %v6489, %v6506
    %v6511 = vunpack.c.l.s4 1983009808
    %v6512 = vunpack.c.0.s8 %v6511
    %v6513 = vlaneseq
    %v6514 = vshrl.u32 %v6513, 7
    %v6515 = vsub.s32 %v6512, %v6514
    %v6516 = vrot.slane %v6508, %v6515
    %6517 = vrot.lane.b32.xlu0 %v6516, 80
    %v6518 = vpop.permute.xlu0 %6517
    %v6519 = vsel %vm4789, %v6518, 0
    %6521 = vmatprep.subr.mxu0 0.0
    %6522 = vmatpush1.msra.mxu0 %v4763
    %6523 = vmatprep.subr.mxu0 0.0
    %6524 = vmatpush1.msra.mxu0 %v4764
    %6525 = vmatprep.subr.mxu0 0.0
    %6526 = vmatpush1.msra.mxu0 0.0
    %6527 = vmatprep.subr.mxu0 0.0
    %6528 = vmatpush1.msra.mxu0 0.0
    %6529 = vmatprep.subr.mxu0 0.0
    %6530 = vmatpush1.msra.mxu0 0.0
    %6531 = vmatprep.subr.mxu0 0.0
    %6532 = vmatpush1.msra.mxu0 0.0
    %6533 = vmatprep.subr.mxu0 0.0
    %6534 = vmatpush1.msra.mxu0 0.0
    %6535 = vmatprep.subr.mxu0 0.0
    %6536 = vmatpush1.msra.mxu0 0.0
    %6537 = vmatprep.subr.mxu0 0.0
    %6538 = vmatpush1.msra.mxu0 0.0
    %6539 = vmatprep.subr.mxu0 0.0
    %6540 = vmatpush1.msra.mxu0 0.0
    %6541 = vmatprep.subr.mxu0 0.0
    %6542 = vmatpush1.msra.mxu0 0.0
    %6543 = vmatprep.subr.mxu0 0.0
    %6544 = vmatpush1.msra.mxu0 0.0
    %6545 = vmatprep.subr.mxu0 0.0
    %6546 = vmatpush1.msra.mxu0 0.0
    %6547 = vmatprep.subr.mxu0 0.0
    %6548 = vmatpush1.msra.mxu0 0.0
    %6549 = vmatprep.subr.mxu0 0.0
    %6550 = vmatpush1.msra.mxu0 0.0
    %6551 = vmatprep.subr.mxu0 0.0
    %6552 = vmatpush1.msra.mxu0 0.0
    %6553 = vmatprep.subr.mxu0 0.0
    %6554 = vmatpush1.msra.mxu0 0.0
    %6555 = vmatprep.subr.mxu0 0.0
    %6556 = vmatpush1.msra.mxu0 0.0
    %6557 = vmatprep.subr.mxu0 0.0
    %6558 = vmatpush1.msra.mxu0 0.0
    %6559 = vmatprep.subr.mxu0 0.0
    %6560 = vmatpush1.msra.mxu0 0.0
    %6561 = vmatprep.subr.mxu0 0.0
    %6562 = vmatpush1.msra.mxu0 0.0
    %6563 = vmatprep.subr.mxu0 0.0
    %6564 = vmatpush1.msra.mxu0 0.0
    %6565 = vmatprep.subr.mxu0 0.0
    %6566 = vmatpush1.msra.mxu0 0.0
    %6567 = vmatprep.subr.mxu0 0.0
    %6568 = vmatpush1.msra.mxu0 0.0
    %6569 = vmatprep.subr.mxu0 0.0
    %6570 = vmatpush1.msra.mxu0 0.0
    %6571 = vmatprep.subr.mxu0 0.0
    %6572 = vmatpush1.msra.mxu0 0.0
    %6573 = vmatprep.subr.mxu0 0.0
    %6574 = vmatpush1.msra.mxu0 0.0
    %6575 = vmatprep.subr.mxu0 0.0
    %6576 = vmatpush1.msra.mxu0 0.0
    %6577 = vmatprep.subr.mxu0 0.0
    %6578 = vmatpush1.msra.mxu0 0.0
    %6579 = vmatprep.subr.mxu0 0.0
    %6580 = vmatpush1.msra.mxu0 0.0
    %6581 = vmatprep.subr.mxu0 0.0
    %6582 = vmatpush1.msra.mxu0 0.0
    %6583 = vmatprep.subr.mxu0 0.0
    %6584 = vmatpush1.msra.mxu0 0.0
    %6585 = vmatprep.mubr.f32.mxu0 0.0
    %6586 = vmatmul.mubr.f32.gmra.mrb[0].mxu0 %v6519
    %v6587 = vpop.f32.mrb[0].mxu0
    %v6588 = vadd.f32 0.0, %v6587
    %v6589 = vpop.f32.mrb[0].mxu0
    %6590 = vdwg.mxu0
    %v6591 = vadd.f32 %v4781, %v6588
    %v6592 = vxor.u32 %v6591, 2147483648
    %v6593 = vmul.f32 %v6592, 1.442695
    %v6594 = vpow.pop %v6593
    %v6595 = vadd.f32 %v6594, 1.0
    %v6596 = vrcp.pop %v6595
    %v6597 = vmul.f32 1.0, %v6596
    %v6598 = vmul.f32 %v6597, 2.0
    %v6599 = vsub.f32 %v6598, 1.0
    %v6600 = vmul.f32 %v6597, %v6502
    %6602 = vrot.lane.b32.xlu0 %v6599, 96
    %v6603 = vpop.permute.xlu0 %6602
    %v6605 = vmul.f32 %v6597, %v6603
    %6607 = vrot.lane.b32.xlu0 %v6605, 16
    %v6608 = vpop.permute.xlu0 %6607
    %v6610 = vadd.f32 %v6600, %v6608
    %v6611 = vtanh.pop %v6610
    %6613 = vrot.lane.b32.xlu0 %v6611, 32
    %v6614 = vpop.permute.xlu0 %6613
    %v6616 = vmul.f32 %v6597, %v6614
    %v6619 = vunpack.c.l.s4 1983009808
    %v6620 = vunpack.c.0.s8 %v6619
    %v6621 = vlaneseq
    %v6622 = vshrl.u32 %v6621, 7
    %v6623 = vsub.s32 %v6620, %v6622
    %v6624 = vrot.slane %v6616, %v6623
    %6625 = vrot.lane.b32.xlu0 %v6624, 80
    %v6626 = vpop.permute.xlu0 %6625
    %v6627 = vsel %vm4789, %v6626, 0
    %6629 = vmatprep.subr.mxu0 0.0
    %6630 = vmatpush1.msra.mxu0 %v4763
    %6631 = vmatprep.subr.mxu0 0.0
    %6632 = vmatpush1.msra.mxu0 %v4764
    %6633 = vmatprep.subr.mxu0 0.0
    %6634 = vmatpush1.msra.mxu0 0.0
    %6635 = vmatprep.subr.mxu0 0.0
    %6636 = vmatpush1.msra.mxu0 0.0
    %6637 = vmatprep.subr.mxu0 0.0
    %6638 = vmatpush1.msra.mxu0 0.0
    %6639 = vmatprep.subr.mxu0 0.0
    %6640 = vmatpush1.msra.mxu0 0.0
    %6641 = vmatprep.subr.mxu0 0.0
    %6642 = vmatpush1.msra.mxu0 0.0
    %6643 = vmatprep.subr.mxu0 0.0
    %6644 = vmatpush1.msra.mxu0 0.0
    %6645 = vmatprep.subr.mxu0 0.0
    %6646 = vmatpush1.msra.mxu0 0.0
    %6647 = vmatprep.subr.mxu0 0.0
    %6648 = vmatpush1.msra.mxu0 0.0
    %6649 = vmatprep.subr.mxu0 0.0
    %6650 = vmatpush1.msra.mxu0 0.0
    %6651 = vmatprep.subr.mxu0 0.0
    %6652 = vmatpush1.msra.mxu0 0.0
    %6653 = vmatprep.subr.mxu0 0.0
    %6654 = vmatpush1.msra.mxu0 0.0
    %6655 = vmatprep.subr.mxu0 0.0
    %6656 = vmatpush1.msra.mxu0 0.0
    %6657 = vmatprep.subr.mxu0 0.0
    %6658 = vmatpush1.msra.mxu0 0.0
    %6659 = vmatprep.subr.mxu0 0.0
    %6660 = vmatpush1.msra.mxu0 0.0
    %6661 = vmatprep.subr.mxu0 0.0
    %6662 = vmatpush1.msra.mxu0 0.0
    %6663 = vmatprep.subr.mxu0 0.0
    %6664 = vmatpush1.msra.mxu0 0.0
    %6665 = vmatprep.subr.mxu0 0.0
    %6666 = vmatpush1.msra.mxu0 0.0
    %6667 = vmatprep.subr.mxu0 0.0
    %6668 = vmatpush1.msra.mxu0 0.0
    %6669 = vmatprep.subr.mxu0 0.0
    %6670 = vmatpush1.msra.mxu0 0.0
    %6671 = vmatprep.subr.mxu0 0.0
    %6672 = vmatpush1.msra.mxu0 0.0
    %6673 = vmatprep.subr.mxu0 0.0
    %6674 = vmatpush1.msra.mxu0 0.0
    %6675 = vmatprep.subr.mxu0 0.0
    %6676 = vmatpush1.msra.mxu0 0.0
    %6677 = vmatprep.subr.mxu0 0.0
    %6678 = vmatpush1.msra.mxu0 0.0
    %6679 = vmatprep.subr.mxu0 0.0
    %6680 = vmatpush1.msra.mxu0 0.0
    %6681 = vmatprep.subr.mxu0 0.0
    %6682 = vmatpush1.msra.mxu0 0.0
    %6683 = vmatprep.subr.mxu0 0.0
    %6684 = vmatpush1.msra.mxu0 0.0
    %6685 = vmatprep.subr.mxu0 0.0
    %6686 = vmatpush1.msra.mxu0 0.0
    %6687 = vmatprep.subr.mxu0 0.0
    %6688 = vmatpush1.msra.mxu0 0.0
    %6689 = vmatprep.subr.mxu0 0.0
    %6690 = vmatpush1.msra.mxu0 0.0
    %6691 = vmatprep.subr.mxu0 0.0
    %6692 = vmatpush1.msra.mxu0 0.0
    %6693 = vmatprep.mubr.f32.mxu0 0.0
    %6694 = vmatmul.mubr.f32.gmra.mrb[0].mxu0 %v6627
    %v6695 = vpop.f32.mrb[0].mxu0
    %v6696 = vadd.f32 0.0, %v6695
    %v6697 = vpop.f32.mrb[0].mxu0
    %6698 = vdwg.mxu0
    %v6699 = vadd.f32 %v4782, %v6696
    %v6700 = vxor.u32 %v6699, 2147483648
    %v6701 = vmul.f32 %v6700, 1.442695
    %v6702 = vpow.pop %v6701
    %v6703 = vadd.f32 %v6702, 1.0
    %v6704 = vrcp.pop %v6703
    %v6705 = vmul.f32 1.0, %v6704
    %v6706 = vmul.f32 %v6705, 2.0
    %v6707 = vsub.f32 %v6706, 1.0
    %v6708 = vmul.f32 %v6705, %v6610
    %6710 = vrot.lane.b32.xlu0 %v6707, 96
    %v6711 = vpop.permute.xlu0 %6710
    %v6713 = vmul.f32 %v6705, %v6711
    %6715 = vrot.lane.b32.xlu0 %v6713, 16
    %v6716 = vpop.permute.xlu0 %6715
    %v6718 = vadd.f32 %v6708, %v6716
    %v6719 = vtanh.pop %v6718
    %6721 = vrot.lane.b32.xlu0 %v6719, 32
    %v6722 = vpop.permute.xlu0 %6721
    %v6724 = vmul.f32 %v6705, %v6722
    %v6727 = vunpack.c.l.s4 1983009808
    %v6728 = vunpack.c.0.s8 %v6727
    %v6729 = vlaneseq
    %v6730 = vshrl.u32 %v6729, 7
    %v6731 = vsub.s32 %v6728, %v6730
    %v6732 = vrot.slane %v6724, %v6731
    %6733 = vrot.lane.b32.xlu0 %v6732, 80
    %v6734 = vpop.permute.xlu0 %6733
    %v6735 = vsel %vm4789, %v6734, 0
    %6737 = vmatprep.subr.mxu0 0.0
    %6738 = vmatpush1.msra.mxu0 %v4763
    %6739 = vmatprep.subr.mxu0 0.0
    %6740 = vmatpush1.msra.mxu0 %v4764
    %6741 = vmatprep.subr.mxu0 0.0
    %6742 = vmatpush1.msra.mxu0 0.0
    %6743 = vmatprep.subr.mxu0 0.0
    %6744 = vmatpush1.msra.mxu0 0.0
    %6745 = vmatprep.subr.mxu0 0.0
    %6746 = vmatpush1.msra.mxu0 0.0
    %6747 = vmatprep.subr.mxu0 0.0
    %6748 = vmatpush1.msra.mxu0 0.0
    %6749 = vmatprep.subr.mxu0 0.0
    %6750 = vmatpush1.msra.mxu0 0.0
    %6751 = vmatprep.subr.mxu0 0.0
    %6752 = vmatpush1.msra.mxu0 0.0
    %6753 = vmatprep.subr.mxu0 0.0
    %6754 = vmatpush1.msra.mxu0 0.0
    %6755 = vmatprep.subr.mxu0 0.0
    %6756 = vmatpush1.msra.mxu0 0.0
    %6757 = vmatprep.subr.mxu0 0.0
    %6758 = vmatpush1.msra.mxu0 0.0
    %6759 = vmatprep.subr.mxu0 0.0
    %6760 = vmatpush1.msra.mxu0 0.0
    %6761 = vmatprep.subr.mxu0 0.0
    %6762 = vmatpush1.msra.mxu0 0.0
    %6763 = vmatprep.subr.mxu0 0.0
    %6764 = vmatpush1.msra.mxu0 0.0
    %6765 = vmatprep.subr.mxu0 0.0
    %6766 = vmatpush1.msra.mxu0 0.0
    %6767 = vmatprep.subr.mxu0 0.0
    %6768 = vmatpush1.msra.mxu0 0.0
    %6769 = vmatprep.subr.mxu0 0.0
    %6770 = vmatpush1.msra.mxu0 0.0
    %6771 = vmatprep.subr.mxu0 0.0
    %6772 = vmatpush1.msra.mxu0 0.0
    %6773 = vmatprep.subr.mxu0 0.0
    %6774 = vmatpush1.msra.mxu0 0.0
    %6775 = vmatprep.subr.mxu0 0.0
    %6776 = vmatpush1.msra.mxu0 0.0
    %6777 = vmatprep.subr.mxu0 0.0
    %6778 = vmatpush1.msra.mxu0 0.0
    %6779 = vmatprep.subr.mxu0 0.0
    %6780 = vmatpush1.msra.mxu0 0.0
    %6781 = vmatprep.subr.mxu0 0.0
    %6782 = vmatpush1.msra.mxu0 0.0
    %6783 = vmatprep.subr.mxu0 0.0
    %6784 = vmatpush1.msra.mxu0 0.0
    %6785 = vmatprep.subr.mxu0 0.0
    %6786 = vmatpush1.msra.mxu0 0.0
    %6787 = vmatprep.subr.mxu0 0.0
    %6788 = vmatpush1.msra.mxu0 0.0
    %6789 = vmatprep.subr.mxu0 0.0
    %6790 = vmatpush1.msra.mxu0 0.0
    %6791 = vmatprep.subr.mxu0 0.0
    %6792 = vmatpush1.msra.mxu0 0.0
    %6793 = vmatprep.subr.mxu0 0.0
    %6794 = vmatpush1.msra.mxu0 0.0
    %6795 = vmatprep.subr.mxu0 0.0
    %6796 = vmatpush1.msra.mxu0 0.0
    %6797 = vmatprep.subr.mxu0 0.0
    %6798 = vmatpush1.msra.mxu0 0.0
    %6799 = vmatprep.subr.mxu0 0.0
    %6800 = vmatpush1.msra.mxu0 0.0
    %6801 = vmatprep.mubr.f32.mxu0 0.0
    %6802 = vmatmul.mubr.f32.gmra.mrb[0].mxu0 %v6735
    %v6803 = vpop.f32.mrb[0].mxu0
    %v6804 = vadd.f32 0.0, %v6803
    %v6805 = vpop.f32.mrb[0].mxu0
    %6806 = vdwg.mxu0
    %v6807 = vadd.f32 %v4783, %v6804
    %v6808 = vxor.u32 %v6807, 2147483648
    %v6809 = vmul.f32 %v6808, 1.442695
    %v6810 = vpow.pop %v6809
    %v6811 = vadd.f32 %v6810, 1.0
    %v6812 = vrcp.pop %v6811
    %v6813 = vmul.f32 1.0, %v6812
    %v6814 = vmul.f32 %v6813, 2.0
    %v6815 = vsub.f32 %v6814, 1.0
    %v6816 = vmul.f32 %v6813, %v6718
    %6818 = vrot.lane.b32.xlu0 %v6815, 96
    %v6819 = vpop.permute.xlu0 %6818
    %v6821 = vmul.f32 %v6813, %v6819
    %6823 = vrot.lane.b32.xlu0 %v6821, 16
    %v6824 = vpop.permute.xlu0 %6823
    %v6826 = vadd.f32 %v6816, %v6824
    %v6827 = vtanh.pop %v6826
    %6829 = vrot.lane.b32.xlu0 %v6827, 32
    %v6830 = vpop.permute.xlu0 %6829
    %v6832 = vmul.f32 %v6813, %v6830
    %v6835 = vunpack.c.l.s4 1983009808
    %v6836 = vunpack.c.0.s8 %v6835
    %v6837 = vlaneseq
    %v6838 = vshrl.u32 %v6837, 7
    %v6839 = vsub.s32 %v6836, %v6838
    %v6840 = vrot.slane %v6832, %v6839
    %6841 = vrot.lane.b32.xlu0 %v6840, 80
    %v6842 = vpop.permute.xlu0 %6841
    %v6843 = vsel %vm4789, %v6842, 0
    %6845 = vmatprep.subr.mxu0 0.0
    %6846 = vmatpush1.msra.mxu0 %v4763
    %6847 = vmatprep.subr.mxu0 0.0
    %6848 = vmatpush1.msra.mxu0 %v4764
    %6849 = vmatprep.subr.mxu0 0.0
    %6850 = vmatpush1.msra.mxu0 0.0
    %6851 = vmatprep.subr.mxu0 0.0
    %6852 = vmatpush1.msra.mxu0 0.0
    %6853 = vmatprep.subr.mxu0 0.0
    %6854 = vmatpush1.msra.mxu0 0.0
    %6855 = vmatprep.subr.mxu0 0.0
    %6856 = vmatpush1.msra.mxu0 0.0
    %6857 = vmatprep.subr.mxu0 0.0
    %6858 = vmatpush1.msra.mxu0 0.0
    %6859 = vmatprep.subr.mxu0 0.0
    %6860 = vmatpush1.msra.mxu0 0.0
    %6861 = vmatprep.subr.mxu0 0.0
    %6862 = vmatpush1.msra.mxu0 0.0
    %6863 = vmatprep.subr.mxu0 0.0
    %6864 = vmatpush1.msra.mxu0 0.0
    %6865 = vmatprep.subr.mxu0 0.0
    %6866 = vmatpush1.msra.mxu0 0.0
    %6867 = vmatprep.subr.mxu0 0.0
    %6868 = vmatpush1.msra.mxu0 0.0
    %6869 = vmatprep.subr.mxu0 0.0
    %6870 = vmatpush1.msra.mxu0 0.0
    %6871 = vmatprep.subr.mxu0 0.0
    %6872 = vmatpush1.msra.mxu0 0.0
    %6873 = vmatprep.subr.mxu0 0.0
    %6874 = vmatpush1.msra.mxu0 0.0
    %6875 = vmatprep.subr.mxu0 0.0
    %6876 = vmatpush1.msra.mxu0 0.0
    %6877 = vmatprep.subr.mxu0 0.0
    %6878 = vmatpush1.msra.mxu0 0.0
    %6879 = vmatprep.subr.mxu0 0.0
    %6880 = vmatpush1.msra.mxu0 0.0
    %6881 = vmatprep.subr.mxu0 0.0
    %6882 = vmatpush1.msra.mxu0 0.0
    %6883 = vmatprep.subr.mxu0 0.0
    %6884 = vmatpush1.msra.mxu0 0.0
    %6885 = vmatprep.subr.mxu0 0.0
    %6886 = vmatpush1.msra.mxu0 0.0
    %6887 = vmatprep.subr.mxu0 0.0
    %6888 = vmatpush1.msra.mxu0 0.0
    %6889 = vmatprep.subr.mxu0 0.0
    %6890 = vmatpush1.msra.mxu0 0.0
    %6891 = vmatprep.subr.mxu0 0.0
    %6892 = vmatpush1.msra.mxu0 0.0
    %6893 = vmatprep.subr.mxu0 0.0
    %6894 = vmatpush1.msra.mxu0 0.0
    %6895 = vmatprep.subr.mxu0 0.0
    %6896 = vmatpush1.msra.mxu0 0.0
    %6897 = vmatprep.subr.mxu0 0.0
    %6898 = vmatpush1.msra.mxu0 0.0
    %6899 = vmatprep.subr.mxu0 0.0
    %6900 = vmatpush1.msra.mxu0 0.0
    %6901 = vmatprep.subr.mxu0 0.0
    %6902 = vmatpush1.msra.mxu0 0.0
    %6903 = vmatprep.subr.mxu0 0.0
    %6904 = vmatpush1.msra.mxu0 0.0
    %6905 = vmatprep.subr.mxu0 0.0
    %6906 = vmatpush1.msra.mxu0 0.0
    %6907 = vmatprep.subr.mxu0 0.0
    %6908 = vmatpush1.msra.mxu0 0.0
    %6909 = vmatprep.mubr.f32.mxu0 0.0
    %6910 = vmatmul.mubr.f32.gmra.mrb[0].mxu0 %v6843
    %v6911 = vpop.f32.mrb[0].mxu0
    %v6912 = vadd.f32 0.0, %v6911
    %v6913 = vpop.f32.mrb[0].mxu0
    %6914 = vdwg.mxu0
    %v6915 = vadd.f32 %v4784, %v6912
    %v6916 = vxor.u32 %v6915, 2147483648
    %v6917 = vmul.f32 %v6916, 1.442695
    %v6918 = vpow.pop %v6917
    %v6919 = vadd.f32 %v6918, 1.0
    %v6920 = vrcp.pop %v6919
    %v6921 = vmul.f32 1.0, %v6920
    %v6922 = vmul.f32 %v6921, 2.0
    %v6923 = vsub.f32 %v6922, 1.0
    %v6924 = vmul.f32 %v6921, %v6826
    %6926 = vrot.lane.b32.xlu0 %v6923, 96
    %v6927 = vpop.permute.xlu0 %6926
    %v6929 = vmul.f32 %v6921, %v6927
    %6931 = vrot.lane.b32.xlu0 %v6929, 16
    %v6932 = vpop.permute.xlu0 %6931
    %v6934 = vadd.f32 %v6924, %v6932
    %v6935 = vtanh.pop %v6934
    %6937 = vrot.lane.b32.xlu0 %v6935, 32
    %v6938 = vpop.permute.xlu0 %6937
    %v6940 = vmul.f32 %v6921, %v6938
    %v6943 = vunpack.c.l.s4 1983009808
    %v6944 = vunpack.c.0.s8 %v6943
    %v6945 = vlaneseq
    %v6946 = vshrl.u32 %v6945, 7
    %v6947 = vsub.s32 %v6944, %v6946
    %v6948 = vrot.slane %v6940, %v6947
    %6949 = vrot.lane.b32.xlu0 %v6948, 80
    %v6950 = vpop.permute.xlu0 %6949
    %v6951 = vsel %vm4789, %v6950, 0
    %6953 = vmatprep.subr.mxu0 0.0
    %6954 = vmatpush1.msra.mxu0 %v4763
    %6955 = vmatprep.subr.mxu0 0.0
    %6956 = vmatpush1.msra.mxu0 %v4764
    %6957 = vmatprep.subr.mxu0 0.0
    %6958 = vmatpush1.msra.mxu0 0.0
    %6959 = vmatprep.subr.mxu0 0.0
    %6960 = vmatpush1.msra.mxu0 0.0
    %6961 = vmatprep.subr.mxu0 0.0
    %6962 = vmatpush1.msra.mxu0 0.0
    %6963 = vmatprep.subr.mxu0 0.0
    %6964 = vmatpush1.msra.mxu0 0.0
    %6965 = vmatprep.subr.mxu0 0.0
    %6966 = vmatpush1.msra.mxu0 0.0
    %6967 = vmatprep.subr.mxu0 0.0
    %6968 = vmatpush1.msra.mxu0 0.0
    %6969 = vmatprep.subr.mxu0 0.0
    %6970 = vmatpush1.msra.mxu0 0.0
    %6971 = vmatprep.subr.mxu0 0.0
    %6972 = vmatpush1.msra.mxu0 0.0
    %6973 = vmatprep.subr.mxu0 0.0
    %6974 = vmatpush1.msra.mxu0 0.0
    %6975 = vmatprep.subr.mxu0 0.0
    %6976 = vmatpush1.msra.mxu0 0.0
    %6977 = vmatprep.subr.mxu0 0.0
    %6978 = vmatpush1.msra.mxu0 0.0
    %6979 = vmatprep.subr.mxu0 0.0
    %6980 = vmatpush1.msra.mxu0 0.0
    %6981 = vmatprep.subr.mxu0 0.0
    %6982 = vmatpush1.msra.mxu0 0.0
    %6983 = vmatprep.subr.mxu0 0.0
    %6984 = vmatpush1.msra.mxu0 0.0
    %6985 = vmatprep.subr.mxu0 0.0
    %6986 = vmatpush1.msra.mxu0 0.0
    %6987 = vmatprep.subr.mxu0 0.0
    %6988 = vmatpush1.msra.mxu0 0.0
    %6989 = vmatprep.subr.mxu0 0.0
    %6990 = vmatpush1.msra.mxu0 0.0
    %6991 = vmatprep.subr.mxu0 0.0
    %6992 = vmatpush1.msra.mxu0 0.0
    %6993 = vmatprep.subr.mxu0 0.0
    %6994 = vmatpush1.msra.mxu0 0.0
    %6995 = vmatprep.subr.mxu0 0.0
    %6996 = vmatpush1.msra.mxu0 0.0
    %6997 = vmatprep.subr.mxu0 0.0
    %6998 = vmatpush1.msra.mxu0 0.0
    %6999 = vmatprep.subr.mxu0 0.0
    %7000 = vmatpush1.msra.mxu0 0.0
    %7001 = vmatprep.subr.mxu0 0.0
    %7002 = vmatpush1.msra.mxu0 0.0
    %7003 = vmatprep.subr.mxu0 0.0
    %7004 = vmatpush1.msra.mxu0 0.0
    %7005 = vmatprep.subr.mxu0 0.0
    %7006 = vmatpush1.msra.mxu0 0.0
    %7007 = vmatprep.subr.mxu0 0.0
    %7008 = vmatpush1.msra.mxu0 0.0
    %7009 = vmatprep.subr.mxu0 0.0
    %7010 = vmatpush1.msra.mxu0 0.0
    %7011 = vmatprep.subr.mxu0 0.0
    %7012 = vmatpush1.msra.mxu0 0.0
    %7013 = vmatprep.subr.mxu0 0.0
    %7014 = vmatpush1.msra.mxu0 0.0
    %7015 = vmatprep.subr.mxu0 0.0
    %7016 = vmatpush1.msra.mxu0 0.0
    %7017 = vmatprep.mubr.f32.mxu0 0.0
    %7018 = vmatmul.mubr.f32.gmra.mrb[0].mxu0 %v6951
    %v7019 = vpop.f32.mrb[0].mxu0
    %v7020 = vadd.f32 0.0, %v7019
    %v7021 = vpop.f32.mrb[0].mxu0
    %7022 = vdwg.mxu0
    %v7023 = vadd.f32 %v4785, %v7020
    %v7024 = vxor.u32 %v7023, 2147483648
    %v7025 = vmul.f32 %v7024, 1.442695
    %v7026 = vpow.pop %v7025
    %v7027 = vadd.f32 %v7026, 1.0
    %v7028 = vrcp.pop %v7027
    %v7029 = vmul.f32 1.0, %v7028
    %v7030 = vmul.f32 %v7029, 2.0
    %v7031 = vsub.f32 %v7030, 1.0
    %v7032 = vmul.f32 %v7029, %v6934
    %7034 = vrot.lane.b32.xlu0 %v7031, 96
    %v7035 = vpop.permute.xlu0 %7034
    %v7037 = vmul.f32 %v7029, %v7035
    %7039 = vrot.lane.b32.xlu0 %v7037, 16
    %v7040 = vpop.permute.xlu0 %7039
    %v7042 = vadd.f32 %v7032, %v7040
    %v7043 = vtanh.pop %v7042
    %7045 = vrot.lane.b32.xlu0 %v7043, 32
    %v7046 = vpop.permute.xlu0 %7045
    %v7048 = vmul.f32 %v7029, %v7046
    %v7051 = vunpack.c.l.s4 1983009808
    %v7052 = vunpack.c.0.s8 %v7051
    %v7053 = vlaneseq
    %v7054 = vshrl.u32 %v7053, 7
    %v7055 = vsub.s32 %v7052, %v7054
    %v7056 = vrot.slane %v7048, %v7055
    %7057 = vrot.lane.b32.xlu0 %v7056, 80
    %v7058 = vpop.permute.xlu0 %7057
    %v7059 = vsel %vm4789, %v7058, 0
    %7061 = vmatprep.subr.mxu0 0.0
    %7062 = vmatpush1.msra.mxu0 %v4763
    %7063 = vmatprep.subr.mxu0 0.0
    %7064 = vmatpush1.msra.mxu0 %v4764
    %7065 = vmatprep.subr.mxu0 0.0
    %7066 = vmatpush1.msra.mxu0 0.0
    %7067 = vmatprep.subr.mxu0 0.0
    %7068 = vmatpush1.msra.mxu0 0.0
    %7069 = vmatprep.subr.mxu0 0.0
    %7070 = vmatpush1.msra.mxu0 0.0
    %7071 = vmatprep.subr.mxu0 0.0
    %7072 = vmatpush1.msra.mxu0 0.0
    %7073 = vmatprep.subr.mxu0 0.0
    %7074 = vmatpush1.msra.mxu0 0.0
    %7075 = vmatprep.subr.mxu0 0.0
    %7076 = vmatpush1.msra.mxu0 0.0
    %7077 = vmatprep.subr.mxu0 0.0
    %7078 = vmatpush1.msra.mxu0 0.0
    %7079 = vmatprep.subr.mxu0 0.0
    %7080 = vmatpush1.msra.mxu0 0.0
    %7081 = vmatprep.subr.mxu0 0.0
    %7082 = vmatpush1.msra.mxu0 0.0
    %7083 = vmatprep.subr.mxu0 0.0
    %7084 = vmatpush1.msra.mxu0 0.0
    %7085 = vmatprep.subr.mxu0 0.0
    %7086 = vmatpush1.msra.mxu0 0.0
    %7087 = vmatprep.subr.mxu0 0.0
    %7088 = vmatpush1.msra.mxu0 0.0
    %7089 = vmatprep.subr.mxu0 0.0
    %7090 = vmatpush1.msra.mxu0 0.0
    %7091 = vmatprep.subr.mxu0 0.0
    %7092 = vmatpush1.msra.mxu0 0.0
    %7093 = vmatprep.subr.mxu0 0.0
    %7094 = vmatpush1.msra.mxu0 0.0
    %7095 = vmatprep.subr.mxu0 0.0
    %7096 = vmatpush1.msra.mxu0 0.0
    %7097 = vmatprep.subr.mxu0 0.0
    %7098 = vmatpush1.msra.mxu0 0.0
    %7099 = vmatprep.subr.mxu0 0.0
    %7100 = vmatpush1.msra.mxu0 0.0
    %7101 = vmatprep.subr.mxu0 0.0
    %7102 = vmatpush1.msra.mxu0 0.0
    %7103 = vmatprep.subr.mxu0 0.0
    %7104 = vmatpush1.msra.mxu0 0.0
    %7105 = vmatprep.subr.mxu0 0.0
    %7106 = vmatpush1.msra.mxu0 0.0
    %7107 = vmatprep.subr.mxu0 0.0
    %7108 = vmatpush1.msra.mxu0 0.0
    %7109 = vmatprep.subr.mxu0 0.0
    %7110 = vmatpush1.msra.mxu0 0.0
    %7111 = vmatprep.subr.mxu0 0.0
    %7112 = vmatpush1.msra.mxu0 0.0
    %7113 = vmatprep.subr.mxu0 0.0
    %7114 = vmatpush1.msra.mxu0 0.0
    %7115 = vmatprep.subr.mxu0 0.0
    %7116 = vmatpush1.msra.mxu0 0.0
    %7117 = vmatprep.subr.mxu0 0.0
    %7118 = vmatpush1.msra.mxu0 0.0
    %7119 = vmatprep.subr.mxu0 0.0
    %7120 = vmatpush1.msra.mxu0 0.0
    %7121 = vmatprep.subr.mxu0 0.0
    %7122 = vmatpush1.msra.mxu0 0.0
    %7123 = vmatprep.subr.mxu0 0.0
    %7124 = vmatpush1.msra.mxu0 0.0
    %7125 = vmatprep.mubr.f32.mxu0 0.0
    %7126 = vmatmul.mubr.f32.gmra.mrb[0].mxu0 %v7059
    %v7127 = vpop.f32.mrb[0].mxu0
    %v7128 = vadd.f32 0.0, %v7127
    %v7129 = vpop.f32.mrb[0].mxu0
    %7130 = vdwg.mxu0
    %v7131 = vadd.f32 %v4786, %v7128
    %v7132 = vxor.u32 %v7131, 2147483648
    %v7133 = vmul.f32 %v7132, 1.442695
    %v7134 = vpow.pop %v7133
    %v7135 = vadd.f32 %v7134, 1.0
    %v7136 = vrcp.pop %v7135
    %v7137 = vmul.f32 1.0, %v7136
    %v7138 = vmul.f32 %v7137, 2.0
    %v7139 = vsub.f32 %v7138, 1.0
    %v7140 = vmul.f32 %v7137, %v7042
    %7142 = vrot.lane.b32.xlu0 %v7139, 96
    %v7143 = vpop.permute.xlu0 %7142
    %v7145 = vmul.f32 %v7137, %v7143
    %7147 = vrot.lane.b32.xlu0 %v7145, 16
    %v7148 = vpop.permute.xlu0 %7147
    %v7150 = vadd.f32 %v7140, %v7148
    %v7151 = vtanh.pop %v7150
    %7153 = vrot.lane.b32.xlu0 %v7151, 32
    %v7154 = vpop.permute.xlu0 %7153
    %v7156 = vmul.f32 %v7137, %v7154
    %v7159 = vunpack.c.l.s4 1983009808
    %v7160 = vunpack.c.0.s8 %v7159
    %v7161 = vlaneseq
    %v7162 = vshrl.u32 %v7161, 7
    %v7163 = vsub.s32 %v7160, %v7162
    %v7164 = vrot.slane %v7156, %v7163
    %7165 = vrot.lane.b32.xlu0 %v7164, 80
    %v7166 = vpop.permute.xlu0 %7165
    %v7167 = vsel %vm4789, %v7166, 0
    %7169 = vmatprep.subr.mxu0 0.0
    %7170 = vmatpush1.msra.mxu0 %v4763
    %7171 = vmatprep.subr.mxu0 0.0
    %7172 = vmatpush1.msra.mxu0 %v4764
    %7173 = vmatprep.subr.mxu0 0.0
    %7174 = vmatpush1.msra.mxu0 0.0
    %7175 = vmatprep.subr.mxu0 0.0
    %7176 = vmatpush1.msra.mxu0 0.0
    %7177 = vmatprep.subr.mxu0 0.0
    %7178 = vmatpush1.msra.mxu0 0.0
    %7179 = vmatprep.subr.mxu0 0.0
    %7180 = vmatpush1.msra.mxu0 0.0
    %7181 = vmatprep.subr.mxu0 0.0
    %7182 = vmatpush1.msra.mxu0 0.0
    %7183 = vmatprep.subr.mxu0 0.0
    %7184 = vmatpush1.msra.mxu0 0.0
    %7185 = vmatprep.subr.mxu0 0.0
    %7186 = vmatpush1.msra.mxu0 0.0
    %7187 = vmatprep.subr.mxu0 0.0
    %7188 = vmatpush1.msra.mxu0 0.0
    %7189 = vmatprep.subr.mxu0 0.0
    %7190 = vmatpush1.msra.mxu0 0.0
    %7191 = vmatprep.subr.mxu0 0.0
    %7192 = vmatpush1.msra.mxu0 0.0
    %7193 = vmatprep.subr.mxu0 0.0
    %7194 = vmatpush1.msra.mxu0 0.0
    %7195 = vmatprep.subr.mxu0 0.0
    %7196 = vmatpush1.msra.mxu0 0.0
    %7197 = vmatprep.subr.mxu0 0.0
    %7198 = vmatpush1.msra.mxu0 0.0
    %7199 = vmatprep.subr.mxu0 0.0
    %7200 = vmatpush1.msra.mxu0 0.0
    %7201 = vmatprep.subr.mxu0 0.0
    %7202 = vmatpush1.msra.mxu0 0.0
    %7203 = vmatprep.subr.mxu0 0.0
    %7204 = vmatpush1.msra.mxu0 0.0
    %7205 = vmatprep.subr.mxu0 0.0
    %7206 = vmatpush1.msra.mxu0 0.0
    %7207 = vmatprep.subr.mxu0 0.0
    %7208 = vmatpush1.msra.mxu0 0.0
    %7209 = vmatprep.subr.mxu0 0.0
    %7210 = vmatpush1.msra.mxu0 0.0
    %7211 = vmatprep.subr.mxu0 0.0
    %7212 = vmatpush1.msra.mxu0 0.0
    %7213 = vmatprep.subr.mxu0 0.0
    %7214 = vmatpush1.msra.mxu0 0.0
    %7215 = vmatprep.subr.mxu0 0.0
    %7216 = vmatpush1.msra.mxu0 0.0
    %7217 = vmatprep.subr.mxu0 0.0
    %7218 = vmatpush1.msra.mxu0 0.0
    %7219 = vmatprep.subr.mxu0 0.0
    %7220 = vmatpush1.msra.mxu0 0.0
    %7221 = vmatprep.subr.mxu0 0.0
    %7222 = vmatpush1.msra.mxu0 0.0
    %7223 = vmatprep.subr.mxu0 0.0
    %7224 = vmatpush1.msra.mxu0 0.0
    %7225 = vmatprep.subr.mxu0 0.0
    %7226 = vmatpush1.msra.mxu0 0.0
    %7227 = vmatprep.subr.mxu0 0.0
    %7228 = vmatpush1.msra.mxu0 0.0
    %7229 = vmatprep.subr.mxu0 0.0
    %7230 = vmatpush1.msra.mxu0 0.0
    %7231 = vmatprep.subr.mxu0 0.0
    %7232 = vmatpush1.msra.mxu0 0.0
    %7233 = vmatprep.mubr.f32.mxu0 0.0
    %7234 = vmatmul.mubr.f32.gmra.mrb[0].mxu0 %v7167
    %v7235 = vpop.f32.mrb[0].mxu0
    %v7236 = vadd.f32 0.0, %v7235
    %v7237 = vpop.f32.mrb[0].mxu0
    %7238 = vdwg.mxu0
    %v7239 = vadd.f32 %v4787, %v7236
    %v7240 = vxor.u32 %v7239, 2147483648
    %v7241 = vmul.f32 %v7240, 1.442695
    %v7242 = vpow.pop %v7241
    %v7243 = vadd.f32 %v7242, 1.0
    %v7244 = vrcp.pop %v7243
    %v7245 = vmul.f32 1.0, %v7244
    %v7246 = vmul.f32 %v7245, 2.0
    %v7247 = vsub.f32 %v7246, 1.0
    %v7248 = vmul.f32 %v7245, %v7150
    %7250 = vrot.lane.b32.xlu0 %v7247, 96
    %v7251 = vpop.permute.xlu0 %7250
    %v7253 = vmul.f32 %v7245, %v7251
    %7255 = vrot.lane.b32.xlu0 %v7253, 16
    %v7256 = vpop.permute.xlu0 %7255
    %v7258 = vadd.f32 %v7248, %v7256
    %v7259 = vtanh.pop %v7258
    %7261 = vrot.lane.b32.xlu0 %v7259, 32
    %v7262 = vpop.permute.xlu0 %7261
    %v7264 = vmul.f32 %v7245, %v7262
    %v7267 = vunpack.c.l.s4 1983009808
    %v7268 = vunpack.c.0.s8 %v7267
    %v7269 = vlaneseq
    %v7270 = vshrl.u32 %v7269, 7
    %v7271 = vsub.s32 %v7268, %v7270
    %v7272 = vrot.slane %v7264, %v7271
    %7273 = vrot.lane.b32.xlu0 %v7272, 80
    %v7274 = vpop.permute.xlu0 %7273
    %v7275 = vsel %vm4789, %v7274, 0
    %7277 = vmatprep.subr.mxu0 0.0
    %7278 = vmatpush1.msra.mxu0 %v4763
    %7279 = vmatprep.subr.mxu0 0.0
    %7280 = vmatpush1.msra.mxu0 %v4764
    %7281 = vmatprep.subr.mxu0 0.0
    %7282 = vmatpush1.msra.mxu0 0.0
    %7283 = vmatprep.subr.mxu0 0.0
    %7284 = vmatpush1.msra.mxu0 0.0
    %7285 = vmatprep.subr.mxu0 0.0
    %7286 = vmatpush1.msra.mxu0 0.0
    %7287 = vmatprep.subr.mxu0 0.0
    %7288 = vmatpush1.msra.mxu0 0.0
    %7289 = vmatprep.subr.mxu0 0.0
    %7290 = vmatpush1.msra.mxu0 0.0
    %7291 = vmatprep.subr.mxu0 0.0
    %7292 = vmatpush1.msra.mxu0 0.0
    %7293 = vmatprep.subr.mxu0 0.0
    %7294 = vmatpush1.msra.mxu0 0.0
    %7295 = vmatprep.subr.mxu0 0.0
    %7296 = vmatpush1.msra.mxu0 0.0
    %7297 = vmatprep.subr.mxu0 0.0
    %7298 = vmatpush1.msra.mxu0 0.0
    %7299 = vmatprep.subr.mxu0 0.0
    %7300 = vmatpush1.msra.mxu0 0.0
    %7301 = vmatprep.subr.mxu0 0.0
    %7302 = vmatpush1.msra.mxu0 0.0
    %7303 = vmatprep.subr.mxu0 0.0
    %7304 = vmatpush1.msra.mxu0 0.0
    %7305 = vmatprep.subr.mxu0 0.0
    %7306 = vmatpush1.msra.mxu0 0.0
    %7307 = vmatprep.subr.mxu0 0.0
    %7308 = vmatpush1.msra.mxu0 0.0
    %7309 = vmatprep.subr.mxu0 0.0
    %7310 = vmatpush1.msra.mxu0 0.0
    %7311 = vmatprep.subr.mxu0 0.0
    %7312 = vmatpush1.msra.mxu0 0.0
    %7313 = vmatprep.subr.mxu0 0.0
    %7314 = vmatpush1.msra.mxu0 0.0
    %7315 = vmatprep.subr.mxu0 0.0
    %7316 = vmatpush1.msra.mxu0 0.0
    %7317 = vmatprep.subr.mxu0 0.0
    %7318 = vmatpush1.msra.mxu0 0.0
    %7319 = vmatprep.subr.mxu0 0.0
    %7320 = vmatpush1.msra.mxu0 0.0
    %7321 = vmatprep.subr.mxu0 0.0
    %7322 = vmatpush1.msra.mxu0 0.0
    %7323 = vmatprep.subr.mxu0 0.0
    %7324 = vmatpush1.msra.mxu0 0.0
    %7325 = vmatprep.subr.mxu0 0.0
    %7326 = vmatpush1.msra.mxu0 0.0
    %7327 = vmatprep.subr.mxu0 0.0
    %7328 = vmatpush1.msra.mxu0 0.0
    %7329 = vmatprep.subr.mxu0 0.0
    %7330 = vmatpush1.msra.mxu0 0.0
    %7331 = vmatprep.subr.mxu0 0.0
    %7332 = vmatpush1.msra.mxu0 0.0
    %7333 = vmatprep.subr.mxu0 0.0
    %7334 = vmatpush1.msra.mxu0 0.0
    %7335 = vmatprep.subr.mxu0 0.0
    %7336 = vmatpush1.msra.mxu0 0.0
    %7337 = vmatprep.subr.mxu0 0.0
    %7338 = vmatpush1.msra.mxu0 0.0
    %7339 = vmatprep.subr.mxu0 0.0
    %7340 = vmatpush1.msra.mxu0 0.0
    %7341 = vmatprep.mubr.f32.mxu0 0.0
    %7342 = vmatmul.mubr.f32.gmra.mrb[0].mxu0 %v7275
    %v7343 = vpop.f32.mrb[0].mxu0
    %v7344 = vadd.f32 0.0, %v7343
    %v7345 = vpop.f32.mrb[0].mxu0
    %7346 = vdwg.mxu0
    %v7347 = vadd.f32 %v4788, %v7344
    %v7348 = vxor.u32 %v7347, 2147483648
    %v7349 = vmul.f32 %v7348, 1.442695
    %v7350 = vpow.pop %v7349
    %v7351 = vadd.f32 %v7350, 1.0
    %v7352 = vrcp.pop %v7351
    %v7353 = vmul.f32 1.0, %v7352
    %v7354 = vmul.f32 %v7353, 2.0
    %v7355 = vsub.f32 %v7354, 1.0
    %v7356 = vmul.f32 %v7353, %v7258
    %7358 = vrot.lane.b32.xlu0 %v7355, 96
    %v7359 = vpop.permute.xlu0 %7358
    %v7361 = vmul.f32 %v7353, %v7359
    %7363 = vrot.lane.b32.xlu0 %v7361, 16
    %v7364 = vpop.permute.xlu0 %7363
    %v7366 = vadd.f32 %v7356, %v7364
    %v7367 = vtanh.pop %v7366
    %7369 = vrot.lane.b32.xlu0 %v7367, 32
    %v7370 = vpop.permute.xlu0 %7369
    %v7372 = vmul.f32 %v7353, %v7370
    %v7373 = vld [vmem:[%s13] sm:$0xff]
    %v7374 = vld [vmem:[%s13 + $0x8] sm:$0xff]
    %v7375 = vld [vmem:[#allocation9] sm:$0x1]
    %v7377 = vlaneseq
    %v7378 = vshrl.u32 %v7377, 7
    %v7379 = vsub.s32 0, %v7378
    %v7380 = vrot.slane %v7375, %v7379
    %v7384 = vunpack.c.l.s4 1983009808
    %v7385 = vunpack.c.0.s8 %v7384
    %v7386 = vlaneseq
    %v7387 = vshrl.u32 %v7386, 7
    %v7388 = vsub.s32 %v7385, %v7387
    %v7389 = vrot.slane %v7372, %v7388
    %7390 = vrot.lane.b32.xlu0 %v7389, 80
    %v7391 = vpop.permute.xlu0 %7390
    %v7392 = vsel %vm4789, %v7391, 0
    %7394 = vmatprep.subr.mxu0 0.0
    %7395 = vmatpush1.msra.mxu0 %v7373
    %7396 = vmatprep.subr.mxu0 0.0
    %7397 = vmatpush1.msra.mxu0 %v7374
    %7398 = vmatprep.subr.mxu0 0.0
    %7399 = vmatpush1.msra.mxu0 0.0
    %7400 = vmatprep.subr.mxu0 0.0
    %7401 = vmatpush1.msra.mxu0 0.0
    %7402 = vmatprep.subr.mxu0 0.0
    %7403 = vmatpush1.msra.mxu0 0.0
    %7404 = vmatprep.subr.mxu0 0.0
    %7405 = vmatpush1.msra.mxu0 0.0
    %7406 = vmatprep.subr.mxu0 0.0
    %7407 = vmatpush1.msra.mxu0 0.0
    %7408 = vmatprep.subr.mxu0 0.0
    %7409 = vmatpush1.msra.mxu0 0.0
    %7410 = vmatprep.subr.mxu0 0.0
    %7411 = vmatpush1.msra.mxu0 0.0
    %7412 = vmatprep.subr.mxu0 0.0
    %7413 = vmatpush1.msra.mxu0 0.0
    %7414 = vmatprep.subr.mxu0 0.0
    %7415 = vmatpush1.msra.mxu0 0.0
    %7416 = vmatprep.subr.mxu0 0.0
    %7417 = vmatpush1.msra.mxu0 0.0
    %7418 = vmatprep.subr.mxu0 0.0
    %7419 = vmatpush1.msra.mxu0 0.0
    %7420 = vmatprep.subr.mxu0 0.0
    %7421 = vmatpush1.msra.mxu0 0.0
    %7422 = vmatprep.subr.mxu0 0.0
    %7423 = vmatpush1.msra.mxu0 0.0
    %7424 = vmatprep.subr.mxu0 0.0
    %7425 = vmatpush1.msra.mxu0 0.0
    %7426 = vmatprep.subr.mxu0 0.0
    %7427 = vmatpush1.msra.mxu0 0.0
    %7428 = vmatprep.subr.mxu0 0.0
    %7429 = vmatpush1.msra.mxu0 0.0
    %7430 = vmatprep.subr.mxu0 0.0
    %7431 = vmatpush1.msra.mxu0 0.0
    %7432 = vmatprep.subr.mxu0 0.0
    %7433 = vmatpush1.msra.mxu0 0.0
    %7434 = vmatprep.subr.mxu0 0.0
    %7435 = vmatpush1.msra.mxu0 0.0
    %7436 = vmatprep.subr.mxu0 0.0
    %7437 = vmatpush1.msra.mxu0 0.0
    %7438 = vmatprep.subr.mxu0 0.0
    %7439 = vmatpush1.msra.mxu0 0.0
    %7440 = vmatprep.subr.mxu0 0.0
    %7441 = vmatpush1.msra.mxu0 0.0
    %7442 = vmatprep.subr.mxu0 0.0
    %7443 = vmatpush1.msra.mxu0 0.0
    %7444 = vmatprep.subr.mxu0 0.0
    %7445 = vmatpush1.msra.mxu0 0.0
    %7446 = vmatprep.subr.mxu0 0.0
    %7447 = vmatpush1.msra.mxu0 0.0
    %7448 = vmatprep.subr.mxu0 0.0
    %7449 = vmatpush1.msra.mxu0 0.0
    %7450 = vmatprep.subr.mxu0 0.0
    %7451 = vmatpush1.msra.mxu0 0.0
    %7452 = vmatprep.subr.mxu0 0.0
    %7453 = vmatpush1.msra.mxu0 0.0
    %7454 = vmatprep.subr.mxu0 0.0
    %7455 = vmatpush1.msra.mxu0 0.0
    %7456 = vmatprep.subr.mxu0 0.0
    %7457 = vmatpush1.msra.mxu0 0.0
    %7458 = vmatprep.mubr.f32.mxu0 0.0
    %7459 = vmatmul.mubr.f32.gmra.mrb[0].mxu0 %v7392
    %v7460 = vpop.f32.mrb[0].mxu0
    %v7461 = vadd.f32 %v7380, %v7460
    %v7462 = vpop.f32.mrb[0].mxu0
    %7463 = vdwg.mxu0
    %7464 = vst [vmem:[%s15] sm:$0x3] %v7461
    // Predicated region
    $region82: #{cnn_forward.1} parent=1 // pred_check
      _
    $region83: #{cnn_forward.1} parent=1 // pred_check_branch
      %7466 = sbr.rel (0) target = $region85
    $region84: #{cnn_forward.1} parent=1 // pred_region
      _
    $region85: #{cnn_forward.1} parent=1 // pred_fallthru
      _
    // Predicated region
    $region86: #{cnn_forward.1} parent=1 // pred_check
      _
    $region87: #{cnn_forward.1} parent=1 // pred_check_branch
      %7468 = sbr.rel (0) target = $region89
    $region88: #{cnn_forward.1} parent=1 // pred_region
      _
    $region89: #{cnn_forward.1} parent=1 // pred_fallthru
      _
    %7469 = vsyncpa [#allocation3], 1
    %7470 = vsyncpa [#allocation5], 1
    %7471 = vsyncpa [#allocation8], 1

</llo_original>
